<compile_context>
chip_gen: v5e
topology: v5e:2x2
jax: 0.10.0
libtpu: 0.0.40
codegen_flags: <defaults>
</compile_context>

<pallas_src>
import numpy as np
import jax
import jax.numpy as jnp
from jax.experimental import pallas as pl
from jax.experimental.pallas import tpu as pltpu


def _elu(x):
    # ELU(alpha=1). exp(x)-1 matches the reference bit pattern; the where() selects the
    # positive branch so the exp never propagates an overflow.
    return jnp.where(x > 0, x, jnp.exp(x) - 1.0)


# ----------------------------------------------------------------------------
# Single fused kernel: per-image forward pass, all intermediates VMEM-resident.
# ----------------------------------------------------------------------------
def _fused_cnn_kernel(x_ref, w1_ref, b1_ref, w2_ref, b2_ref, w3_ref, b3_ref,
                      wfc_ref, bfc_ref, o_ref):
    # x_ref:   (1, H, W)            single image (Cin = 1)
    # w1_ref:  (3, 3, 1, C1)        conv1 weights (HWIO)
    # b1_ref:  (1, C1)
    # w2_ref:  (3, 3, C1, C2)       conv2 weights with BN1 folded in
    # b2_ref:  (1, C2)
    # w3_ref:  (3, 3, C2, C2)       conv3 weights with BN2 folded in
    # b3_ref:  (1, C2)
    # wfc_ref: (C2, 1)              fc weights with BN3 folded in
    # bfc_ref: (1, 1)
    # o_ref:   (1, 1, 1)
    x = x_ref[0]                                          # (H, W)
    H, W = x.shape
    KH, KW = 3, 3

    # ---- conv1 (Cin=1) + bias + ELU : pure VPU broadcast FMAs ---------------
    Ho1, Wo1 = H - KH + 1, W - KW + 1
    C1 = w1_ref.shape[3]
    acc1 = jnp.zeros((Ho1, Wo1, C1), jnp.float32)
    for kh in range(KH):
        for kw in range(KW):
            patch = x[kh:kh + Ho1, kw:kw + Wo1]           # (Ho1, Wo1), static slice
            acc1 = acc1 + patch[:, :, None] * w1_ref[kh, kw]   # (1, C1) broadcast
    a1 = _elu(acc1 + b1_ref[0])                           # BN1 folded into conv2

    # ---- conv2 (C1 -> C2) + bias + ELU : 9 shifted-tap MXU matmuls ----------
    Ho2, Wo2 = Ho1 - KH + 1, Wo1 - KW + 1
    C2 = w2_ref.shape[3]
    acc2 = jnp.zeros((Ho2, Wo2, C2), jnp.float32)
    for kh in range(KH):
        for kw in range(KW):
            patch = a1[kh:kh + Ho2, kw:kw + Wo2, :]       # (Ho2, Wo2, C1)
            acc2 = acc2 + jnp.einsum(
                "hwc,co->hwo", patch, w2_ref[kh, kw],
                preferred_element_type=jnp.float32)
    a2 = _elu(acc2 + b2_ref[0])                           # BN2 folded into conv3

    # ---- conv3 (C2 -> C2) + bias + ELU --------------------------------------
    Ho3, Wo3 = Ho2 - KH + 1, Wo2 - KW + 1
    acc3 = jnp.zeros((Ho3, Wo3, C2), jnp.float32)
    for kh in range(KH):
        for kw in range(KW):
            patch = a2[kh:kh + Ho3, kw:kw + Wo3, :]       # (Ho3, Wo3, C2)
            acc3 = acc3 + jnp.einsum(
                "hwc,co->hwo", patch, w3_ref[kh, kw],
                preferred_element_type=jnp.float32)
    a3 = _elu(acc3 + b3_ref[0])                           # BN3 folded into fc

    # ---- global avg pool + Linear(C2 -> 1); Dropout is identity in eval -----
    pooled = jnp.sum(jnp.sum(a3, axis=0), axis=0, keepdims=True)   # (1, C2)
    pooled = pooled * (1.0 / float(Ho3 * Wo3))
    y = jnp.dot(pooled, wfc_ref[...], preferred_element_type=jnp.float32)
    o_ref[0] = y + bfc_ref[...]                           # (1, 1)


def simple_cnn_forward(x_bhw, kp):
    """x_bhw: (B, H, W) float32; kp: prepared (BN-folded) kernel params."""
    B, H, W = x_bhw.shape
    C1 = kp["w1"].shape[3]
    C2 = kp["w2"].shape[3]
    out = pl.pallas_call(
        _fused_cnn_kernel,
        out_shape=jax.ShapeDtypeStruct((B, 1, 1), jnp.float32),
        grid=(B,),
        in_specs=[
            pl.BlockSpec((1, H, W), lambda i: (i, 0, 0)),
            pl.BlockSpec((3, 3, 1, C1), lambda i: (0, 0, 0, 0)),
            pl.BlockSpec((1, C1), lambda i: (0, 0)),
            pl.BlockSpec((3, 3, C1, C2), lambda i: (0, 0, 0, 0)),
            pl.BlockSpec((1, C2), lambda i: (0, 0)),
            pl.BlockSpec((3, 3, C2, C2), lambda i: (0, 0, 0, 0)),
            pl.BlockSpec((1, C2), lambda i: (0, 0)),
            pl.BlockSpec((C2, 1), lambda i: (0, 0)),
            pl.BlockSpec((1, 1), lambda i: (0, 0)),
        ],
        out_specs=pl.BlockSpec((1, 1, 1), lambda i: (i, 0, 0)),
        compiler_params=pltpu.CompilerParams(
            dimension_semantics=("parallel",)),     # v7x: one image per TensorCore
    )(x_bhw, kp["w1"], kp["b1"], kp["w2"], kp["b2"], kp["w3"], kp["b3"],
      kp["wfc"], kp["bfc"])
    return out[:, :, 0]                              # (B, 1)


# ----------------------------------------------------------------------------
# Parameter init (deterministic, synthetic — shapes from SimpleCNN.__init__)
# and BN constant-folding at prep time.
# ----------------------------------------------------------------------------
def init_params(key, dim_val):
    dv, dv2 = dim_val, dim_val * 2
    ks = jax.random.split(key, 24)

    def conv_w(k, cout, cin):
        # PyTorch layout (Cout, Cin, KH, KW) -> HWIO for NHWC conv.
        w = 0.1 * jax.random.normal(k, (cout, cin, 3, 3), jnp.float32)
        return jnp.transpose(w, (2, 3, 1, 0))        # (KH, KW, Cin, Cout)

    def bn(kg, kb, km, kv, c):
        gamma = 1.0 + 0.1 * jax.random.normal(kg, (c,), jnp.float32)
        beta = 0.1 * jax.random.normal(kb, (c,), jnp.float32)
        mean = 0.1 * jax.random.normal(km, (c,), jnp.float32)
        var = jnp.abs(1.0 + 0.1 * jax.random.normal(kv, (c,), jnp.float32))
        return gamma, beta, mean, var

    return {
        "w1": conv_w(ks[0], dv, 1),
        "b1": 0.1 * jax.random.normal(ks[1], (dv,), jnp.float32),
        "w2": conv_w(ks[2], dv2, dv),
        "b2": 0.1 * jax.random.normal(ks[3], (dv2,), jnp.float32),
        "w3": conv_w(ks[4], dv2, dv2),
        "b3": 0.1 * jax.random.normal(ks[5], (dv2,), jnp.float32),
        "bn1": bn(ks[6], ks[7], ks[8], ks[9], dv),
        "bn2": bn(ks[10], ks[11], ks[12], ks[13], dv2),
        "bn3": bn(ks[14], ks[15], ks[16], ks[17], dv2),
        "wfc": 0.1 * jax.random.normal(ks[18], (dv2, 1), jnp.float32),
        "bfc": 0.1 * jax.random.normal(ks[19], (1,), jnp.float32),
    }


def _bn_scale_shift(bn, eps=1e-5):
    gamma, beta, mean, var = bn
    scale = gamma / jnp.sqrt(var + eps)
    shift = beta - mean * scale
    return scale, shift


def prepare_kernel_params(p):
    """Fold eval-mode BatchNorms into the *next* linear op (done once, zero kernel cost).

      conv(s*x + h) = conv_w'(x) + b'  with  w' = w * s[cin],
                                             b' = b + sum_{kh,kw,cin} w * h[cin]
      fc(mean(s*x + h)) = mean(x) @ (s[:,None]*wfc) + (h @ wfc + bfc)
    """
    s1, h1 = _bn_scale_shift(p["bn1"])
    s2, h2 = _bn_scale_shift(p["bn2"])
    s3, h3 = _bn_scale_shift(p["bn3"])

    w2 = p["w2"] * s1[None, None, :, None]
    b2 = p["b2"] + jnp.einsum("hwio,i->o", p["w2"], h1)
    w3 = p["w3"] * s2[None, None, :, None]
    b3 = p["b3"] + jnp.einsum("hwio,i->o", p["w3"], h2)
    wfc = p["wfc"] * s3[:, None]
    bfc = p["bfc"] + h3 @ p["wfc"]                   # (1,)

    return {
        "w1": p["w1"], "b1": p["b1"].reshape(1, -1),
        "w2": w2, "b2": b2.reshape(1, -1),
        "w3": w3, "b3": b3.reshape(1, -1),
        "wfc": wfc, "bfc": bfc.reshape(1, 1),
    }


# ----------------------------------------------------------------------------
# Pure-JAX reference (un-folded BN, lax.conv) for correctness checking
# ----------------------------------------------------------------------------
def reference_forward(x_bhw, p):
    def conv(x, w, b):
        y = jax.lax.conv_general_dilated(
            x, w, window_strides=(1, 1), padding="VALID",
            dimension_numbers=("NHWC", "HWIO", "NHWC"))
        return y + b.reshape(1, 1, 1, -1)

    def bn(x, params, eps=1e-5):
        gamma, beta, mean, var = params
        scale = (gamma / jnp.sqrt(var + eps)).reshape(1, 1, 1, -1)
        return (x - mean.reshape(1, 1, 1, -1)) * scale + beta.reshape(1, 1, 1, -1)

    x = x_bhw[..., None]
    x = bn(_elu(conv(x, p["w1"], p["b1"])), p["bn1"])
    x = bn(_elu(conv(x, p["w2"], p["b2"])), p["bn2"])
    x = bn(_elu(conv(x, p["w3"], p["b3"])), p["bn3"])
    pooled = jnp.mean(x, axis=(1, 2))
    return pooled @ p["wfc"] + p["bfc"].reshape(1, 1)


if __name__ == "__main__":
    B, H, W = 2, 16, 16
    dim_val = 8

    x = jax.random.normal(jax.random.PRNGKey(0), (B, H, W), jnp.float32)
    raw_params = init_params(jax.random.PRNGKey(1), dim_val)
    kernel_params = prepare_kernel_params(raw_params)

    out = jax.block_until_ready(simple_cnn_forward(x, kernel_params))
    assert out.shape == (B, 1), out.shape

    ref = jax.block_until_ready(reference_forward(x, raw_params))
    np.testing.assert_allclose(np.asarray(out), np.asarray(ref),
                               rtol=1e-4, atol=1e-4)

    print("KERNEL_OK")
</pallas_src>

<mosaic_0001>
module attributes {stable_mosaic.version = 11 : i64} {
  func.func @_fused_cnn_kernel(%arg0: i32, %arg1: memref<1x16x16xf32, #tpu.memory_space<vmem>>, %arg2: memref<3x3x1x8xf32, #tpu.memory_space<vmem>>, %arg3: memref<1x8xf32, #tpu.memory_space<vmem>>, %arg4: memref<3x3x8x16xf32, #tpu.memory_space<vmem>>, %arg5: memref<1x16xf32, #tpu.memory_space<vmem>>, %arg6: memref<3x3x16x16xf32, #tpu.memory_space<vmem>>, %arg7: memref<1x16xf32, #tpu.memory_space<vmem>>, %arg8: memref<16x1xf32, #tpu.memory_space<vmem>>, %arg9: memref<1x1xf32, #tpu.memory_space<vmem>>, %arg10: memref<1x1x1xf32, #tpu.memory_space<vmem>>) attributes {dimension_semantics = [#tpu.dimension_semantics<parallel>], iteration_bounds = array<i64: 2>, scalar_prefetch = 0 : i64, scratch_operands = 0 : i64, tpu.core_type = #tpu.core_type<tc>, window_params = [{transform_indices = @transform_0, window_bounds = array<i64: 1, 16, 16>}, {pipeline_mode = #tpu.pipeline_mode<synchronous>, transform_indices = @transform_1, window_bounds = array<i64: 3, 3, 1, 8>}, {pipeline_mode = #tpu.pipeline_mode<synchronous>, transform_indices = @transform_2, window_bounds = array<i64: 1, 8>}, {pipeline_mode = #tpu.pipeline_mode<synchronous>, transform_indices = @transform_3, window_bounds = array<i64: 3, 3, 8, 16>}, {pipeline_mode = #tpu.pipeline_mode<synchronous>, transform_indices = @transform_4, window_bounds = array<i64: 1, 16>}, {pipeline_mode = #tpu.pipeline_mode<synchronous>, transform_indices = @transform_5, window_bounds = array<i64: 3, 3, 16, 16>}, {pipeline_mode = #tpu.pipeline_mode<synchronous>, transform_indices = @transform_6, window_bounds = array<i64: 1, 16>}, {pipeline_mode = #tpu.pipeline_mode<synchronous>, transform_indices = @transform_7, window_bounds = array<i64: 16, 1>}, {pipeline_mode = #tpu.pipeline_mode<synchronous>, transform_indices = @transform_8, window_bounds = array<i64: 1, 1>}, {transform_indices = @transform_9, window_bounds = array<i64: 1, 1, 1>}]} {
    %c0 = arith.constant 0 : index
    %c0_0 = arith.constant 0 : index
    %c0_1 = arith.constant 0 : index
    %0 = vector.load %arg1[%c0, %c0_0, %c0_1] : memref<1x16x16xf32, #tpu.memory_space<vmem>>, vector<1x16x16xf32>
    %1 = vector.shape_cast %0 : vector<1x16x16xf32> to vector<16x16xf32>
    %cst = arith.constant 0.000000e+00 : f32
    %2 = vector.broadcast %cst : f32 to vector<14x14x8xf32>
    %3 = vector.extract_strided_slice %1 {offsets = [0, 0], sizes = [14, 14], strides = [1, 1]} : vector<16x16xf32> to vector<14x14xf32>
    %4 = vector.shape_cast %3 : vector<14x14xf32> to vector<14x14x1xf32>
    %c0_2 = arith.constant 0 : index
    %c0_3 = arith.constant 0 : index
    %c0_4 = arith.constant 0 : index
    %c0_5 = arith.constant 0 : index
    %5 = vector.load %arg2[%c0_2, %c0_3, %c0_4, %c0_5] : memref<3x3x1x8xf32, #tpu.memory_space<vmem>>, vector<1x1x1x8xf32>
    %6 = vector.shape_cast %5 : vector<1x1x1x8xf32> to vector<1x8xf32>
    %7 = vector.shape_cast %6 : vector<1x8xf32> to vector<1x1x8xf32>
    %8 = vector.broadcast %4 : vector<14x14x1xf32> to vector<14x14x8xf32>
    %9 = vector.broadcast %7 : vector<1x1x8xf32> to vector<14x14x8xf32>
    %10 = arith.mulf %8, %9 : vector<14x14x8xf32>
    %11 = arith.addf %2, %10 : vector<14x14x8xf32>
    %12 = vector.extract_strided_slice %1 {offsets = [0, 1], sizes = [14, 14], strides = [1, 1]} : vector<16x16xf32> to vector<14x14xf32>
    %13 = vector.shape_cast %12 : vector<14x14xf32> to vector<14x14x1xf32>
    %c0_6 = arith.constant 0 : index
    %c1 = arith.constant 1 : index
    %c0_7 = arith.constant 0 : index
    %c0_8 = arith.constant 0 : index
    %14 = vector.load %arg2[%c0_6, %c1, %c0_7, %c0_8] : memref<3x3x1x8xf32, #tpu.memory_space<vmem>>, vector<1x1x1x8xf32>
    %15 = vector.shape_cast %14 : vector<1x1x1x8xf32> to vector<1x8xf32>
    %16 = vector.shape_cast %15 : vector<1x8xf32> to vector<1x1x8xf32>
    %17 = vector.broadcast %13 : vector<14x14x1xf32> to vector<14x14x8xf32>
    %18 = vector.broadcast %16 : vector<1x1x8xf32> to vector<14x14x8xf32>
    %19 = arith.mulf %17, %18 : vector<14x14x8xf32>
    %20 = arith.addf %11, %19 : vector<14x14x8xf32>
    %21 = vector.extract_strided_slice %1 {offsets = [0, 2], sizes = [14, 14], strides = [1, 1]} : vector<16x16xf32> to vector<14x14xf32>
    %22 = vector.shape_cast %21 : vector<14x14xf32> to vector<14x14x1xf32>
    %c0_9 = arith.constant 0 : index
    %c2 = arith.constant 2 : index
    %c0_10 = arith.constant 0 : index
    %c0_11 = arith.constant 0 : index
    %23 = vector.load %arg2[%c0_9, %c2, %c0_10, %c0_11] : memref<3x3x1x8xf32, #tpu.memory_space<vmem>>, vector<1x1x1x8xf32>
    %24 = vector.shape_cast %23 : vector<1x1x1x8xf32> to vector<1x8xf32>
    %25 = vector.shape_cast %24 : vector<1x8xf32> to vector<1x1x8xf32>
    %26 = vector.broadcast %22 : vector<14x14x1xf32> to vector<14x14x8xf32>
    %27 = vector.broadcast %25 : vector<1x1x8xf32> to vector<14x14x8xf32>
    %28 = arith.mulf %26, %27 : vector<14x14x8xf32>
    %29 = arith.addf %20, %28 : vector<14x14x8xf32>
    %30 = vector.extract_strided_slice %1 {offsets = [1, 0], sizes = [14, 14], strides = [1, 1]} : vector<16x16xf32> to vector<14x14xf32>
    %31 = vector.shape_cast %30 : vector<14x14xf32> to vector<14x14x1xf32>
    %c1_12 = arith.constant 1 : index
    %c0_13 = arith.constant 0 : index
    %c0_14 = arith.constant 0 : index
    %c0_15 = arith.constant 0 : index
    %32 = vector.load %arg2[%c1_12, %c0_13, %c0_14, %c0_15] : memref<3x3x1x8xf32, #tpu.memory_space<vmem>>, vector<1x1x1x8xf32>
    %33 = vector.shape_cast %32 : vector<1x1x1x8xf32> to vector<1x8xf32>
    %34 = vector.shape_cast %33 : vector<1x8xf32> to vector<1x1x8xf32>
    %35 = vector.broadcast %31 : vector<14x14x1xf32> to vector<14x14x8xf32>
    %36 = vector.broadcast %34 : vector<1x1x8xf32> to vector<14x14x8xf32>
    %37 = arith.mulf %35, %36 : vector<14x14x8xf32>
    %38 = arith.addf %29, %37 : vector<14x14x8xf32>
    %39 = vector.extract_strided_slice %1 {offsets = [1, 1], sizes = [14, 14], strides = [1, 1]} : vector<16x16xf32> to vector<14x14xf32>
    %40 = vector.shape_cast %39 : vector<14x14xf32> to vector<14x14x1xf32>
    %c1_16 = arith.constant 1 : index
    %c1_17 = arith.constant 1 : index
    %c0_18 = arith.constant 0 : index
    %c0_19 = arith.constant 0 : index
    %41 = vector.load %arg2[%c1_16, %c1_17, %c0_18, %c0_19] : memref<3x3x1x8xf32, #tpu.memory_space<vmem>>, vector<1x1x1x8xf32>
    %42 = vector.shape_cast %41 : vector<1x1x1x8xf32> to vector<1x8xf32>
    %43 = vector.shape_cast %42 : vector<1x8xf32> to vector<1x1x8xf32>
    %44 = vector.broadcast %40 : vector<14x14x1xf32> to vector<14x14x8xf32>
    %45 = vector.broadcast %43 : vector<1x1x8xf32> to vector<14x14x8xf32>
    %46 = arith.mulf %44, %45 : vector<14x14x8xf32>
    %47 = arith.addf %38, %46 : vector<14x14x8xf32>
    %48 = vector.extract_strided_slice %1 {offsets = [1, 2], sizes = [14, 14], strides = [1, 1]} : vector<16x16xf32> to vector<14x14xf32>
    %49 = vector.shape_cast %48 : vector<14x14xf32> to vector<14x14x1xf32>
    %c1_20 = arith.constant 1 : index
    %c2_21 = arith.constant 2 : index
    %c0_22 = arith.constant 0 : index
    %c0_23 = arith.constant 0 : index
    %50 = vector.load %arg2[%c1_20, %c2_21, %c0_22, %c0_23] : memref<3x3x1x8xf32, #tpu.memory_space<vmem>>, vector<1x1x1x8xf32>
    %51 = vector.shape_cast %50 : vector<1x1x1x8xf32> to vector<1x8xf32>
    %52 = vector.shape_cast %51 : vector<1x8xf32> to vector<1x1x8xf32>
    %53 = vector.broadcast %49 : vector<14x14x1xf32> to vector<14x14x8xf32>
    %54 = vector.broadcast %52 : vector<1x1x8xf32> to vector<14x14x8xf32>
    %55 = arith.mulf %53, %54 : vector<14x14x8xf32>
    %56 = arith.addf %47, %55 : vector<14x14x8xf32>
    %57 = vector.extract_strided_slice %1 {offsets = [2, 0], sizes = [14, 14], strides = [1, 1]} : vector<16x16xf32> to vector<14x14xf32>
    %58 = vector.shape_cast %57 : vector<14x14xf32> to vector<14x14x1xf32>
    %c2_24 = arith.constant 2 : index
    %c0_25 = arith.constant 0 : index
    %c0_26 = arith.constant 0 : index
    %c0_27 = arith.constant 0 : index
    %59 = vector.load %arg2[%c2_24, %c0_25, %c0_26, %c0_27] : memref<3x3x1x8xf32, #tpu.memory_space<vmem>>, vector<1x1x1x8xf32>
    %60 = vector.shape_cast %59 : vector<1x1x1x8xf32> to vector<1x8xf32>
    %61 = vector.shape_cast %60 : vector<1x8xf32> to vector<1x1x8xf32>
    %62 = vector.broadcast %58 : vector<14x14x1xf32> to vector<14x14x8xf32>
    %63 = vector.broadcast %61 : vector<1x1x8xf32> to vector<14x14x8xf32>
    %64 = arith.mulf %62, %63 : vector<14x14x8xf32>
    %65 = arith.addf %56, %64 : vector<14x14x8xf32>
    %66 = vector.extract_strided_slice %1 {offsets = [2, 1], sizes = [14, 14], strides = [1, 1]} : vector<16x16xf32> to vector<14x14xf32>
    %67 = vector.shape_cast %66 : vector<14x14xf32> to vector<14x14x1xf32>
    %c2_28 = arith.constant 2 : index
    %c1_29 = arith.constant 1 : index
    %c0_30 = arith.constant 0 : index
    %c0_31 = arith.constant 0 : index
    %68 = vector.load %arg2[%c2_28, %c1_29, %c0_30, %c0_31] : memref<3x3x1x8xf32, #tpu.memory_space<vmem>>, vector<1x1x1x8xf32>
    %69 = vector.shape_cast %68 : vector<1x1x1x8xf32> to vector<1x8xf32>
    %70 = vector.shape_cast %69 : vector<1x8xf32> to vector<1x1x8xf32>
    %71 = vector.broadcast %67 : vector<14x14x1xf32> to vector<14x14x8xf32>
    %72 = vector.broadcast %70 : vector<1x1x8xf32> to vector<14x14x8xf32>
    %73 = arith.mulf %71, %72 : vector<14x14x8xf32>
    %74 = arith.addf %65, %73 : vector<14x14x8xf32>
    %75 = vector.extract_strided_slice %1 {offsets = [2, 2], sizes = [14, 14], strides = [1, 1]} : vector<16x16xf32> to vector<14x14xf32>
    %76 = vector.shape_cast %75 : vector<14x14xf32> to vector<14x14x1xf32>
    %c2_32 = arith.constant 2 : index
    %c2_33 = arith.constant 2 : index
    %c0_34 = arith.constant 0 : index
    %c0_35 = arith.constant 0 : index
    %77 = vector.load %arg2[%c2_32, %c2_33, %c0_34, %c0_35] : memref<3x3x1x8xf32, #tpu.memory_space<vmem>>, vector<1x1x1x8xf32>
    %78 = vector.shape_cast %77 : vector<1x1x1x8xf32> to vector<1x8xf32>
    %79 = vector.shape_cast %78 : vector<1x8xf32> to vector<1x1x8xf32>
    %80 = vector.broadcast %76 : vector<14x14x1xf32> to vector<14x14x8xf32>
    %81 = vector.broadcast %79 : vector<1x1x8xf32> to vector<14x14x8xf32>
    %82 = arith.mulf %80, %81 : vector<14x14x8xf32>
    %83 = arith.addf %74, %82 : vector<14x14x8xf32>
    %c0_36 = arith.constant 0 : index
    %c0_37 = arith.constant 0 : index
    %84 = vector.load %arg3[%c0_36, %c0_37] : memref<1x8xf32, #tpu.memory_space<vmem>>, vector<1x8xf32>
    %85 = vector.shape_cast %84 : vector<1x8xf32> to vector<8xf32>
    %86 = vector.shape_cast %85 : vector<8xf32> to vector<1x1x8xf32>
    %87 = vector.broadcast %86 : vector<1x1x8xf32> to vector<14x14x8xf32>
    %88 = arith.addf %83, %87 : vector<14x14x8xf32>
    %cst_38 = arith.constant 0.000000e+00 : f32
    %89 = vector.broadcast %cst_38 : f32 to vector<14x14x8xf32>
    %90 = arith.cmpf ogt, %88, %89 : vector<14x14x8xf32>
    %91 = math.exp %88 : vector<14x14x8xf32>
    %cst_39 = arith.constant 1.000000e+00 : f32
    %92 = vector.broadcast %cst_39 : f32 to vector<14x14x8xf32>
    %93 = arith.subf %91, %92 : vector<14x14x8xf32>
    %94 = arith.select %90, %88, %93 : vector<14x14x8xi1>, vector<14x14x8xf32>
    %cst_40 = arith.constant 0.000000e+00 : f32
    %95 = vector.broadcast %cst_40 : f32 to vector<12x12x16xf32>
    %96 = vector.extract_strided_slice %94 {offsets = [0, 0, 0], sizes = [12, 12, 8], strides = [1, 1, 1]} : vector<14x14x8xf32> to vector<12x12x8xf32>
    %c0_41 = arith.constant 0 : index
    %c0_42 = arith.constant 0 : index
    %c0_43 = arith.constant 0 : index
    %c0_44 = arith.constant 0 : index
    %97 = vector.load %arg4[%c0_41, %c0_42, %c0_43, %c0_44] : memref<3x3x8x16xf32, #tpu.memory_space<vmem>>, vector<1x1x8x16xf32>
    %98 = vector.shape_cast %97 : vector<1x1x8x16xf32> to vector<8x16xf32>
    "tpu.trace_start"() <{level = 10 : i32, message = "hwc,co->hwo"}> : () -> ()
    %cst_45 = arith.constant dense<0.000000e+00> : vector<12x12x16xf32>
    %99 = tpu.matmul %96, %98, %cst_45 {dimension_numbers = #tpu.dot_dimension_numbers<[2], [0], [0, 1], [1], [0, 0, 0, 1, 1, 1], [], []>} : vector<12x12x8xf32>, vector<8x16xf32>, vector<12x12x16xf32> -> vector<12x12x16xf32>
    "tpu.trace_stop"() : () -> ()
    %100 = arith.addf %95, %99 : vector<12x12x16xf32>
    %101 = vector.extract_strided_slice %94 {offsets = [0, 1, 0], sizes = [12, 12, 8], strides = [1, 1, 1]} : vector<14x14x8xf32> to vector<12x12x8xf32>
    %c0_46 = arith.constant 0 : index
    %c1_47 = arith.constant 1 : index
    %c0_48 = arith.constant 0 : index
    %c0_49 = arith.constant 0 : index
    %102 = vector.load %arg4[%c0_46, %c1_47, %c0_48, %c0_49] : memref<3x3x8x16xf32, #tpu.memory_space<vmem>>, vector<1x1x8x16xf32>
    %103 = vector.shape_cast %102 : vector<1x1x8x16xf32> to vector<8x16xf32>
    "tpu.trace_start"() <{level = 10 : i32, message = "hwc,co->hwo"}> : () -> ()
    %cst_50 = arith.constant dense<0.000000e+00> : vector<12x12x16xf32>
    %104 = tpu.matmul %101, %103, %cst_50 {dimension_numbers = #tpu.dot_dimension_numbers<[2], [0], [0, 1], [1], [0, 0, 0, 1, 1, 1], [], []>} : vector<12x12x8xf32>, vector<8x16xf32>, vector<12x12x16xf32> -> vector<12x12x16xf32>
    "tpu.trace_stop"() : () -> ()
    %105 = arith.addf %100, %104 : vector<12x12x16xf32>
    %106 = vector.extract_strided_slice %94 {offsets = [0, 2, 0], sizes = [12, 12, 8], strides = [1, 1, 1]} : vector<14x14x8xf32> to vector<12x12x8xf32>
    %c0_51 = arith.constant 0 : index
    %c2_52 = arith.constant 2 : index
    %c0_53 = arith.constant 0 : index
    %c0_54 = arith.constant 0 : index
    %107 = vector.load %arg4[%c0_51, %c2_52, %c0_53, %c0_54] : memref<3x3x8x16xf32, #tpu.memory_space<vmem>>, vector<1x1x8x16xf32>
    %108 = vector.shape_cast %107 : vector<1x1x8x16xf32> to vector<8x16xf32>
    "tpu.trace_start"() <{level = 10 : i32, message = "hwc,co->hwo"}> : () -> ()
    %cst_55 = arith.constant dense<0.000000e+00> : vector<12x12x16xf32>
    %109 = tpu.matmul %106, %108, %cst_55 {dimension_numbers = #tpu.dot_dimension_numbers<[2], [0], [0, 1], [1], [0, 0, 0, 1, 1, 1], [], []>} : vector<12x12x8xf32>, vector<8x16xf32>, vector<12x12x16xf32> -> vector<12x12x16xf32>
    "tpu.trace_stop"() : () -> ()
    %110 = arith.addf %105, %109 : vector<12x12x16xf32>
    %111 = vector.extract_strided_slice %94 {offsets = [1, 0, 0], sizes = [12, 12, 8], strides = [1, 1, 1]} : vector<14x14x8xf32> to vector<12x12x8xf32>
    %c1_56 = arith.constant 1 : index
    %c0_57 = arith.constant 0 : index
    %c0_58 = arith.constant 0 : index
    %c0_59 = arith.constant 0 : index
    %112 = vector.load %arg4[%c1_56, %c0_57, %c0_58, %c0_59] : memref<3x3x8x16xf32, #tpu.memory_space<vmem>>, vector<1x1x8x16xf32>
    %113 = vector.shape_cast %112 : vector<1x1x8x16xf32> to vector<8x16xf32>
    "tpu.trace_start"() <{level = 10 : i32, message = "hwc,co->hwo"}> : () -> ()
    %cst_60 = arith.constant dense<0.000000e+00> : vector<12x12x16xf32>
    %114 = tpu.matmul %111, %113, %cst_60 {dimension_numbers = #tpu.dot_dimension_numbers<[2], [0], [0, 1], [1], [0, 0, 0, 1, 1, 1], [], []>} : vector<12x12x8xf32>, vector<8x16xf32>, vector<12x12x16xf32> -> vector<12x12x16xf32>
    "tpu.trace_stop"() : () -> ()
    %115 = arith.addf %110, %114 : vector<12x12x16xf32>
    %116 = vector.extract_strided_slice %94 {offsets = [1, 1, 0], sizes = [12, 12, 8], strides = [1, 1, 1]} : vector<14x14x8xf32> to vector<12x12x8xf32>
    %c1_61 = arith.constant 1 : index
    %c1_62 = arith.constant 1 : index
    %c0_63 = arith.constant 0 : index
    %c0_64 = arith.constant 0 : index
    %117 = vector.load %arg4[%c1_61, %c1_62, %c0_63, %c0_64] : memref<3x3x8x16xf32, #tpu.memory_space<vmem>>, vector<1x1x8x16xf32>
    %118 = vector.shape_cast %117 : vector<1x1x8x16xf32> to vector<8x16xf32>
    "tpu.trace_start"() <{level = 10 : i32, message = "hwc,co->hwo"}> : () -> ()
    %cst_65 = arith.constant dense<0.000000e+00> : vector<12x12x16xf32>
    %119 = tpu.matmul %116, %118, %cst_65 {dimension_numbers = #tpu.dot_dimension_numbers<[2], [0], [0, 1], [1], [0, 0, 0, 1, 1, 1], [], []>} : vector<12x12x8xf32>, vector<8x16xf32>, vector<12x12x16xf32> -> vector<12x12x16xf32>
    "tpu.trace_stop"() : () -> ()
    %120 = arith.addf %115, %119 : vector<12x12x16xf32>
    %121 = vector.extract_strided_slice %94 {offsets = [1, 2, 0], sizes = [12, 12, 8], strides = [1, 1, 1]} : vector<14x14x8xf32> to vector<12x12x8xf32>
    %c1_66 = arith.constant 1 : index
    %c2_67 = arith.constant 2 : index
    %c0_68 = arith.constant 0 : index
    %c0_69 = arith.constant 0 : index
    %122 = vector.load %arg4[%c1_66, %c2_67, %c0_68, %c0_69] : memref<3x3x8x16xf32, #tpu.memory_space<vmem>>, vector<1x1x8x16xf32>
    %123 = vector.shape_cast %122 : vector<1x1x8x16xf32> to vector<8x16xf32>
    "tpu.trace_start"() <{level = 10 : i32, message = "hwc,co->hwo"}> : () -> ()
    %cst_70 = arith.constant dense<0.000000e+00> : vector<12x12x16xf32>
    %124 = tpu.matmul %121, %123, %cst_70 {dimension_numbers = #tpu.dot_dimension_numbers<[2], [0], [0, 1], [1], [0, 0, 0, 1, 1, 1], [], []>} : vector<12x12x8xf32>, vector<8x16xf32>, vector<12x12x16xf32> -> vector<12x12x16xf32>
    "tpu.trace_stop"() : () -> ()
    %125 = arith.addf %120, %124 : vector<12x12x16xf32>
    %126 = vector.extract_strided_slice %94 {offsets = [2, 0, 0], sizes = [12, 12, 8], strides = [1, 1, 1]} : vector<14x14x8xf32> to vector<12x12x8xf32>
    %c2_71 = arith.constant 2 : index
    %c0_72 = arith.constant 0 : index
    %c0_73 = arith.constant 0 : index
    %c0_74 = arith.constant 0 : index
    %127 = vector.load %arg4[%c2_71, %c0_72, %c0_73, %c0_74] : memref<3x3x8x16xf32, #tpu.memory_space<vmem>>, vector<1x1x8x16xf32>
    %128 = vector.shape_cast %127 : vector<1x1x8x16xf32> to vector<8x16xf32>
    "tpu.trace_start"() <{level = 10 : i32, message = "hwc,co->hwo"}> : () -> ()
    %cst_75 = arith.constant dense<0.000000e+00> : vector<12x12x16xf32>
    %129 = tpu.matmul %126, %128, %cst_75 {dimension_numbers = #tpu.dot_dimension_numbers<[2], [0], [0, 1], [1], [0, 0, 0, 1, 1, 1], [], []>} : vector<12x12x8xf32>, vector<8x16xf32>, vector<12x12x16xf32> -> vector<12x12x16xf32>
    "tpu.trace_stop"() : () -> ()
    %130 = arith.addf %125, %129 : vector<12x12x16xf32>
    %131 = vector.extract_strided_slice %94 {offsets = [2, 1, 0], sizes = [12, 12, 8], strides = [1, 1, 1]} : vector<14x14x8xf32> to vector<12x12x8xf32>
    %c2_76 = arith.constant 2 : index
    %c1_77 = arith.constant 1 : index
    %c0_78 = arith.constant 0 : index
    %c0_79 = arith.constant 0 : index
    %132 = vector.load %arg4[%c2_76, %c1_77, %c0_78, %c0_79] : memref<3x3x8x16xf32, #tpu.memory_space<vmem>>, vector<1x1x8x16xf32>
    %133 = vector.shape_cast %132 : vector<1x1x8x16xf32> to vector<8x16xf32>
    "tpu.trace_start"() <{level = 10 : i32, message = "hwc,co->hwo"}> : () -> ()
    %cst_80 = arith.constant dense<0.000000e+00> : vector<12x12x16xf32>
    %134 = tpu.matmul %131, %133, %cst_80 {dimension_numbers = #tpu.dot_dimension_numbers<[2], [0], [0, 1], [1], [0, 0, 0, 1, 1, 1], [], []>} : vector<12x12x8xf32>, vector<8x16xf32>, vector<12x12x16xf32> -> vector<12x12x16xf32>
    "tpu.trace_stop"() : () -> ()
    %135 = arith.addf %130, %134 : vector<12x12x16xf32>
    %136 = vector.extract_strided_slice %94 {offsets = [2, 2, 0], sizes = [12, 12, 8], strides = [1, 1, 1]} : vector<14x14x8xf32> to vector<12x12x8xf32>
    %c2_81 = arith.constant 2 : index
    %c2_82 = arith.constant 2 : index
    %c0_83 = arith.constant 0 : index
    %c0_84 = arith.constant 0 : index
    %137 = vector.load %arg4[%c2_81, %c2_82, %c0_83, %c0_84] : memref<3x3x8x16xf32, #tpu.memory_space<vmem>>, vector<1x1x8x16xf32>
    %138 = vector.shape_cast %137 : vector<1x1x8x16xf32> to vector<8x16xf32>
    "tpu.trace_start"() <{level = 10 : i32, message = "hwc,co->hwo"}> : () -> ()
    %cst_85 = arith.constant dense<0.000000e+00> : vector<12x12x16xf32>
    %139 = tpu.matmul %136, %138, %cst_85 {dimension_numbers = #tpu.dot_dimension_numbers<[2], [0], [0, 1], [1], [0, 0, 0, 1, 1, 1], [], []>} : vector<12x12x8xf32>, vector<8x16xf32>, vector<12x12x16xf32> -> vector<12x12x16xf32>
    "tpu.trace_stop"() : () -> ()
    %140 = arith.addf %135, %139 : vector<12x12x16xf32>
    %c0_86 = arith.constant 0 : index
    %c0_87 = arith.constant 0 : index
    %141 = vector.load %arg5[%c0_86, %c0_87] : memref<1x16xf32, #tpu.memory_space<vmem>>, vector<1x16xf32>
    %142 = vector.shape_cast %141 : vector<1x16xf32> to vector<16xf32>
    %143 = vector.shape_cast %142 : vector<16xf32> to vector<1x1x16xf32>
    %144 = vector.broadcast %143 : vector<1x1x16xf32> to vector<12x12x16xf32>
    %145 = arith.addf %140, %144 : vector<12x12x16xf32>
    %cst_88 = arith.constant 0.000000e+00 : f32
    %146 = vector.broadcast %cst_88 : f32 to vector<12x12x16xf32>
    %147 = arith.cmpf ogt, %145, %146 : vector<12x12x16xf32>
    %148 = math.exp %145 : vector<12x12x16xf32>
    %cst_89 = arith.constant 1.000000e+00 : f32
    %149 = vector.broadcast %cst_89 : f32 to vector<12x12x16xf32>
    %150 = arith.subf %148, %149 : vector<12x12x16xf32>
    %151 = arith.select %147, %145, %150 : vector<12x12x16xi1>, vector<12x12x16xf32>
    %cst_90 = arith.constant 0.000000e+00 : f32
    %152 = vector.broadcast %cst_90 : f32 to vector<10x10x16xf32>
    %153 = vector.extract_strided_slice %151 {offsets = [0, 0, 0], sizes = [10, 10, 16], strides = [1, 1, 1]} : vector<12x12x16xf32> to vector<10x10x16xf32>
    %c0_91 = arith.constant 0 : index
    %c0_92 = arith.constant 0 : index
    %c0_93 = arith.constant 0 : index
    %c0_94 = arith.constant 0 : index
    %154 = vector.load %arg6[%c0_91, %c0_92, %c0_93, %c0_94] : memref<3x3x16x16xf32, #tpu.memory_space<vmem>>, vector<1x1x16x16xf32>
    %155 = vector.shape_cast %154 : vector<1x1x16x16xf32> to vector<16x16xf32>
    "tpu.trace_start"() <{level = 10 : i32, message = "hwc,co->hwo"}> : () -> ()
    %cst_95 = arith.constant dense<0.000000e+00> : vector<10x10x16xf32>
    %156 = tpu.matmul %153, %155, %cst_95 {dimension_numbers = #tpu.dot_dimension_numbers<[2], [0], [0, 1], [1], [0, 0, 0, 1, 1, 1], [], []>} : vector<10x10x16xf32>, vector<16x16xf32>, vector<10x10x16xf32> -> vector<10x10x16xf32>
    "tpu.trace_stop"() : () -> ()
    %157 = arith.addf %152, %156 : vector<10x10x16xf32>
    %158 = vector.extract_strided_slice %151 {offsets = [0, 1, 0], sizes = [10, 10, 16], strides = [1, 1, 1]} : vector<12x12x16xf32> to vector<10x10x16xf32>
    %c0_96 = arith.constant 0 : index
    %c1_97 = arith.constant 1 : index
    %c0_98 = arith.constant 0 : index
    %c0_99 = arith.constant 0 : index
    %159 = vector.load %arg6[%c0_96, %c1_97, %c0_98, %c0_99] : memref<3x3x16x16xf32, #tpu.memory_space<vmem>>, vector<1x1x16x16xf32>
    %160 = vector.shape_cast %159 : vector<1x1x16x16xf32> to vector<16x16xf32>
    "tpu.trace_start"() <{level = 10 : i32, message = "hwc,co->hwo"}> : () -> ()
    %cst_100 = arith.constant dense<0.000000e+00> : vector<10x10x16xf32>
    %161 = tpu.matmul %158, %160, %cst_100 {dimension_numbers = #tpu.dot_dimension_numbers<[2], [0], [0, 1], [1], [0, 0, 0, 1, 1, 1], [], []>} : vector<10x10x16xf32>, vector<16x16xf32>, vector<10x10x16xf32> -> vector<10x10x16xf32>
    "tpu.trace_stop"() : () -> ()
    %162 = arith.addf %157, %161 : vector<10x10x16xf32>
    %163 = vector.extract_strided_slice %151 {offsets = [0, 2, 0], sizes = [10, 10, 16], strides = [1, 1, 1]} : vector<12x12x16xf32> to vector<10x10x16xf32>
    %c0_101 = arith.constant 0 : index
    %c2_102 = arith.constant 2 : index
    %c0_103 = arith.constant 0 : index
    %c0_104 = arith.constant 0 : index
    %164 = vector.load %arg6[%c0_101, %c2_102, %c0_103, %c0_104] : memref<3x3x16x16xf32, #tpu.memory_space<vmem>>, vector<1x1x16x16xf32>
    %165 = vector.shape_cast %164 : vector<1x1x16x16xf32> to vector<16x16xf32>
    "tpu.trace_start"() <{level = 10 : i32, message = "hwc,co->hwo"}> : () -> ()
    %cst_105 = arith.constant dense<0.000000e+00> : vector<10x10x16xf32>
    %166 = tpu.matmul %163, %165, %cst_105 {dimension_numbers = #tpu.dot_dimension_numbers<[2], [0], [0, 1], [1], [0, 0, 0, 1, 1, 1], [], []>} : vector<10x10x16xf32>, vector<16x16xf32>, vector<10x10x16xf32> -> vector<10x10x16xf32>
    "tpu.trace_stop"() : () -> ()
    %167 = arith.addf %162, %166 : vector<10x10x16xf32>
    %168 = vector.extract_strided_slice %151 {offsets = [1, 0, 0], sizes = [10, 10, 16], strides = [1, 1, 1]} : vector<12x12x16xf32> to vector<10x10x16xf32>
    %c1_106 = arith.constant 1 : index
    %c0_107 = arith.constant 0 : index
    %c0_108 = arith.constant 0 : index
    %c0_109 = arith.constant 0 : index
    %169 = vector.load %arg6[%c1_106, %c0_107, %c0_108, %c0_109] : memref<3x3x16x16xf32, #tpu.memory_space<vmem>>, vector<1x1x16x16xf32>
    %170 = vector.shape_cast %169 : vector<1x1x16x16xf32> to vector<16x16xf32>
    "tpu.trace_start"() <{level = 10 : i32, message = "hwc,co->hwo"}> : () -> ()
    %cst_110 = arith.constant dense<0.000000e+00> : vector<10x10x16xf32>
    %171 = tpu.matmul %168, %170, %cst_110 {dimension_numbers = #tpu.dot_dimension_numbers<[2], [0], [0, 1], [1], [0, 0, 0, 1, 1, 1], [], []>} : vector<10x10x16xf32>, vector<16x16xf32>, vector<10x10x16xf32> -> vector<10x10x16xf32>
    "tpu.trace_stop"() : () -> ()
    %172 = arith.addf %167, %171 : vector<10x10x16xf32>
    %173 = vector.extract_strided_slice %151 {offsets = [1, 1, 0], sizes = [10, 10, 16], strides = [1, 1, 1]} : vector<12x12x16xf32> to vector<10x10x16xf32>
    %c1_111 = arith.constant 1 : index
    %c1_112 = arith.constant 1 : index
    %c0_113 = arith.constant 0 : index
    %c0_114 = arith.constant 0 : index
    %174 = vector.load %arg6[%c1_111, %c1_112, %c0_113, %c0_114] : memref<3x3x16x16xf32, #tpu.memory_space<vmem>>, vector<1x1x16x16xf32>
    %175 = vector.shape_cast %174 : vector<1x1x16x16xf32> to vector<16x16xf32>
    "tpu.trace_start"() <{level = 10 : i32, message = "hwc,co->hwo"}> : () -> ()
    %cst_115 = arith.constant dense<0.000000e+00> : vector<10x10x16xf32>
    %176 = tpu.matmul %173, %175, %cst_115 {dimension_numbers = #tpu.dot_dimension_numbers<[2], [0], [0, 1], [1], [0, 0, 0, 1, 1, 1], [], []>} : vector<10x10x16xf32>, vector<16x16xf32>, vector<10x10x16xf32> -> vector<10x10x16xf32>
    "tpu.trace_stop"() : () -> ()
    %177 = arith.addf %172, %176 : vector<10x10x16xf32>
    %178 = vector.extract_strided_slice %151 {offsets = [1, 2, 0], sizes = [10, 10, 16], strides = [1, 1, 1]} : vector<12x12x16xf32> to vector<10x10x16xf32>
    %c1_116 = arith.constant 1 : index
    %c2_117 = arith.constant 2 : index
    %c0_118 = arith.constant 0 : index
    %c0_119 = arith.constant 0 : index
    %179 = vector.load %arg6[%c1_116, %c2_117, %c0_118, %c0_119] : memref<3x3x16x16xf32, #tpu.memory_space<vmem>>, vector<1x1x16x16xf32>
    %180 = vector.shape_cast %179 : vector<1x1x16x16xf32> to vector<16x16xf32>
    "tpu.trace_start"() <{level = 10 : i32, message = "hwc,co->hwo"}> : () -> ()
    %cst_120 = arith.constant dense<0.000000e+00> : vector<10x10x16xf32>
    %181 = tpu.matmul %178, %180, %cst_120 {dimension_numbers = #tpu.dot_dimension_numbers<[2], [0], [0, 1], [1], [0, 0, 0, 1, 1, 1], [], []>} : vector<10x10x16xf32>, vector<16x16xf32>, vector<10x10x16xf32> -> vector<10x10x16xf32>
    "tpu.trace_stop"() : () -> ()
    %182 = arith.addf %177, %181 : vector<10x10x16xf32>
    %183 = vector.extract_strided_slice %151 {offsets = [2, 0, 0], sizes = [10, 10, 16], strides = [1, 1, 1]} : vector<12x12x16xf32> to vector<10x10x16xf32>
    %c2_121 = arith.constant 2 : index
    %c0_122 = arith.constant 0 : index
    %c0_123 = arith.constant 0 : index
    %c0_124 = arith.constant 0 : index
    %184 = vector.load %arg6[%c2_121, %c0_122, %c0_123, %c0_124] : memref<3x3x16x16xf32, #tpu.memory_space<vmem>>, vector<1x1x16x16xf32>
    %185 = vector.shape_cast %184 : vector<1x1x16x16xf32> to vector<16x16xf32>
    "tpu.trace_start"() <{level = 10 : i32, message = "hwc,co->hwo"}> : () -> ()
    %cst_125 = arith.constant dense<0.000000e+00> : vector<10x10x16xf32>
    %186 = tpu.matmul %183, %185, %cst_125 {dimension_numbers = #tpu.dot_dimension_numbers<[2], [0], [0, 1], [1], [0, 0, 0, 1, 1, 1], [], []>} : vector<10x10x16xf32>, vector<16x16xf32>, vector<10x10x16xf32> -> vector<10x10x16xf32>
    "tpu.trace_stop"() : () -> ()
    %187 = arith.addf %182, %186 : vector<10x10x16xf32>
    %188 = vector.extract_strided_slice %151 {offsets = [2, 1, 0], sizes = [10, 10, 16], strides = [1, 1, 1]} : vector<12x12x16xf32> to vector<10x10x16xf32>
    %c2_126 = arith.constant 2 : index
    %c1_127 = arith.constant 1 : index
    %c0_128 = arith.constant 0 : index
    %c0_129 = arith.constant 0 : index
    %189 = vector.load %arg6[%c2_126, %c1_127, %c0_128, %c0_129] : memref<3x3x16x16xf32, #tpu.memory_space<vmem>>, vector<1x1x16x16xf32>
    %190 = vector.shape_cast %189 : vector<1x1x16x16xf32> to vector<16x16xf32>
    "tpu.trace_start"() <{level = 10 : i32, message = "hwc,co->hwo"}> : () -> ()
    %cst_130 = arith.constant dense<0.000000e+00> : vector<10x10x16xf32>
    %191 = tpu.matmul %188, %190, %cst_130 {dimension_numbers = #tpu.dot_dimension_numbers<[2], [0], [0, 1], [1], [0, 0, 0, 1, 1, 1], [], []>} : vector<10x10x16xf32>, vector<16x16xf32>, vector<10x10x16xf32> -> vector<10x10x16xf32>
    "tpu.trace_stop"() : () -> ()
    %192 = arith.addf %187, %191 : vector<10x10x16xf32>
    %193 = vector.extract_strided_slice %151 {offsets = [2, 2, 0], sizes = [10, 10, 16], strides = [1, 1, 1]} : vector<12x12x16xf32> to vector<10x10x16xf32>
    %c2_131 = arith.constant 2 : index
    %c2_132 = arith.constant 2 : index
    %c0_133 = arith.constant 0 : index
    %c0_134 = arith.constant 0 : index
    %194 = vector.load %arg6[%c2_131, %c2_132, %c0_133, %c0_134] : memref<3x3x16x16xf32, #tpu.memory_space<vmem>>, vector<1x1x16x16xf32>
    %195 = vector.shape_cast %194 : vector<1x1x16x16xf32> to vector<16x16xf32>
    "tpu.trace_start"() <{level = 10 : i32, message = "hwc,co->hwo"}> : () -> ()
    %cst_135 = arith.constant dense<0.000000e+00> : vector<10x10x16xf32>
    %196 = tpu.matmul %193, %195, %cst_135 {dimension_numbers = #tpu.dot_dimension_numbers<[2], [0], [0, 1], [1], [0, 0, 0, 1, 1, 1], [], []>} : vector<10x10x16xf32>, vector<16x16xf32>, vector<10x10x16xf32> -> vector<10x10x16xf32>
    "tpu.trace_stop"() : () -> ()
    %197 = arith.addf %192, %196 : vector<10x10x16xf32>
    %c0_136 = arith.constant 0 : index
    %c0_137 = arith.constant 0 : index
    %198 = vector.load %arg7[%c0_136, %c0_137] : memref<1x16xf32, #tpu.memory_space<vmem>>, vector<1x16xf32>
    %199 = vector.shape_cast %198 : vector<1x16xf32> to vector<16xf32>
    %200 = vector.shape_cast %199 : vector<16xf32> to vector<1x1x16xf32>
    %201 = vector.broadcast %200 : vector<1x1x16xf32> to vector<10x10x16xf32>
    %202 = arith.addf %197, %201 : vector<10x10x16xf32>
    %cst_138 = arith.constant 0.000000e+00 : f32
    %203 = vector.broadcast %cst_138 : f32 to vector<10x10x16xf32>
    %204 = arith.cmpf ogt, %202, %203 : vector<10x10x16xf32>
    %205 = math.exp %202 : vector<10x10x16xf32>
    %cst_139 = arith.constant 1.000000e+00 : f32
    %206 = vector.broadcast %cst_139 : f32 to vector<10x10x16xf32>
    %207 = arith.subf %205, %206 : vector<10x10x16xf32>
    %208 = arith.select %204, %202, %207 : vector<10x10x16xi1>, vector<10x10x16xf32>
    %cst_140 = arith.constant dense<0.000000e+00> : vector<10x16xf32>
    %209 = vector.multi_reduction <add>, %208, %cst_140 [0] : vector<10x10x16xf32> to vector<10x16xf32>
    %cst_141 = arith.constant dense<0.000000e+00> : vector<16xf32>
    %210 = vector.multi_reduction <add>, %209, %cst_141 [0] : vector<10x16xf32> to vector<16xf32>
    %211 = vector.shape_cast %210 : vector<16xf32> to vector<1x16xf32>
    %cst_142 = arith.constant 0.00999999977 : f32
    %212 = vector.broadcast %cst_142 : f32 to vector<1x16xf32>
    %213 = arith.mulf %211, %212 : vector<1x16xf32>
    %c0_143 = arith.constant 0 : index
    %c0_144 = arith.constant 0 : index
    %214 = vector.load %arg8[%c0_143, %c0_144] : memref<16x1xf32, #tpu.memory_space<vmem>>, vector<16x1xf32>
    %cst_145 = arith.constant dense<0.000000e+00> : vector<1x1xf32>
    %215 = tpu.matmul %213, %214, %cst_145 {dimension_numbers = #tpu.dot_dimension_numbers<[1], [0], [0], [1], [0, 0, 1, 1], [], []>} : vector<1x16xf32>, vector<16x1xf32>, vector<1x1xf32> -> vector<1x1xf32>
    %c0_146 = arith.constant 0 : index
    %c0_147 = arith.constant 0 : index
    %216 = vector.load %arg9[%c0_146, %c0_147] : memref<1x1xf32, #tpu.memory_space<vmem>>, vector<1x1xf32>
    %217 = arith.addf %215, %216 : vector<1x1xf32>
    %c0_148 = arith.constant 0 : index
    %c0_149 = arith.constant 0 : index
    %c0_150 = arith.constant 0 : index
    %218 = vector.load %arg10[%c0_148, %c0_149, %c0_150] : memref<1x1x1xf32, #tpu.memory_space<vmem>>, vector<1x1x1xf32>
    %219 = vector.shape_cast %218 : vector<1x1x1xf32> to vector<1x1xf32>
    %220 = vector.shape_cast %217 : vector<1x1xf32> to vector<1x1x1xf32>
    tpu.vector_store %arg10[%c0_148, %c0_149, %c0_150], %220 {strides = array<i32>} : memref<1x1x1xf32, #tpu.memory_space<vmem>>, vector<1x1x1xf32>,
    return
  }
  func.func @transform_0(%arg0: i32) -> (i32, i32, i32) {
    %c0_i32 = arith.constant 0 : i32
    %c0_i32_0 = arith.constant 0 : i32
    %c0_i32_1 = arith.constant 0 : i32
    return %arg0, %c0_i32, %c0_i32_0 : i32, i32, i32
  }
  func.func @transform_1(%arg0: i32) -> (i32, i32, i32, i32) {
    %c0_i32 = arith.constant 0 : i32
    %c0_i32_0 = arith.constant 0 : i32
    %c0_i32_1 = arith.constant 0 : i32
    %c0_i32_2 = arith.constant 0 : i32
    %c0_i32_3 = arith.constant 0 : i32
    return %c0_i32, %c0_i32_0, %c0_i32_1, %c0_i32_2 : i32, i32, i32, i32
  }
  func.func @transform_2(%arg0: i32) -> (i32, i32) {
    %c0_i32 = arith.constant 0 : i32
    %c0_i32_0 = arith.constant 0 : i32
    %c0_i32_1 = arith.constant 0 : i32
    return %c0_i32, %c0_i32_0 : i32, i32
  }
  func.func @transform_3(%arg0: i32) -> (i32, i32, i32, i32) {
    %c0_i32 = arith.constant 0 : i32
    %c0_i32_0 = arith.constant 0 : i32
    %c0_i32_1 = arith.constant 0 : i32
    %c0_i32_2 = arith.constant 0 : i32
    %c0_i32_3 = arith.constant 0 : i32
    return %c0_i32, %c0_i32_0, %c0_i32_1, %c0_i32_2 : i32, i32, i32, i32
  }
  func.func @transform_4(%arg0: i32) -> (i32, i32) {
    %c0_i32 = arith.constant 0 : i32
    %c0_i32_0 = arith.constant 0 : i32
    %c0_i32_1 = arith.constant 0 : i32
    return %c0_i32, %c0_i32_0 : i32, i32
  }
  func.func @transform_5(%arg0: i32) -> (i32, i32, i32, i32) {
    %c0_i32 = arith.constant 0 : i32
    %c0_i32_0 = arith.constant 0 : i32
    %c0_i32_1 = arith.constant 0 : i32
    %c0_i32_2 = arith.constant 0 : i32
    %c0_i32_3 = arith.constant 0 : i32
    return %c0_i32, %c0_i32_0, %c0_i32_1, %c0_i32_2 : i32, i32, i32, i32
  }
  func.func @transform_6(%arg0: i32) -> (i32, i32) {
    %c0_i32 = arith.constant 0 : i32
    %c0_i32_0 = arith.constant 0 : i32
    %c0_i32_1 = arith.constant 0 : i32
    return %c0_i32, %c0_i32_0 : i32, i32
  }
  func.func @transform_7(%arg0: i32) -> (i32, i32) {
    %c0_i32 = arith.constant 0 : i32
    %c0_i32_0 = arith.constant 0 : i32
    %c0_i32_1 = arith.constant 0 : i32
    return %c0_i32, %c0_i32_0 : i32, i32
  }
  func.func @transform_8(%arg0: i32) -> (i32, i32) {
    %c0_i32 = arith.constant 0 : i32
    %c0_i32_0 = arith.constant 0 : i32
    %c0_i32_1 = arith.constant 0 : i32
    return %c0_i32, %c0_i32_0 : i32, i32
  }
  func.func @transform_9(%arg0: i32) -> (i32, i32, i32) {
    %c0_i32 = arith.constant 0 : i32
    %c0_i32_0 = arith.constant 0 : i32
    %c0_i32_1 = arith.constant 0 : i32
    return %arg0, %c0_i32, %c0_i32_0 : i32, i32, i32
  }
}

</mosaic_0001>

<llo_original>
// kernel: tpu_custom_call.1
$region0: #{tpu_custom_call.1}
  #allocation0 [shape = 'u32[]', space=smem, size = 0x4, offset = 0x4, fixed_abs, tag = 'smem constant byte address 0x4 - core index']
  #allocation1 [shape = 'u32[72,128]{1,0:T(1,128)}', space=vmem, size = 0x9000, scoped, tag = 'internal scratch']
  #allocation2 [shape = 'f32[1,1]{1,0:T(1,128)S(1)}', space=vmem, size = 0x200, scoped, tag = 'scoped memory for tpu_custom_call.1']
  %s0 = inlined_call_operand.hbm [shape: f32[2,16,16], index: 0, kind: input, shape index: {}]
  %s1 = inlined_call_operand.vmem [shape: f32[3,3,1,8], index: 1, kind: input, shape index: {}]
  %s2 = inlined_call_operand.vmem [shape: f32[1,8], index: 2, kind: input, shape index: {}]
  %s3 = inlined_call_operand.hbm [shape: f32[3,3,8,16], index: 3, kind: input, shape index: {}]
  %s4 = inlined_call_operand.vmem [shape: f32[1,16], index: 4, kind: input, shape index: {}]
  %s5 = inlined_call_operand.hbm [shape: f32[3,3,16,16], index: 5, kind: input, shape index: {}]
  %s6 = inlined_call_operand.vmem [shape: f32[1,16], index: 6, kind: input, shape index: {}]
  %s7 = inlined_call_operand.vmem [shape: f32[16,1], index: 7, kind: input, shape index: {}]
  %s8 = inlined_call_operand.<no memory space> [shape: f32[1,1], index: 8, kind: input, shape index: {}]
  %s9 = inlined_call_operand.vmem [shape: f32[2,1,1], index: 9, kind: output, shape index: {}]
  %s10 = sld [smem:[#allocation0]]
  $region81: #{tpu_custom_call.1} parent=0
    _
  %s12 = ssub.s32 1, %s10
  %s13 = scalar_select 0, %s12, %s10
  %v14 = vstv %s8
  %15 = vst [vmem:[#allocation2] sm:$0x1] %v14
  $region1: #{tpu_custom_call.1} parent=0
    #allocation3 [shape = 'u8[16384]{0}', space=vmem, size = 0x4000, scoped, tag = 'input window, operand 0']
    #allocation4 [shape = 's32[2]{0}', space=sflag, size = 0x8, scoped, tag = 'scoped memory for tpu_custom_call.1']
    #allocation5 [shape = 'u8[36864]{0}', space=vmem, size = 0x9000, scoped, tag = 'input window, operand 3, single buffered']
    #allocation6 [shape = 's32[1]{0}', space=sflag, size = 0x4, scoped, tag = 'scoped memory for tpu_custom_call.1']
    #allocation7 [shape = 'u8[73728]{0}', space=vmem, size = 0x12000, scoped, tag = 'input window, operand 5, single buffered']
    %16 = vsyncpa [#allocation4], 0
    %s17 = scalar_lea.sflag [#allocation4], 1
    %18 = vsyncpa %s17, 0
    %19 = vsyncpa [#allocation6], 0
    loop: start=0, step=1, limit=4
    $region2: #{tpu_custom_call.1} parent=1 // loop_pre_header
      _
    $region3: #{tpu_custom_call.1} parent=1 // loop_header
      %s21 = sphi 0, %s25
      %p22 = scmp.ge.s32.totalorder %s21, 4
      %s31 = sphi 0, %s33
      %s34 = sphi 0, %s31
      %s35 = sphi 0, %s34
      %s51 = sphi 0, %s35
      %s55 = sphi 0, %s55
      %s57 = sphi 0, %s55
      %s58 = sphi 0, %s57
      %s72 = sphi 0, %s58
      %s76 = sphi 0, %s76
      %s78 = sphi 0, %s76
      %s79 = sphi 0, %s78
      %s93 = sphi 0, %s79
      %s97 = sphi 0, %s97
      %s99 = sphi 0, %s97
      %s100 = sphi 0, %s99
      %s114 = sphi 0, %s100
      %s118 = sphi 0, %s118
      %s120 = sphi 0, %s118
      %s121 = sphi 0, %s120
      %s135 = sphi 0, %s121
      %s139 = sphi 0, %s139
      %s141 = sphi 0, %s139
      %s142 = sphi 0, %s141
      %s156 = sphi 0, %s142
      %s160 = sphi 0, %s160
      %s162 = sphi 0, %s160
      %s163 = sphi 0, %s162
      %s177 = sphi 0, %s163
      %s181 = sphi 0, %s181
      %s183 = sphi 0, %s181
      %s184 = sphi 0, %s183
      %s198 = sphi 0, %s184
      %s202 = sphi 0, %s202
      %s204 = sphi 0, %s202
      %s205 = sphi 0, %s204
      %s219 = sphi 0, %s205
      %s225 = sphi 0, %s227
      %s228 = sphi 0, %s225
      %s229 = sphi 0, %s228
      %s245 = sphi 0, %s229
    $region4: #{tpu_custom_call.1} parent=1 // loop_header_branch
      %24 = sbr.rel (%p22) target = $region8
    $region5: #{tpu_custom_call.1} parent=1 // loop_body
      %s26 = ssub.s32 %s21, 1
      %s27 = ssub.s32 %s21, 2
      %s28 = sadd.s32 %s21, 1
      %s29 = ssub.s32 %s21, %s28
      %p30 = scmp.eq.s32.totalorder %s29, 0
      %s32 = sadd.s32 %s31, 1
      %s33 = scalar_select %p30, %s31, %s32
      %p36 = pneg %p30
      %p37 = scmp.eq.s32.totalorder %s21, 1
      %p38 = por %p36, %p37
      %p39 = scmp.ne.s32.totalorder %s31, %s34
      %p40 = scmp.eq.s32.totalorder %s21, 0
      %p41 = por %p39, %p40
      %p42 = scmp.ne.s32.totalorder %s31, %s34
      %p43 = scmp.eq.s32.totalorder %s26, 1
      %p44 = por %p42, %p43
      %p45 = scmp.ne.s32.totalorder %s34, %s35
      %p46 = scmp.eq.s32.totalorder %s26, 0
      %p47 = por %p45, %p46
      %p48 = scmp.ne.s32.totalorder %s34, %s35
      %p49 = scmp.eq.s32.totalorder %s27, 1
      %p50 = por %p48, %p49
      %p52 = scmp.ne.s32.totalorder %s35, %s51
      %p53 = scmp.eq.s32.totalorder %s27, 0
      %p54 = por %p52, %p53
      %s56 = sadd.s32 %s55, 1
      %p59 = scmp.eq.s32.totalorder %s21, 1
      %p60 = scmp.ne.s32.totalorder %s55, %s57
      %p61 = scmp.eq.s32.totalorder %s21, 0
      %p62 = por %p60, %p61
      %p63 = scmp.ne.s32.totalorder %s55, %s57
      %p64 = scmp.eq.s32.totalorder %s26, 1
      %p65 = por %p63, %p64
      %p66 = scmp.ne.s32.totalorder %s57, %s58
      %p67 = scmp.eq.s32.totalorder %s26, 0
      %p68 = por %p66, %p67
      %p69 = scmp.ne.s32.totalorder %s57, %s58
      %p70 = scmp.eq.s32.totalorder %s27, 1
      %p71 = por %p69, %p70
      %p73 = scmp.ne.s32.totalorder %s58, %s72
      %p74 = scmp.eq.s32.totalorder %s27, 0
      %p75 = por %p73, %p74
      %s77 = sadd.s32 %s76, 1
      %p80 = scmp.eq.s32.totalorder %s21, 1
      %p81 = scmp.ne.s32.totalorder %s76, %s78
      %p82 = scmp.eq.s32.totalorder %s21, 0
      %p83 = por %p81, %p82
      %p84 = scmp.ne.s32.totalorder %s76, %s78
      %p85 = scmp.eq.s32.totalorder %s26, 1
      %p86 = por %p84, %p85
      %p87 = scmp.ne.s32.totalorder %s78, %s79
      %p88 = scmp.eq.s32.totalorder %s26, 0
      %p89 = por %p87, %p88
      %p90 = scmp.ne.s32.totalorder %s78, %s79
      %p91 = scmp.eq.s32.totalorder %s27, 1
      %p92 = por %p90, %p91
      %p94 = scmp.ne.s32.totalorder %s79, %s93
      %p95 = scmp.eq.s32.totalorder %s27, 0
      %p96 = por %p94, %p95
      %s98 = sadd.s32 %s97, 1
      %p101 = scmp.eq.s32.totalorder %s21, 1
      %p102 = scmp.ne.s32.totalorder %s97, %s99
      %p103 = scmp.eq.s32.totalorder %s21, 0
      %p104 = por %p102, %p103
      %p105 = scmp.ne.s32.totalorder %s97, %s99
      %p106 = scmp.eq.s32.totalorder %s26, 1
      %p107 = por %p105, %p106
      %p108 = scmp.ne.s32.totalorder %s99, %s100
      %p109 = scmp.eq.s32.totalorder %s26, 0
      %p110 = por %p108, %p109
      %p111 = scmp.ne.s32.totalorder %s99, %s100
      %p112 = scmp.eq.s32.totalorder %s27, 1
      %p113 = por %p111, %p112
      %p115 = scmp.ne.s32.totalorder %s100, %s114
      %p116 = scmp.eq.s32.totalorder %s27, 0
      %p117 = por %p115, %p116
      %s119 = sadd.s32 %s118, 1
      %p122 = scmp.eq.s32.totalorder %s21, 1
      %p123 = scmp.ne.s32.totalorder %s118, %s120
      %p124 = scmp.eq.s32.totalorder %s21, 0
      %p125 = por %p123, %p124
      %p126 = scmp.ne.s32.totalorder %s118, %s120
      %p127 = scmp.eq.s32.totalorder %s26, 1
      %p128 = por %p126, %p127
      %p129 = scmp.ne.s32.totalorder %s120, %s121
      %p130 = scmp.eq.s32.totalorder %s26, 0
      %p131 = por %p129, %p130
      %p132 = scmp.ne.s32.totalorder %s120, %s121
      %p133 = scmp.eq.s32.totalorder %s27, 1
      %p134 = por %p132, %p133
      %p136 = scmp.ne.s32.totalorder %s121, %s135
      %p137 = scmp.eq.s32.totalorder %s27, 0
      %p138 = por %p136, %p137
      %s140 = sadd.s32 %s139, 1
      %p143 = scmp.eq.s32.totalorder %s21, 1
      %p144 = scmp.ne.s32.totalorder %s139, %s141
      %p145 = scmp.eq.s32.totalorder %s21, 0
      %p146 = por %p144, %p145
      %p147 = scmp.ne.s32.totalorder %s139, %s141
      %p148 = scmp.eq.s32.totalorder %s26, 1
      %p149 = por %p147, %p148
      %p150 = scmp.ne.s32.totalorder %s141, %s142
      %p151 = scmp.eq.s32.totalorder %s26, 0
      %p152 = por %p150, %p151
      %p153 = scmp.ne.s32.totalorder %s141, %s142
      %p154 = scmp.eq.s32.totalorder %s27, 1
      %p155 = por %p153, %p154
      %p157 = scmp.ne.s32.totalorder %s142, %s156
      %p158 = scmp.eq.s32.totalorder %s27, 0
      %p159 = por %p157, %p158
      %s161 = sadd.s32 %s160, 1
      %p164 = scmp.eq.s32.totalorder %s21, 1
      %p165 = scmp.ne.s32.totalorder %s160, %s162
      %p166 = scmp.eq.s32.totalorder %s21, 0
      %p167 = por %p165, %p166
      %p168 = scmp.ne.s32.totalorder %s160, %s162
      %p169 = scmp.eq.s32.totalorder %s26, 1
      %p170 = por %p168, %p169
      %p171 = scmp.ne.s32.totalorder %s162, %s163
      %p172 = scmp.eq.s32.totalorder %s26, 0
      %p173 = por %p171, %p172
      %p174 = scmp.ne.s32.totalorder %s162, %s163
      %p175 = scmp.eq.s32.totalorder %s27, 1
      %p176 = por %p174, %p175
      %p178 = scmp.ne.s32.totalorder %s163, %s177
      %p179 = scmp.eq.s32.totalorder %s27, 0
      %p180 = por %p178, %p179
      %s182 = sadd.s32 %s181, 1
      %p185 = scmp.eq.s32.totalorder %s21, 1
      %p186 = scmp.ne.s32.totalorder %s181, %s183
      %p187 = scmp.eq.s32.totalorder %s21, 0
      %p188 = por %p186, %p187
      %p189 = scmp.ne.s32.totalorder %s181, %s183
      %p190 = scmp.eq.s32.totalorder %s26, 1
      %p191 = por %p189, %p190
      %p192 = scmp.ne.s32.totalorder %s183, %s184
      %p193 = scmp.eq.s32.totalorder %s26, 0
      %p194 = por %p192, %p193
      %p195 = scmp.ne.s32.totalorder %s183, %s184
      %p196 = scmp.eq.s32.totalorder %s27, 1
      %p197 = por %p195, %p196
      %p199 = scmp.ne.s32.totalorder %s184, %s198
      %p200 = scmp.eq.s32.totalorder %s27, 0
      %p201 = por %p199, %p200
      %s203 = sadd.s32 %s202, 1
      %p206 = scmp.eq.s32.totalorder %s21, 1
      %p207 = scmp.ne.s32.totalorder %s202, %s204
      %p208 = scmp.eq.s32.totalorder %s21, 0
      %p209 = por %p207, %p208
      %p210 = scmp.ne.s32.totalorder %s202, %s204
      %p211 = scmp.eq.s32.totalorder %s26, 1
      %p212 = por %p210, %p211
      %p213 = scmp.ne.s32.totalorder %s204, %s205
      %p214 = scmp.eq.s32.totalorder %s26, 0
      %p215 = por %p213, %p214
      %p216 = scmp.ne.s32.totalorder %s204, %s205
      %p217 = scmp.eq.s32.totalorder %s27, 1
      %p218 = por %p216, %p217
      %p220 = scmp.ne.s32.totalorder %s205, %s219
      %p221 = scmp.eq.s32.totalorder %s27, 0
      %p222 = por %p220, %p221
      %s223 = ssub.s32 %s21, %s28
      %p224 = scmp.eq.s32.totalorder %s223, 0
      %s226 = sadd.s32 %s225, 1
      %s227 = scalar_select %p224, %s225, %s226
      %p230 = pneg %p224
      %p231 = scmp.eq.s32.totalorder %s21, 1
      %p232 = por %p230, %p231
      %p233 = scmp.ne.s32.totalorder %s225, %s228
      %p234 = scmp.eq.s32.totalorder %s21, 0
      %p235 = por %p233, %p234
      %p236 = scmp.ne.s32.totalorder %s225, %s228
      %p237 = scmp.eq.s32.totalorder %s26, 1
      %p238 = por %p236, %p237
      %p239 = scmp.ne.s32.totalorder %s228, %s229
      %p240 = scmp.eq.s32.totalorder %s26, 0
      %p241 = por %p239, %p240
      %p242 = scmp.ne.s32.totalorder %s228, %s229
      %p243 = scmp.eq.s32.totalorder %s27, 1
      %p244 = por %p242, %p243
      %p246 = scmp.ne.s32.totalorder %s229, %s245
      %p247 = scmp.eq.s32.totalorder %s27, 0
      %p248 = por %p246, %p247
      %p249 = scmp.le.s32.totalorder 1, %s21
      %p250 = scmp.lt.s32.totalorder %s21, 3
      %p251 = pnand %p249, %p250
      %p252 = pneg %p251
      // Predicated region
      $region9: #{tpu_custom_call.1} parent=5 // pred_check
        _
      $region10: #{tpu_custom_call.1} parent=5 // pred_check_branch
        %254 = sbr.rel (%p251) target = $region12
      $region11: #{tpu_custom_call.1} parent=5 // pred_region
        %s255 = ssub.s32 %s21, 1
        // Predicated region
        $region13: #{tpu_custom_call.1} parent=11 // pred_check
          %p256 = pneg %p68
        $region14: #{tpu_custom_call.1} parent=11 // pred_check_branch
          %258 = sbr.rel (%p256) target = $region16
        $region15: #{tpu_custom_call.1} parent=11 // pred_region
          _
        $region16: #{tpu_custom_call.1} parent=11 // pred_fallthru
          _
        // Predicated region
        $region17: #{tpu_custom_call.1} parent=11 // pred_check
          %p259 = pneg %p89
        $region18: #{tpu_custom_call.1} parent=11 // pred_check_branch
          %261 = sbr.rel (%p259) target = $region20
        $region19: #{tpu_custom_call.1} parent=11 // pred_region
          _
        $region20: #{tpu_custom_call.1} parent=11 // pred_fallthru
          _
        // Predicated region
        $region21: #{tpu_custom_call.1} parent=11 // pred_check
          %p262 = pneg %p110
        $region22: #{tpu_custom_call.1} parent=11 // pred_check_branch
          %264 = sbr.rel (%p262) target = $region24
        $region23: #{tpu_custom_call.1} parent=11 // pred_region
          %266 = vsyncadd [#allocation6], 0
          %s267 = sshll.u32 %s3, 4
          %s268 = int_to_ptr.hbm [resolvable:$true] %s267
          %s269 = sshll.u32 [#allocation5], 4
          %s270 = int_to_ptr.vmem [resolvable:$true] %s269
          %275 = dma.hbm_to_vmem [thread:$0]  %s268, 1152, %s270, [#allocation6], 128, 128, 8
        $region24: #{tpu_custom_call.1} parent=11 // pred_fallthru
          _
        // Predicated region
        $region25: #{tpu_custom_call.1} parent=11 // pred_check
          %p276 = pneg %p131
        $region26: #{tpu_custom_call.1} parent=11 // pred_check_branch
          %278 = sbr.rel (%p276) target = $region28
        $region27: #{tpu_custom_call.1} parent=11 // pred_region
          _
        $region28: #{tpu_custom_call.1} parent=11 // pred_fallthru
          _
        // Predicated region
        $region29: #{tpu_custom_call.1} parent=11 // pred_check
          %p279 = pneg %p152
        $region30: #{tpu_custom_call.1} parent=11 // pred_check_branch
          %281 = sbr.rel (%p279) target = $region32
        $region31: #{tpu_custom_call.1} parent=11 // pred_region
          %283 = vsyncadd [#allocation6], 0
          %s284 = sshll.u32 %s5, 4
          %s285 = int_to_ptr.hbm [resolvable:$true] %s284
          %s286 = sshll.u32 [#allocation7], 4
          %s287 = int_to_ptr.vmem [resolvable:$true] %s286
          %292 = dma.hbm_to_vmem [thread:$0]  %s285, 2304, %s287, [#allocation6], 128, 128, 8
        $region32: #{tpu_custom_call.1} parent=11 // pred_fallthru
          _
        // Predicated region
        $region33: #{tpu_custom_call.1} parent=11 // pred_check
          %p293 = pneg %p173
        $region34: #{tpu_custom_call.1} parent=11 // pred_check_branch
          %295 = sbr.rel (%p293) target = $region36
        $region35: #{tpu_custom_call.1} parent=11 // pred_region
          _
        $region36: #{tpu_custom_call.1} parent=11 // pred_fallthru
          _
        // Predicated region
        $region37: #{tpu_custom_call.1} parent=11 // pred_check
          %p296 = pneg %p194
        $region38: #{tpu_custom_call.1} parent=11 // pred_check_branch
          %298 = sbr.rel (%p296) target = $region40
        $region39: #{tpu_custom_call.1} parent=11 // pred_region
          _
        $region40: #{tpu_custom_call.1} parent=11 // pred_fallthru
          _
        // Predicated region
        $region41: #{tpu_custom_call.1} parent=11 // pred_check
          %p299 = pneg %p215
        $region42: #{tpu_custom_call.1} parent=11 // pred_check_branch
          %301 = sbr.rel (%p299) target = $region44
        $region43: #{tpu_custom_call.1} parent=11 // pred_region
          _
        $region44: #{tpu_custom_call.1} parent=11 // pred_fallthru
          _
      $region12: #{tpu_custom_call.1} parent=5 // pred_fallthru
        _
      %p302 = scmp.lt.s32.totalorder %s21, 2
      // Predicated region
      $region45: #{tpu_custom_call.1} parent=5 // pred_check
        %p303 = pneg %p302
      $region46: #{tpu_custom_call.1} parent=5 // pred_check_branch
        %305 = sbr.rel (%p303) target = $region48
      $region47: #{tpu_custom_call.1} parent=5 // pred_region
        // Predicated region
        $region49: #{tpu_custom_call.1} parent=47 // pred_check
          %p306 = pneg %p41
        $region50: #{tpu_custom_call.1} parent=47 // pred_check_branch
          %308 = sbr.rel (%p306) target = $region52
        $region51: #{tpu_custom_call.1} parent=47 // pred_region
          %s309 = sand.u32 %s31, 1
          %s310 = scalar_lea.sflag [#allocation4], %s309
          %s311 = sand.u32 %s31, 1
          %s312 = smul.addr %s311, 16
          %s313 = scalar_lea.vmem [#allocation3], %s312
          %315 = vsyncadd %s310, 0
          %s316 = smul.addr %s21, 2
          %s317 = smul.addr %s316, 8
          %s318 = scalar_lea.hbm %s0, %s317
          %s319 = sshll.u32 %s318, 4
          %s320 = int_to_ptr.hbm [resolvable:$true] %s319
          %s321 = sshll.u32 %s313, 4
          %s322 = int_to_ptr.vmem [resolvable:$true] %s321
          %327 = dma.hbm_to_vmem [thread:$0]  %s320, 256, %s322, %s310, 128, 128, 8
        $region52: #{tpu_custom_call.1} parent=47 // pred_fallthru
          _
      $region48: #{tpu_custom_call.1} parent=5 // pred_fallthru
        _
      %p328 = scmp.le.s32.totalorder 1, %s21
      %p329 = scmp.lt.s32.totalorder %s21, 3
      %p330 = pnand %p328, %p329
      %p331 = pneg %p330
      // Predicated region
      $region53: #{tpu_custom_call.1} parent=5 // pred_check
        _
      $region54: #{tpu_custom_call.1} parent=5 // pred_check_branch
        %333 = sbr.rel (%p330) target = $region56
      $region55: #{tpu_custom_call.1} parent=5 // pred_region
        %s334 = ssub.s32 %s21, 1
        %s335 = sand.u32 %s34, 1
        %s336 = scalar_lea.sflag [#allocation4], %s335
        %s337 = sand.u32 %s34, 1
        %s338 = smul.addr %s337, 16
        %s339 = scalar_lea.vmem [#allocation3], %s338
        // Predicated region
        $region57: #{tpu_custom_call.1} parent=55 // pred_check
          %p340 = pneg %p47
        $region58: #{tpu_custom_call.1} parent=55 // pred_check_branch
          %342 = sbr.rel (%p340) target = $region60
        $region59: #{tpu_custom_call.1} parent=55 // pred_region
          %344 = dma.done %s336, 256
        $region60: #{tpu_custom_call.1} parent=55 // pred_fallthru
          _
        // Predicated region
        $region61: #{tpu_custom_call.1} parent=55 // pred_check
          %p345 = pneg %p110
        $region62: #{tpu_custom_call.1} parent=55 // pred_check_branch
          %347 = sbr.rel (%p345) target = $region64
        $region63: #{tpu_custom_call.1} parent=55 // pred_region
          %349 = dma.done [#allocation6], 1152
        $region64: #{tpu_custom_call.1} parent=55 // pred_fallthru
          _
        // Predicated region
        $region65: #{tpu_custom_call.1} parent=55 // pred_check
          %p350 = pneg %p152
        $region66: #{tpu_custom_call.1} parent=55 // pred_check_branch
          %352 = sbr.rel (%p350) target = $region68
        $region67: #{tpu_custom_call.1} parent=55 // pred_region
          %354 = dma.done [#allocation6], 2304
        $region68: #{tpu_custom_call.1} parent=55 // pred_fallthru
          _
        %s355 = sand.u32 %s34, 1
        %s356 = scalar_lea.sflag [#allocation4], %s355
        %s357 = sand.u32 %s34, 1
        %s358 = smul.addr %s357, 16
        %s359 = scalar_lea.vmem [#allocation3], %s358
        %p360 = pneg %p47
        %p361 = pneg %p44
        %p362 = pneg %p68
        %p363 = pneg %p65
        %p364 = pneg %p89
        %p365 = pneg %p86
        %p366 = pneg %p110
        %p367 = pneg %p107
        %p368 = pneg %p131
        %p369 = pneg %p128
        %p370 = pneg %p152
        %p371 = pneg %p149
        %p372 = pneg %p173
        %p373 = pneg %p170
        %p374 = pneg %p194
        %p375 = pneg %p191
        %p376 = pneg %p215
        %p377 = pneg %p212
        %p378 = pneg %p241
        %p379 = pneg %p238
        %p380 = scmp.lt.s32.totalorder %s26, 1
        %s381 = scalar_select %p380, %s26, 1
        %s382 = scalar_lea.vmem %s9, %s381
        %p383 = scmp.lt.s32.totalorder %s26, 1
        %s384 = scalar_select %p383, %s26, 1
        %s385 = scalar_lea.vmem %s9, %s384
        %v386 = vld [vmem:[%s339] sm:$0xff]
        %v387 = vld [vmem:[%s339 + $0x8] sm:$0xff]
        %v388 = vperm.slane %v386, 0
        %v389 = vlaneseq
        %v390 = vshrl.u32 %v389, 7
        %392 = vset.pattern.permute.xlu0 %v390
        %393 = vperm.xlu0 %392, %v388
        %v394 = vpop.permute.xlu0 %393
        %v395 = vlaneseq
        %v396 = vshrl.u32 %v395, 7
        %v397 = vadd.s32 %v396, 8
        %398 = vset.pattern.permute.xlu0 %v397
        %399 = vperm.xlu0 %398, %v388
        %v400 = vpop.permute.xlu0 %399
        %v401 = vperm.slane %v386, 1
        %v402 = vlaneseq
        %v403 = vshrl.u32 %v402, 7
        %405 = vset.pattern.permute.xlu0 %v403
        %406 = vperm.xlu0 %405, %v401
        %v407 = vpop.permute.xlu0 %406
        %v408 = vlaneseq
        %v409 = vshrl.u32 %v408, 7
        %v410 = vadd.s32 %v409, 8
        %411 = vset.pattern.permute.xlu0 %v410
        %412 = vperm.xlu0 %411, %v401
        %v413 = vpop.permute.xlu0 %412
        %v414 = vperm.slane %v386, 2
        %v415 = vlaneseq
        %v416 = vshrl.u32 %v415, 7
        %418 = vset.pattern.permute.xlu0 %v416
        %419 = vperm.xlu0 %418, %v414
        %v420 = vpop.permute.xlu0 %419
        %v421 = vlaneseq
        %v422 = vshrl.u32 %v421, 7
        %v423 = vadd.s32 %v422, 8
        %424 = vset.pattern.permute.xlu0 %v423
        %425 = vperm.xlu0 %424, %v414
        %v426 = vpop.permute.xlu0 %425
        %v427 = vperm.slane %v386, 3
        %v428 = vlaneseq
        %v429 = vshrl.u32 %v428, 7
        %431 = vset.pattern.permute.xlu0 %v429
        %432 = vperm.xlu0 %431, %v427
        %v433 = vpop.permute.xlu0 %432
        %v434 = vlaneseq
        %v435 = vshrl.u32 %v434, 7
        %v436 = vadd.s32 %v435, 8
        %437 = vset.pattern.permute.xlu0 %v436
        %438 = vperm.xlu0 %437, %v427
        %v439 = vpop.permute.xlu0 %438
        %v440 = vperm.slane %v386, 4
        %v441 = vlaneseq
        %v442 = vshrl.u32 %v441, 7
        %444 = vset.pattern.permute.xlu0 %v442
        %445 = vperm.xlu0 %444, %v440
        %v446 = vpop.permute.xlu0 %445
        %v447 = vlaneseq
        %v448 = vshrl.u32 %v447, 7
        %v449 = vadd.s32 %v448, 8
        %450 = vset.pattern.permute.xlu0 %v449
        %451 = vperm.xlu0 %450, %v440
        %v452 = vpop.permute.xlu0 %451
        %v453 = vperm.slane %v386, 5
        %v454 = vlaneseq
        %v455 = vshrl.u32 %v454, 7
        %457 = vset.pattern.permute.xlu0 %v455
        %458 = vperm.xlu0 %457, %v453
        %v459 = vpop.permute.xlu0 %458
        %v460 = vlaneseq
        %v461 = vshrl.u32 %v460, 7
        %v462 = vadd.s32 %v461, 8
        %463 = vset.pattern.permute.xlu0 %v462
        %464 = vperm.xlu0 %463, %v453
        %v465 = vpop.permute.xlu0 %464
        %v466 = vperm.slane %v386, 6
        %v467 = vlaneseq
        %v468 = vshrl.u32 %v467, 7
        %470 = vset.pattern.permute.xlu0 %v468
        %471 = vperm.xlu0 %470, %v466
        %v472 = vpop.permute.xlu0 %471
        %v473 = vlaneseq
        %v474 = vshrl.u32 %v473, 7
        %v475 = vadd.s32 %v474, 8
        %476 = vset.pattern.permute.xlu0 %v475
        %477 = vperm.xlu0 %476, %v466
        %v478 = vpop.permute.xlu0 %477
        %v479 = vperm.slane %v386, 7
        %v480 = vlaneseq
        %v481 = vshrl.u32 %v480, 7
        %483 = vset.pattern.permute.xlu0 %v481
        %484 = vperm.xlu0 %483, %v479
        %v485 = vpop.permute.xlu0 %484
        %v486 = vlaneseq
        %v487 = vshrl.u32 %v486, 7
        %v488 = vadd.s32 %v487, 8
        %489 = vset.pattern.permute.xlu0 %v488
        %490 = vperm.xlu0 %489, %v479
        %v491 = vpop.permute.xlu0 %490
        %v492 = vperm.slane %v387, 0
        %v493 = vlaneseq
        %v494 = vshrl.u32 %v493, 7
        %496 = vset.pattern.permute.xlu0 %v494
        %497 = vperm.xlu0 %496, %v492
        %v498 = vpop.permute.xlu0 %497
        %v499 = vlaneseq
        %v500 = vshrl.u32 %v499, 7
        %v501 = vadd.s32 %v500, 8
        %502 = vset.pattern.permute.xlu0 %v501
        %503 = vperm.xlu0 %502, %v492
        %v504 = vpop.permute.xlu0 %503
        %v505 = vperm.slane %v387, 1
        %v506 = vlaneseq
        %v507 = vshrl.u32 %v506, 7
        %509 = vset.pattern.permute.xlu0 %v507
        %510 = vperm.xlu0 %509, %v505
        %v511 = vpop.permute.xlu0 %510
        %v512 = vlaneseq
        %v513 = vshrl.u32 %v512, 7
        %v514 = vadd.s32 %v513, 8
        %515 = vset.pattern.permute.xlu0 %v514
        %516 = vperm.xlu0 %515, %v505
        %v517 = vpop.permute.xlu0 %516
        %v518 = vperm.slane %v387, 2
        %v519 = vlaneseq
        %v520 = vshrl.u32 %v519, 7
        %522 = vset.pattern.permute.xlu0 %v520
        %523 = vperm.xlu0 %522, %v518
        %v524 = vpop.permute.xlu0 %523
        %v525 = vlaneseq
        %v526 = vshrl.u32 %v525, 7
        %v527 = vadd.s32 %v526, 8
        %528 = vset.pattern.permute.xlu0 %v527
        %529 = vperm.xlu0 %528, %v518
        %v530 = vpop.permute.xlu0 %529
        %v531 = vperm.slane %v387, 3
        %v532 = vlaneseq
        %v533 = vshrl.u32 %v532, 7
        %535 = vset.pattern.permute.xlu0 %v533
        %536 = vperm.xlu0 %535, %v531
        %v537 = vpop.permute.xlu0 %536
        %v538 = vlaneseq
        %v539 = vshrl.u32 %v538, 7
        %v540 = vadd.s32 %v539, 8
        %541 = vset.pattern.permute.xlu0 %v540
        %542 = vperm.xlu0 %541, %v531
        %v543 = vpop.permute.xlu0 %542
        %v544 = vperm.slane %v387, 4
        %v545 = vlaneseq
        %v546 = vshrl.u32 %v545, 7
        %548 = vset.pattern.permute.xlu0 %v546
        %549 = vperm.xlu0 %548, %v544
        %v550 = vpop.permute.xlu0 %549
        %v551 = vlaneseq
        %v552 = vshrl.u32 %v551, 7
        %v553 = vadd.s32 %v552, 8
        %554 = vset.pattern.permute.xlu0 %v553
        %555 = vperm.xlu0 %554, %v544
        %v556 = vpop.permute.xlu0 %555
        %v557 = vperm.slane %v387, 5
        %v558 = vlaneseq
        %v559 = vshrl.u32 %v558, 7
        %561 = vset.pattern.permute.xlu0 %v559
        %562 = vperm.xlu0 %561, %v557
        %v563 = vpop.permute.xlu0 %562
        %v564 = vlaneseq
        %v565 = vshrl.u32 %v564, 7
        %v566 = vadd.s32 %v565, 8
        %567 = vset.pattern.permute.xlu0 %v566
        %568 = vperm.xlu0 %567, %v557
        %v569 = vpop.permute.xlu0 %568
        %v570 = vld [vmem:[%s1] sm:$0x1]
        %v572 = vperm.slane %v570, 0
        %v574 = vmul.f32 %v394, %v572
        %v575 = vmul.f32 %v400, %v572
        %v576 = vmul.f32 %v407, %v572
        %v577 = vmul.f32 %v413, %v572
        %v578 = vmul.f32 %v420, %v572
        %v579 = vmul.f32 %v426, %v572
        %v580 = vmul.f32 %v433, %v572
        %v581 = vmul.f32 %v439, %v572
        %v582 = vmul.f32 %v446, %v572
        %v583 = vmul.f32 %v452, %v572
        %v584 = vmul.f32 %v459, %v572
        %v585 = vmul.f32 %v465, %v572
        %v586 = vmul.f32 %v472, %v572
        %v587 = vmul.f32 %v478, %v572
        %v588 = vmul.f32 %v485, %v572
        %v589 = vmul.f32 %v491, %v572
        %v590 = vmul.f32 %v498, %v572
        %v591 = vmul.f32 %v504, %v572
        %v592 = vmul.f32 %v511, %v572
        %v593 = vmul.f32 %v517, %v572
        %v594 = vmul.f32 %v524, %v572
        %v595 = vmul.f32 %v530, %v572
        %v596 = vmul.f32 %v537, %v572
        %v597 = vmul.f32 %v543, %v572
        %v598 = vmul.f32 %v550, %v572
        %v599 = vmul.f32 %v556, %v572
        %v600 = vmul.f32 %v563, %v572
        %v601 = vmul.f32 %v569, %v572
        %v602 = vadd.f32 %v574, 0.0
        %v603 = vadd.f32 %v575, 0.0
        %v604 = vadd.f32 %v576, 0.0
        %v605 = vadd.f32 %v577, 0.0
        %v606 = vadd.f32 %v578, 0.0
        %v607 = vadd.f32 %v579, 0.0
        %v608 = vadd.f32 %v580, 0.0
        %v609 = vadd.f32 %v581, 0.0
        %v610 = vadd.f32 %v582, 0.0
        %v611 = vadd.f32 %v583, 0.0
        %v612 = vadd.f32 %v584, 0.0
        %v613 = vadd.f32 %v585, 0.0
        %v614 = vadd.f32 %v586, 0.0
        %v615 = vadd.f32 %v587, 0.0
        %v616 = vadd.f32 %v588, 0.0
        %v617 = vadd.f32 %v589, 0.0
        %v618 = vadd.f32 %v590, 0.0
        %v619 = vadd.f32 %v591, 0.0
        %v620 = vadd.f32 %v592, 0.0
        %v621 = vadd.f32 %v593, 0.0
        %v622 = vadd.f32 %v594, 0.0
        %v623 = vadd.f32 %v595, 0.0
        %v624 = vadd.f32 %v596, 0.0
        %v625 = vadd.f32 %v597, 0.0
        %v626 = vadd.f32 %v598, 0.0
        %v627 = vadd.f32 %v599, 0.0
        %v628 = vadd.f32 %v600, 0.0
        %v629 = vadd.f32 %v601, 0.0
        %v630 = vlaneseq
        %v631 = vshrl.u32 %v630, 7
        %v632 = vadd.s32 %v631, 1
        %633 = vset.pattern.permute.xlu0 %v632
        %634 = vperm.xlu0 %633, %v388
        %v635 = vpop.permute.xlu0 %634
        %v636 = vlaneseq
        %v637 = vshrl.u32 %v636, 7
        %v638 = vadd.s32 %v637, 9
        %639 = vset.pattern.permute.xlu0 %v638
        %640 = vperm.xlu0 %639, %v388
        %v641 = vpop.permute.xlu0 %640
        %v642 = vlaneseq
        %v643 = vshrl.u32 %v642, 7
        %v644 = vadd.s32 %v643, 1
        %645 = vset.pattern.permute.xlu0 %v644
        %646 = vperm.xlu0 %645, %v401
        %v647 = vpop.permute.xlu0 %646
        %v648 = vlaneseq
        %v649 = vshrl.u32 %v648, 7
        %v650 = vadd.s32 %v649, 9
        %651 = vset.pattern.permute.xlu0 %v650
        %652 = vperm.xlu0 %651, %v401
        %v653 = vpop.permute.xlu0 %652
        %v654 = vlaneseq
        %v655 = vshrl.u32 %v654, 7
        %v656 = vadd.s32 %v655, 1
        %657 = vset.pattern.permute.xlu0 %v656
        %658 = vperm.xlu0 %657, %v414
        %v659 = vpop.permute.xlu0 %658
        %v660 = vlaneseq
        %v661 = vshrl.u32 %v660, 7
        %v662 = vadd.s32 %v661, 9
        %663 = vset.pattern.permute.xlu0 %v662
        %664 = vperm.xlu0 %663, %v414
        %v665 = vpop.permute.xlu0 %664
        %v666 = vlaneseq
        %v667 = vshrl.u32 %v666, 7
        %v668 = vadd.s32 %v667, 1
        %669 = vset.pattern.permute.xlu0 %v668
        %670 = vperm.xlu0 %669, %v427
        %v671 = vpop.permute.xlu0 %670
        %v672 = vlaneseq
        %v673 = vshrl.u32 %v672, 7
        %v674 = vadd.s32 %v673, 9
        %675 = vset.pattern.permute.xlu0 %v674
        %676 = vperm.xlu0 %675, %v427
        %v677 = vpop.permute.xlu0 %676
        %v678 = vlaneseq
        %v679 = vshrl.u32 %v678, 7
        %v680 = vadd.s32 %v679, 1
        %681 = vset.pattern.permute.xlu0 %v680
        %682 = vperm.xlu0 %681, %v440
        %v683 = vpop.permute.xlu0 %682
        %v684 = vlaneseq
        %v685 = vshrl.u32 %v684, 7
        %v686 = vadd.s32 %v685, 9
        %687 = vset.pattern.permute.xlu0 %v686
        %688 = vperm.xlu0 %687, %v440
        %v689 = vpop.permute.xlu0 %688
        %v690 = vlaneseq
        %v691 = vshrl.u32 %v690, 7
        %v692 = vadd.s32 %v691, 1
        %693 = vset.pattern.permute.xlu0 %v692
        %694 = vperm.xlu0 %693, %v453
        %v695 = vpop.permute.xlu0 %694
        %v696 = vlaneseq
        %v697 = vshrl.u32 %v696, 7
        %v698 = vadd.s32 %v697, 9
        %699 = vset.pattern.permute.xlu0 %v698
        %700 = vperm.xlu0 %699, %v453
        %v701 = vpop.permute.xlu0 %700
        %v702 = vlaneseq
        %v703 = vshrl.u32 %v702, 7
        %v704 = vadd.s32 %v703, 1
        %705 = vset.pattern.permute.xlu0 %v704
        %706 = vperm.xlu0 %705, %v466
        %v707 = vpop.permute.xlu0 %706
        %v708 = vlaneseq
        %v709 = vshrl.u32 %v708, 7
        %v710 = vadd.s32 %v709, 9
        %711 = vset.pattern.permute.xlu0 %v710
        %712 = vperm.xlu0 %711, %v466
        %v713 = vpop.permute.xlu0 %712
        %v714 = vlaneseq
        %v715 = vshrl.u32 %v714, 7
        %v716 = vadd.s32 %v715, 1
        %717 = vset.pattern.permute.xlu0 %v716
        %718 = vperm.xlu0 %717, %v479
        %v719 = vpop.permute.xlu0 %718
        %v720 = vlaneseq
        %v721 = vshrl.u32 %v720, 7
        %v722 = vadd.s32 %v721, 9
        %723 = vset.pattern.permute.xlu0 %v722
        %724 = vperm.xlu0 %723, %v479
        %v725 = vpop.permute.xlu0 %724
        %v726 = vlaneseq
        %v727 = vshrl.u32 %v726, 7
        %v728 = vadd.s32 %v727, 1
        %729 = vset.pattern.permute.xlu0 %v728
        %730 = vperm.xlu0 %729, %v492
        %v731 = vpop.permute.xlu0 %730
        %v732 = vlaneseq
        %v733 = vshrl.u32 %v732, 7
        %v734 = vadd.s32 %v733, 9
        %735 = vset.pattern.permute.xlu0 %v734
        %736 = vperm.xlu0 %735, %v492
        %v737 = vpop.permute.xlu0 %736
        %v738 = vlaneseq
        %v739 = vshrl.u32 %v738, 7
        %v740 = vadd.s32 %v739, 1
        %741 = vset.pattern.permute.xlu0 %v740
        %742 = vperm.xlu0 %741, %v505
        %v743 = vpop.permute.xlu0 %742
        %v744 = vlaneseq
        %v745 = vshrl.u32 %v744, 7
        %v746 = vadd.s32 %v745, 9
        %747 = vset.pattern.permute.xlu0 %v746
        %748 = vperm.xlu0 %747, %v505
        %v749 = vpop.permute.xlu0 %748
        %v750 = vlaneseq
        %v751 = vshrl.u32 %v750, 7
        %v752 = vadd.s32 %v751, 1
        %753 = vset.pattern.permute.xlu0 %v752
        %754 = vperm.xlu0 %753, %v518
        %v755 = vpop.permute.xlu0 %754
        %v756 = vlaneseq
        %v757 = vshrl.u32 %v756, 7
        %v758 = vadd.s32 %v757, 9
        %759 = vset.pattern.permute.xlu0 %v758
        %760 = vperm.xlu0 %759, %v518
        %v761 = vpop.permute.xlu0 %760
        %v762 = vlaneseq
        %v763 = vshrl.u32 %v762, 7
        %v764 = vadd.s32 %v763, 1
        %765 = vset.pattern.permute.xlu0 %v764
        %766 = vperm.xlu0 %765, %v531
        %v767 = vpop.permute.xlu0 %766
        %v768 = vlaneseq
        %v769 = vshrl.u32 %v768, 7
        %v770 = vadd.s32 %v769, 9
        %771 = vset.pattern.permute.xlu0 %v770
        %772 = vperm.xlu0 %771, %v531
        %v773 = vpop.permute.xlu0 %772
        %v774 = vlaneseq
        %v775 = vshrl.u32 %v774, 7
        %v776 = vadd.s32 %v775, 1
        %777 = vset.pattern.permute.xlu0 %v776
        %778 = vperm.xlu0 %777, %v544
        %v779 = vpop.permute.xlu0 %778
        %v780 = vlaneseq
        %v781 = vshrl.u32 %v780, 7
        %v782 = vadd.s32 %v781, 9
        %783 = vset.pattern.permute.xlu0 %v782
        %784 = vperm.xlu0 %783, %v544
        %v785 = vpop.permute.xlu0 %784
        %v786 = vlaneseq
        %v787 = vshrl.u32 %v786, 7
        %v788 = vadd.s32 %v787, 1
        %789 = vset.pattern.permute.xlu0 %v788
        %790 = vperm.xlu0 %789, %v557
        %v791 = vpop.permute.xlu0 %790
        %v792 = vlaneseq
        %v793 = vshrl.u32 %v792, 7
        %v794 = vadd.s32 %v793, 9
        %795 = vset.pattern.permute.xlu0 %v794
        %796 = vperm.xlu0 %795, %v557
        %v797 = vpop.permute.xlu0 %796
        %s798 = scalar_lea.vmem %s1, 1
        %v799 = vld [vmem:[%s798] sm:$0x1]
        %v801 = vperm.slane %v799, 0
        %v803 = vmul.f32 %v635, %v801
        %v804 = vmul.f32 %v641, %v801
        %v805 = vmul.f32 %v647, %v801
        %v806 = vmul.f32 %v653, %v801
        %v807 = vmul.f32 %v659, %v801
        %v808 = vmul.f32 %v665, %v801
        %v809 = vmul.f32 %v671, %v801
        %v810 = vmul.f32 %v677, %v801
        %v811 = vmul.f32 %v683, %v801
        %v812 = vmul.f32 %v689, %v801
        %v813 = vmul.f32 %v695, %v801
        %v814 = vmul.f32 %v701, %v801
        %v815 = vmul.f32 %v707, %v801
        %v816 = vmul.f32 %v713, %v801
        %v817 = vmul.f32 %v719, %v801
        %v818 = vmul.f32 %v725, %v801
        %v819 = vmul.f32 %v731, %v801
        %v820 = vmul.f32 %v737, %v801
        %v821 = vmul.f32 %v743, %v801
        %v822 = vmul.f32 %v749, %v801
        %v823 = vmul.f32 %v755, %v801
        %v824 = vmul.f32 %v761, %v801
        %v825 = vmul.f32 %v767, %v801
        %v826 = vmul.f32 %v773, %v801
        %v827 = vmul.f32 %v779, %v801
        %v828 = vmul.f32 %v785, %v801
        %v829 = vmul.f32 %v791, %v801
        %v830 = vmul.f32 %v797, %v801
        %v831 = vadd.f32 %v602, %v803
        %v832 = vadd.f32 %v603, %v804
        %v833 = vadd.f32 %v604, %v805
        %v834 = vadd.f32 %v605, %v806
        %v835 = vadd.f32 %v606, %v807
        %v836 = vadd.f32 %v607, %v808
        %v837 = vadd.f32 %v608, %v809
        %v838 = vadd.f32 %v609, %v810
        %v839 = vadd.f32 %v610, %v811
        %v840 = vadd.f32 %v611, %v812
        %v841 = vadd.f32 %v612, %v813
        %v842 = vadd.f32 %v613, %v814
        %v843 = vadd.f32 %v614, %v815
        %v844 = vadd.f32 %v615, %v816
        %v845 = vadd.f32 %v616, %v817
        %v846 = vadd.f32 %v617, %v818
        %v847 = vadd.f32 %v618, %v819
        %v848 = vadd.f32 %v619, %v820
        %v849 = vadd.f32 %v620, %v821
        %v850 = vadd.f32 %v621, %v822
        %v851 = vadd.f32 %v622, %v823
        %v852 = vadd.f32 %v623, %v824
        %v853 = vadd.f32 %v624, %v825
        %v854 = vadd.f32 %v625, %v826
        %v855 = vadd.f32 %v626, %v827
        %v856 = vadd.f32 %v627, %v828
        %v857 = vadd.f32 %v628, %v829
        %v858 = vadd.f32 %v629, %v830
        %v859 = vlaneseq
        %v860 = vshrl.u32 %v859, 7
        %v861 = vadd.s32 %v860, 2
        %862 = vset.pattern.permute.xlu0 %v861
        %863 = vperm.xlu0 %862, %v388
        %v864 = vpop.permute.xlu0 %863
        %v865 = vlaneseq
        %v866 = vshrl.u32 %v865, 7
        %v867 = vadd.s32 %v866, 10
        %868 = vset.pattern.permute.xlu0 %v867
        %869 = vperm.xlu0 %868, %v388
        %v870 = vpop.permute.xlu0 %869
        %v871 = vlaneseq
        %v872 = vshrl.u32 %v871, 7
        %v873 = vadd.s32 %v872, 2
        %874 = vset.pattern.permute.xlu0 %v873
        %875 = vperm.xlu0 %874, %v401
        %v876 = vpop.permute.xlu0 %875
        %v877 = vlaneseq
        %v878 = vshrl.u32 %v877, 7
        %v879 = vadd.s32 %v878, 10
        %880 = vset.pattern.permute.xlu0 %v879
        %881 = vperm.xlu0 %880, %v401
        %v882 = vpop.permute.xlu0 %881
        %v883 = vlaneseq
        %v884 = vshrl.u32 %v883, 7
        %v885 = vadd.s32 %v884, 2
        %886 = vset.pattern.permute.xlu0 %v885
        %887 = vperm.xlu0 %886, %v414
        %v888 = vpop.permute.xlu0 %887
        %v889 = vlaneseq
        %v890 = vshrl.u32 %v889, 7
        %v891 = vadd.s32 %v890, 10
        %892 = vset.pattern.permute.xlu0 %v891
        %893 = vperm.xlu0 %892, %v414
        %v894 = vpop.permute.xlu0 %893
        %v895 = vlaneseq
        %v896 = vshrl.u32 %v895, 7
        %v897 = vadd.s32 %v896, 2
        %898 = vset.pattern.permute.xlu0 %v897
        %899 = vperm.xlu0 %898, %v427
        %v900 = vpop.permute.xlu0 %899
        %v901 = vlaneseq
        %v902 = vshrl.u32 %v901, 7
        %v903 = vadd.s32 %v902, 10
        %904 = vset.pattern.permute.xlu0 %v903
        %905 = vperm.xlu0 %904, %v427
        %v906 = vpop.permute.xlu0 %905
        %v907 = vlaneseq
        %v908 = vshrl.u32 %v907, 7
        %v909 = vadd.s32 %v908, 2
        %910 = vset.pattern.permute.xlu0 %v909
        %911 = vperm.xlu0 %910, %v440
        %v912 = vpop.permute.xlu0 %911
        %v913 = vlaneseq
        %v914 = vshrl.u32 %v913, 7
        %v915 = vadd.s32 %v914, 10
        %916 = vset.pattern.permute.xlu0 %v915
        %917 = vperm.xlu0 %916, %v440
        %v918 = vpop.permute.xlu0 %917
        %v919 = vlaneseq
        %v920 = vshrl.u32 %v919, 7
        %v921 = vadd.s32 %v920, 2
        %922 = vset.pattern.permute.xlu0 %v921
        %923 = vperm.xlu0 %922, %v453
        %v924 = vpop.permute.xlu0 %923
        %v925 = vlaneseq
        %v926 = vshrl.u32 %v925, 7
        %v927 = vadd.s32 %v926, 10
        %928 = vset.pattern.permute.xlu0 %v927
        %929 = vperm.xlu0 %928, %v453
        %v930 = vpop.permute.xlu0 %929
        %v931 = vlaneseq
        %v932 = vshrl.u32 %v931, 7
        %v933 = vadd.s32 %v932, 2
        %934 = vset.pattern.permute.xlu0 %v933
        %935 = vperm.xlu0 %934, %v466
        %v936 = vpop.permute.xlu0 %935
        %v937 = vlaneseq
        %v938 = vshrl.u32 %v937, 7
        %v939 = vadd.s32 %v938, 10
        %940 = vset.pattern.permute.xlu0 %v939
        %941 = vperm.xlu0 %940, %v466
        %v942 = vpop.permute.xlu0 %941
        %v943 = vlaneseq
        %v944 = vshrl.u32 %v943, 7
        %v945 = vadd.s32 %v944, 2
        %946 = vset.pattern.permute.xlu0 %v945
        %947 = vperm.xlu0 %946, %v479
        %v948 = vpop.permute.xlu0 %947
        %v949 = vlaneseq
        %v950 = vshrl.u32 %v949, 7
        %v951 = vadd.s32 %v950, 10
        %952 = vset.pattern.permute.xlu0 %v951
        %953 = vperm.xlu0 %952, %v479
        %v954 = vpop.permute.xlu0 %953
        %v955 = vlaneseq
        %v956 = vshrl.u32 %v955, 7
        %v957 = vadd.s32 %v956, 2
        %958 = vset.pattern.permute.xlu0 %v957
        %959 = vperm.xlu0 %958, %v492
        %v960 = vpop.permute.xlu0 %959
        %v961 = vlaneseq
        %v962 = vshrl.u32 %v961, 7
        %v963 = vadd.s32 %v962, 10
        %964 = vset.pattern.permute.xlu0 %v963
        %965 = vperm.xlu0 %964, %v492
        %v966 = vpop.permute.xlu0 %965
        %v967 = vlaneseq
        %v968 = vshrl.u32 %v967, 7
        %v969 = vadd.s32 %v968, 2
        %970 = vset.pattern.permute.xlu0 %v969
        %971 = vperm.xlu0 %970, %v505
        %v972 = vpop.permute.xlu0 %971
        %v973 = vlaneseq
        %v974 = vshrl.u32 %v973, 7
        %v975 = vadd.s32 %v974, 10
        %976 = vset.pattern.permute.xlu0 %v975
        %977 = vperm.xlu0 %976, %v505
        %v978 = vpop.permute.xlu0 %977
        %v979 = vlaneseq
        %v980 = vshrl.u32 %v979, 7
        %v981 = vadd.s32 %v980, 2
        %982 = vset.pattern.permute.xlu0 %v981
        %983 = vperm.xlu0 %982, %v518
        %v984 = vpop.permute.xlu0 %983
        %v985 = vlaneseq
        %v986 = vshrl.u32 %v985, 7
        %v987 = vadd.s32 %v986, 10
        %988 = vset.pattern.permute.xlu0 %v987
        %989 = vperm.xlu0 %988, %v518
        %v990 = vpop.permute.xlu0 %989
        %v991 = vlaneseq
        %v992 = vshrl.u32 %v991, 7
        %v993 = vadd.s32 %v992, 2
        %994 = vset.pattern.permute.xlu0 %v993
        %995 = vperm.xlu0 %994, %v531
        %v996 = vpop.permute.xlu0 %995
        %v997 = vlaneseq
        %v998 = vshrl.u32 %v997, 7
        %v999 = vadd.s32 %v998, 10
        %1000 = vset.pattern.permute.xlu0 %v999
        %1001 = vperm.xlu0 %1000, %v531
        %v1002 = vpop.permute.xlu0 %1001
        %v1003 = vlaneseq
        %v1004 = vshrl.u32 %v1003, 7
        %v1005 = vadd.s32 %v1004, 2
        %1006 = vset.pattern.permute.xlu0 %v1005
        %1007 = vperm.xlu0 %1006, %v544
        %v1008 = vpop.permute.xlu0 %1007
        %v1009 = vlaneseq
        %v1010 = vshrl.u32 %v1009, 7
        %v1011 = vadd.s32 %v1010, 10
        %1012 = vset.pattern.permute.xlu0 %v1011
        %1013 = vperm.xlu0 %1012, %v544
        %v1014 = vpop.permute.xlu0 %1013
        %v1015 = vlaneseq
        %v1016 = vshrl.u32 %v1015, 7
        %v1017 = vadd.s32 %v1016, 2
        %1018 = vset.pattern.permute.xlu0 %v1017
        %1019 = vperm.xlu0 %1018, %v557
        %v1020 = vpop.permute.xlu0 %1019
        %v1021 = vlaneseq
        %v1022 = vshrl.u32 %v1021, 7
        %v1023 = vadd.s32 %v1022, 10
        %1024 = vset.pattern.permute.xlu0 %v1023
        %1025 = vperm.xlu0 %1024, %v557
        %v1026 = vpop.permute.xlu0 %1025
        %s1027 = scalar_lea.vmem %s1, 2
        %v1028 = vld [vmem:[%s1027] sm:$0x1]
        %v1030 = vperm.slane %v1028, 0
        %v1032 = vmul.f32 %v864, %v1030
        %v1033 = vmul.f32 %v870, %v1030
        %v1034 = vmul.f32 %v876, %v1030
        %v1035 = vmul.f32 %v882, %v1030
        %v1036 = vmul.f32 %v888, %v1030
        %v1037 = vmul.f32 %v894, %v1030
        %v1038 = vmul.f32 %v900, %v1030
        %v1039 = vmul.f32 %v906, %v1030
        %v1040 = vmul.f32 %v912, %v1030
        %v1041 = vmul.f32 %v918, %v1030
        %v1042 = vmul.f32 %v924, %v1030
        %v1043 = vmul.f32 %v930, %v1030
        %v1044 = vmul.f32 %v936, %v1030
        %v1045 = vmul.f32 %v942, %v1030
        %v1046 = vmul.f32 %v948, %v1030
        %v1047 = vmul.f32 %v954, %v1030
        %v1048 = vmul.f32 %v960, %v1030
        %v1049 = vmul.f32 %v966, %v1030
        %v1050 = vmul.f32 %v972, %v1030
        %v1051 = vmul.f32 %v978, %v1030
        %v1052 = vmul.f32 %v984, %v1030
        %v1053 = vmul.f32 %v990, %v1030
        %v1054 = vmul.f32 %v996, %v1030
        %v1055 = vmul.f32 %v1002, %v1030
        %v1056 = vmul.f32 %v1008, %v1030
        %v1057 = vmul.f32 %v1014, %v1030
        %v1058 = vmul.f32 %v1020, %v1030
        %v1059 = vmul.f32 %v1026, %v1030
        %v1060 = vadd.f32 %v831, %v1032
        %v1061 = vadd.f32 %v832, %v1033
        %v1062 = vadd.f32 %v833, %v1034
        %v1063 = vadd.f32 %v834, %v1035
        %v1064 = vadd.f32 %v835, %v1036
        %v1065 = vadd.f32 %v836, %v1037
        %v1066 = vadd.f32 %v837, %v1038
        %v1067 = vadd.f32 %v838, %v1039
        %v1068 = vadd.f32 %v839, %v1040
        %v1069 = vadd.f32 %v840, %v1041
        %v1070 = vadd.f32 %v841, %v1042
        %v1071 = vadd.f32 %v842, %v1043
        %v1072 = vadd.f32 %v843, %v1044
        %v1073 = vadd.f32 %v844, %v1045
        %v1074 = vadd.f32 %v845, %v1046
        %v1075 = vadd.f32 %v846, %v1047
        %v1076 = vadd.f32 %v847, %v1048
        %v1077 = vadd.f32 %v848, %v1049
        %v1078 = vadd.f32 %v849, %v1050
        %v1079 = vadd.f32 %v850, %v1051
        %v1080 = vadd.f32 %v851, %v1052
        %v1081 = vadd.f32 %v852, %v1053
        %v1082 = vadd.f32 %v853, %v1054
        %v1083 = vadd.f32 %v854, %v1055
        %v1084 = vadd.f32 %v855, %v1056
        %v1085 = vadd.f32 %v856, %v1057
        %v1086 = vadd.f32 %v857, %v1058
        %v1087 = vadd.f32 %v858, %v1059
        %v1088 = vperm.slane %v387, 6
        %v1089 = vlaneseq
        %v1090 = vshrl.u32 %v1089, 7
        %1092 = vset.pattern.permute.xlu0 %v1090
        %1093 = vperm.xlu0 %1092, %v1088
        %v1094 = vpop.permute.xlu0 %1093
        %v1095 = vlaneseq
        %v1096 = vshrl.u32 %v1095, 7
        %v1097 = vadd.s32 %v1096, 8
        %1098 = vset.pattern.permute.xlu0 %v1097
        %1099 = vperm.xlu0 %1098, %v1088
        %v1100 = vpop.permute.xlu0 %1099
        %s1101 = scalar_lea.vmem %s1, 3
        %v1102 = vld [vmem:[%s1101] sm:$0x1]
        %v1104 = vperm.slane %v1102, 0
        %v1106 = vmul.f32 %v407, %v1104
        %v1107 = vmul.f32 %v413, %v1104
        %v1108 = vmul.f32 %v420, %v1104
        %v1109 = vmul.f32 %v426, %v1104
        %v1110 = vmul.f32 %v433, %v1104
        %v1111 = vmul.f32 %v439, %v1104
        %v1112 = vmul.f32 %v446, %v1104
        %v1113 = vmul.f32 %v452, %v1104
        %v1114 = vmul.f32 %v459, %v1104
        %v1115 = vmul.f32 %v465, %v1104
        %v1116 = vmul.f32 %v472, %v1104
        %v1117 = vmul.f32 %v478, %v1104
        %v1118 = vmul.f32 %v485, %v1104
        %v1119 = vmul.f32 %v491, %v1104
        %v1120 = vmul.f32 %v498, %v1104
        %v1121 = vmul.f32 %v504, %v1104
        %v1122 = vmul.f32 %v511, %v1104
        %v1123 = vmul.f32 %v517, %v1104
        %v1124 = vmul.f32 %v524, %v1104
        %v1125 = vmul.f32 %v530, %v1104
        %v1126 = vmul.f32 %v537, %v1104
        %v1127 = vmul.f32 %v543, %v1104
        %v1128 = vmul.f32 %v550, %v1104
        %v1129 = vmul.f32 %v556, %v1104
        %v1130 = vmul.f32 %v563, %v1104
        %v1131 = vmul.f32 %v569, %v1104
        %v1132 = vmul.f32 %v1094, %v1104
        %v1133 = vmul.f32 %v1100, %v1104
        %v1134 = vadd.f32 %v1060, %v1106
        %v1135 = vadd.f32 %v1061, %v1107
        %v1136 = vadd.f32 %v1062, %v1108
        %v1137 = vadd.f32 %v1063, %v1109
        %v1138 = vadd.f32 %v1064, %v1110
        %v1139 = vadd.f32 %v1065, %v1111
        %v1140 = vadd.f32 %v1066, %v1112
        %v1141 = vadd.f32 %v1067, %v1113
        %v1142 = vadd.f32 %v1068, %v1114
        %v1143 = vadd.f32 %v1069, %v1115
        %v1144 = vadd.f32 %v1070, %v1116
        %v1145 = vadd.f32 %v1071, %v1117
        %v1146 = vadd.f32 %v1072, %v1118
        %v1147 = vadd.f32 %v1073, %v1119
        %v1148 = vadd.f32 %v1074, %v1120
        %v1149 = vadd.f32 %v1075, %v1121
        %v1150 = vadd.f32 %v1076, %v1122
        %v1151 = vadd.f32 %v1077, %v1123
        %v1152 = vadd.f32 %v1078, %v1124
        %v1153 = vadd.f32 %v1079, %v1125
        %v1154 = vadd.f32 %v1080, %v1126
        %v1155 = vadd.f32 %v1081, %v1127
        %v1156 = vadd.f32 %v1082, %v1128
        %v1157 = vadd.f32 %v1083, %v1129
        %v1158 = vadd.f32 %v1084, %v1130
        %v1159 = vadd.f32 %v1085, %v1131
        %v1160 = vadd.f32 %v1086, %v1132
        %v1161 = vadd.f32 %v1087, %v1133
        %v1162 = vlaneseq
        %v1163 = vshrl.u32 %v1162, 7
        %v1164 = vadd.s32 %v1163, 1
        %1165 = vset.pattern.permute.xlu0 %v1164
        %1166 = vperm.xlu0 %1165, %v1088
        %v1167 = vpop.permute.xlu0 %1166
        %v1168 = vlaneseq
        %v1169 = vshrl.u32 %v1168, 7
        %v1170 = vadd.s32 %v1169, 9
        %1171 = vset.pattern.permute.xlu0 %v1170
        %1172 = vperm.xlu0 %1171, %v1088
        %v1173 = vpop.permute.xlu0 %1172
        %s1174 = scalar_lea.vmem %s1, 4
        %v1175 = vld [vmem:[%s1174] sm:$0x1]
        %v1177 = vperm.slane %v1175, 0
        %v1179 = vmul.f32 %v647, %v1177
        %v1180 = vmul.f32 %v653, %v1177
        %v1181 = vmul.f32 %v659, %v1177
        %v1182 = vmul.f32 %v665, %v1177
        %v1183 = vmul.f32 %v671, %v1177
        %v1184 = vmul.f32 %v677, %v1177
        %v1185 = vmul.f32 %v683, %v1177
        %v1186 = vmul.f32 %v689, %v1177
        %v1187 = vmul.f32 %v695, %v1177
        %v1188 = vmul.f32 %v701, %v1177
        %v1189 = vmul.f32 %v707, %v1177
        %v1190 = vmul.f32 %v713, %v1177
        %v1191 = vmul.f32 %v719, %v1177
        %v1192 = vmul.f32 %v725, %v1177
        %v1193 = vmul.f32 %v731, %v1177
        %v1194 = vmul.f32 %v737, %v1177
        %v1195 = vmul.f32 %v743, %v1177
        %v1196 = vmul.f32 %v749, %v1177
        %v1197 = vmul.f32 %v755, %v1177
        %v1198 = vmul.f32 %v761, %v1177
        %v1199 = vmul.f32 %v767, %v1177
        %v1200 = vmul.f32 %v773, %v1177
        %v1201 = vmul.f32 %v779, %v1177
        %v1202 = vmul.f32 %v785, %v1177
        %v1203 = vmul.f32 %v791, %v1177
        %v1204 = vmul.f32 %v797, %v1177
        %v1205 = vmul.f32 %v1167, %v1177
        %v1206 = vmul.f32 %v1173, %v1177
        %v1207 = vadd.f32 %v1134, %v1179
        %v1208 = vadd.f32 %v1135, %v1180
        %v1209 = vadd.f32 %v1136, %v1181
        %v1210 = vadd.f32 %v1137, %v1182
        %v1211 = vadd.f32 %v1138, %v1183
        %v1212 = vadd.f32 %v1139, %v1184
        %v1213 = vadd.f32 %v1140, %v1185
        %v1214 = vadd.f32 %v1141, %v1186
        %v1215 = vadd.f32 %v1142, %v1187
        %v1216 = vadd.f32 %v1143, %v1188
        %v1217 = vadd.f32 %v1144, %v1189
        %v1218 = vadd.f32 %v1145, %v1190
        %v1219 = vadd.f32 %v1146, %v1191
        %v1220 = vadd.f32 %v1147, %v1192
        %v1221 = vadd.f32 %v1148, %v1193
        %v1222 = vadd.f32 %v1149, %v1194
        %v1223 = vadd.f32 %v1150, %v1195
        %v1224 = vadd.f32 %v1151, %v1196
        %v1225 = vadd.f32 %v1152, %v1197
        %v1226 = vadd.f32 %v1153, %v1198
        %v1227 = vadd.f32 %v1154, %v1199
        %v1228 = vadd.f32 %v1155, %v1200
        %v1229 = vadd.f32 %v1156, %v1201
        %v1230 = vadd.f32 %v1157, %v1202
        %v1231 = vadd.f32 %v1158, %v1203
        %v1232 = vadd.f32 %v1159, %v1204
        %v1233 = vadd.f32 %v1160, %v1205
        %v1234 = vadd.f32 %v1161, %v1206
        %v1235 = vlaneseq
        %v1236 = vshrl.u32 %v1235, 7
        %v1237 = vadd.s32 %v1236, 2
        %1238 = vset.pattern.permute.xlu0 %v1237
        %1239 = vperm.xlu0 %1238, %v1088
        %v1240 = vpop.permute.xlu0 %1239
        %v1241 = vlaneseq
        %v1242 = vshrl.u32 %v1241, 7
        %v1243 = vadd.s32 %v1242, 10
        %1244 = vset.pattern.permute.xlu0 %v1243
        %1245 = vperm.xlu0 %1244, %v1088
        %v1246 = vpop.permute.xlu0 %1245
        %s1247 = scalar_lea.vmem %s1, 5
        %v1248 = vld [vmem:[%s1247] sm:$0x1]
        %v1250 = vperm.slane %v1248, 0
        %v1252 = vmul.f32 %v876, %v1250
        %v1253 = vmul.f32 %v882, %v1250
        %v1254 = vmul.f32 %v888, %v1250
        %v1255 = vmul.f32 %v894, %v1250
        %v1256 = vmul.f32 %v900, %v1250
        %v1257 = vmul.f32 %v906, %v1250
        %v1258 = vmul.f32 %v912, %v1250
        %v1259 = vmul.f32 %v918, %v1250
        %v1260 = vmul.f32 %v924, %v1250
        %v1261 = vmul.f32 %v930, %v1250
        %v1262 = vmul.f32 %v936, %v1250
        %v1263 = vmul.f32 %v942, %v1250
        %v1264 = vmul.f32 %v948, %v1250
        %v1265 = vmul.f32 %v954, %v1250
        %v1266 = vmul.f32 %v960, %v1250
        %v1267 = vmul.f32 %v966, %v1250
        %v1268 = vmul.f32 %v972, %v1250
        %v1269 = vmul.f32 %v978, %v1250
        %v1270 = vmul.f32 %v984, %v1250
        %v1271 = vmul.f32 %v990, %v1250
        %v1272 = vmul.f32 %v996, %v1250
        %v1273 = vmul.f32 %v1002, %v1250
        %v1274 = vmul.f32 %v1008, %v1250
        %v1275 = vmul.f32 %v1014, %v1250
        %v1276 = vmul.f32 %v1020, %v1250
        %v1277 = vmul.f32 %v1026, %v1250
        %v1278 = vmul.f32 %v1240, %v1250
        %v1279 = vmul.f32 %v1246, %v1250
        %v1280 = vadd.f32 %v1207, %v1252
        %v1281 = vadd.f32 %v1208, %v1253
        %v1282 = vadd.f32 %v1209, %v1254
        %v1283 = vadd.f32 %v1210, %v1255
        %v1284 = vadd.f32 %v1211, %v1256
        %v1285 = vadd.f32 %v1212, %v1257
        %v1286 = vadd.f32 %v1213, %v1258
        %v1287 = vadd.f32 %v1214, %v1259
        %v1288 = vadd.f32 %v1215, %v1260
        %v1289 = vadd.f32 %v1216, %v1261
        %v1290 = vadd.f32 %v1217, %v1262
        %v1291 = vadd.f32 %v1218, %v1263
        %v1292 = vadd.f32 %v1219, %v1264
        %v1293 = vadd.f32 %v1220, %v1265
        %v1294 = vadd.f32 %v1221, %v1266
        %v1295 = vadd.f32 %v1222, %v1267
        %v1296 = vadd.f32 %v1223, %v1268
        %v1297 = vadd.f32 %v1224, %v1269
        %v1298 = vadd.f32 %v1225, %v1270
        %v1299 = vadd.f32 %v1226, %v1271
        %v1300 = vadd.f32 %v1227, %v1272
        %v1301 = vadd.f32 %v1228, %v1273
        %v1302 = vadd.f32 %v1229, %v1274
        %v1303 = vadd.f32 %v1230, %v1275
        %v1304 = vadd.f32 %v1231, %v1276
        %v1305 = vadd.f32 %v1232, %v1277
        %v1306 = vadd.f32 %v1233, %v1278
        %v1307 = vadd.f32 %v1234, %v1279
        %v1308 = vperm.slane %v387, 7
        %v1309 = vlaneseq
        %v1310 = vshrl.u32 %v1309, 7
        %1312 = vset.pattern.permute.xlu0 %v1310
        %1313 = vperm.xlu0 %1312, %v1308
        %v1314 = vpop.permute.xlu0 %1313
        %v1315 = vlaneseq
        %v1316 = vshrl.u32 %v1315, 7
        %v1317 = vadd.s32 %v1316, 8
        %1318 = vset.pattern.permute.xlu0 %v1317
        %1319 = vperm.xlu0 %1318, %v1308
        %v1320 = vpop.permute.xlu0 %1319
        %s1321 = scalar_lea.vmem %s1, 6
        %v1322 = vld [vmem:[%s1321] sm:$0x1]
        %v1324 = vperm.slane %v1322, 0
        %v1326 = vmul.f32 %v420, %v1324
        %v1327 = vmul.f32 %v426, %v1324
        %v1328 = vmul.f32 %v433, %v1324
        %v1329 = vmul.f32 %v439, %v1324
        %v1330 = vmul.f32 %v446, %v1324
        %v1331 = vmul.f32 %v452, %v1324
        %v1332 = vmul.f32 %v459, %v1324
        %v1333 = vmul.f32 %v465, %v1324
        %v1334 = vmul.f32 %v472, %v1324
        %v1335 = vmul.f32 %v478, %v1324
        %v1336 = vmul.f32 %v485, %v1324
        %v1337 = vmul.f32 %v491, %v1324
        %v1338 = vmul.f32 %v498, %v1324
        %v1339 = vmul.f32 %v504, %v1324
        %v1340 = vmul.f32 %v511, %v1324
        %v1341 = vmul.f32 %v517, %v1324
        %v1342 = vmul.f32 %v524, %v1324
        %v1343 = vmul.f32 %v530, %v1324
        %v1344 = vmul.f32 %v537, %v1324
        %v1345 = vmul.f32 %v543, %v1324
        %v1346 = vmul.f32 %v550, %v1324
        %v1347 = vmul.f32 %v556, %v1324
        %v1348 = vmul.f32 %v563, %v1324
        %v1349 = vmul.f32 %v569, %v1324
        %v1350 = vmul.f32 %v1094, %v1324
        %v1351 = vmul.f32 %v1100, %v1324
        %v1352 = vmul.f32 %v1314, %v1324
        %v1353 = vmul.f32 %v1320, %v1324
        %v1354 = vadd.f32 %v1280, %v1326
        %v1355 = vadd.f32 %v1281, %v1327
        %v1356 = vadd.f32 %v1282, %v1328
        %v1357 = vadd.f32 %v1283, %v1329
        %v1358 = vadd.f32 %v1284, %v1330
        %v1359 = vadd.f32 %v1285, %v1331
        %v1360 = vadd.f32 %v1286, %v1332
        %v1361 = vadd.f32 %v1287, %v1333
        %v1362 = vadd.f32 %v1288, %v1334
        %v1363 = vadd.f32 %v1289, %v1335
        %v1364 = vadd.f32 %v1290, %v1336
        %v1365 = vadd.f32 %v1291, %v1337
        %v1366 = vadd.f32 %v1292, %v1338
        %v1367 = vadd.f32 %v1293, %v1339
        %v1368 = vadd.f32 %v1294, %v1340
        %v1369 = vadd.f32 %v1295, %v1341
        %v1370 = vadd.f32 %v1296, %v1342
        %v1371 = vadd.f32 %v1297, %v1343
        %v1372 = vadd.f32 %v1298, %v1344
        %v1373 = vadd.f32 %v1299, %v1345
        %v1374 = vadd.f32 %v1300, %v1346
        %v1375 = vadd.f32 %v1301, %v1347
        %v1376 = vadd.f32 %v1302, %v1348
        %v1377 = vadd.f32 %v1303, %v1349
        %v1378 = vadd.f32 %v1304, %v1350
        %v1379 = vadd.f32 %v1305, %v1351
        %v1380 = vadd.f32 %v1306, %v1352
        %v1381 = vadd.f32 %v1307, %v1353
        %v1382 = vlaneseq
        %v1383 = vshrl.u32 %v1382, 7
        %v1384 = vadd.s32 %v1383, 1
        %1385 = vset.pattern.permute.xlu0 %v1384
        %1386 = vperm.xlu0 %1385, %v1308
        %v1387 = vpop.permute.xlu0 %1386
        %v1388 = vlaneseq
        %v1389 = vshrl.u32 %v1388, 7
        %v1390 = vadd.s32 %v1389, 9
        %1391 = vset.pattern.permute.xlu0 %v1390
        %1392 = vperm.xlu0 %1391, %v1308
        %v1393 = vpop.permute.xlu0 %1392
        %s1394 = scalar_lea.vmem %s1, 7
        %v1395 = vld [vmem:[%s1394] sm:$0x1]
        %v1397 = vperm.slane %v1395, 0
        %v1399 = vmul.f32 %v659, %v1397
        %v1400 = vmul.f32 %v665, %v1397
        %v1401 = vmul.f32 %v671, %v1397
        %v1402 = vmul.f32 %v677, %v1397
        %v1403 = vmul.f32 %v683, %v1397
        %v1404 = vmul.f32 %v689, %v1397
        %v1405 = vmul.f32 %v695, %v1397
        %v1406 = vmul.f32 %v701, %v1397
        %v1407 = vmul.f32 %v707, %v1397
        %v1408 = vmul.f32 %v713, %v1397
        %v1409 = vmul.f32 %v719, %v1397
        %v1410 = vmul.f32 %v725, %v1397
        %v1411 = vmul.f32 %v731, %v1397
        %v1412 = vmul.f32 %v737, %v1397
        %v1413 = vmul.f32 %v743, %v1397
        %v1414 = vmul.f32 %v749, %v1397
        %v1415 = vmul.f32 %v755, %v1397
        %v1416 = vmul.f32 %v761, %v1397
        %v1417 = vmul.f32 %v767, %v1397
        %v1418 = vmul.f32 %v773, %v1397
        %v1419 = vmul.f32 %v779, %v1397
        %v1420 = vmul.f32 %v785, %v1397
        %v1421 = vmul.f32 %v791, %v1397
        %v1422 = vmul.f32 %v797, %v1397
        %v1423 = vmul.f32 %v1167, %v1397
        %v1424 = vmul.f32 %v1173, %v1397
        %v1425 = vmul.f32 %v1387, %v1397
        %v1426 = vmul.f32 %v1393, %v1397
        %v1427 = vadd.f32 %v1354, %v1399
        %v1428 = vadd.f32 %v1355, %v1400
        %v1429 = vadd.f32 %v1356, %v1401
        %v1430 = vadd.f32 %v1357, %v1402
        %v1431 = vadd.f32 %v1358, %v1403
        %v1432 = vadd.f32 %v1359, %v1404
        %v1433 = vadd.f32 %v1360, %v1405
        %v1434 = vadd.f32 %v1361, %v1406
        %v1435 = vadd.f32 %v1362, %v1407
        %v1436 = vadd.f32 %v1363, %v1408
        %v1437 = vadd.f32 %v1364, %v1409
        %v1438 = vadd.f32 %v1365, %v1410
        %v1439 = vadd.f32 %v1366, %v1411
        %v1440 = vadd.f32 %v1367, %v1412
        %v1441 = vadd.f32 %v1368, %v1413
        %v1442 = vadd.f32 %v1369, %v1414
        %v1443 = vadd.f32 %v1370, %v1415
        %v1444 = vadd.f32 %v1371, %v1416
        %v1445 = vadd.f32 %v1372, %v1417
        %v1446 = vadd.f32 %v1373, %v1418
        %v1447 = vadd.f32 %v1374, %v1419
        %v1448 = vadd.f32 %v1375, %v1420
        %v1449 = vadd.f32 %v1376, %v1421
        %v1450 = vadd.f32 %v1377, %v1422
        %v1451 = vadd.f32 %v1378, %v1423
        %v1452 = vadd.f32 %v1379, %v1424
        %v1453 = vadd.f32 %v1380, %v1425
        %v1454 = vadd.f32 %v1381, %v1426
        %v1455 = vlaneseq
        %v1456 = vshrl.u32 %v1455, 7
        %v1457 = vadd.s32 %v1456, 2
        %1458 = vset.pattern.permute.xlu0 %v1457
        %1459 = vperm.xlu0 %1458, %v1308
        %v1460 = vpop.permute.xlu0 %1459
        %v1461 = vlaneseq
        %v1462 = vshrl.u32 %v1461, 7
        %v1463 = vadd.s32 %v1462, 10
        %1464 = vset.pattern.permute.xlu0 %v1463
        %1465 = vperm.xlu0 %1464, %v1308
        %v1466 = vpop.permute.xlu0 %1465
        %s1467 = scalar_lea.vmem %s1, 8
        %v1468 = vld [vmem:[%s1467] sm:$0x1]
        %v1470 = vperm.slane %v1468, 0
        %v1472 = vmul.f32 %v888, %v1470
        %v1473 = vmul.f32 %v894, %v1470
        %v1474 = vmul.f32 %v900, %v1470
        %v1475 = vmul.f32 %v906, %v1470
        %v1476 = vmul.f32 %v912, %v1470
        %v1477 = vmul.f32 %v918, %v1470
        %v1478 = vmul.f32 %v924, %v1470
        %v1479 = vmul.f32 %v930, %v1470
        %v1480 = vmul.f32 %v936, %v1470
        %v1481 = vmul.f32 %v942, %v1470
        %v1482 = vmul.f32 %v948, %v1470
        %v1483 = vmul.f32 %v954, %v1470
        %v1484 = vmul.f32 %v960, %v1470
        %v1485 = vmul.f32 %v966, %v1470
        %v1486 = vmul.f32 %v972, %v1470
        %v1487 = vmul.f32 %v978, %v1470
        %v1488 = vmul.f32 %v984, %v1470
        %v1489 = vmul.f32 %v990, %v1470
        %v1490 = vmul.f32 %v996, %v1470
        %v1491 = vmul.f32 %v1002, %v1470
        %v1492 = vmul.f32 %v1008, %v1470
        %v1493 = vmul.f32 %v1014, %v1470
        %v1494 = vmul.f32 %v1020, %v1470
        %v1495 = vmul.f32 %v1026, %v1470
        %v1496 = vmul.f32 %v1240, %v1470
        %v1497 = vmul.f32 %v1246, %v1470
        %v1498 = vmul.f32 %v1460, %v1470
        %v1499 = vmul.f32 %v1466, %v1470
        %v1500 = vadd.f32 %v1427, %v1472
        %v1501 = vadd.f32 %v1428, %v1473
        %v1502 = vadd.f32 %v1429, %v1474
        %v1503 = vadd.f32 %v1430, %v1475
        %v1504 = vadd.f32 %v1431, %v1476
        %v1505 = vadd.f32 %v1432, %v1477
        %v1506 = vadd.f32 %v1433, %v1478
        %v1507 = vadd.f32 %v1434, %v1479
        %v1508 = vadd.f32 %v1435, %v1480
        %v1509 = vadd.f32 %v1436, %v1481
        %v1510 = vadd.f32 %v1437, %v1482
        %v1511 = vadd.f32 %v1438, %v1483
        %v1512 = vadd.f32 %v1439, %v1484
        %v1513 = vadd.f32 %v1440, %v1485
        %v1514 = vadd.f32 %v1441, %v1486
        %v1515 = vadd.f32 %v1442, %v1487
        %v1516 = vadd.f32 %v1443, %v1488
        %v1517 = vadd.f32 %v1444, %v1489
        %v1518 = vadd.f32 %v1445, %v1490
        %v1519 = vadd.f32 %v1446, %v1491
        %v1520 = vadd.f32 %v1447, %v1492
        %v1521 = vadd.f32 %v1448, %v1493
        %v1522 = vadd.f32 %v1449, %v1494
        %v1523 = vadd.f32 %v1450, %v1495
        %v1524 = vadd.f32 %v1451, %v1496
        %v1525 = vadd.f32 %v1452, %v1497
        %v1526 = vadd.f32 %v1453, %v1498
        %v1527 = vadd.f32 %v1454, %v1499
        %v1528 = vld [vmem:[%s2] sm:$0x1]
        %v1530 = vperm.slane %v1528, 0
        %v1532 = vadd.f32 %v1500, %v1530
        %v1533 = vadd.f32 %v1501, %v1530
        %v1534 = vadd.f32 %v1502, %v1530
        %v1535 = vadd.f32 %v1503, %v1530
        %v1536 = vadd.f32 %v1504, %v1530
        %v1537 = vadd.f32 %v1505, %v1530
        %v1538 = vadd.f32 %v1506, %v1530
        %v1539 = vadd.f32 %v1507, %v1530
        %v1540 = vadd.f32 %v1508, %v1530
        %v1541 = vadd.f32 %v1509, %v1530
        %v1542 = vadd.f32 %v1510, %v1530
        %v1543 = vadd.f32 %v1511, %v1530
        %v1544 = vadd.f32 %v1512, %v1530
        %v1545 = vadd.f32 %v1513, %v1530
        %v1546 = vadd.f32 %v1514, %v1530
        %v1547 = vadd.f32 %v1515, %v1530
        %v1548 = vadd.f32 %v1516, %v1530
        %v1549 = vadd.f32 %v1517, %v1530
        %v1550 = vadd.f32 %v1518, %v1530
        %v1551 = vadd.f32 %v1519, %v1530
        %v1552 = vadd.f32 %v1520, %v1530
        %v1553 = vadd.f32 %v1521, %v1530
        %v1554 = vadd.f32 %v1522, %v1530
        %v1555 = vadd.f32 %v1523, %v1530
        %v1556 = vadd.f32 %v1524, %v1530
        %v1557 = vadd.f32 %v1525, %v1530
        %v1558 = vadd.f32 %v1526, %v1530
        %v1559 = vadd.f32 %v1527, %v1530
        %vm1560 = vcmp.gt.f32.partialorder %v1532, 0.0
        %vm1561 = vcmp.gt.f32.partialorder %v1533, 0.0
        %vm1562 = vcmp.gt.f32.partialorder %v1534, 0.0
        %vm1563 = vcmp.gt.f32.partialorder %v1535, 0.0
        %vm1564 = vcmp.gt.f32.partialorder %v1536, 0.0
        %vm1565 = vcmp.gt.f32.partialorder %v1537, 0.0
        %vm1566 = vcmp.gt.f32.partialorder %v1538, 0.0
        %vm1567 = vcmp.gt.f32.partialorder %v1539, 0.0
        %vm1568 = vcmp.gt.f32.partialorder %v1540, 0.0
        %vm1569 = vcmp.gt.f32.partialorder %v1541, 0.0
        %vm1570 = vcmp.gt.f32.partialorder %v1542, 0.0
        %vm1571 = vcmp.gt.f32.partialorder %v1543, 0.0
        %vm1572 = vcmp.gt.f32.partialorder %v1544, 0.0
        %vm1573 = vcmp.gt.f32.partialorder %v1545, 0.0
        %vm1574 = vcmp.gt.f32.partialorder %v1546, 0.0
        %vm1575 = vcmp.gt.f32.partialorder %v1547, 0.0
        %vm1576 = vcmp.gt.f32.partialorder %v1548, 0.0
        %vm1577 = vcmp.gt.f32.partialorder %v1549, 0.0
        %vm1578 = vcmp.gt.f32.partialorder %v1550, 0.0
        %vm1579 = vcmp.gt.f32.partialorder %v1551, 0.0
        %vm1580 = vcmp.gt.f32.partialorder %v1552, 0.0
        %vm1581 = vcmp.gt.f32.partialorder %v1553, 0.0
        %vm1582 = vcmp.gt.f32.partialorder %v1554, 0.0
        %vm1583 = vcmp.gt.f32.partialorder %v1555, 0.0
        %vm1584 = vcmp.gt.f32.partialorder %v1556, 0.0
        %vm1585 = vcmp.gt.f32.partialorder %v1557, 0.0
        %vm1586 = vcmp.gt.f32.partialorder %v1558, 0.0
        %vm1587 = vcmp.gt.f32.partialorder %v1559, 0.0
        %v1588 = vmul.f32 %v1532, 1.442695
        %v1589 = vpow.pop %v1588
        %v1590 = vmul.f32 %v1533, 1.442695
        %v1591 = vpow.pop %v1590
        %v1592 = vmul.f32 %v1534, 1.442695
        %v1593 = vpow.pop %v1592
        %v1594 = vmul.f32 %v1535, 1.442695
        %v1595 = vpow.pop %v1594
        %v1596 = vmul.f32 %v1536, 1.442695
        %v1597 = vpow.pop %v1596
        %v1598 = vmul.f32 %v1537, 1.442695
        %v1599 = vpow.pop %v1598
        %v1600 = vmul.f32 %v1538, 1.442695
        %v1601 = vpow.pop %v1600
        %v1602 = vmul.f32 %v1539, 1.442695
        %v1603 = vpow.pop %v1602
        %v1604 = vmul.f32 %v1540, 1.442695
        %v1605 = vpow.pop %v1604
        %v1606 = vmul.f32 %v1541, 1.442695
        %v1607 = vpow.pop %v1606
        %v1608 = vmul.f32 %v1542, 1.442695
        %v1609 = vpow.pop %v1608
        %v1610 = vmul.f32 %v1543, 1.442695
        %v1611 = vpow.pop %v1610
        %v1612 = vmul.f32 %v1544, 1.442695
        %v1613 = vpow.pop %v1612
        %v1614 = vmul.f32 %v1545, 1.442695
        %v1615 = vpow.pop %v1614
        %v1616 = vmul.f32 %v1546, 1.442695
        %v1617 = vpow.pop %v1616
        %v1618 = vmul.f32 %v1547, 1.442695
        %v1619 = vpow.pop %v1618
        %v1620 = vmul.f32 %v1548, 1.442695
        %v1621 = vpow.pop %v1620
        %v1622 = vmul.f32 %v1549, 1.442695
        %v1623 = vpow.pop %v1622
        %v1624 = vmul.f32 %v1550, 1.442695
        %v1625 = vpow.pop %v1624
        %v1626 = vmul.f32 %v1551, 1.442695
        %v1627 = vpow.pop %v1626
        %v1628 = vmul.f32 %v1552, 1.442695
        %v1629 = vpow.pop %v1628
        %v1630 = vmul.f32 %v1553, 1.442695
        %v1631 = vpow.pop %v1630
        %v1632 = vmul.f32 %v1554, 1.442695
        %v1633 = vpow.pop %v1632
        %v1634 = vmul.f32 %v1555, 1.442695
        %v1635 = vpow.pop %v1634
        %v1636 = vmul.f32 %v1556, 1.442695
        %v1637 = vpow.pop %v1636
        %v1638 = vmul.f32 %v1557, 1.442695
        %v1639 = vpow.pop %v1638
        %v1640 = vmul.f32 %v1558, 1.442695
        %v1641 = vpow.pop %v1640
        %v1642 = vmul.f32 %v1559, 1.442695
        %v1643 = vpow.pop %v1642
        %v1644 = vsub.f32 %v1589, 1.0
        %v1645 = vsub.f32 %v1591, 1.0
        %v1646 = vsub.f32 %v1593, 1.0
        %v1647 = vsub.f32 %v1595, 1.0
        %v1648 = vsub.f32 %v1597, 1.0
        %v1649 = vsub.f32 %v1599, 1.0
        %v1650 = vsub.f32 %v1601, 1.0
        %v1651 = vsub.f32 %v1603, 1.0
        %v1652 = vsub.f32 %v1605, 1.0
        %v1653 = vsub.f32 %v1607, 1.0
        %v1654 = vsub.f32 %v1609, 1.0
        %v1655 = vsub.f32 %v1611, 1.0
        %v1656 = vsub.f32 %v1613, 1.0
        %v1657 = vsub.f32 %v1615, 1.0
        %v1658 = vsub.f32 %v1617, 1.0
        %v1659 = vsub.f32 %v1619, 1.0
        %v1660 = vsub.f32 %v1621, 1.0
        %v1661 = vsub.f32 %v1623, 1.0
        %v1662 = vsub.f32 %v1625, 1.0
        %v1663 = vsub.f32 %v1627, 1.0
        %v1664 = vsub.f32 %v1629, 1.0
        %v1665 = vsub.f32 %v1631, 1.0
        %v1666 = vsub.f32 %v1633, 1.0
        %v1667 = vsub.f32 %v1635, 1.0
        %v1668 = vsub.f32 %v1637, 1.0
        %v1669 = vsub.f32 %v1639, 1.0
        %v1670 = vsub.f32 %v1641, 1.0
        %v1671 = vsub.f32 %v1643, 1.0
        %v1672 = vsel %vm1560, %v1532, %v1644
        %v1673 = vsel %vm1561, %v1533, %v1645
        %v1674 = vsel %vm1562, %v1534, %v1646
        %v1675 = vsel %vm1563, %v1535, %v1647
        %v1676 = vsel %vm1564, %v1536, %v1648
        %v1677 = vsel %vm1565, %v1537, %v1649
        %v1678 = vsel %vm1566, %v1538, %v1650
        %v1679 = vsel %vm1567, %v1539, %v1651
        %v1680 = vsel %vm1568, %v1540, %v1652
        %v1681 = vsel %vm1569, %v1541, %v1653
        %v1682 = vsel %vm1570, %v1542, %v1654
        %v1683 = vsel %vm1571, %v1543, %v1655
        %v1684 = vsel %vm1572, %v1544, %v1656
        %v1685 = vsel %vm1573, %v1545, %v1657
        %v1686 = vsel %vm1574, %v1546, %v1658
        %v1687 = vsel %vm1575, %v1547, %v1659
        %v1688 = vsel %vm1576, %v1548, %v1660
        %v1689 = vsel %vm1577, %v1549, %v1661
        %v1690 = vsel %vm1578, %v1550, %v1662
        %v1691 = vsel %vm1579, %v1551, %v1663
        %v1692 = vsel %vm1580, %v1552, %v1664
        %v1693 = vsel %vm1581, %v1553, %v1665
        %v1694 = vsel %vm1582, %v1554, %v1666
        %v1695 = vsel %vm1583, %v1555, %v1667
        %v1696 = vsel %vm1584, %v1556, %v1668
        %v1697 = vsel %vm1585, %v1557, %v1669
        %v1698 = vsel %vm1586, %v1558, %v1670
        %v1699 = vsel %vm1587, %v1559, %v1671
        %v1700 = vld [vmem:[#allocation5] sm:$0xff]
        %s1701 = scalar_lea.vmem [#allocation5], 8
        %v1702 = vld [vmem:[%s1701] sm:$0xff]
        %v1727 = vrot.slane %v1672, 4
        %v1728 = vrot.slane %v1673, 4
        %v1729 = vrot.slane %v1674, 4
        %v1730 = vrot.slane %v1675, 4
        %v1731 = vrot.slane %v1676, 4
        %v1732 = vrot.slane %v1677, 4
        %v1733 = vrot.slane %v1678, 4
        %v1734 = vrot.slane %v1679, 4
        %v1735 = vrot.slane %v1680, 4
        %v1736 = vrot.slane %v1681, 4
        %v1737 = vrot.slane %v1682, 4
        %v1738 = vrot.slane %v1683, 4
        %v1739 = vrot.slane %v1684, 4
        %v1740 = vrot.slane %v1685, 4
        %v1741 = vrot.slane %v1686, 4
        %v1742 = vrot.slane %v1687, 4
        %v1743 = vrot.slane %v1688, 4
        %v1744 = vrot.slane %v1689, 4
        %v1745 = vrot.slane %v1690, 4
        %v1746 = vrot.slane %v1691, 4
        %v1747 = vrot.slane %v1692, 4
        %v1748 = vrot.slane %v1693, 4
        %v1749 = vrot.slane %v1694, 4
        %v1750 = vrot.slane %v1695, 4
        %vm1751 = vcmask 1042432
        %vm1752 = vcmask 1046532
        %vm1753 = vmor %vm1751, %vm1752
        %v1754 = vrot.slane %v1672, 5
        %v1755 = vrot.slane %v1754, 4
        %v1756 = vrot.slane %v1727, 5
        %v1757 = vsel %vm1753, %v1755, %v1756
        %v1758 = vrot.slane %v1756, 4
        %v1759 = vrot.slane %v1673, 5
        %v1760 = vsel %vm1753, %v1758, %v1759
        %v1761 = vrot.slane %v1759, 4
        %v1762 = vrot.slane %v1728, 5
        %v1763 = vsel %vm1753, %v1761, %v1762
        %v1764 = vrot.slane %v1674, 5
        %v1765 = vrot.slane %v1764, 4
        %v1766 = vrot.slane %v1729, 5
        %v1767 = vsel %vm1753, %v1765, %v1766
        %v1768 = vrot.slane %v1766, 4
        %v1769 = vrot.slane %v1675, 5
        %v1770 = vsel %vm1753, %v1768, %v1769
        %v1771 = vrot.slane %v1769, 4
        %v1772 = vrot.slane %v1730, 5
        %v1773 = vsel %vm1753, %v1771, %v1772
        %v1774 = vrot.slane %v1676, 5
        %v1775 = vrot.slane %v1774, 4
        %v1776 = vrot.slane %v1731, 5
        %v1777 = vsel %vm1753, %v1775, %v1776
        %v1778 = vrot.slane %v1776, 4
        %v1779 = vrot.slane %v1677, 5
        %v1780 = vsel %vm1753, %v1778, %v1779
        %v1781 = vrot.slane %v1779, 4
        %v1782 = vrot.slane %v1732, 5
        %v1783 = vsel %vm1753, %v1781, %v1782
        %v1784 = vrot.slane %v1678, 5
        %v1785 = vrot.slane %v1784, 4
        %v1786 = vrot.slane %v1733, 5
        %v1787 = vsel %vm1753, %v1785, %v1786
        %v1788 = vrot.slane %v1786, 4
        %v1789 = vrot.slane %v1679, 5
        %v1790 = vsel %vm1753, %v1788, %v1789
        %v1791 = vrot.slane %v1789, 4
        %v1792 = vrot.slane %v1734, 5
        %v1793 = vsel %vm1753, %v1791, %v1792
        %v1794 = vrot.slane %v1680, 5
        %v1795 = vrot.slane %v1794, 4
        %v1796 = vrot.slane %v1735, 5
        %v1797 = vsel %vm1753, %v1795, %v1796
        %v1798 = vrot.slane %v1796, 4
        %v1799 = vrot.slane %v1681, 5
        %v1800 = vsel %vm1753, %v1798, %v1799
        %v1801 = vrot.slane %v1799, 4
        %v1802 = vrot.slane %v1736, 5
        %v1803 = vsel %vm1753, %v1801, %v1802
        %v1804 = vrot.slane %v1682, 5
        %v1805 = vrot.slane %v1804, 4
        %v1806 = vrot.slane %v1737, 5
        %v1807 = vsel %vm1753, %v1805, %v1806
        %v1808 = vrot.slane %v1806, 4
        %v1809 = vrot.slane %v1683, 5
        %v1810 = vsel %vm1753, %v1808, %v1809
        %v1811 = vrot.slane %v1809, 4
        %v1812 = vrot.slane %v1738, 5
        %v1813 = vsel %vm1753, %v1811, %v1812
        %v1814 = vrot.slane %v1684, 5
        %v1815 = vrot.slane %v1814, 4
        %v1816 = vrot.slane %v1739, 5
        %v1817 = vsel %vm1753, %v1815, %v1816
        %v1818 = vrot.slane %v1816, 4
        %v1819 = vrot.slane %v1685, 5
        %v1820 = vsel %vm1753, %v1818, %v1819
        %v1821 = vrot.slane %v1819, 4
        %v1822 = vrot.slane %v1740, 5
        %v1823 = vsel %vm1753, %v1821, %v1822
        %v1824 = vrot.slane %v1686, 5
        %v1825 = vrot.slane %v1824, 4
        %v1826 = vrot.slane %v1741, 5
        %v1827 = vsel %vm1753, %v1825, %v1826
        %v1828 = vrot.slane %v1826, 4
        %v1829 = vrot.slane %v1687, 5
        %v1830 = vsel %vm1753, %v1828, %v1829
        %v1831 = vrot.slane %v1829, 4
        %v1832 = vrot.slane %v1742, 5
        %v1833 = vsel %vm1753, %v1831, %v1832
        %v1834 = vrot.slane %v1688, 5
        %v1835 = vrot.slane %v1834, 4
        %v1836 = vrot.slane %v1743, 5
        %v1837 = vsel %vm1753, %v1835, %v1836
        %v1838 = vrot.slane %v1836, 4
        %v1839 = vrot.slane %v1689, 5
        %v1840 = vsel %vm1753, %v1838, %v1839
        %v1841 = vrot.slane %v1839, 4
        %v1842 = vrot.slane %v1744, 5
        %v1843 = vsel %vm1753, %v1841, %v1842
        %v1844 = vrot.slane %v1690, 5
        %v1845 = vrot.slane %v1844, 4
        %v1846 = vrot.slane %v1745, 5
        %v1847 = vsel %vm1753, %v1845, %v1846
        %v1848 = vrot.slane %v1846, 4
        %v1849 = vrot.slane %v1691, 5
        %v1850 = vsel %vm1753, %v1848, %v1849
        %v1851 = vrot.slane %v1849, 4
        %v1852 = vrot.slane %v1746, 5
        %v1853 = vsel %vm1753, %v1851, %v1852
        %v1854 = vrot.slane %v1692, 5
        %v1855 = vrot.slane %v1854, 4
        %v1856 = vrot.slane %v1747, 5
        %v1857 = vsel %vm1753, %v1855, %v1856
        %v1858 = vrot.slane %v1856, 4
        %v1859 = vrot.slane %v1693, 5
        %v1860 = vsel %vm1753, %v1858, %v1859
        %v1861 = vrot.slane %v1859, 4
        %v1862 = vrot.slane %v1748, 5
        %v1863 = vsel %vm1753, %v1861, %v1862
        %v1864 = vrot.slane %v1694, 5
        %v1865 = vrot.slane %v1864, 4
        %v1866 = vrot.slane %v1749, 5
        %v1867 = vsel %vm1753, %v1865, %v1866
        %v1868 = vrot.slane %v1866, 4
        %v1869 = vrot.slane %v1695, 5
        %v1870 = vsel %vm1753, %v1868, %v1869
        %v1871 = vrot.slane %v1869, 4
        %v1872 = vrot.slane %v1750, 5
        %v1873 = vsel %vm1753, %v1871, %v1872
        %1874 = vst [vmem:[#allocation1] ss:$2 sm:$0xff] %v1757
        %s1875 = scalar_lea.vmem [#allocation1], 1
        %1876 = vst [vmem:[%s1875] ss:$2 sm:$0xff] %v1760
        %s1877 = scalar_lea.vmem [#allocation1], 16
        %1878 = vst [vmem:[%s1877] ss:$2 sm:$0xff] %v1763
        %s1879 = scalar_lea.vmem [#allocation1], 17
        %1880 = vst [vmem:[%s1879] ss:$2 sm:$0xff] %v1767
        %s1881 = scalar_lea.vmem [#allocation1], 32
        %1882 = vst [vmem:[%s1881] ss:$2 sm:$0xff] %v1770
        %s1883 = scalar_lea.vmem [#allocation1], 33
        %1884 = vst [vmem:[%s1883] ss:$2 sm:$0xff] %v1773
        %s1885 = scalar_lea.vmem [#allocation1], 48
        %1886 = vst [vmem:[%s1885] ss:$2 sm:$0xff] %v1777
        %s1887 = scalar_lea.vmem [#allocation1], 49
        %1888 = vst [vmem:[%s1887] ss:$2 sm:$0xff] %v1780
        %v1889 = vld.sshfl [vmem:[#allocation1] sm:$0xff pattern:$0x75316420]
        %v1890 = vld.sshfl [vmem:[#allocation1 + $0x10] sm:$0xff pattern:$0x75316420]
        %v1891 = vld.sshfl [vmem:[#allocation1 + $0x20] sm:$0xff pattern:$0x75316420]
        %v1892 = vld.sshfl [vmem:[#allocation1 + $0x30] sm:$0xff pattern:$0x75316420]
        %1893 = vst [vmem:[#allocation1] ss:$2 sm:$0xff] %v1783
        %1894 = vst [vmem:[%s1875] ss:$2 sm:$0xff] %v1787
        %1895 = vst [vmem:[%s1877] ss:$2 sm:$0xff] %v1790
        %1896 = vst [vmem:[%s1879] ss:$2 sm:$0xff] %v1793
        %1897 = vst [vmem:[%s1881] ss:$2 sm:$0xff] %v1797
        %1898 = vst [vmem:[%s1883] ss:$2 sm:$0xff] %v1800
        %1899 = vst [vmem:[%s1885] ss:$2 sm:$0xff] %v1803
        %1900 = vst [vmem:[%s1887] ss:$2 sm:$0xff] %v1807
        %v1901 = vld.sshfl [vmem:[#allocation1] sm:$0xff pattern:$0x75316420]
        %v1902 = vld.sshfl [vmem:[#allocation1 + $0x10] sm:$0xff pattern:$0x75316420]
        %v1903 = vld.sshfl [vmem:[#allocation1 + $0x20] sm:$0xff pattern:$0x75316420]
        %v1904 = vld.sshfl [vmem:[#allocation1 + $0x30] sm:$0xff pattern:$0x75316420]
        %1905 = vst [vmem:[#allocation1] ss:$2 sm:$0xff] %v1810
        %1906 = vst [vmem:[%s1875] ss:$2 sm:$0xff] %v1813
        %1907 = vst [vmem:[%s1877] ss:$2 sm:$0xff] %v1817
        %1908 = vst [vmem:[%s1879] ss:$2 sm:$0xff] %v1820
        %1909 = vst [vmem:[%s1881] ss:$2 sm:$0xff] %v1823
        %1910 = vst [vmem:[%s1883] ss:$2 sm:$0xff] %v1827
        %1911 = vst [vmem:[%s1885] ss:$2 sm:$0xff] %v1830
        %1912 = vst [vmem:[%s1887] ss:$2 sm:$0xff] %v1833
        %v1913 = vld.sshfl [vmem:[#allocation1] sm:$0xff pattern:$0x75316420]
        %v1914 = vld.sshfl [vmem:[#allocation1 + $0x10] sm:$0xff pattern:$0x75316420]
        %v1915 = vld.sshfl [vmem:[#allocation1 + $0x20] sm:$0xff pattern:$0x75316420]
        %v1916 = vld.sshfl [vmem:[#allocation1 + $0x30] sm:$0xff pattern:$0x75316420]
        %1917 = vst [vmem:[#allocation1] ss:$2 sm:$0xff] %v1837
        %1918 = vst [vmem:[%s1875] ss:$2 sm:$0xff] %v1840
        %1919 = vst [vmem:[%s1877] ss:$2 sm:$0xff] %v1843
        %1920 = vst [vmem:[%s1879] ss:$2 sm:$0xff] %v1847
        %1921 = vst [vmem:[%s1881] ss:$2 sm:$0xff] %v1850
        %1922 = vst [vmem:[%s1883] ss:$2 sm:$0xff] %v1853
        %1923 = vst [vmem:[%s1885] ss:$2 sm:$0xff] %v1857
        %1924 = vst [vmem:[%s1887] ss:$2 sm:$0xff] %v1860
        %v1925 = vld.sshfl [vmem:[#allocation1] sm:$0xff pattern:$0x75316420]
        %v1926 = vld.sshfl [vmem:[#allocation1 + $0x10] sm:$0xff pattern:$0x75316420]
        %v1927 = vld.sshfl [vmem:[#allocation1 + $0x20] sm:$0xff pattern:$0x75316420]
        %v1928 = vld.sshfl [vmem:[#allocation1 + $0x30] sm:$0xff pattern:$0x75316420]
        %1929 = vst [vmem:[#allocation1] ss:$2 sm:$0xff] %v1863
        %1930 = vst [vmem:[%s1875] ss:$2 sm:$0xff] %v1867
        %1931 = vst [vmem:[%s1877] ss:$2 sm:$0xff] %v1870
        %1932 = vst [vmem:[%s1879] ss:$2 sm:$0xff] %v1873
        %v1933 = vld.sshfl [vmem:[#allocation1] sm:$0xff pattern:$0x75316420]
        %v1934 = vld.sshfl [vmem:[#allocation1 + $0x10] sm:$0xff pattern:$0x75316420]
        %vm1935 = vcmask 64512
        %v1936 = vsel %vm1935, %v1889, 0
        %v1938 = vsel %vm1935, %v1890, 0
        %v1940 = vsel %vm1935, %v1891, 0
        %v1942 = vsel %vm1935, %v1892, 0
        %v1944 = vsel %vm1935, %v1901, 0
        %v1946 = vsel %vm1935, %v1902, 0
        %v1948 = vsel %vm1935, %v1903, 0
        %v1950 = vsel %vm1935, %v1904, 0
        %v1952 = vsel %vm1935, %v1913, 0
        %v1954 = vsel %vm1935, %v1914, 0
        %v1956 = vsel %vm1935, %v1915, 0
        %v1958 = vsel %vm1935, %v1916, 0
        %v1960 = vsel %vm1935, %v1925, 0
        %v1962 = vsel %vm1935, %v1926, 0
        %v1964 = vsel %vm1935, %v1927, 0
        %v1966 = vsel %vm1935, %v1928, 0
        %v1968 = vsel %vm1935, %v1933, 0
        %v1970 = vsel %vm1935, %v1934, 0
        %1972 = vmatpush.msra.mxu0 0.0
        %1973 = vmatpush.msra.mxu0 0.0
        %1974 = vmatpush.msra.mxu0 0.0
        %1975 = vmatpush.msra.mxu0 0.0
        %1976 = vmatpush.msra.mxu0 0.0
        %1977 = vmatpush.msra.mxu0 0.0
        %1978 = vmatpush.msra.mxu0 0.0
        %1979 = vmatpush.msra.mxu0 0.0
        %1980 = vmatpush.msra.mxu0 0.0
        %1981 = vmatpush.msra.mxu0 0.0
        %1982 = vmatpush.msra.mxu0 0.0
        %1983 = vmatpush.msra.mxu0 0.0
        %1984 = vmatpush.msra.mxu0 0.0
        %1985 = vmatpush.msra.mxu0 0.0
        %1986 = vmatpush.msra.mxu0 0.0
        %1987 = vmatpush.msra.mxu0 %v1702
        %1988 = vmatmul.f32.gmra.mxu0 %v1936
        %v1989 = vpop.f32.mrf.mxu0
        %v1990 = vadd.f32 0.0, %v1989
        %1991 = vmatmul.f32.gmra.mxu0 %v1938
        %v1992 = vpop.f32.mrf.mxu0
        %v1993 = vadd.f32 0.0, %v1992
        %1994 = vmatmul.f32.gmra.mxu0 %v1940
        %v1995 = vpop.f32.mrf.mxu0
        %v1996 = vadd.f32 0.0, %v1995
        %1997 = vmatmul.f32.gmra.mxu0 %v1942
        %v1998 = vpop.f32.mrf.mxu0
        %v1999 = vadd.f32 0.0, %v1998
        %2000 = vmatmul.f32.gmra.mxu0 %v1944
        %v2001 = vpop.f32.mrf.mxu0
        %v2002 = vadd.f32 0.0, %v2001
        %2003 = vmatmul.f32.gmra.mxu0 %v1946
        %v2004 = vpop.f32.mrf.mxu0
        %v2005 = vadd.f32 0.0, %v2004
        %2006 = vmatmul.f32.gmra.mxu0 %v1948
        %v2007 = vpop.f32.mrf.mxu0
        %v2008 = vadd.f32 0.0, %v2007
        %2009 = vmatmul.f32.gmra.mxu0 %v1950
        %v2010 = vpop.f32.mrf.mxu0
        %v2011 = vadd.f32 0.0, %v2010
        %2012 = vmatmul.f32.gmra.mxu0 %v1952
        %v2013 = vpop.f32.mrf.mxu0
        %v2014 = vadd.f32 0.0, %v2013
        %2015 = vmatmul.f32.gmra.mxu0 %v1954
        %v2016 = vpop.f32.mrf.mxu0
        %v2017 = vadd.f32 0.0, %v2016
        %2018 = vmatmul.f32.gmra.mxu0 %v1956
        %v2019 = vpop.f32.mrf.mxu0
        %v2020 = vadd.f32 0.0, %v2019
        %2021 = vmatmul.f32.gmra.mxu0 %v1958
        %v2022 = vpop.f32.mrf.mxu0
        %v2023 = vadd.f32 0.0, %v2022
        %2024 = vmatmul.f32.gmra.mxu0 %v1960
        %v2025 = vpop.f32.mrf.mxu0
        %v2026 = vadd.f32 0.0, %v2025
        %2027 = vmatmul.f32.gmra.mxu0 %v1962
        %v2028 = vpop.f32.mrf.mxu0
        %v2029 = vadd.f32 0.0, %v2028
        %2030 = vmatmul.f32.gmra.mxu0 %v1964
        %v2031 = vpop.f32.mrf.mxu0
        %v2032 = vadd.f32 0.0, %v2031
        %2033 = vmatmul.f32.gmra.mxu0 %v1966
        %v2034 = vpop.f32.mrf.mxu0
        %v2035 = vadd.f32 0.0, %v2034
        %2036 = vmatmul.f32.gmra.mxu0 %v1968
        %v2037 = vpop.f32.mrf.mxu0
        %v2038 = vadd.f32 0.0, %v2037
        %2039 = vmatmul.f32.gmra.mxu0 %v1970
        %v2040 = vpop.f32.mrf.mxu0
        %v2041 = vadd.f32 0.0, %v2040
        %2042 = vdwg.mxu0
        %2043 = vst [vmem:[#allocation1] ss:$2 sm:$0xff] %v1672
        %s2044 = scalar_lea.vmem [#allocation1], 1
        %2045 = vst [vmem:[%s2044] ss:$2 sm:$0xff] %v1727
        %s2046 = scalar_lea.vmem [#allocation1], 16
        %2047 = vst [vmem:[%s2046] ss:$2 sm:$0xff] %v1673
        %s2048 = scalar_lea.vmem [#allocation1], 17
        %2049 = vst [vmem:[%s2048] ss:$2 sm:$0xff] %v1674
        %s2050 = scalar_lea.vmem [#allocation1], 32
        %2051 = vst [vmem:[%s2050] ss:$2 sm:$0xff] %v1729
        %s2052 = scalar_lea.vmem [#allocation1], 33
        %2053 = vst [vmem:[%s2052] ss:$2 sm:$0xff] %v1675
        %s2054 = scalar_lea.vmem [#allocation1], 48
        %2055 = vst [vmem:[%s2054] ss:$2 sm:$0xff] %v1676
        %s2056 = scalar_lea.vmem [#allocation1], 49
        %2057 = vst [vmem:[%s2056] ss:$2 sm:$0xff] %v1731
        %v2058 = vld.sshfl [vmem:[#allocation1] sm:$0xff pattern:$0x75316420]
        %v2059 = vld.sshfl [vmem:[#allocation1 + $0x10] sm:$0xff pattern:$0x75316420]
        %v2060 = vld.sshfl [vmem:[#allocation1 + $0x20] sm:$0xff pattern:$0x75316420]
        %v2061 = vld.sshfl [vmem:[#allocation1 + $0x30] sm:$0xff pattern:$0x75316420]
        %2062 = vst [vmem:[#allocation1] ss:$2 sm:$0xff] %v1677
        %2063 = vst [vmem:[%s2044] ss:$2 sm:$0xff] %v1678
        %2064 = vst [vmem:[%s2046] ss:$2 sm:$0xff] %v1733
        %2065 = vst [vmem:[%s2048] ss:$2 sm:$0xff] %v1679
        %2066 = vst [vmem:[%s2050] ss:$2 sm:$0xff] %v1680
        %2067 = vst [vmem:[%s2052] ss:$2 sm:$0xff] %v1735
        %2068 = vst [vmem:[%s2054] ss:$2 sm:$0xff] %v1681
        %2069 = vst [vmem:[%s2056] ss:$2 sm:$0xff] %v1682
        %v2070 = vld.sshfl [vmem:[#allocation1] sm:$0xff pattern:$0x75316420]
        %v2071 = vld.sshfl [vmem:[#allocation1 + $0x10] sm:$0xff pattern:$0x75316420]
        %v2072 = vld.sshfl [vmem:[#allocation1 + $0x20] sm:$0xff pattern:$0x75316420]
        %v2073 = vld.sshfl [vmem:[#allocation1 + $0x30] sm:$0xff pattern:$0x75316420]
        %2074 = vst [vmem:[#allocation1] ss:$2 sm:$0xff] %v1737
        %2075 = vst [vmem:[%s2044] ss:$2 sm:$0xff] %v1683
        %2076 = vst [vmem:[%s2046] ss:$2 sm:$0xff] %v1684
        %2077 = vst [vmem:[%s2048] ss:$2 sm:$0xff] %v1739
        %2078 = vst [vmem:[%s2050] ss:$2 sm:$0xff] %v1685
        %2079 = vst [vmem:[%s2052] ss:$2 sm:$0xff] %v1686
        %2080 = vst [vmem:[%s2054] ss:$2 sm:$0xff] %v1741
        %2081 = vst [vmem:[%s2056] ss:$2 sm:$0xff] %v1687
        %v2082 = vld.sshfl [vmem:[#allocation1] sm:$0xff pattern:$0x75316420]
        %v2083 = vld.sshfl [vmem:[#allocation1 + $0x10] sm:$0xff pattern:$0x75316420]
        %v2084 = vld.sshfl [vmem:[#allocation1 + $0x20] sm:$0xff pattern:$0x75316420]
        %v2085 = vld.sshfl [vmem:[#allocation1 + $0x30] sm:$0xff pattern:$0x75316420]
        %2086 = vst [vmem:[#allocation1] ss:$2 sm:$0xff] %v1688
        %2087 = vst [vmem:[%s2044] ss:$2 sm:$0xff] %v1743
        %2088 = vst [vmem:[%s2046] ss:$2 sm:$0xff] %v1689
        %2089 = vst [vmem:[%s2048] ss:$2 sm:$0xff] %v1690
        %2090 = vst [vmem:[%s2050] ss:$2 sm:$0xff] %v1745
        %2091 = vst [vmem:[%s2052] ss:$2 sm:$0xff] %v1691
        %2092 = vst [vmem:[%s2054] ss:$2 sm:$0xff] %v1692
        %2093 = vst [vmem:[%s2056] ss:$2 sm:$0xff] %v1747
        %v2094 = vld.sshfl [vmem:[#allocation1] sm:$0xff pattern:$0x75316420]
        %v2095 = vld.sshfl [vmem:[#allocation1 + $0x10] sm:$0xff pattern:$0x75316420]
        %v2096 = vld.sshfl [vmem:[#allocation1 + $0x20] sm:$0xff pattern:$0x75316420]
        %v2097 = vld.sshfl [vmem:[#allocation1 + $0x30] sm:$0xff pattern:$0x75316420]
        %2098 = vst [vmem:[#allocation1] ss:$2 sm:$0xff] %v1693
        %2099 = vst [vmem:[%s2044] ss:$2 sm:$0xff] %v1694
        %2100 = vst [vmem:[%s2046] ss:$2 sm:$0xff] %v1749
        %2101 = vst [vmem:[%s2048] ss:$2 sm:$0xff] %v1695
        %v2102 = vld.sshfl [vmem:[#allocation1] sm:$0xff pattern:$0x75316420]
        %v2103 = vld.sshfl [vmem:[#allocation1 + $0x10] sm:$0xff pattern:$0x75316420]
        %v2104 = vsel %vm1935, %v2058, 0
        %v2106 = vsel %vm1935, %v2059, 0
        %v2108 = vsel %vm1935, %v2060, 0
        %v2110 = vsel %vm1935, %v2061, 0
        %v2112 = vsel %vm1935, %v2070, 0
        %v2114 = vsel %vm1935, %v2071, 0
        %v2116 = vsel %vm1935, %v2072, 0
        %v2118 = vsel %vm1935, %v2073, 0
        %v2120 = vsel %vm1935, %v2082, 0
        %v2122 = vsel %vm1935, %v2083, 0
        %v2124 = vsel %vm1935, %v2084, 0
        %v2126 = vsel %vm1935, %v2085, 0
        %v2128 = vsel %vm1935, %v2094, 0
        %v2130 = vsel %vm1935, %v2095, 0
        %v2132 = vsel %vm1935, %v2096, 0
        %v2134 = vsel %vm1935, %v2097, 0
        %v2136 = vsel %vm1935, %v2102, 0
        %v2138 = vsel %vm1935, %v2103, 0
        %2140 = vmatpush.msra.mxu0 0.0
        %2141 = vmatpush.msra.mxu0 0.0
        %2142 = vmatpush.msra.mxu0 0.0
        %2143 = vmatpush.msra.mxu0 0.0
        %2144 = vmatpush.msra.mxu0 0.0
        %2145 = vmatpush.msra.mxu0 0.0
        %2146 = vmatpush.msra.mxu0 0.0
        %2147 = vmatpush.msra.mxu0 0.0
        %2148 = vmatpush.msra.mxu0 0.0
        %2149 = vmatpush.msra.mxu0 0.0
        %2150 = vmatpush.msra.mxu0 0.0
        %2151 = vmatpush.msra.mxu0 0.0
        %2152 = vmatpush.msra.mxu0 0.0
        %2153 = vmatpush.msra.mxu0 0.0
        %2154 = vmatpush.msra.mxu0 0.0
        %2155 = vmatpush.msra.mxu0 %v1700
        %2156 = vmatmul.f32.gmra.mxu0 %v2104
        %v2157 = vpop.f32.mrf.mxu0
        %v2158 = vadd.f32 %v1990, %v2157
        %2159 = vmatmul.f32.gmra.mxu0 %v2106
        %v2160 = vpop.f32.mrf.mxu0
        %v2161 = vadd.f32 %v1993, %v2160
        %2162 = vmatmul.f32.gmra.mxu0 %v2108
        %v2163 = vpop.f32.mrf.mxu0
        %v2164 = vadd.f32 %v1996, %v2163
        %2165 = vmatmul.f32.gmra.mxu0 %v2110
        %v2166 = vpop.f32.mrf.mxu0
        %v2167 = vadd.f32 %v1999, %v2166
        %2168 = vmatmul.f32.gmra.mxu0 %v2112
        %v2169 = vpop.f32.mrf.mxu0
        %v2170 = vadd.f32 %v2002, %v2169
        %2171 = vmatmul.f32.gmra.mxu0 %v2114
        %v2172 = vpop.f32.mrf.mxu0
        %v2173 = vadd.f32 %v2005, %v2172
        %2174 = vmatmul.f32.gmra.mxu0 %v2116
        %v2175 = vpop.f32.mrf.mxu0
        %v2176 = vadd.f32 %v2008, %v2175
        %2177 = vmatmul.f32.gmra.mxu0 %v2118
        %v2178 = vpop.f32.mrf.mxu0
        %v2179 = vadd.f32 %v2011, %v2178
        %2180 = vmatmul.f32.gmra.mxu0 %v2120
        %v2181 = vpop.f32.mrf.mxu0
        %v2182 = vadd.f32 %v2014, %v2181
        %2183 = vmatmul.f32.gmra.mxu0 %v2122
        %v2184 = vpop.f32.mrf.mxu0
        %v2185 = vadd.f32 %v2017, %v2184
        %2186 = vmatmul.f32.gmra.mxu0 %v2124
        %v2187 = vpop.f32.mrf.mxu0
        %v2188 = vadd.f32 %v2020, %v2187
        %2189 = vmatmul.f32.gmra.mxu0 %v2126
        %v2190 = vpop.f32.mrf.mxu0
        %v2191 = vadd.f32 %v2023, %v2190
        %2192 = vmatmul.f32.gmra.mxu0 %v2128
        %v2193 = vpop.f32.mrf.mxu0
        %v2194 = vadd.f32 %v2026, %v2193
        %2195 = vmatmul.f32.gmra.mxu0 %v2130
        %v2196 = vpop.f32.mrf.mxu0
        %v2197 = vadd.f32 %v2029, %v2196
        %2198 = vmatmul.f32.gmra.mxu0 %v2132
        %v2199 = vpop.f32.mrf.mxu0
        %v2200 = vadd.f32 %v2032, %v2199
        %2201 = vmatmul.f32.gmra.mxu0 %v2134
        %v2202 = vpop.f32.mrf.mxu0
        %v2203 = vadd.f32 %v2035, %v2202
        %2204 = vmatmul.f32.gmra.mxu0 %v2136
        %v2205 = vpop.f32.mrf.mxu0
        %v2206 = vadd.f32 %v2038, %v2205
        %2207 = vmatmul.f32.gmra.mxu0 %v2138
        %v2208 = vpop.f32.mrf.mxu0
        %v2209 = vadd.f32 %v2041, %v2208
        %2210 = vdwg.mxu0
        %v2229 = vrot.slane %v2158, 4
        %v2230 = vrot.slane %v2161, 4
        %v2231 = vrot.slane %v2164, 4
        %v2232 = vrot.slane %v2167, 4
        %v2233 = vrot.slane %v2170, 4
        %v2234 = vrot.slane %v2173, 4
        %v2235 = vrot.slane %v2176, 4
        %v2236 = vrot.slane %v2179, 4
        %v2237 = vrot.slane %v2182, 4
        %v2238 = vrot.slane %v2185, 4
        %v2239 = vrot.slane %v2188, 4
        %v2240 = vrot.slane %v2191, 4
        %v2241 = vrot.slane %v2194, 4
        %v2242 = vrot.slane %v2197, 4
        %v2243 = vrot.slane %v2200, 4
        %v2244 = vrot.slane %v2203, 4
        %v2245 = vrot.slane %v2206, 4
        %v2246 = vrot.slane %v2209, 4
        %s2265 = scalar_lea.vmem [#allocation5], 16
        %v2266 = vld [vmem:[%s2265] sm:$0xff]
        %vm2267 = vcmask 1041408
        %vm2268 = vcmask 1045508
        %vm2269 = vmor %vm2267, %vm2268
        %v2270 = vrot.slane %v1672, 6
        %v2271 = vrot.slane %v2270, 4
        %v2272 = vrot.slane %v1727, 6
        %v2273 = vsel %vm2269, %v2271, %v2272
        %v2274 = vrot.slane %v2272, 4
        %v2275 = vrot.slane %v1673, 6
        %v2276 = vsel %vm2269, %v2274, %v2275
        %v2277 = vrot.slane %v2275, 4
        %v2278 = vrot.slane %v1728, 6
        %v2279 = vsel %vm2269, %v2277, %v2278
        %v2280 = vrot.slane %v1674, 6
        %v2281 = vrot.slane %v2280, 4
        %v2282 = vrot.slane %v1729, 6
        %v2283 = vsel %vm2269, %v2281, %v2282
        %v2284 = vrot.slane %v2282, 4
        %v2285 = vrot.slane %v1675, 6
        %v2286 = vsel %vm2269, %v2284, %v2285
        %v2287 = vrot.slane %v2285, 4
        %v2288 = vrot.slane %v1730, 6
        %v2289 = vsel %vm2269, %v2287, %v2288
        %v2290 = vrot.slane %v1676, 6
        %v2291 = vrot.slane %v2290, 4
        %v2292 = vrot.slane %v1731, 6
        %v2293 = vsel %vm2269, %v2291, %v2292
        %v2294 = vrot.slane %v2292, 4
        %v2295 = vrot.slane %v1677, 6
        %v2296 = vsel %vm2269, %v2294, %v2295
        %v2297 = vrot.slane %v2295, 4
        %v2298 = vrot.slane %v1732, 6
        %v2299 = vsel %vm2269, %v2297, %v2298
        %v2300 = vrot.slane %v1678, 6
        %v2301 = vrot.slane %v2300, 4
        %v2302 = vrot.slane %v1733, 6
        %v2303 = vsel %vm2269, %v2301, %v2302
        %v2304 = vrot.slane %v2302, 4
        %v2305 = vrot.slane %v1679, 6
        %v2306 = vsel %vm2269, %v2304, %v2305
        %v2307 = vrot.slane %v2305, 4
        %v2308 = vrot.slane %v1734, 6
        %v2309 = vsel %vm2269, %v2307, %v2308
        %v2310 = vrot.slane %v1680, 6
        %v2311 = vrot.slane %v2310, 4
        %v2312 = vrot.slane %v1735, 6
        %v2313 = vsel %vm2269, %v2311, %v2312
        %v2314 = vrot.slane %v2312, 4
        %v2315 = vrot.slane %v1681, 6
        %v2316 = vsel %vm2269, %v2314, %v2315
        %v2317 = vrot.slane %v2315, 4
        %v2318 = vrot.slane %v1736, 6
        %v2319 = vsel %vm2269, %v2317, %v2318
        %v2320 = vrot.slane %v1682, 6
        %v2321 = vrot.slane %v2320, 4
        %v2322 = vrot.slane %v1737, 6
        %v2323 = vsel %vm2269, %v2321, %v2322
        %v2324 = vrot.slane %v2322, 4
        %v2325 = vrot.slane %v1683, 6
        %v2326 = vsel %vm2269, %v2324, %v2325
        %v2327 = vrot.slane %v2325, 4
        %v2328 = vrot.slane %v1738, 6
        %v2329 = vsel %vm2269, %v2327, %v2328
        %v2330 = vrot.slane %v1684, 6
        %v2331 = vrot.slane %v2330, 4
        %v2332 = vrot.slane %v1739, 6
        %v2333 = vsel %vm2269, %v2331, %v2332
        %v2334 = vrot.slane %v2332, 4
        %v2335 = vrot.slane %v1685, 6
        %v2336 = vsel %vm2269, %v2334, %v2335
        %v2337 = vrot.slane %v2335, 4
        %v2338 = vrot.slane %v1740, 6
        %v2339 = vsel %vm2269, %v2337, %v2338
        %v2340 = vrot.slane %v1686, 6
        %v2341 = vrot.slane %v2340, 4
        %v2342 = vrot.slane %v1741, 6
        %v2343 = vsel %vm2269, %v2341, %v2342
        %v2344 = vrot.slane %v2342, 4
        %v2345 = vrot.slane %v1687, 6
        %v2346 = vsel %vm2269, %v2344, %v2345
        %v2347 = vrot.slane %v2345, 4
        %v2348 = vrot.slane %v1742, 6
        %v2349 = vsel %vm2269, %v2347, %v2348
        %v2350 = vrot.slane %v1688, 6
        %v2351 = vrot.slane %v2350, 4
        %v2352 = vrot.slane %v1743, 6
        %v2353 = vsel %vm2269, %v2351, %v2352
        %v2354 = vrot.slane %v2352, 4
        %v2355 = vrot.slane %v1689, 6
        %v2356 = vsel %vm2269, %v2354, %v2355
        %v2357 = vrot.slane %v2355, 4
        %v2358 = vrot.slane %v1744, 6
        %v2359 = vsel %vm2269, %v2357, %v2358
        %v2360 = vrot.slane %v1690, 6
        %v2361 = vrot.slane %v2360, 4
        %v2362 = vrot.slane %v1745, 6
        %v2363 = vsel %vm2269, %v2361, %v2362
        %v2364 = vrot.slane %v2362, 4
        %v2365 = vrot.slane %v1691, 6
        %v2366 = vsel %vm2269, %v2364, %v2365
        %v2367 = vrot.slane %v2365, 4
        %v2368 = vrot.slane %v1746, 6
        %v2369 = vsel %vm2269, %v2367, %v2368
        %v2370 = vrot.slane %v1692, 6
        %v2371 = vrot.slane %v2370, 4
        %v2372 = vrot.slane %v1747, 6
        %v2373 = vsel %vm2269, %v2371, %v2372
        %v2374 = vrot.slane %v2372, 4
        %v2375 = vrot.slane %v1693, 6
        %v2376 = vsel %vm2269, %v2374, %v2375
        %v2377 = vrot.slane %v2375, 4
        %v2378 = vrot.slane %v1748, 6
        %v2379 = vsel %vm2269, %v2377, %v2378
        %v2380 = vrot.slane %v1694, 6
        %v2381 = vrot.slane %v2380, 4
        %v2382 = vrot.slane %v1749, 6
        %v2383 = vsel %vm2269, %v2381, %v2382
        %v2384 = vrot.slane %v2382, 4
        %v2385 = vrot.slane %v1695, 6
        %v2386 = vsel %vm2269, %v2384, %v2385
        %v2387 = vrot.slane %v2385, 4
        %v2388 = vrot.slane %v1750, 6
        %v2389 = vsel %vm2269, %v2387, %v2388
        %2390 = vst [vmem:[#allocation1] ss:$2 sm:$0xff] %v2273
        %s2391 = scalar_lea.vmem [#allocation1], 1
        %2392 = vst [vmem:[%s2391] ss:$2 sm:$0xff] %v2276
        %s2393 = scalar_lea.vmem [#allocation1], 16
        %2394 = vst [vmem:[%s2393] ss:$2 sm:$0xff] %v2279
        %s2395 = scalar_lea.vmem [#allocation1], 17
        %2396 = vst [vmem:[%s2395] ss:$2 sm:$0xff] %v2283
        %s2397 = scalar_lea.vmem [#allocation1], 32
        %2398 = vst [vmem:[%s2397] ss:$2 sm:$0xff] %v2286
        %s2399 = scalar_lea.vmem [#allocation1], 33
        %2400 = vst [vmem:[%s2399] ss:$2 sm:$0xff] %v2289
        %s2401 = scalar_lea.vmem [#allocation1], 48
        %2402 = vst [vmem:[%s2401] ss:$2 sm:$0xff] %v2293
        %s2403 = scalar_lea.vmem [#allocation1], 49
        %2404 = vst [vmem:[%s2403] ss:$2 sm:$0xff] %v2296
        %v2405 = vld.sshfl [vmem:[#allocation1] sm:$0xff pattern:$0x75316420]
        %v2406 = vld.sshfl [vmem:[#allocation1 + $0x10] sm:$0xff pattern:$0x75316420]
        %v2407 = vld.sshfl [vmem:[#allocation1 + $0x20] sm:$0xff pattern:$0x75316420]
        %v2408 = vld.sshfl [vmem:[#allocation1 + $0x30] sm:$0xff pattern:$0x75316420]
        %2409 = vst [vmem:[#allocation1] ss:$2 sm:$0xff] %v2299
        %2410 = vst [vmem:[%s2391] ss:$2 sm:$0xff] %v2303
        %2411 = vst [vmem:[%s2393] ss:$2 sm:$0xff] %v2306
        %2412 = vst [vmem:[%s2395] ss:$2 sm:$0xff] %v2309
        %2413 = vst [vmem:[%s2397] ss:$2 sm:$0xff] %v2313
        %2414 = vst [vmem:[%s2399] ss:$2 sm:$0xff] %v2316
        %2415 = vst [vmem:[%s2401] ss:$2 sm:$0xff] %v2319
        %2416 = vst [vmem:[%s2403] ss:$2 sm:$0xff] %v2323
        %v2417 = vld.sshfl [vmem:[#allocation1] sm:$0xff pattern:$0x75316420]
        %v2418 = vld.sshfl [vmem:[#allocation1 + $0x10] sm:$0xff pattern:$0x75316420]
        %v2419 = vld.sshfl [vmem:[#allocation1 + $0x20] sm:$0xff pattern:$0x75316420]
        %v2420 = vld.sshfl [vmem:[#allocation1 + $0x30] sm:$0xff pattern:$0x75316420]
        %2421 = vst [vmem:[#allocation1] ss:$2 sm:$0xff] %v2326
        %2422 = vst [vmem:[%s2391] ss:$2 sm:$0xff] %v2329
        %2423 = vst [vmem:[%s2393] ss:$2 sm:$0xff] %v2333
        %2424 = vst [vmem:[%s2395] ss:$2 sm:$0xff] %v2336
        %2425 = vst [vmem:[%s2397] ss:$2 sm:$0xff] %v2339
        %2426 = vst [vmem:[%s2399] ss:$2 sm:$0xff] %v2343
        %2427 = vst [vmem:[%s2401] ss:$2 sm:$0xff] %v2346
        %2428 = vst [vmem:[%s2403] ss:$2 sm:$0xff] %v2349
        %v2429 = vld.sshfl [vmem:[#allocation1] sm:$0xff pattern:$0x75316420]
        %v2430 = vld.sshfl [vmem:[#allocation1 + $0x10] sm:$0xff pattern:$0x75316420]
        %v2431 = vld.sshfl [vmem:[#allocation1 + $0x20] sm:$0xff pattern:$0x75316420]
        %v2432 = vld.sshfl [vmem:[#allocation1 + $0x30] sm:$0xff pattern:$0x75316420]
        %2433 = vst [vmem:[#allocation1] ss:$2 sm:$0xff] %v2353
        %2434 = vst [vmem:[%s2391] ss:$2 sm:$0xff] %v2356
        %2435 = vst [vmem:[%s2393] ss:$2 sm:$0xff] %v2359
        %2436 = vst [vmem:[%s2395] ss:$2 sm:$0xff] %v2363
        %2437 = vst [vmem:[%s2397] ss:$2 sm:$0xff] %v2366
        %2438 = vst [vmem:[%s2399] ss:$2 sm:$0xff] %v2369
        %2439 = vst [vmem:[%s2401] ss:$2 sm:$0xff] %v2373
        %2440 = vst [vmem:[%s2403] ss:$2 sm:$0xff] %v2376
        %v2441 = vld.sshfl [vmem:[#allocation1] sm:$0xff pattern:$0x75316420]
        %v2442 = vld.sshfl [vmem:[#allocation1 + $0x10] sm:$0xff pattern:$0x75316420]
        %v2443 = vld.sshfl [vmem:[#allocation1 + $0x20] sm:$0xff pattern:$0x75316420]
        %v2444 = vld.sshfl [vmem:[#allocation1 + $0x30] sm:$0xff pattern:$0x75316420]
        %2445 = vst [vmem:[#allocation1] ss:$2 sm:$0xff] %v2379
        %2446 = vst [vmem:[%s2391] ss:$2 sm:$0xff] %v2383
        %2447 = vst [vmem:[%s2393] ss:$2 sm:$0xff] %v2386
        %2448 = vst [vmem:[%s2395] ss:$2 sm:$0xff] %v2389
        %v2449 = vld.sshfl [vmem:[#allocation1] sm:$0xff pattern:$0x75316420]
        %v2450 = vld.sshfl [vmem:[#allocation1 + $0x10] sm:$0xff pattern:$0x75316420]
        %v2451 = vsel %vm1935, %v2405, 0
        %v2453 = vsel %vm1935, %v2406, 0
        %v2455 = vsel %vm1935, %v2407, 0
        %v2457 = vsel %vm1935, %v2408, 0
        %v2459 = vsel %vm1935, %v2417, 0
        %v2461 = vsel %vm1935, %v2418, 0
        %v2463 = vsel %vm1935, %v2419, 0
        %v2465 = vsel %vm1935, %v2420, 0
        %v2467 = vsel %vm1935, %v2429, 0
        %v2469 = vsel %vm1935, %v2430, 0
        %v2471 = vsel %vm1935, %v2431, 0
        %v2473 = vsel %vm1935, %v2432, 0
        %v2475 = vsel %vm1935, %v2441, 0
        %v2477 = vsel %vm1935, %v2442, 0
        %v2479 = vsel %vm1935, %v2443, 0
        %v2481 = vsel %vm1935, %v2444, 0
        %v2483 = vsel %vm1935, %v2449, 0
        %v2485 = vsel %vm1935, %v2450, 0
        %2487 = vmatpush.msra.mxu0 0.0
        %2488 = vmatpush.msra.mxu0 0.0
        %2489 = vmatpush.msra.mxu0 0.0
        %2490 = vmatpush.msra.mxu0 0.0
        %2491 = vmatpush.msra.mxu0 0.0
        %2492 = vmatpush.msra.mxu0 0.0
        %2493 = vmatpush.msra.mxu0 0.0
        %2494 = vmatpush.msra.mxu0 0.0
        %2495 = vmatpush.msra.mxu0 0.0
        %2496 = vmatpush.msra.mxu0 0.0
        %2497 = vmatpush.msra.mxu0 0.0
        %2498 = vmatpush.msra.mxu0 0.0
        %2499 = vmatpush.msra.mxu0 0.0
        %2500 = vmatpush.msra.mxu0 0.0
        %2501 = vmatpush.msra.mxu0 0.0
        %2502 = vmatpush.msra.mxu0 %v2266
        %2503 = vmatmul.f32.gmra.mxu0 %v2451
        %v2504 = vpop.f32.mrf.mxu0
        %v2505 = vadd.f32 0.0, %v2504
        %2506 = vmatmul.f32.gmra.mxu0 %v2453
        %v2507 = vpop.f32.mrf.mxu0
        %v2508 = vadd.f32 0.0, %v2507
        %2509 = vmatmul.f32.gmra.mxu0 %v2455
        %v2510 = vpop.f32.mrf.mxu0
        %v2511 = vadd.f32 0.0, %v2510
        %2512 = vmatmul.f32.gmra.mxu0 %v2457
        %v2513 = vpop.f32.mrf.mxu0
        %v2514 = vadd.f32 0.0, %v2513
        %2515 = vmatmul.f32.gmra.mxu0 %v2459
        %v2516 = vpop.f32.mrf.mxu0
        %v2517 = vadd.f32 0.0, %v2516
        %2518 = vmatmul.f32.gmra.mxu0 %v2461
        %v2519 = vpop.f32.mrf.mxu0
        %v2520 = vadd.f32 0.0, %v2519
        %2521 = vmatmul.f32.gmra.mxu0 %v2463
        %v2522 = vpop.f32.mrf.mxu0
        %v2523 = vadd.f32 0.0, %v2522
        %2524 = vmatmul.f32.gmra.mxu0 %v2465
        %v2525 = vpop.f32.mrf.mxu0
        %v2526 = vadd.f32 0.0, %v2525
        %2527 = vmatmul.f32.gmra.mxu0 %v2467
        %v2528 = vpop.f32.mrf.mxu0
        %v2529 = vadd.f32 0.0, %v2528
        %2530 = vmatmul.f32.gmra.mxu0 %v2469
        %v2531 = vpop.f32.mrf.mxu0
        %v2532 = vadd.f32 0.0, %v2531
        %2533 = vmatmul.f32.gmra.mxu0 %v2471
        %v2534 = vpop.f32.mrf.mxu0
        %v2535 = vadd.f32 0.0, %v2534
        %2536 = vmatmul.f32.gmra.mxu0 %v2473
        %v2537 = vpop.f32.mrf.mxu0
        %v2538 = vadd.f32 0.0, %v2537
        %2539 = vmatmul.f32.gmra.mxu0 %v2475
        %v2540 = vpop.f32.mrf.mxu0
        %v2541 = vadd.f32 0.0, %v2540
        %2542 = vmatmul.f32.gmra.mxu0 %v2477
        %v2543 = vpop.f32.mrf.mxu0
        %v2544 = vadd.f32 0.0, %v2543
        %2545 = vmatmul.f32.gmra.mxu0 %v2479
        %v2546 = vpop.f32.mrf.mxu0
        %v2547 = vadd.f32 0.0, %v2546
        %2548 = vmatmul.f32.gmra.mxu0 %v2481
        %v2549 = vpop.f32.mrf.mxu0
        %v2550 = vadd.f32 0.0, %v2549
        %2551 = vmatmul.f32.gmra.mxu0 %v2483
        %v2552 = vpop.f32.mrf.mxu0
        %v2553 = vadd.f32 0.0, %v2552
        %2554 = vmatmul.f32.gmra.mxu0 %v2485
        %v2555 = vpop.f32.mrf.mxu0
        %v2556 = vadd.f32 0.0, %v2555
        %2557 = vdwg.mxu0
        %v2576 = vrot.slane %v2505, 4
        %v2577 = vrot.slane %v2508, 4
        %v2578 = vrot.slane %v2511, 4
        %v2579 = vrot.slane %v2514, 4
        %v2580 = vrot.slane %v2517, 4
        %v2581 = vrot.slane %v2520, 4
        %v2582 = vrot.slane %v2523, 4
        %v2583 = vrot.slane %v2526, 4
        %v2584 = vrot.slane %v2529, 4
        %v2585 = vrot.slane %v2532, 4
        %v2586 = vrot.slane %v2535, 4
        %v2587 = vrot.slane %v2538, 4
        %v2588 = vrot.slane %v2541, 4
        %v2589 = vrot.slane %v2544, 4
        %v2590 = vrot.slane %v2547, 4
        %v2591 = vrot.slane %v2550, 4
        %v2592 = vrot.slane %v2553, 4
        %v2593 = vrot.slane %v2556, 4
        %v2612 = vadd.f32 %v2158, %v2505
        %v2613 = vadd.f32 %v2229, %v2576
        %v2614 = vadd.f32 %v2161, %v2508
        %v2615 = vadd.f32 %v2230, %v2577
        %v2616 = vadd.f32 %v2164, %v2511
        %v2617 = vadd.f32 %v2231, %v2578
        %v2618 = vadd.f32 %v2167, %v2514
        %v2619 = vadd.f32 %v2232, %v2579
        %v2620 = vadd.f32 %v2170, %v2517
        %v2621 = vadd.f32 %v2233, %v2580
        %v2622 = vadd.f32 %v2173, %v2520
        %v2623 = vadd.f32 %v2234, %v2581
        %v2624 = vadd.f32 %v2176, %v2523
        %v2625 = vadd.f32 %v2235, %v2582
        %v2626 = vadd.f32 %v2179, %v2526
        %v2627 = vadd.f32 %v2236, %v2583
        %v2628 = vadd.f32 %v2182, %v2529
        %v2629 = vadd.f32 %v2237, %v2584
        %v2630 = vadd.f32 %v2185, %v2532
        %v2631 = vadd.f32 %v2238, %v2585
        %v2632 = vadd.f32 %v2188, %v2535
        %v2633 = vadd.f32 %v2239, %v2586
        %v2634 = vadd.f32 %v2191, %v2538
        %v2635 = vadd.f32 %v2240, %v2587
        %v2636 = vadd.f32 %v2194, %v2541
        %v2637 = vadd.f32 %v2241, %v2588
        %v2638 = vadd.f32 %v2197, %v2544
        %v2639 = vadd.f32 %v2242, %v2589
        %v2640 = vadd.f32 %v2200, %v2547
        %v2641 = vadd.f32 %v2243, %v2590
        %v2642 = vadd.f32 %v2203, %v2550
        %v2643 = vadd.f32 %v2244, %v2591
        %v2644 = vadd.f32 %v2206, %v2553
        %v2645 = vadd.f32 %v2245, %v2592
        %v2646 = vadd.f32 %v2209, %v2556
        %v2647 = vadd.f32 %v2246, %v2593
        %s2648 = scalar_lea.vmem [#allocation5], 24
        %v2649 = vld [vmem:[%s2648] sm:$0xff]
        %v2652 = vrot.slane %v1696, 4
        %2653 = vst [vmem:[#allocation1] ss:$2 sm:$0xff] %v1674
        %s2654 = scalar_lea.vmem [#allocation1], 1
        %2655 = vst [vmem:[%s2654] ss:$2 sm:$0xff] %v1729
        %s2656 = scalar_lea.vmem [#allocation1], 16
        %2657 = vst [vmem:[%s2656] ss:$2 sm:$0xff] %v1675
        %s2658 = scalar_lea.vmem [#allocation1], 17
        %2659 = vst [vmem:[%s2658] ss:$2 sm:$0xff] %v1676
        %s2660 = scalar_lea.vmem [#allocation1], 32
        %2661 = vst [vmem:[%s2660] ss:$2 sm:$0xff] %v1731
        %s2662 = scalar_lea.vmem [#allocation1], 33
        %2663 = vst [vmem:[%s2662] ss:$2 sm:$0xff] %v1677
        %s2664 = scalar_lea.vmem [#allocation1], 48
        %2665 = vst [vmem:[%s2664] ss:$2 sm:$0xff] %v1678
        %s2666 = scalar_lea.vmem [#allocation1], 49
        %2667 = vst [vmem:[%s2666] ss:$2 sm:$0xff] %v1733
        %v2668 = vld.sshfl [vmem:[#allocation1] sm:$0xff pattern:$0x75316420]
        %v2669 = vld.sshfl [vmem:[#allocation1 + $0x10] sm:$0xff pattern:$0x75316420]
        %v2670 = vld.sshfl [vmem:[#allocation1 + $0x20] sm:$0xff pattern:$0x75316420]
        %v2671 = vld.sshfl [vmem:[#allocation1 + $0x30] sm:$0xff pattern:$0x75316420]
        %2672 = vst [vmem:[#allocation1] ss:$2 sm:$0xff] %v1679
        %2673 = vst [vmem:[%s2654] ss:$2 sm:$0xff] %v1680
        %2674 = vst [vmem:[%s2656] ss:$2 sm:$0xff] %v1735
        %2675 = vst [vmem:[%s2658] ss:$2 sm:$0xff] %v1681
        %2676 = vst [vmem:[%s2660] ss:$2 sm:$0xff] %v1682
        %2677 = vst [vmem:[%s2662] ss:$2 sm:$0xff] %v1737
        %2678 = vst [vmem:[%s2664] ss:$2 sm:$0xff] %v1683
        %2679 = vst [vmem:[%s2666] ss:$2 sm:$0xff] %v1684
        %v2680 = vld.sshfl [vmem:[#allocation1] sm:$0xff pattern:$0x75316420]
        %v2681 = vld.sshfl [vmem:[#allocation1 + $0x10] sm:$0xff pattern:$0x75316420]
        %v2682 = vld.sshfl [vmem:[#allocation1 + $0x20] sm:$0xff pattern:$0x75316420]
        %v2683 = vld.sshfl [vmem:[#allocation1 + $0x30] sm:$0xff pattern:$0x75316420]
        %2684 = vst [vmem:[#allocation1] ss:$2 sm:$0xff] %v1739
        %2685 = vst [vmem:[%s2654] ss:$2 sm:$0xff] %v1685
        %2686 = vst [vmem:[%s2656] ss:$2 sm:$0xff] %v1686
        %2687 = vst [vmem:[%s2658] ss:$2 sm:$0xff] %v1741
        %2688 = vst [vmem:[%s2660] ss:$2 sm:$0xff] %v1687
        %2689 = vst [vmem:[%s2662] ss:$2 sm:$0xff] %v1688
        %2690 = vst [vmem:[%s2664] ss:$2 sm:$0xff] %v1743
        %2691 = vst [vmem:[%s2666] ss:$2 sm:$0xff] %v1689
        %v2692 = vld.sshfl [vmem:[#allocation1] sm:$0xff pattern:$0x75316420]
        %v2693 = vld.sshfl [vmem:[#allocation1 + $0x10] sm:$0xff pattern:$0x75316420]
        %v2694 = vld.sshfl [vmem:[#allocation1 + $0x20] sm:$0xff pattern:$0x75316420]
        %v2695 = vld.sshfl [vmem:[#allocation1 + $0x30] sm:$0xff pattern:$0x75316420]
        %2696 = vst [vmem:[#allocation1] ss:$2 sm:$0xff] %v1690
        %2697 = vst [vmem:[%s2654] ss:$2 sm:$0xff] %v1745
        %2698 = vst [vmem:[%s2656] ss:$2 sm:$0xff] %v1691
        %2699 = vst [vmem:[%s2658] ss:$2 sm:$0xff] %v1692
        %2700 = vst [vmem:[%s2660] ss:$2 sm:$0xff] %v1747
        %2701 = vst [vmem:[%s2662] ss:$2 sm:$0xff] %v1693
        %2702 = vst [vmem:[%s2664] ss:$2 sm:$0xff] %v1694
        %2703 = vst [vmem:[%s2666] ss:$2 sm:$0xff] %v1749
        %v2704 = vld.sshfl [vmem:[#allocation1] sm:$0xff pattern:$0x75316420]
        %v2705 = vld.sshfl [vmem:[#allocation1 + $0x10] sm:$0xff pattern:$0x75316420]
        %v2706 = vld.sshfl [vmem:[#allocation1 + $0x20] sm:$0xff pattern:$0x75316420]
        %v2707 = vld.sshfl [vmem:[#allocation1 + $0x30] sm:$0xff pattern:$0x75316420]
        %2708 = vst [vmem:[#allocation1] ss:$2 sm:$0xff] %v1695
        %2709 = vst [vmem:[%s2654] ss:$2 sm:$0xff] %v1696
        %2710 = vst [vmem:[%s2656] ss:$2 sm:$0xff] %v2652
        %2711 = vst [vmem:[%s2658] ss:$2 sm:$0xff] %v1697
        %v2712 = vld.sshfl [vmem:[#allocation1] sm:$0xff pattern:$0x75316420]
        %v2713 = vld.sshfl [vmem:[#allocation1 + $0x10] sm:$0xff pattern:$0x75316420]
        %v2714 = vsel %vm1935, %v2668, 0
        %v2716 = vsel %vm1935, %v2669, 0
        %v2718 = vsel %vm1935, %v2670, 0
        %v2720 = vsel %vm1935, %v2671, 0
        %v2722 = vsel %vm1935, %v2680, 0
        %v2724 = vsel %vm1935, %v2681, 0
        %v2726 = vsel %vm1935, %v2682, 0
        %v2728 = vsel %vm1935, %v2683, 0
        %v2730 = vsel %vm1935, %v2692, 0
        %v2732 = vsel %vm1935, %v2693, 0
        %v2734 = vsel %vm1935, %v2694, 0
        %v2736 = vsel %vm1935, %v2695, 0
        %v2738 = vsel %vm1935, %v2704, 0
        %v2740 = vsel %vm1935, %v2705, 0
        %v2742 = vsel %vm1935, %v2706, 0
        %v2744 = vsel %vm1935, %v2707, 0
        %v2746 = vsel %vm1935, %v2712, 0
        %v2748 = vsel %vm1935, %v2713, 0
        %2750 = vmatpush.msra.mxu0 0.0
        %2751 = vmatpush.msra.mxu0 0.0
        %2752 = vmatpush.msra.mxu0 0.0
        %2753 = vmatpush.msra.mxu0 0.0
        %2754 = vmatpush.msra.mxu0 0.0
        %2755 = vmatpush.msra.mxu0 0.0
        %2756 = vmatpush.msra.mxu0 0.0
        %2757 = vmatpush.msra.mxu0 0.0
        %2758 = vmatpush.msra.mxu0 0.0
        %2759 = vmatpush.msra.mxu0 0.0
        %2760 = vmatpush.msra.mxu0 0.0
        %2761 = vmatpush.msra.mxu0 0.0
        %2762 = vmatpush.msra.mxu0 0.0
        %2763 = vmatpush.msra.mxu0 0.0
        %2764 = vmatpush.msra.mxu0 0.0
        %2765 = vmatpush.msra.mxu0 %v2649
        %2766 = vmatmul.f32.gmra.mxu0 %v2714
        %v2767 = vpop.f32.mrf.mxu0
        %v2768 = vadd.f32 0.0, %v2767
        %2769 = vmatmul.f32.gmra.mxu0 %v2716
        %v2770 = vpop.f32.mrf.mxu0
        %v2771 = vadd.f32 0.0, %v2770
        %2772 = vmatmul.f32.gmra.mxu0 %v2718
        %v2773 = vpop.f32.mrf.mxu0
        %v2774 = vadd.f32 0.0, %v2773
        %2775 = vmatmul.f32.gmra.mxu0 %v2720
        %v2776 = vpop.f32.mrf.mxu0
        %v2777 = vadd.f32 0.0, %v2776
        %2778 = vmatmul.f32.gmra.mxu0 %v2722
        %v2779 = vpop.f32.mrf.mxu0
        %v2780 = vadd.f32 0.0, %v2779
        %2781 = vmatmul.f32.gmra.mxu0 %v2724
        %v2782 = vpop.f32.mrf.mxu0
        %v2783 = vadd.f32 0.0, %v2782
        %2784 = vmatmul.f32.gmra.mxu0 %v2726
        %v2785 = vpop.f32.mrf.mxu0
        %v2786 = vadd.f32 0.0, %v2785
        %2787 = vmatmul.f32.gmra.mxu0 %v2728
        %v2788 = vpop.f32.mrf.mxu0
        %v2789 = vadd.f32 0.0, %v2788
        %2790 = vmatmul.f32.gmra.mxu0 %v2730
        %v2791 = vpop.f32.mrf.mxu0
        %v2792 = vadd.f32 0.0, %v2791
        %2793 = vmatmul.f32.gmra.mxu0 %v2732
        %v2794 = vpop.f32.mrf.mxu0
        %v2795 = vadd.f32 0.0, %v2794
        %2796 = vmatmul.f32.gmra.mxu0 %v2734
        %v2797 = vpop.f32.mrf.mxu0
        %v2798 = vadd.f32 0.0, %v2797
        %2799 = vmatmul.f32.gmra.mxu0 %v2736
        %v2800 = vpop.f32.mrf.mxu0
        %v2801 = vadd.f32 0.0, %v2800
        %2802 = vmatmul.f32.gmra.mxu0 %v2738
        %v2803 = vpop.f32.mrf.mxu0
        %v2804 = vadd.f32 0.0, %v2803
        %2805 = vmatmul.f32.gmra.mxu0 %v2740
        %v2806 = vpop.f32.mrf.mxu0
        %v2807 = vadd.f32 0.0, %v2806
        %2808 = vmatmul.f32.gmra.mxu0 %v2742
        %v2809 = vpop.f32.mrf.mxu0
        %v2810 = vadd.f32 0.0, %v2809
        %2811 = vmatmul.f32.gmra.mxu0 %v2744
        %v2812 = vpop.f32.mrf.mxu0
        %v2813 = vadd.f32 0.0, %v2812
        %2814 = vmatmul.f32.gmra.mxu0 %v2746
        %v2815 = vpop.f32.mrf.mxu0
        %v2816 = vadd.f32 0.0, %v2815
        %2817 = vmatmul.f32.gmra.mxu0 %v2748
        %v2818 = vpop.f32.mrf.mxu0
        %v2819 = vadd.f32 0.0, %v2818
        %2820 = vdwg.mxu0
        %v2839 = vrot.slane %v2768, 4
        %v2840 = vrot.slane %v2771, 4
        %v2841 = vrot.slane %v2774, 4
        %v2842 = vrot.slane %v2777, 4
        %v2843 = vrot.slane %v2780, 4
        %v2844 = vrot.slane %v2783, 4
        %v2845 = vrot.slane %v2786, 4
        %v2846 = vrot.slane %v2789, 4
        %v2847 = vrot.slane %v2792, 4
        %v2848 = vrot.slane %v2795, 4
        %v2849 = vrot.slane %v2798, 4
        %v2850 = vrot.slane %v2801, 4
        %v2851 = vrot.slane %v2804, 4
        %v2852 = vrot.slane %v2807, 4
        %v2853 = vrot.slane %v2810, 4
        %v2854 = vrot.slane %v2813, 4
        %v2855 = vrot.slane %v2816, 4
        %v2856 = vrot.slane %v2819, 4
        %v2875 = vadd.f32 %v2612, %v2768
        %v2876 = vadd.f32 %v2613, %v2839
        %v2877 = vadd.f32 %v2614, %v2771
        %v2878 = vadd.f32 %v2615, %v2840
        %v2879 = vadd.f32 %v2616, %v2774
        %v2880 = vadd.f32 %v2617, %v2841
        %v2881 = vadd.f32 %v2618, %v2777
        %v2882 = vadd.f32 %v2619, %v2842
        %v2883 = vadd.f32 %v2620, %v2780
        %v2884 = vadd.f32 %v2621, %v2843
        %v2885 = vadd.f32 %v2622, %v2783
        %v2886 = vadd.f32 %v2623, %v2844
        %v2887 = vadd.f32 %v2624, %v2786
        %v2888 = vadd.f32 %v2625, %v2845
        %v2889 = vadd.f32 %v2626, %v2789
        %v2890 = vadd.f32 %v2627, %v2846
        %v2891 = vadd.f32 %v2628, %v2792
        %v2892 = vadd.f32 %v2629, %v2847
        %v2893 = vadd.f32 %v2630, %v2795
        %v2894 = vadd.f32 %v2631, %v2848
        %v2895 = vadd.f32 %v2632, %v2798
        %v2896 = vadd.f32 %v2633, %v2849
        %v2897 = vadd.f32 %v2634, %v2801
        %v2898 = vadd.f32 %v2635, %v2850
        %v2899 = vadd.f32 %v2636, %v2804
        %v2900 = vadd.f32 %v2637, %v2851
        %v2901 = vadd.f32 %v2638, %v2807
        %v2902 = vadd.f32 %v2639, %v2852
        %v2903 = vadd.f32 %v2640, %v2810
        %v2904 = vadd.f32 %v2641, %v2853
        %v2905 = vadd.f32 %v2642, %v2813
        %v2906 = vadd.f32 %v2643, %v2854
        %v2907 = vadd.f32 %v2644, %v2816
        %v2908 = vadd.f32 %v2645, %v2855
        %v2909 = vadd.f32 %v2646, %v2819
        %v2910 = vadd.f32 %v2647, %v2856
        %s2911 = scalar_lea.vmem [#allocation5], 32
        %v2912 = vld [vmem:[%s2911] sm:$0xff]
        %v2913 = vrot.slane %v1697, 4
        %v2914 = vrot.slane %v1696, 5
        %v2915 = vrot.slane %v2914, 4
        %v2916 = vrot.slane %v2652, 5
        %v2917 = vsel %vm1753, %v2915, %v2916
        %v2918 = vrot.slane %v2916, 4
        %v2919 = vrot.slane %v1697, 5
        %v2920 = vsel %vm1753, %v2918, %v2919
        %v2921 = vrot.slane %v2919, 4
        %v2922 = vrot.slane %v2913, 5
        %v2923 = vsel %vm1753, %v2921, %v2922
        %2924 = vst [vmem:[#allocation1] ss:$2 sm:$0xff] %v1767
        %s2925 = scalar_lea.vmem [#allocation1], 1
        %2926 = vst [vmem:[%s2925] ss:$2 sm:$0xff] %v1770
        %s2927 = scalar_lea.vmem [#allocation1], 16
        %2928 = vst [vmem:[%s2927] ss:$2 sm:$0xff] %v1773
        %s2929 = scalar_lea.vmem [#allocation1], 17
        %2930 = vst [vmem:[%s2929] ss:$2 sm:$0xff] %v1777
        %s2931 = scalar_lea.vmem [#allocation1], 32
        %2932 = vst [vmem:[%s2931] ss:$2 sm:$0xff] %v1780
        %s2933 = scalar_lea.vmem [#allocation1], 33
        %2934 = vst [vmem:[%s2933] ss:$2 sm:$0xff] %v1783
        %s2935 = scalar_lea.vmem [#allocation1], 48
        %2936 = vst [vmem:[%s2935] ss:$2 sm:$0xff] %v1787
        %s2937 = scalar_lea.vmem [#allocation1], 49
        %2938 = vst [vmem:[%s2937] ss:$2 sm:$0xff] %v1790
        %v2939 = vld.sshfl [vmem:[#allocation1] sm:$0xff pattern:$0x75316420]
        %v2940 = vld.sshfl [vmem:[#allocation1 + $0x10] sm:$0xff pattern:$0x75316420]
        %v2941 = vld.sshfl [vmem:[#allocation1 + $0x20] sm:$0xff pattern:$0x75316420]
        %v2942 = vld.sshfl [vmem:[#allocation1 + $0x30] sm:$0xff pattern:$0x75316420]
        %2943 = vst [vmem:[#allocation1] ss:$2 sm:$0xff] %v1793
        %2944 = vst [vmem:[%s2925] ss:$2 sm:$0xff] %v1797
        %2945 = vst [vmem:[%s2927] ss:$2 sm:$0xff] %v1800
        %2946 = vst [vmem:[%s2929] ss:$2 sm:$0xff] %v1803
        %2947 = vst [vmem:[%s2931] ss:$2 sm:$0xff] %v1807
        %2948 = vst [vmem:[%s2933] ss:$2 sm:$0xff] %v1810
        %2949 = vst [vmem:[%s2935] ss:$2 sm:$0xff] %v1813
        %2950 = vst [vmem:[%s2937] ss:$2 sm:$0xff] %v1817
        %v2951 = vld.sshfl [vmem:[#allocation1] sm:$0xff pattern:$0x75316420]
        %v2952 = vld.sshfl [vmem:[#allocation1 + $0x10] sm:$0xff pattern:$0x75316420]
        %v2953 = vld.sshfl [vmem:[#allocation1 + $0x20] sm:$0xff pattern:$0x75316420]
        %v2954 = vld.sshfl [vmem:[#allocation1 + $0x30] sm:$0xff pattern:$0x75316420]
        %2955 = vst [vmem:[#allocation1] ss:$2 sm:$0xff] %v1820
        %2956 = vst [vmem:[%s2925] ss:$2 sm:$0xff] %v1823
        %2957 = vst [vmem:[%s2927] ss:$2 sm:$0xff] %v1827
        %2958 = vst [vmem:[%s2929] ss:$2 sm:$0xff] %v1830
        %2959 = vst [vmem:[%s2931] ss:$2 sm:$0xff] %v1833
        %2960 = vst [vmem:[%s2933] ss:$2 sm:$0xff] %v1837
        %2961 = vst [vmem:[%s2935] ss:$2 sm:$0xff] %v1840
        %2962 = vst [vmem:[%s2937] ss:$2 sm:$0xff] %v1843
        %v2963 = vld.sshfl [vmem:[#allocation1] sm:$0xff pattern:$0x75316420]
        %v2964 = vld.sshfl [vmem:[#allocation1 + $0x10] sm:$0xff pattern:$0x75316420]
        %v2965 = vld.sshfl [vmem:[#allocation1 + $0x20] sm:$0xff pattern:$0x75316420]
        %v2966 = vld.sshfl [vmem:[#allocation1 + $0x30] sm:$0xff pattern:$0x75316420]
        %2967 = vst [vmem:[#allocation1] ss:$2 sm:$0xff] %v1847
        %2968 = vst [vmem:[%s2925] ss:$2 sm:$0xff] %v1850
        %2969 = vst [vmem:[%s2927] ss:$2 sm:$0xff] %v1853
        %2970 = vst [vmem:[%s2929] ss:$2 sm:$0xff] %v1857
        %2971 = vst [vmem:[%s2931] ss:$2 sm:$0xff] %v1860
        %2972 = vst [vmem:[%s2933] ss:$2 sm:$0xff] %v1863
        %2973 = vst [vmem:[%s2935] ss:$2 sm:$0xff] %v1867
        %2974 = vst [vmem:[%s2937] ss:$2 sm:$0xff] %v1870
        %v2975 = vld.sshfl [vmem:[#allocation1] sm:$0xff pattern:$0x75316420]
        %v2976 = vld.sshfl [vmem:[#allocation1 + $0x10] sm:$0xff pattern:$0x75316420]
        %v2977 = vld.sshfl [vmem:[#allocation1 + $0x20] sm:$0xff pattern:$0x75316420]
        %v2978 = vld.sshfl [vmem:[#allocation1 + $0x30] sm:$0xff pattern:$0x75316420]
        %2979 = vst [vmem:[#allocation1] ss:$2 sm:$0xff] %v1873
        %2980 = vst [vmem:[%s2925] ss:$2 sm:$0xff] %v2917
        %2981 = vst [vmem:[%s2927] ss:$2 sm:$0xff] %v2920
        %2982 = vst [vmem:[%s2929] ss:$2 sm:$0xff] %v2923
        %v2983 = vld.sshfl [vmem:[#allocation1] sm:$0xff pattern:$0x75316420]
        %v2984 = vld.sshfl [vmem:[#allocation1 + $0x10] sm:$0xff pattern:$0x75316420]
        %v2985 = vsel %vm1935, %v2939, 0
        %v2987 = vsel %vm1935, %v2940, 0
        %v2989 = vsel %vm1935, %v2941, 0
        %v2991 = vsel %vm1935, %v2942, 0
        %v2993 = vsel %vm1935, %v2951, 0
        %v2995 = vsel %vm1935, %v2952, 0
        %v2997 = vsel %vm1935, %v2953, 0
        %v2999 = vsel %vm1935, %v2954, 0
        %v3001 = vsel %vm1935, %v2963, 0
        %v3003 = vsel %vm1935, %v2964, 0
        %v3005 = vsel %vm1935, %v2965, 0
        %v3007 = vsel %vm1935, %v2966, 0
        %v3009 = vsel %vm1935, %v2975, 0
        %v3011 = vsel %vm1935, %v2976, 0
        %v3013 = vsel %vm1935, %v2977, 0
        %v3015 = vsel %vm1935, %v2978, 0
        %v3017 = vsel %vm1935, %v2983, 0
        %v3019 = vsel %vm1935, %v2984, 0
        %3021 = vmatpush.msra.mxu0 0.0
        %3022 = vmatpush.msra.mxu0 0.0
        %3023 = vmatpush.msra.mxu0 0.0
        %3024 = vmatpush.msra.mxu0 0.0
        %3025 = vmatpush.msra.mxu0 0.0
        %3026 = vmatpush.msra.mxu0 0.0
        %3027 = vmatpush.msra.mxu0 0.0
        %3028 = vmatpush.msra.mxu0 0.0
        %3029 = vmatpush.msra.mxu0 0.0
        %3030 = vmatpush.msra.mxu0 0.0
        %3031 = vmatpush.msra.mxu0 0.0
        %3032 = vmatpush.msra.mxu0 0.0
        %3033 = vmatpush.msra.mxu0 0.0
        %3034 = vmatpush.msra.mxu0 0.0
        %3035 = vmatpush.msra.mxu0 0.0
        %3036 = vmatpush.msra.mxu0 %v2912
        %3037 = vmatmul.f32.gmra.mxu0 %v2985
        %v3038 = vpop.f32.mrf.mxu0
        %v3039 = vadd.f32 0.0, %v3038
        %3040 = vmatmul.f32.gmra.mxu0 %v2987
        %v3041 = vpop.f32.mrf.mxu0
        %v3042 = vadd.f32 0.0, %v3041
        %3043 = vmatmul.f32.gmra.mxu0 %v2989
        %v3044 = vpop.f32.mrf.mxu0
        %v3045 = vadd.f32 0.0, %v3044
        %3046 = vmatmul.f32.gmra.mxu0 %v2991
        %v3047 = vpop.f32.mrf.mxu0
        %v3048 = vadd.f32 0.0, %v3047
        %3049 = vmatmul.f32.gmra.mxu0 %v2993
        %v3050 = vpop.f32.mrf.mxu0
        %v3051 = vadd.f32 0.0, %v3050
        %3052 = vmatmul.f32.gmra.mxu0 %v2995
        %v3053 = vpop.f32.mrf.mxu0
        %v3054 = vadd.f32 0.0, %v3053
        %3055 = vmatmul.f32.gmra.mxu0 %v2997
        %v3056 = vpop.f32.mrf.mxu0
        %v3057 = vadd.f32 0.0, %v3056
        %3058 = vmatmul.f32.gmra.mxu0 %v2999
        %v3059 = vpop.f32.mrf.mxu0
        %v3060 = vadd.f32 0.0, %v3059
        %3061 = vmatmul.f32.gmra.mxu0 %v3001
        %v3062 = vpop.f32.mrf.mxu0
        %v3063 = vadd.f32 0.0, %v3062
        %3064 = vmatmul.f32.gmra.mxu0 %v3003
        %v3065 = vpop.f32.mrf.mxu0
        %v3066 = vadd.f32 0.0, %v3065
        %3067 = vmatmul.f32.gmra.mxu0 %v3005
        %v3068 = vpop.f32.mrf.mxu0
        %v3069 = vadd.f32 0.0, %v3068
        %3070 = vmatmul.f32.gmra.mxu0 %v3007
        %v3071 = vpop.f32.mrf.mxu0
        %v3072 = vadd.f32 0.0, %v3071
        %3073 = vmatmul.f32.gmra.mxu0 %v3009
        %v3074 = vpop.f32.mrf.mxu0
        %v3075 = vadd.f32 0.0, %v3074
        %3076 = vmatmul.f32.gmra.mxu0 %v3011
        %v3077 = vpop.f32.mrf.mxu0
        %v3078 = vadd.f32 0.0, %v3077
        %3079 = vmatmul.f32.gmra.mxu0 %v3013
        %v3080 = vpop.f32.mrf.mxu0
        %v3081 = vadd.f32 0.0, %v3080
        %3082 = vmatmul.f32.gmra.mxu0 %v3015
        %v3083 = vpop.f32.mrf.mxu0
        %v3084 = vadd.f32 0.0, %v3083
        %3085 = vmatmul.f32.gmra.mxu0 %v3017
        %v3086 = vpop.f32.mrf.mxu0
        %v3087 = vadd.f32 0.0, %v3086
        %3088 = vmatmul.f32.gmra.mxu0 %v3019
        %v3089 = vpop.f32.mrf.mxu0
        %v3090 = vadd.f32 0.0, %v3089
        %3091 = vdwg.mxu0
        %v3110 = vrot.slane %v3039, 4
        %v3111 = vrot.slane %v3042, 4
        %v3112 = vrot.slane %v3045, 4
        %v3113 = vrot.slane %v3048, 4
        %v3114 = vrot.slane %v3051, 4
        %v3115 = vrot.slane %v3054, 4
        %v3116 = vrot.slane %v3057, 4
        %v3117 = vrot.slane %v3060, 4
        %v3118 = vrot.slane %v3063, 4
        %v3119 = vrot.slane %v3066, 4
        %v3120 = vrot.slane %v3069, 4
        %v3121 = vrot.slane %v3072, 4
        %v3122 = vrot.slane %v3075, 4
        %v3123 = vrot.slane %v3078, 4
        %v3124 = vrot.slane %v3081, 4
        %v3125 = vrot.slane %v3084, 4
        %v3126 = vrot.slane %v3087, 4
        %v3127 = vrot.slane %v3090, 4
        %v3146 = vadd.f32 %v2875, %v3039
        %v3147 = vadd.f32 %v2876, %v3110
        %v3148 = vadd.f32 %v2877, %v3042
        %v3149 = vadd.f32 %v2878, %v3111
        %v3150 = vadd.f32 %v2879, %v3045
        %v3151 = vadd.f32 %v2880, %v3112
        %v3152 = vadd.f32 %v2881, %v3048
        %v3153 = vadd.f32 %v2882, %v3113
        %v3154 = vadd.f32 %v2883, %v3051
        %v3155 = vadd.f32 %v2884, %v3114
        %v3156 = vadd.f32 %v2885, %v3054
        %v3157 = vadd.f32 %v2886, %v3115
        %v3158 = vadd.f32 %v2887, %v3057
        %v3159 = vadd.f32 %v2888, %v3116
        %v3160 = vadd.f32 %v2889, %v3060
        %v3161 = vadd.f32 %v2890, %v3117
        %v3162 = vadd.f32 %v2891, %v3063
        %v3163 = vadd.f32 %v2892, %v3118
        %v3164 = vadd.f32 %v2893, %v3066
        %v3165 = vadd.f32 %v2894, %v3119
        %v3166 = vadd.f32 %v2895, %v3069
        %v3167 = vadd.f32 %v2896, %v3120
        %v3168 = vadd.f32 %v2897, %v3072
        %v3169 = vadd.f32 %v2898, %v3121
        %v3170 = vadd.f32 %v2899, %v3075
        %v3171 = vadd.f32 %v2900, %v3122
        %v3172 = vadd.f32 %v2901, %v3078
        %v3173 = vadd.f32 %v2902, %v3123
        %v3174 = vadd.f32 %v2903, %v3081
        %v3175 = vadd.f32 %v2904, %v3124
        %v3176 = vadd.f32 %v2905, %v3084
        %v3177 = vadd.f32 %v2906, %v3125
        %v3178 = vadd.f32 %v2907, %v3087
        %v3179 = vadd.f32 %v2908, %v3126
        %v3180 = vadd.f32 %v2909, %v3090
        %v3181 = vadd.f32 %v2910, %v3127
        %s3182 = scalar_lea.vmem [#allocation5], 40
        %v3183 = vld [vmem:[%s3182] sm:$0xff]
        %v3184 = vrot.slane %v1696, 6
        %v3185 = vrot.slane %v3184, 4
        %v3186 = vrot.slane %v2652, 6
        %v3187 = vsel %vm2269, %v3185, %v3186
        %v3188 = vrot.slane %v3186, 4
        %v3189 = vrot.slane %v1697, 6
        %v3190 = vsel %vm2269, %v3188, %v3189
        %v3191 = vrot.slane %v3189, 4
        %v3192 = vrot.slane %v2913, 6
        %v3193 = vsel %vm2269, %v3191, %v3192
        %3194 = vst [vmem:[#allocation1] ss:$2 sm:$0xff] %v2283
        %s3195 = scalar_lea.vmem [#allocation1], 1
        %3196 = vst [vmem:[%s3195] ss:$2 sm:$0xff] %v2286
        %s3197 = scalar_lea.vmem [#allocation1], 16
        %3198 = vst [vmem:[%s3197] ss:$2 sm:$0xff] %v2289
        %s3199 = scalar_lea.vmem [#allocation1], 17
        %3200 = vst [vmem:[%s3199] ss:$2 sm:$0xff] %v2293
        %s3201 = scalar_lea.vmem [#allocation1], 32
        %3202 = vst [vmem:[%s3201] ss:$2 sm:$0xff] %v2296
        %s3203 = scalar_lea.vmem [#allocation1], 33
        %3204 = vst [vmem:[%s3203] ss:$2 sm:$0xff] %v2299
        %s3205 = scalar_lea.vmem [#allocation1], 48
        %3206 = vst [vmem:[%s3205] ss:$2 sm:$0xff] %v2303
        %s3207 = scalar_lea.vmem [#allocation1], 49
        %3208 = vst [vmem:[%s3207] ss:$2 sm:$0xff] %v2306
        %v3209 = vld.sshfl [vmem:[#allocation1] sm:$0xff pattern:$0x75316420]
        %v3210 = vld.sshfl [vmem:[#allocation1 + $0x10] sm:$0xff pattern:$0x75316420]
        %v3211 = vld.sshfl [vmem:[#allocation1 + $0x20] sm:$0xff pattern:$0x75316420]
        %v3212 = vld.sshfl [vmem:[#allocation1 + $0x30] sm:$0xff pattern:$0x75316420]
        %3213 = vst [vmem:[#allocation1] ss:$2 sm:$0xff] %v2309
        %3214 = vst [vmem:[%s3195] ss:$2 sm:$0xff] %v2313
        %3215 = vst [vmem:[%s3197] ss:$2 sm:$0xff] %v2316
        %3216 = vst [vmem:[%s3199] ss:$2 sm:$0xff] %v2319
        %3217 = vst [vmem:[%s3201] ss:$2 sm:$0xff] %v2323
        %3218 = vst [vmem:[%s3203] ss:$2 sm:$0xff] %v2326
        %3219 = vst [vmem:[%s3205] ss:$2 sm:$0xff] %v2329
        %3220 = vst [vmem:[%s3207] ss:$2 sm:$0xff] %v2333
        %v3221 = vld.sshfl [vmem:[#allocation1] sm:$0xff pattern:$0x75316420]
        %v3222 = vld.sshfl [vmem:[#allocation1 + $0x10] sm:$0xff pattern:$0x75316420]
        %v3223 = vld.sshfl [vmem:[#allocation1 + $0x20] sm:$0xff pattern:$0x75316420]
        %v3224 = vld.sshfl [vmem:[#allocation1 + $0x30] sm:$0xff pattern:$0x75316420]
        %3225 = vst [vmem:[#allocation1] ss:$2 sm:$0xff] %v2336
        %3226 = vst [vmem:[%s3195] ss:$2 sm:$0xff] %v2339
        %3227 = vst [vmem:[%s3197] ss:$2 sm:$0xff] %v2343
        %3228 = vst [vmem:[%s3199] ss:$2 sm:$0xff] %v2346
        %3229 = vst [vmem:[%s3201] ss:$2 sm:$0xff] %v2349
        %3230 = vst [vmem:[%s3203] ss:$2 sm:$0xff] %v2353
        %3231 = vst [vmem:[%s3205] ss:$2 sm:$0xff] %v2356
        %3232 = vst [vmem:[%s3207] ss:$2 sm:$0xff] %v2359
        %v3233 = vld.sshfl [vmem:[#allocation1] sm:$0xff pattern:$0x75316420]
        %v3234 = vld.sshfl [vmem:[#allocation1 + $0x10] sm:$0xff pattern:$0x75316420]
        %v3235 = vld.sshfl [vmem:[#allocation1 + $0x20] sm:$0xff pattern:$0x75316420]
        %v3236 = vld.sshfl [vmem:[#allocation1 + $0x30] sm:$0xff pattern:$0x75316420]
        %3237 = vst [vmem:[#allocation1] ss:$2 sm:$0xff] %v2363
        %3238 = vst [vmem:[%s3195] ss:$2 sm:$0xff] %v2366
        %3239 = vst [vmem:[%s3197] ss:$2 sm:$0xff] %v2369
        %3240 = vst [vmem:[%s3199] ss:$2 sm:$0xff] %v2373
        %3241 = vst [vmem:[%s3201] ss:$2 sm:$0xff] %v2376
        %3242 = vst [vmem:[%s3203] ss:$2 sm:$0xff] %v2379
        %3243 = vst [vmem:[%s3205] ss:$2 sm:$0xff] %v2383
        %3244 = vst [vmem:[%s3207] ss:$2 sm:$0xff] %v2386
        %v3245 = vld.sshfl [vmem:[#allocation1] sm:$0xff pattern:$0x75316420]
        %v3246 = vld.sshfl [vmem:[#allocation1 + $0x10] sm:$0xff pattern:$0x75316420]
        %v3247 = vld.sshfl [vmem:[#allocation1 + $0x20] sm:$0xff pattern:$0x75316420]
        %v3248 = vld.sshfl [vmem:[#allocation1 + $0x30] sm:$0xff pattern:$0x75316420]
        %3249 = vst [vmem:[#allocation1] ss:$2 sm:$0xff] %v2389
        %3250 = vst [vmem:[%s3195] ss:$2 sm:$0xff] %v3187
        %3251 = vst [vmem:[%s3197] ss:$2 sm:$0xff] %v3190
        %3252 = vst [vmem:[%s3199] ss:$2 sm:$0xff] %v3193
        %v3253 = vld.sshfl [vmem:[#allocation1] sm:$0xff pattern:$0x75316420]
        %v3254 = vld.sshfl [vmem:[#allocation1 + $0x10] sm:$0xff pattern:$0x75316420]
        %v3255 = vsel %vm1935, %v3209, 0
        %v3257 = vsel %vm1935, %v3210, 0
        %v3259 = vsel %vm1935, %v3211, 0
        %v3261 = vsel %vm1935, %v3212, 0
        %v3263 = vsel %vm1935, %v3221, 0
        %v3265 = vsel %vm1935, %v3222, 0
        %v3267 = vsel %vm1935, %v3223, 0
        %v3269 = vsel %vm1935, %v3224, 0
        %v3271 = vsel %vm1935, %v3233, 0
        %v3273 = vsel %vm1935, %v3234, 0
        %v3275 = vsel %vm1935, %v3235, 0
        %v3277 = vsel %vm1935, %v3236, 0
        %v3279 = vsel %vm1935, %v3245, 0
        %v3281 = vsel %vm1935, %v3246, 0
        %v3283 = vsel %vm1935, %v3247, 0
        %v3285 = vsel %vm1935, %v3248, 0
        %v3287 = vsel %vm1935, %v3253, 0
        %v3289 = vsel %vm1935, %v3254, 0
        %3291 = vmatpush.msra.mxu0 0.0
        %3292 = vmatpush.msra.mxu0 0.0
        %3293 = vmatpush.msra.mxu0 0.0
        %3294 = vmatpush.msra.mxu0 0.0
        %3295 = vmatpush.msra.mxu0 0.0
        %3296 = vmatpush.msra.mxu0 0.0
        %3297 = vmatpush.msra.mxu0 0.0
        %3298 = vmatpush.msra.mxu0 0.0
        %3299 = vmatpush.msra.mxu0 0.0
        %3300 = vmatpush.msra.mxu0 0.0
        %3301 = vmatpush.msra.mxu0 0.0
        %3302 = vmatpush.msra.mxu0 0.0
        %3303 = vmatpush.msra.mxu0 0.0
        %3304 = vmatpush.msra.mxu0 0.0
        %3305 = vmatpush.msra.mxu0 0.0
        %3306 = vmatpush.msra.mxu0 %v3183
        %3307 = vmatmul.f32.gmra.mxu0 %v3255
        %v3308 = vpop.f32.mrf.mxu0
        %v3309 = vadd.f32 0.0, %v3308
        %3310 = vmatmul.f32.gmra.mxu0 %v3257
        %v3311 = vpop.f32.mrf.mxu0
        %v3312 = vadd.f32 0.0, %v3311
        %3313 = vmatmul.f32.gmra.mxu0 %v3259
        %v3314 = vpop.f32.mrf.mxu0
        %v3315 = vadd.f32 0.0, %v3314
        %3316 = vmatmul.f32.gmra.mxu0 %v3261
        %v3317 = vpop.f32.mrf.mxu0
        %v3318 = vadd.f32 0.0, %v3317
        %3319 = vmatmul.f32.gmra.mxu0 %v3263
        %v3320 = vpop.f32.mrf.mxu0
        %v3321 = vadd.f32 0.0, %v3320
        %3322 = vmatmul.f32.gmra.mxu0 %v3265
        %v3323 = vpop.f32.mrf.mxu0
        %v3324 = vadd.f32 0.0, %v3323
        %3325 = vmatmul.f32.gmra.mxu0 %v3267
        %v3326 = vpop.f32.mrf.mxu0
        %v3327 = vadd.f32 0.0, %v3326
        %3328 = vmatmul.f32.gmra.mxu0 %v3269
        %v3329 = vpop.f32.mrf.mxu0
        %v3330 = vadd.f32 0.0, %v3329
        %3331 = vmatmul.f32.gmra.mxu0 %v3271
        %v3332 = vpop.f32.mrf.mxu0
        %v3333 = vadd.f32 0.0, %v3332
        %3334 = vmatmul.f32.gmra.mxu0 %v3273
        %v3335 = vpop.f32.mrf.mxu0
        %v3336 = vadd.f32 0.0, %v3335
        %3337 = vmatmul.f32.gmra.mxu0 %v3275
        %v3338 = vpop.f32.mrf.mxu0
        %v3339 = vadd.f32 0.0, %v3338
        %3340 = vmatmul.f32.gmra.mxu0 %v3277
        %v3341 = vpop.f32.mrf.mxu0
        %v3342 = vadd.f32 0.0, %v3341
        %3343 = vmatmul.f32.gmra.mxu0 %v3279
        %v3344 = vpop.f32.mrf.mxu0
        %v3345 = vadd.f32 0.0, %v3344
        %3346 = vmatmul.f32.gmra.mxu0 %v3281
        %v3347 = vpop.f32.mrf.mxu0
        %v3348 = vadd.f32 0.0, %v3347
        %3349 = vmatmul.f32.gmra.mxu0 %v3283
        %v3350 = vpop.f32.mrf.mxu0
        %v3351 = vadd.f32 0.0, %v3350
        %3352 = vmatmul.f32.gmra.mxu0 %v3285
        %v3353 = vpop.f32.mrf.mxu0
        %v3354 = vadd.f32 0.0, %v3353
        %3355 = vmatmul.f32.gmra.mxu0 %v3287
        %v3356 = vpop.f32.mrf.mxu0
        %v3357 = vadd.f32 0.0, %v3356
        %3358 = vmatmul.f32.gmra.mxu0 %v3289
        %v3359 = vpop.f32.mrf.mxu0
        %v3360 = vadd.f32 0.0, %v3359
        %3361 = vdwg.mxu0
        %v3380 = vrot.slane %v3309, 4
        %v3381 = vrot.slane %v3312, 4
        %v3382 = vrot.slane %v3315, 4
        %v3383 = vrot.slane %v3318, 4
        %v3384 = vrot.slane %v3321, 4
        %v3385 = vrot.slane %v3324, 4
        %v3386 = vrot.slane %v3327, 4
        %v3387 = vrot.slane %v3330, 4
        %v3388 = vrot.slane %v3333, 4
        %v3389 = vrot.slane %v3336, 4
        %v3390 = vrot.slane %v3339, 4
        %v3391 = vrot.slane %v3342, 4
        %v3392 = vrot.slane %v3345, 4
        %v3393 = vrot.slane %v3348, 4
        %v3394 = vrot.slane %v3351, 4
        %v3395 = vrot.slane %v3354, 4
        %v3396 = vrot.slane %v3357, 4
        %v3397 = vrot.slane %v3360, 4
        %v3416 = vadd.f32 %v3146, %v3309
        %v3417 = vadd.f32 %v3147, %v3380
        %v3418 = vadd.f32 %v3148, %v3312
        %v3419 = vadd.f32 %v3149, %v3381
        %v3420 = vadd.f32 %v3150, %v3315
        %v3421 = vadd.f32 %v3151, %v3382
        %v3422 = vadd.f32 %v3152, %v3318
        %v3423 = vadd.f32 %v3153, %v3383
        %v3424 = vadd.f32 %v3154, %v3321
        %v3425 = vadd.f32 %v3155, %v3384
        %v3426 = vadd.f32 %v3156, %v3324
        %v3427 = vadd.f32 %v3157, %v3385
        %v3428 = vadd.f32 %v3158, %v3327
        %v3429 = vadd.f32 %v3159, %v3386
        %v3430 = vadd.f32 %v3160, %v3330
        %v3431 = vadd.f32 %v3161, %v3387
        %v3432 = vadd.f32 %v3162, %v3333
        %v3433 = vadd.f32 %v3163, %v3388
        %v3434 = vadd.f32 %v3164, %v3336
        %v3435 = vadd.f32 %v3165, %v3389
        %v3436 = vadd.f32 %v3166, %v3339
        %v3437 = vadd.f32 %v3167, %v3390
        %v3438 = vadd.f32 %v3168, %v3342
        %v3439 = vadd.f32 %v3169, %v3391
        %v3440 = vadd.f32 %v3170, %v3345
        %v3441 = vadd.f32 %v3171, %v3392
        %v3442 = vadd.f32 %v3172, %v3348
        %v3443 = vadd.f32 %v3173, %v3393
        %v3444 = vadd.f32 %v3174, %v3351
        %v3445 = vadd.f32 %v3175, %v3394
        %v3446 = vadd.f32 %v3176, %v3354
        %v3447 = vadd.f32 %v3177, %v3395
        %v3448 = vadd.f32 %v3178, %v3357
        %v3449 = vadd.f32 %v3179, %v3396
        %v3450 = vadd.f32 %v3180, %v3360
        %v3451 = vadd.f32 %v3181, %v3397
        %s3452 = scalar_lea.vmem [#allocation5], 48
        %v3453 = vld [vmem:[%s3452] sm:$0xff]
        %v3456 = vrot.slane %v1698, 4
        %3457 = vst [vmem:[#allocation1] ss:$2 sm:$0xff] %v1676
        %s3458 = scalar_lea.vmem [#allocation1], 1
        %3459 = vst [vmem:[%s3458] ss:$2 sm:$0xff] %v1731
        %s3460 = scalar_lea.vmem [#allocation1], 16
        %3461 = vst [vmem:[%s3460] ss:$2 sm:$0xff] %v1677
        %s3462 = scalar_lea.vmem [#allocation1], 17
        %3463 = vst [vmem:[%s3462] ss:$2 sm:$0xff] %v1678
        %s3464 = scalar_lea.vmem [#allocation1], 32
        %3465 = vst [vmem:[%s3464] ss:$2 sm:$0xff] %v1733
        %s3466 = scalar_lea.vmem [#allocation1], 33
        %3467 = vst [vmem:[%s3466] ss:$2 sm:$0xff] %v1679
        %s3468 = scalar_lea.vmem [#allocation1], 48
        %3469 = vst [vmem:[%s3468] ss:$2 sm:$0xff] %v1680
        %s3470 = scalar_lea.vmem [#allocation1], 49
        %3471 = vst [vmem:[%s3470] ss:$2 sm:$0xff] %v1735
        %v3472 = vld.sshfl [vmem:[#allocation1] sm:$0xff pattern:$0x75316420]
        %v3473 = vld.sshfl [vmem:[#allocation1 + $0x10] sm:$0xff pattern:$0x75316420]
        %v3474 = vld.sshfl [vmem:[#allocation1 + $0x20] sm:$0xff pattern:$0x75316420]
        %v3475 = vld.sshfl [vmem:[#allocation1 + $0x30] sm:$0xff pattern:$0x75316420]
        %3476 = vst [vmem:[#allocation1] ss:$2 sm:$0xff] %v1681
        %3477 = vst [vmem:[%s3458] ss:$2 sm:$0xff] %v1682
        %3478 = vst [vmem:[%s3460] ss:$2 sm:$0xff] %v1737
        %3479 = vst [vmem:[%s3462] ss:$2 sm:$0xff] %v1683
        %3480 = vst [vmem:[%s3464] ss:$2 sm:$0xff] %v1684
        %3481 = vst [vmem:[%s3466] ss:$2 sm:$0xff] %v1739
        %3482 = vst [vmem:[%s3468] ss:$2 sm:$0xff] %v1685
        %3483 = vst [vmem:[%s3470] ss:$2 sm:$0xff] %v1686
        %v3484 = vld.sshfl [vmem:[#allocation1] sm:$0xff pattern:$0x75316420]
        %v3485 = vld.sshfl [vmem:[#allocation1 + $0x10] sm:$0xff pattern:$0x75316420]
        %v3486 = vld.sshfl [vmem:[#allocation1 + $0x20] sm:$0xff pattern:$0x75316420]
        %v3487 = vld.sshfl [vmem:[#allocation1 + $0x30] sm:$0xff pattern:$0x75316420]
        %3488 = vst [vmem:[#allocation1] ss:$2 sm:$0xff] %v1741
        %3489 = vst [vmem:[%s3458] ss:$2 sm:$0xff] %v1687
        %3490 = vst [vmem:[%s3460] ss:$2 sm:$0xff] %v1688
        %3491 = vst [vmem:[%s3462] ss:$2 sm:$0xff] %v1743
        %3492 = vst [vmem:[%s3464] ss:$2 sm:$0xff] %v1689
        %3493 = vst [vmem:[%s3466] ss:$2 sm:$0xff] %v1690
        %3494 = vst [vmem:[%s3468] ss:$2 sm:$0xff] %v1745
        %3495 = vst [vmem:[%s3470] ss:$2 sm:$0xff] %v1691
        %v3496 = vld.sshfl [vmem:[#allocation1] sm:$0xff pattern:$0x75316420]
        %v3497 = vld.sshfl [vmem:[#allocation1 + $0x10] sm:$0xff pattern:$0x75316420]
        %v3498 = vld.sshfl [vmem:[#allocation1 + $0x20] sm:$0xff pattern:$0x75316420]
        %v3499 = vld.sshfl [vmem:[#allocation1 + $0x30] sm:$0xff pattern:$0x75316420]
        %3500 = vst [vmem:[#allocation1] ss:$2 sm:$0xff] %v1692
        %3501 = vst [vmem:[%s3458] ss:$2 sm:$0xff] %v1747
        %3502 = vst [vmem:[%s3460] ss:$2 sm:$0xff] %v1693
        %3503 = vst [vmem:[%s3462] ss:$2 sm:$0xff] %v1694
        %3504 = vst [vmem:[%s3464] ss:$2 sm:$0xff] %v1749
        %3505 = vst [vmem:[%s3466] ss:$2 sm:$0xff] %v1695
        %3506 = vst [vmem:[%s3468] ss:$2 sm:$0xff] %v1696
        %3507 = vst [vmem:[%s3470] ss:$2 sm:$0xff] %v2652
        %v3508 = vld.sshfl [vmem:[#allocation1] sm:$0xff pattern:$0x75316420]
        %v3509 = vld.sshfl [vmem:[#allocation1 + $0x10] sm:$0xff pattern:$0x75316420]
        %v3510 = vld.sshfl [vmem:[#allocation1 + $0x20] sm:$0xff pattern:$0x75316420]
        %v3511 = vld.sshfl [vmem:[#allocation1 + $0x30] sm:$0xff pattern:$0x75316420]
        %3512 = vst [vmem:[#allocation1] ss:$2 sm:$0xff] %v1697
        %3513 = vst [vmem:[%s3458] ss:$2 sm:$0xff] %v1698
        %3514 = vst [vmem:[%s3460] ss:$2 sm:$0xff] %v3456
        %3515 = vst [vmem:[%s3462] ss:$2 sm:$0xff] %v1699
        %v3516 = vld.sshfl [vmem:[#allocation1] sm:$0xff pattern:$0x75316420]
        %v3517 = vld.sshfl [vmem:[#allocation1 + $0x10] sm:$0xff pattern:$0x75316420]
        %v3518 = vsel %vm1935, %v3472, 0
        %v3520 = vsel %vm1935, %v3473, 0
        %v3522 = vsel %vm1935, %v3474, 0
        %v3524 = vsel %vm1935, %v3475, 0
        %v3526 = vsel %vm1935, %v3484, 0
        %v3528 = vsel %vm1935, %v3485, 0
        %v3530 = vsel %vm1935, %v3486, 0
        %v3532 = vsel %vm1935, %v3487, 0
        %v3534 = vsel %vm1935, %v3496, 0
        %v3536 = vsel %vm1935, %v3497, 0
        %v3538 = vsel %vm1935, %v3498, 0
        %v3540 = vsel %vm1935, %v3499, 0
        %v3542 = vsel %vm1935, %v3508, 0
        %v3544 = vsel %vm1935, %v3509, 0
        %v3546 = vsel %vm1935, %v3510, 0
        %v3548 = vsel %vm1935, %v3511, 0
        %v3550 = vsel %vm1935, %v3516, 0
        %v3552 = vsel %vm1935, %v3517, 0
        %3554 = vmatpush.msra.mxu0 0.0
        %3555 = vmatpush.msra.mxu0 0.0
        %3556 = vmatpush.msra.mxu0 0.0
        %3557 = vmatpush.msra.mxu0 0.0
        %3558 = vmatpush.msra.mxu0 0.0
        %3559 = vmatpush.msra.mxu0 0.0
        %3560 = vmatpush.msra.mxu0 0.0
        %3561 = vmatpush.msra.mxu0 0.0
        %3562 = vmatpush.msra.mxu0 0.0
        %3563 = vmatpush.msra.mxu0 0.0
        %3564 = vmatpush.msra.mxu0 0.0
        %3565 = vmatpush.msra.mxu0 0.0
        %3566 = vmatpush.msra.mxu0 0.0
        %3567 = vmatpush.msra.mxu0 0.0
        %3568 = vmatpush.msra.mxu0 0.0
        %3569 = vmatpush.msra.mxu0 %v3453
        %3570 = vmatmul.f32.gmra.mxu0 %v3518
        %v3571 = vpop.f32.mrf.mxu0
        %v3572 = vadd.f32 0.0, %v3571
        %3573 = vmatmul.f32.gmra.mxu0 %v3520
        %v3574 = vpop.f32.mrf.mxu0
        %v3575 = vadd.f32 0.0, %v3574
        %3576 = vmatmul.f32.gmra.mxu0 %v3522
        %v3577 = vpop.f32.mrf.mxu0
        %v3578 = vadd.f32 0.0, %v3577
        %3579 = vmatmul.f32.gmra.mxu0 %v3524
        %v3580 = vpop.f32.mrf.mxu0
        %v3581 = vadd.f32 0.0, %v3580
        %3582 = vmatmul.f32.gmra.mxu0 %v3526
        %v3583 = vpop.f32.mrf.mxu0
        %v3584 = vadd.f32 0.0, %v3583
        %3585 = vmatmul.f32.gmra.mxu0 %v3528
        %v3586 = vpop.f32.mrf.mxu0
        %v3587 = vadd.f32 0.0, %v3586
        %3588 = vmatmul.f32.gmra.mxu0 %v3530
        %v3589 = vpop.f32.mrf.mxu0
        %v3590 = vadd.f32 0.0, %v3589
        %3591 = vmatmul.f32.gmra.mxu0 %v3532
        %v3592 = vpop.f32.mrf.mxu0
        %v3593 = vadd.f32 0.0, %v3592
        %3594 = vmatmul.f32.gmra.mxu0 %v3534
        %v3595 = vpop.f32.mrf.mxu0
        %v3596 = vadd.f32 0.0, %v3595
        %3597 = vmatmul.f32.gmra.mxu0 %v3536
        %v3598 = vpop.f32.mrf.mxu0
        %v3599 = vadd.f32 0.0, %v3598
        %3600 = vmatmul.f32.gmra.mxu0 %v3538
        %v3601 = vpop.f32.mrf.mxu0
        %v3602 = vadd.f32 0.0, %v3601
        %3603 = vmatmul.f32.gmra.mxu0 %v3540
        %v3604 = vpop.f32.mrf.mxu0
        %v3605 = vadd.f32 0.0, %v3604
        %3606 = vmatmul.f32.gmra.mxu0 %v3542
        %v3607 = vpop.f32.mrf.mxu0
        %v3608 = vadd.f32 0.0, %v3607
        %3609 = vmatmul.f32.gmra.mxu0 %v3544
        %v3610 = vpop.f32.mrf.mxu0
        %v3611 = vadd.f32 0.0, %v3610
        %3612 = vmatmul.f32.gmra.mxu0 %v3546
        %v3613 = vpop.f32.mrf.mxu0
        %v3614 = vadd.f32 0.0, %v3613
        %3615 = vmatmul.f32.gmra.mxu0 %v3548
        %v3616 = vpop.f32.mrf.mxu0
        %v3617 = vadd.f32 0.0, %v3616
        %3618 = vmatmul.f32.gmra.mxu0 %v3550
        %v3619 = vpop.f32.mrf.mxu0
        %v3620 = vadd.f32 0.0, %v3619
        %3621 = vmatmul.f32.gmra.mxu0 %v3552
        %v3622 = vpop.f32.mrf.mxu0
        %v3623 = vadd.f32 0.0, %v3622
        %3624 = vdwg.mxu0
        %v3643 = vrot.slane %v3572, 4
        %v3644 = vrot.slane %v3575, 4
        %v3645 = vrot.slane %v3578, 4
        %v3646 = vrot.slane %v3581, 4
        %v3647 = vrot.slane %v3584, 4
        %v3648 = vrot.slane %v3587, 4
        %v3649 = vrot.slane %v3590, 4
        %v3650 = vrot.slane %v3593, 4
        %v3651 = vrot.slane %v3596, 4
        %v3652 = vrot.slane %v3599, 4
        %v3653 = vrot.slane %v3602, 4
        %v3654 = vrot.slane %v3605, 4
        %v3655 = vrot.slane %v3608, 4
        %v3656 = vrot.slane %v3611, 4
        %v3657 = vrot.slane %v3614, 4
        %v3658 = vrot.slane %v3617, 4
        %v3659 = vrot.slane %v3620, 4
        %v3660 = vrot.slane %v3623, 4
        %v3679 = vadd.f32 %v3416, %v3572
        %v3680 = vadd.f32 %v3417, %v3643
        %v3681 = vadd.f32 %v3418, %v3575
        %v3682 = vadd.f32 %v3419, %v3644
        %v3683 = vadd.f32 %v3420, %v3578
        %v3684 = vadd.f32 %v3421, %v3645
        %v3685 = vadd.f32 %v3422, %v3581
        %v3686 = vadd.f32 %v3423, %v3646
        %v3687 = vadd.f32 %v3424, %v3584
        %v3688 = vadd.f32 %v3425, %v3647
        %v3689 = vadd.f32 %v3426, %v3587
        %v3690 = vadd.f32 %v3427, %v3648
        %v3691 = vadd.f32 %v3428, %v3590
        %v3692 = vadd.f32 %v3429, %v3649
        %v3693 = vadd.f32 %v3430, %v3593
        %v3694 = vadd.f32 %v3431, %v3650
        %v3695 = vadd.f32 %v3432, %v3596
        %v3696 = vadd.f32 %v3433, %v3651
        %v3697 = vadd.f32 %v3434, %v3599
        %v3698 = vadd.f32 %v3435, %v3652
        %v3699 = vadd.f32 %v3436, %v3602
        %v3700 = vadd.f32 %v3437, %v3653
        %v3701 = vadd.f32 %v3438, %v3605
        %v3702 = vadd.f32 %v3439, %v3654
        %v3703 = vadd.f32 %v3440, %v3608
        %v3704 = vadd.f32 %v3441, %v3655
        %v3705 = vadd.f32 %v3442, %v3611
        %v3706 = vadd.f32 %v3443, %v3656
        %v3707 = vadd.f32 %v3444, %v3614
        %v3708 = vadd.f32 %v3445, %v3657
        %v3709 = vadd.f32 %v3446, %v3617
        %v3710 = vadd.f32 %v3447, %v3658
        %v3711 = vadd.f32 %v3448, %v3620
        %v3712 = vadd.f32 %v3449, %v3659
        %v3713 = vadd.f32 %v3450, %v3623
        %v3714 = vadd.f32 %v3451, %v3660
        %s3715 = scalar_lea.vmem [#allocation5], 56
        %v3716 = vld [vmem:[%s3715] sm:$0xff]
        %v3717 = vrot.slane %v1699, 4
        %v3718 = vrot.slane %v1698, 5
        %v3719 = vrot.slane %v3718, 4
        %v3720 = vrot.slane %v3456, 5
        %v3721 = vsel %vm1753, %v3719, %v3720
        %v3722 = vrot.slane %v3720, 4
        %v3723 = vrot.slane %v1699, 5
        %v3724 = vsel %vm1753, %v3722, %v3723
        %v3725 = vrot.slane %v3723, 4
        %v3726 = vrot.slane %v3717, 5
        %v3727 = vsel %vm1753, %v3725, %v3726
        %3728 = vst [vmem:[#allocation1] ss:$2 sm:$0xff] %v1777
        %s3729 = scalar_lea.vmem [#allocation1], 1
        %3730 = vst [vmem:[%s3729] ss:$2 sm:$0xff] %v1780
        %s3731 = scalar_lea.vmem [#allocation1], 16
        %3732 = vst [vmem:[%s3731] ss:$2 sm:$0xff] %v1783
        %s3733 = scalar_lea.vmem [#allocation1], 17
        %3734 = vst [vmem:[%s3733] ss:$2 sm:$0xff] %v1787
        %s3735 = scalar_lea.vmem [#allocation1], 32
        %3736 = vst [vmem:[%s3735] ss:$2 sm:$0xff] %v1790
        %s3737 = scalar_lea.vmem [#allocation1], 33
        %3738 = vst [vmem:[%s3737] ss:$2 sm:$0xff] %v1793
        %s3739 = scalar_lea.vmem [#allocation1], 48
        %3740 = vst [vmem:[%s3739] ss:$2 sm:$0xff] %v1797
        %s3741 = scalar_lea.vmem [#allocation1], 49
        %3742 = vst [vmem:[%s3741] ss:$2 sm:$0xff] %v1800
        %v3743 = vld.sshfl [vmem:[#allocation1] sm:$0xff pattern:$0x75316420]
        %v3744 = vld.sshfl [vmem:[#allocation1 + $0x10] sm:$0xff pattern:$0x75316420]
        %v3745 = vld.sshfl [vmem:[#allocation1 + $0x20] sm:$0xff pattern:$0x75316420]
        %v3746 = vld.sshfl [vmem:[#allocation1 + $0x30] sm:$0xff pattern:$0x75316420]
        %3747 = vst [vmem:[#allocation1] ss:$2 sm:$0xff] %v1803
        %3748 = vst [vmem:[%s3729] ss:$2 sm:$0xff] %v1807
        %3749 = vst [vmem:[%s3731] ss:$2 sm:$0xff] %v1810
        %3750 = vst [vmem:[%s3733] ss:$2 sm:$0xff] %v1813
        %3751 = vst [vmem:[%s3735] ss:$2 sm:$0xff] %v1817
        %3752 = vst [vmem:[%s3737] ss:$2 sm:$0xff] %v1820
        %3753 = vst [vmem:[%s3739] ss:$2 sm:$0xff] %v1823
        %3754 = vst [vmem:[%s3741] ss:$2 sm:$0xff] %v1827
        %v3755 = vld.sshfl [vmem:[#allocation1] sm:$0xff pattern:$0x75316420]
        %v3756 = vld.sshfl [vmem:[#allocation1 + $0x10] sm:$0xff pattern:$0x75316420]
        %v3757 = vld.sshfl [vmem:[#allocation1 + $0x20] sm:$0xff pattern:$0x75316420]
        %v3758 = vld.sshfl [vmem:[#allocation1 + $0x30] sm:$0xff pattern:$0x75316420]
        %3759 = vst [vmem:[#allocation1] ss:$2 sm:$0xff] %v1830
        %3760 = vst [vmem:[%s3729] ss:$2 sm:$0xff] %v1833
        %3761 = vst [vmem:[%s3731] ss:$2 sm:$0xff] %v1837
        %3762 = vst [vmem:[%s3733] ss:$2 sm:$0xff] %v1840
        %3763 = vst [vmem:[%s3735] ss:$2 sm:$0xff] %v1843
        %3764 = vst [vmem:[%s3737] ss:$2 sm:$0xff] %v1847
        %3765 = vst [vmem:[%s3739] ss:$2 sm:$0xff] %v1850
        %3766 = vst [vmem:[%s3741] ss:$2 sm:$0xff] %v1853
        %v3767 = vld.sshfl [vmem:[#allocation1] sm:$0xff pattern:$0x75316420]
        %v3768 = vld.sshfl [vmem:[#allocation1 + $0x10] sm:$0xff pattern:$0x75316420]
        %v3769 = vld.sshfl [vmem:[#allocation1 + $0x20] sm:$0xff pattern:$0x75316420]
        %v3770 = vld.sshfl [vmem:[#allocation1 + $0x30] sm:$0xff pattern:$0x75316420]
        %3771 = vst [vmem:[#allocation1] ss:$2 sm:$0xff] %v1857
        %3772 = vst [vmem:[%s3729] ss:$2 sm:$0xff] %v1860
        %3773 = vst [vmem:[%s3731] ss:$2 sm:$0xff] %v1863
        %3774 = vst [vmem:[%s3733] ss:$2 sm:$0xff] %v1867
        %3775 = vst [vmem:[%s3735] ss:$2 sm:$0xff] %v1870
        %3776 = vst [vmem:[%s3737] ss:$2 sm:$0xff] %v1873
        %3777 = vst [vmem:[%s3739] ss:$2 sm:$0xff] %v2917
        %3778 = vst [vmem:[%s3741] ss:$2 sm:$0xff] %v2920
        %v3779 = vld.sshfl [vmem:[#allocation1] sm:$0xff pattern:$0x75316420]
        %v3780 = vld.sshfl [vmem:[#allocation1 + $0x10] sm:$0xff pattern:$0x75316420]
        %v3781 = vld.sshfl [vmem:[#allocation1 + $0x20] sm:$0xff pattern:$0x75316420]
        %v3782 = vld.sshfl [vmem:[#allocation1 + $0x30] sm:$0xff pattern:$0x75316420]
        %3783 = vst [vmem:[#allocation1] ss:$2 sm:$0xff] %v2923
        %3784 = vst [vmem:[%s3729] ss:$2 sm:$0xff] %v3721
        %3785 = vst [vmem:[%s3731] ss:$2 sm:$0xff] %v3724
        %3786 = vst [vmem:[%s3733] ss:$2 sm:$0xff] %v3727
        %v3787 = vld.sshfl [vmem:[#allocation1] sm:$0xff pattern:$0x75316420]
        %v3788 = vld.sshfl [vmem:[#allocation1 + $0x10] sm:$0xff pattern:$0x75316420]
        %v3789 = vsel %vm1935, %v3743, 0
        %v3791 = vsel %vm1935, %v3744, 0
        %v3793 = vsel %vm1935, %v3745, 0
        %v3795 = vsel %vm1935, %v3746, 0
        %v3797 = vsel %vm1935, %v3755, 0
        %v3799 = vsel %vm1935, %v3756, 0
        %v3801 = vsel %vm1935, %v3757, 0
        %v3803 = vsel %vm1935, %v3758, 0
        %v3805 = vsel %vm1935, %v3767, 0
        %v3807 = vsel %vm1935, %v3768, 0
        %v3809 = vsel %vm1935, %v3769, 0
        %v3811 = vsel %vm1935, %v3770, 0
        %v3813 = vsel %vm1935, %v3779, 0
        %v3815 = vsel %vm1935, %v3780, 0
        %v3817 = vsel %vm1935, %v3781, 0
        %v3819 = vsel %vm1935, %v3782, 0
        %v3821 = vsel %vm1935, %v3787, 0
        %v3823 = vsel %vm1935, %v3788, 0
        %3825 = vmatpush.msra.mxu0 0.0
        %3826 = vmatpush.msra.mxu0 0.0
        %3827 = vmatpush.msra.mxu0 0.0
        %3828 = vmatpush.msra.mxu0 0.0
        %3829 = vmatpush.msra.mxu0 0.0
        %3830 = vmatpush.msra.mxu0 0.0
        %3831 = vmatpush.msra.mxu0 0.0
        %3832 = vmatpush.msra.mxu0 0.0
        %3833 = vmatpush.msra.mxu0 0.0
        %3834 = vmatpush.msra.mxu0 0.0
        %3835 = vmatpush.msra.mxu0 0.0
        %3836 = vmatpush.msra.mxu0 0.0
        %3837 = vmatpush.msra.mxu0 0.0
        %3838 = vmatpush.msra.mxu0 0.0
        %3839 = vmatpush.msra.mxu0 0.0
        %3840 = vmatpush.msra.mxu0 %v3716
        %3841 = vmatmul.f32.gmra.mxu0 %v3789
        %v3842 = vpop.f32.mrf.mxu0
        %v3843 = vadd.f32 0.0, %v3842
        %3844 = vmatmul.f32.gmra.mxu0 %v3791
        %v3845 = vpop.f32.mrf.mxu0
        %v3846 = vadd.f32 0.0, %v3845
        %3847 = vmatmul.f32.gmra.mxu0 %v3793
        %v3848 = vpop.f32.mrf.mxu0
        %v3849 = vadd.f32 0.0, %v3848
        %3850 = vmatmul.f32.gmra.mxu0 %v3795
        %v3851 = vpop.f32.mrf.mxu0
        %v3852 = vadd.f32 0.0, %v3851
        %3853 = vmatmul.f32.gmra.mxu0 %v3797
        %v3854 = vpop.f32.mrf.mxu0
        %v3855 = vadd.f32 0.0, %v3854
        %3856 = vmatmul.f32.gmra.mxu0 %v3799
        %v3857 = vpop.f32.mrf.mxu0
        %v3858 = vadd.f32 0.0, %v3857
        %3859 = vmatmul.f32.gmra.mxu0 %v3801
        %v3860 = vpop.f32.mrf.mxu0
        %v3861 = vadd.f32 0.0, %v3860
        %3862 = vmatmul.f32.gmra.mxu0 %v3803
        %v3863 = vpop.f32.mrf.mxu0
        %v3864 = vadd.f32 0.0, %v3863
        %3865 = vmatmul.f32.gmra.mxu0 %v3805
        %v3866 = vpop.f32.mrf.mxu0
        %v3867 = vadd.f32 0.0, %v3866
        %3868 = vmatmul.f32.gmra.mxu0 %v3807
        %v3869 = vpop.f32.mrf.mxu0
        %v3870 = vadd.f32 0.0, %v3869
        %3871 = vmatmul.f32.gmra.mxu0 %v3809
        %v3872 = vpop.f32.mrf.mxu0
        %v3873 = vadd.f32 0.0, %v3872
        %3874 = vmatmul.f32.gmra.mxu0 %v3811
        %v3875 = vpop.f32.mrf.mxu0
        %v3876 = vadd.f32 0.0, %v3875
        %3877 = vmatmul.f32.gmra.mxu0 %v3813
        %v3878 = vpop.f32.mrf.mxu0
        %v3879 = vadd.f32 0.0, %v3878
        %3880 = vmatmul.f32.gmra.mxu0 %v3815
        %v3881 = vpop.f32.mrf.mxu0
        %v3882 = vadd.f32 0.0, %v3881
        %3883 = vmatmul.f32.gmra.mxu0 %v3817
        %v3884 = vpop.f32.mrf.mxu0
        %v3885 = vadd.f32 0.0, %v3884
        %3886 = vmatmul.f32.gmra.mxu0 %v3819
        %v3887 = vpop.f32.mrf.mxu0
        %v3888 = vadd.f32 0.0, %v3887
        %3889 = vmatmul.f32.gmra.mxu0 %v3821
        %v3890 = vpop.f32.mrf.mxu0
        %v3891 = vadd.f32 0.0, %v3890
        %3892 = vmatmul.f32.gmra.mxu0 %v3823
        %v3893 = vpop.f32.mrf.mxu0
        %v3894 = vadd.f32 0.0, %v3893
        %3895 = vdwg.mxu0
        %v3914 = vrot.slane %v3843, 4
        %v3915 = vrot.slane %v3846, 4
        %v3916 = vrot.slane %v3849, 4
        %v3917 = vrot.slane %v3852, 4
        %v3918 = vrot.slane %v3855, 4
        %v3919 = vrot.slane %v3858, 4
        %v3920 = vrot.slane %v3861, 4
        %v3921 = vrot.slane %v3864, 4
        %v3922 = vrot.slane %v3867, 4
        %v3923 = vrot.slane %v3870, 4
        %v3924 = vrot.slane %v3873, 4
        %v3925 = vrot.slane %v3876, 4
        %v3926 = vrot.slane %v3879, 4
        %v3927 = vrot.slane %v3882, 4
        %v3928 = vrot.slane %v3885, 4
        %v3929 = vrot.slane %v3888, 4
        %v3930 = vrot.slane %v3891, 4
        %v3931 = vrot.slane %v3894, 4
        %v3950 = vadd.f32 %v3679, %v3843
        %v3951 = vadd.f32 %v3680, %v3914
        %v3952 = vadd.f32 %v3681, %v3846
        %v3953 = vadd.f32 %v3682, %v3915
        %v3954 = vadd.f32 %v3683, %v3849
        %v3955 = vadd.f32 %v3684, %v3916
        %v3956 = vadd.f32 %v3685, %v3852
        %v3957 = vadd.f32 %v3686, %v3917
        %v3958 = vadd.f32 %v3687, %v3855
        %v3959 = vadd.f32 %v3688, %v3918
        %v3960 = vadd.f32 %v3689, %v3858
        %v3961 = vadd.f32 %v3690, %v3919
        %v3962 = vadd.f32 %v3691, %v3861
        %v3963 = vadd.f32 %v3692, %v3920
        %v3964 = vadd.f32 %v3693, %v3864
        %v3965 = vadd.f32 %v3694, %v3921
        %v3966 = vadd.f32 %v3695, %v3867
        %v3967 = vadd.f32 %v3696, %v3922
        %v3968 = vadd.f32 %v3697, %v3870
        %v3969 = vadd.f32 %v3698, %v3923
        %v3970 = vadd.f32 %v3699, %v3873
        %v3971 = vadd.f32 %v3700, %v3924
        %v3972 = vadd.f32 %v3701, %v3876
        %v3973 = vadd.f32 %v3702, %v3925
        %v3974 = vadd.f32 %v3703, %v3879
        %v3975 = vadd.f32 %v3704, %v3926
        %v3976 = vadd.f32 %v3705, %v3882
        %v3977 = vadd.f32 %v3706, %v3927
        %v3978 = vadd.f32 %v3707, %v3885
        %v3979 = vadd.f32 %v3708, %v3928
        %v3980 = vadd.f32 %v3709, %v3888
        %v3981 = vadd.f32 %v3710, %v3929
        %v3982 = vadd.f32 %v3711, %v3891
        %v3983 = vadd.f32 %v3712, %v3930
        %v3984 = vadd.f32 %v3713, %v3894
        %v3985 = vadd.f32 %v3714, %v3931
        %s3986 = scalar_lea.vmem [#allocation5], 64
        %v3987 = vld [vmem:[%s3986] sm:$0xff]
        %v3988 = vrot.slane %v1698, 6
        %v3989 = vrot.slane %v3988, 4
        %v3990 = vrot.slane %v3456, 6
        %v3991 = vsel %vm2269, %v3989, %v3990
        %v3992 = vrot.slane %v3990, 4
        %v3993 = vrot.slane %v1699, 6
        %v3994 = vsel %vm2269, %v3992, %v3993
        %v3995 = vrot.slane %v3993, 4
        %v3996 = vrot.slane %v3717, 6
        %v3997 = vsel %vm2269, %v3995, %v3996
        %3998 = vst [vmem:[#allocation1] ss:$2 sm:$0xff] %v2293
        %s3999 = scalar_lea.vmem [#allocation1], 1
        %4000 = vst [vmem:[%s3999] ss:$2 sm:$0xff] %v2296
        %s4001 = scalar_lea.vmem [#allocation1], 16
        %4002 = vst [vmem:[%s4001] ss:$2 sm:$0xff] %v2299
        %s4003 = scalar_lea.vmem [#allocation1], 17
        %4004 = vst [vmem:[%s4003] ss:$2 sm:$0xff] %v2303
        %s4005 = scalar_lea.vmem [#allocation1], 32
        %4006 = vst [vmem:[%s4005] ss:$2 sm:$0xff] %v2306
        %s4007 = scalar_lea.vmem [#allocation1], 33
        %4008 = vst [vmem:[%s4007] ss:$2 sm:$0xff] %v2309
        %s4009 = scalar_lea.vmem [#allocation1], 48
        %4010 = vst [vmem:[%s4009] ss:$2 sm:$0xff] %v2313
        %s4011 = scalar_lea.vmem [#allocation1], 49
        %4012 = vst [vmem:[%s4011] ss:$2 sm:$0xff] %v2316
        %v4013 = vld.sshfl [vmem:[#allocation1] sm:$0xff pattern:$0x75316420]
        %v4014 = vld.sshfl [vmem:[#allocation1 + $0x10] sm:$0xff pattern:$0x75316420]
        %v4015 = vld.sshfl [vmem:[#allocation1 + $0x20] sm:$0xff pattern:$0x75316420]
        %v4016 = vld.sshfl [vmem:[#allocation1 + $0x30] sm:$0xff pattern:$0x75316420]
        %4017 = vst [vmem:[#allocation1] ss:$2 sm:$0xff] %v2319
        %4018 = vst [vmem:[%s3999] ss:$2 sm:$0xff] %v2323
        %4019 = vst [vmem:[%s4001] ss:$2 sm:$0xff] %v2326
        %4020 = vst [vmem:[%s4003] ss:$2 sm:$0xff] %v2329
        %4021 = vst [vmem:[%s4005] ss:$2 sm:$0xff] %v2333
        %4022 = vst [vmem:[%s4007] ss:$2 sm:$0xff] %v2336
        %4023 = vst [vmem:[%s4009] ss:$2 sm:$0xff] %v2339
        %4024 = vst [vmem:[%s4011] ss:$2 sm:$0xff] %v2343
        %v4025 = vld.sshfl [vmem:[#allocation1] sm:$0xff pattern:$0x75316420]
        %v4026 = vld.sshfl [vmem:[#allocation1 + $0x10] sm:$0xff pattern:$0x75316420]
        %v4027 = vld.sshfl [vmem:[#allocation1 + $0x20] sm:$0xff pattern:$0x75316420]
        %v4028 = vld.sshfl [vmem:[#allocation1 + $0x30] sm:$0xff pattern:$0x75316420]
        %4029 = vst [vmem:[#allocation1] ss:$2 sm:$0xff] %v2346
        %4030 = vst [vmem:[%s3999] ss:$2 sm:$0xff] %v2349
        %4031 = vst [vmem:[%s4001] ss:$2 sm:$0xff] %v2353
        %4032 = vst [vmem:[%s4003] ss:$2 sm:$0xff] %v2356
        %4033 = vst [vmem:[%s4005] ss:$2 sm:$0xff] %v2359
        %4034 = vst [vmem:[%s4007] ss:$2 sm:$0xff] %v2363
        %4035 = vst [vmem:[%s4009] ss:$2 sm:$0xff] %v2366
        %4036 = vst [vmem:[%s4011] ss:$2 sm:$0xff] %v2369
        %v4037 = vld.sshfl [vmem:[#allocation1] sm:$0xff pattern:$0x75316420]
        %v4038 = vld.sshfl [vmem:[#allocation1 + $0x10] sm:$0xff pattern:$0x75316420]
        %v4039 = vld.sshfl [vmem:[#allocation1 + $0x20] sm:$0xff pattern:$0x75316420]
        %v4040 = vld.sshfl [vmem:[#allocation1 + $0x30] sm:$0xff pattern:$0x75316420]
        %4041 = vst [vmem:[#allocation1] ss:$2 sm:$0xff] %v2373
        %4042 = vst [vmem:[%s3999] ss:$2 sm:$0xff] %v2376
        %4043 = vst [vmem:[%s4001] ss:$2 sm:$0xff] %v2379
        %4044 = vst [vmem:[%s4003] ss:$2 sm:$0xff] %v2383
        %4045 = vst [vmem:[%s4005] ss:$2 sm:$0xff] %v2386
        %4046 = vst [vmem:[%s4007] ss:$2 sm:$0xff] %v2389
        %4047 = vst [vmem:[%s4009] ss:$2 sm:$0xff] %v3187
        %4048 = vst [vmem:[%s4011] ss:$2 sm:$0xff] %v3190
        %v4049 = vld.sshfl [vmem:[#allocation1] sm:$0xff pattern:$0x75316420]
        %v4050 = vld.sshfl [vmem:[#allocation1 + $0x10] sm:$0xff pattern:$0x75316420]
        %v4051 = vld.sshfl [vmem:[#allocation1 + $0x20] sm:$0xff pattern:$0x75316420]
        %v4052 = vld.sshfl [vmem:[#allocation1 + $0x30] sm:$0xff pattern:$0x75316420]
        %4053 = vst [vmem:[#allocation1] ss:$2 sm:$0xff] %v3193
        %4054 = vst [vmem:[%s3999] ss:$2 sm:$0xff] %v3991
        %4055 = vst [vmem:[%s4001] ss:$2 sm:$0xff] %v3994
        %4056 = vst [vmem:[%s4003] ss:$2 sm:$0xff] %v3997
        %v4057 = vld.sshfl [vmem:[#allocation1] sm:$0xff pattern:$0x75316420]
        %v4058 = vld.sshfl [vmem:[#allocation1 + $0x10] sm:$0xff pattern:$0x75316420]
        %v4059 = vsel %vm1935, %v4013, 0
        %v4061 = vsel %vm1935, %v4014, 0
        %v4063 = vsel %vm1935, %v4015, 0
        %v4065 = vsel %vm1935, %v4016, 0
        %v4067 = vsel %vm1935, %v4025, 0
        %v4069 = vsel %vm1935, %v4026, 0
        %v4071 = vsel %vm1935, %v4027, 0
        %v4073 = vsel %vm1935, %v4028, 0
        %v4075 = vsel %vm1935, %v4037, 0
        %v4077 = vsel %vm1935, %v4038, 0
        %v4079 = vsel %vm1935, %v4039, 0
        %v4081 = vsel %vm1935, %v4040, 0
        %v4083 = vsel %vm1935, %v4049, 0
        %v4085 = vsel %vm1935, %v4050, 0
        %v4087 = vsel %vm1935, %v4051, 0
        %v4089 = vsel %vm1935, %v4052, 0
        %v4091 = vsel %vm1935, %v4057, 0
        %v4093 = vsel %vm1935, %v4058, 0
        %4095 = vmatpush.msra.mxu0 0.0
        %4096 = vmatpush.msra.mxu0 0.0
        %4097 = vmatpush.msra.mxu0 0.0
        %4098 = vmatpush.msra.mxu0 0.0
        %4099 = vmatpush.msra.mxu0 0.0
        %4100 = vmatpush.msra.mxu0 0.0
        %4101 = vmatpush.msra.mxu0 0.0
        %4102 = vmatpush.msra.mxu0 0.0
        %4103 = vmatpush.msra.mxu0 0.0
        %4104 = vmatpush.msra.mxu0 0.0
        %4105 = vmatpush.msra.mxu0 0.0
        %4106 = vmatpush.msra.mxu0 0.0
        %4107 = vmatpush.msra.mxu0 0.0
        %4108 = vmatpush.msra.mxu0 0.0
        %4109 = vmatpush.msra.mxu0 0.0
        %4110 = vmatpush.msra.mxu0 %v3987
        %4111 = vmatmul.f32.gmra.mxu0 %v4059
        %v4112 = vpop.f32.mrf.mxu0
        %v4113 = vadd.f32 0.0, %v4112
        %4114 = vmatmul.f32.gmra.mxu0 %v4061
        %v4115 = vpop.f32.mrf.mxu0
        %v4116 = vadd.f32 0.0, %v4115
        %4117 = vmatmul.f32.gmra.mxu0 %v4063
        %v4118 = vpop.f32.mrf.mxu0
        %v4119 = vadd.f32 0.0, %v4118
        %4120 = vmatmul.f32.gmra.mxu0 %v4065
        %v4121 = vpop.f32.mrf.mxu0
        %v4122 = vadd.f32 0.0, %v4121
        %4123 = vmatmul.f32.gmra.mxu0 %v4067
        %v4124 = vpop.f32.mrf.mxu0
        %v4125 = vadd.f32 0.0, %v4124
        %4126 = vmatmul.f32.gmra.mxu0 %v4069
        %v4127 = vpop.f32.mrf.mxu0
        %v4128 = vadd.f32 0.0, %v4127
        %4129 = vmatmul.f32.gmra.mxu0 %v4071
        %v4130 = vpop.f32.mrf.mxu0
        %v4131 = vadd.f32 0.0, %v4130
        %4132 = vmatmul.f32.gmra.mxu0 %v4073
        %v4133 = vpop.f32.mrf.mxu0
        %v4134 = vadd.f32 0.0, %v4133
        %4135 = vmatmul.f32.gmra.mxu0 %v4075
        %v4136 = vpop.f32.mrf.mxu0
        %v4137 = vadd.f32 0.0, %v4136
        %4138 = vmatmul.f32.gmra.mxu0 %v4077
        %v4139 = vpop.f32.mrf.mxu0
        %v4140 = vadd.f32 0.0, %v4139
        %4141 = vmatmul.f32.gmra.mxu0 %v4079
        %v4142 = vpop.f32.mrf.mxu0
        %v4143 = vadd.f32 0.0, %v4142
        %4144 = vmatmul.f32.gmra.mxu0 %v4081
        %v4145 = vpop.f32.mrf.mxu0
        %v4146 = vadd.f32 0.0, %v4145
        %4147 = vmatmul.f32.gmra.mxu0 %v4083
        %v4148 = vpop.f32.mrf.mxu0
        %v4149 = vadd.f32 0.0, %v4148
        %4150 = vmatmul.f32.gmra.mxu0 %v4085
        %v4151 = vpop.f32.mrf.mxu0
        %v4152 = vadd.f32 0.0, %v4151
        %4153 = vmatmul.f32.gmra.mxu0 %v4087
        %v4154 = vpop.f32.mrf.mxu0
        %v4155 = vadd.f32 0.0, %v4154
        %4156 = vmatmul.f32.gmra.mxu0 %v4089
        %v4157 = vpop.f32.mrf.mxu0
        %v4158 = vadd.f32 0.0, %v4157
        %4159 = vmatmul.f32.gmra.mxu0 %v4091
        %v4160 = vpop.f32.mrf.mxu0
        %v4161 = vadd.f32 0.0, %v4160
        %4162 = vmatmul.f32.gmra.mxu0 %v4093
        %v4163 = vpop.f32.mrf.mxu0
        %v4164 = vadd.f32 0.0, %v4163
        %4165 = vdwg.mxu0
        %v4184 = vrot.slane %v4113, 4
        %v4185 = vrot.slane %v4116, 4
        %v4186 = vrot.slane %v4119, 4
        %v4187 = vrot.slane %v4122, 4
        %v4188 = vrot.slane %v4125, 4
        %v4189 = vrot.slane %v4128, 4
        %v4190 = vrot.slane %v4131, 4
        %v4191 = vrot.slane %v4134, 4
        %v4192 = vrot.slane %v4137, 4
        %v4193 = vrot.slane %v4140, 4
        %v4194 = vrot.slane %v4143, 4
        %v4195 = vrot.slane %v4146, 4
        %v4196 = vrot.slane %v4149, 4
        %v4197 = vrot.slane %v4152, 4
        %v4198 = vrot.slane %v4155, 4
        %v4199 = vrot.slane %v4158, 4
        %v4200 = vrot.slane %v4161, 4
        %v4201 = vrot.slane %v4164, 4
        %v4220 = vadd.f32 %v3950, %v4113
        %v4221 = vadd.f32 %v3951, %v4184
        %v4222 = vadd.f32 %v3952, %v4116
        %v4223 = vadd.f32 %v3953, %v4185
        %v4224 = vadd.f32 %v3954, %v4119
        %v4225 = vadd.f32 %v3955, %v4186
        %v4226 = vadd.f32 %v3956, %v4122
        %v4227 = vadd.f32 %v3957, %v4187
        %v4228 = vadd.f32 %v3958, %v4125
        %v4229 = vadd.f32 %v3959, %v4188
        %v4230 = vadd.f32 %v3960, %v4128
        %v4231 = vadd.f32 %v3961, %v4189
        %v4232 = vadd.f32 %v3962, %v4131
        %v4233 = vadd.f32 %v3963, %v4190
        %v4234 = vadd.f32 %v3964, %v4134
        %v4235 = vadd.f32 %v3965, %v4191
        %v4236 = vadd.f32 %v3966, %v4137
        %v4237 = vadd.f32 %v3967, %v4192
        %v4238 = vadd.f32 %v3968, %v4140
        %v4239 = vadd.f32 %v3969, %v4193
        %v4240 = vadd.f32 %v3970, %v4143
        %v4241 = vadd.f32 %v3971, %v4194
        %v4242 = vadd.f32 %v3972, %v4146
        %v4243 = vadd.f32 %v3973, %v4195
        %v4244 = vadd.f32 %v3974, %v4149
        %v4245 = vadd.f32 %v3975, %v4196
        %v4246 = vadd.f32 %v3976, %v4152
        %v4247 = vadd.f32 %v3977, %v4197
        %v4248 = vadd.f32 %v3978, %v4155
        %v4249 = vadd.f32 %v3979, %v4198
        %v4250 = vadd.f32 %v3980, %v4158
        %v4251 = vadd.f32 %v3981, %v4199
        %v4252 = vadd.f32 %v3982, %v4161
        %v4253 = vadd.f32 %v3983, %v4200
        %v4254 = vadd.f32 %v3984, %v4164
        %v4255 = vadd.f32 %v3985, %v4201
        %v4256 = vld [vmem:[%s4] sm:$0x1]
        %v4258 = vperm.slane %v4256, 0
        %v4260 = vrot.slane %v4258, 4
        %v4262 = vadd.f32 %v4220, %v4258
        %v4263 = vadd.f32 %v4221, %v4260
        %v4264 = vadd.f32 %v4222, %v4258
        %v4265 = vadd.f32 %v4223, %v4258
        %v4266 = vadd.f32 %v4224, %v4260
        %v4267 = vadd.f32 %v4225, %v4258
        %v4268 = vadd.f32 %v4226, %v4258
        %v4269 = vadd.f32 %v4227, %v4260
        %v4270 = vadd.f32 %v4228, %v4258
        %v4271 = vadd.f32 %v4229, %v4258
        %v4272 = vadd.f32 %v4230, %v4260
        %v4273 = vadd.f32 %v4231, %v4258
        %v4274 = vadd.f32 %v4232, %v4258
        %v4275 = vadd.f32 %v4233, %v4260
        %v4276 = vadd.f32 %v4234, %v4258
        %v4277 = vadd.f32 %v4235, %v4258
        %v4278 = vadd.f32 %v4236, %v4260
        %v4279 = vadd.f32 %v4237, %v4258
        %v4280 = vadd.f32 %v4238, %v4258
        %v4281 = vadd.f32 %v4239, %v4260
        %v4282 = vadd.f32 %v4240, %v4258
        %v4283 = vadd.f32 %v4241, %v4258
        %v4284 = vadd.f32 %v4242, %v4260
        %v4285 = vadd.f32 %v4243, %v4258
        %v4286 = vadd.f32 %v4244, %v4258
        %v4287 = vadd.f32 %v4245, %v4260
        %v4288 = vadd.f32 %v4246, %v4258
        %v4289 = vadd.f32 %v4247, %v4258
        %v4290 = vadd.f32 %v4248, %v4260
        %v4291 = vadd.f32 %v4249, %v4258
        %v4292 = vadd.f32 %v4250, %v4258
        %v4293 = vadd.f32 %v4251, %v4260
        %v4294 = vadd.f32 %v4252, %v4258
        %v4295 = vadd.f32 %v4253, %v4258
        %v4296 = vadd.f32 %v4254, %v4260
        %v4297 = vadd.f32 %v4255, %v4258
        %vm4298 = vcmp.gt.f32.partialorder %v4262, 0.0
        %vm4299 = vcmp.gt.f32.partialorder %v4263, 0.0
        %vm4300 = vcmp.gt.f32.partialorder %v4264, 0.0
        %vm4301 = vcmp.gt.f32.partialorder %v4265, 0.0
        %vm4302 = vcmp.gt.f32.partialorder %v4266, 0.0
        %vm4303 = vcmp.gt.f32.partialorder %v4267, 0.0
        %vm4304 = vcmp.gt.f32.partialorder %v4268, 0.0
        %vm4305 = vcmp.gt.f32.partialorder %v4269, 0.0
        %vm4306 = vcmp.gt.f32.partialorder %v4270, 0.0
        %vm4307 = vcmp.gt.f32.partialorder %v4271, 0.0
        %vm4308 = vcmp.gt.f32.partialorder %v4272, 0.0
        %vm4309 = vcmp.gt.f32.partialorder %v4273, 0.0
        %vm4310 = vcmp.gt.f32.partialorder %v4274, 0.0
        %vm4311 = vcmp.gt.f32.partialorder %v4275, 0.0
        %vm4312 = vcmp.gt.f32.partialorder %v4276, 0.0
        %vm4313 = vcmp.gt.f32.partialorder %v4277, 0.0
        %vm4314 = vcmp.gt.f32.partialorder %v4278, 0.0
        %vm4315 = vcmp.gt.f32.partialorder %v4279, 0.0
        %vm4316 = vcmp.gt.f32.partialorder %v4280, 0.0
        %vm4317 = vcmp.gt.f32.partialorder %v4281, 0.0
        %vm4318 = vcmp.gt.f32.partialorder %v4282, 0.0
        %vm4319 = vcmp.gt.f32.partialorder %v4283, 0.0
        %vm4320 = vcmp.gt.f32.partialorder %v4284, 0.0
        %vm4321 = vcmp.gt.f32.partialorder %v4285, 0.0
        %vm4322 = vcmp.gt.f32.partialorder %v4286, 0.0
        %vm4323 = vcmp.gt.f32.partialorder %v4287, 0.0
        %vm4324 = vcmp.gt.f32.partialorder %v4288, 0.0
        %vm4325 = vcmp.gt.f32.partialorder %v4289, 0.0
        %vm4326 = vcmp.gt.f32.partialorder %v4290, 0.0
        %vm4327 = vcmp.gt.f32.partialorder %v4291, 0.0
        %vm4328 = vcmp.gt.f32.partialorder %v4292, 0.0
        %vm4329 = vcmp.gt.f32.partialorder %v4293, 0.0
        %vm4330 = vcmp.gt.f32.partialorder %v4294, 0.0
        %vm4331 = vcmp.gt.f32.partialorder %v4295, 0.0
        %vm4332 = vcmp.gt.f32.partialorder %v4296, 0.0
        %vm4333 = vcmp.gt.f32.partialorder %v4297, 0.0
        %v4334 = vmul.f32 %v4262, 1.442695
        %v4335 = vpow.pop %v4334
        %v4336 = vmul.f32 %v4263, 1.442695
        %v4337 = vpow.pop %v4336
        %v4338 = vmul.f32 %v4264, 1.442695
        %v4339 = vpow.pop %v4338
        %v4340 = vmul.f32 %v4265, 1.442695
        %v4341 = vpow.pop %v4340
        %v4342 = vmul.f32 %v4266, 1.442695
        %v4343 = vpow.pop %v4342
        %v4344 = vmul.f32 %v4267, 1.442695
        %v4345 = vpow.pop %v4344
        %v4346 = vmul.f32 %v4268, 1.442695
        %v4347 = vpow.pop %v4346
        %v4348 = vmul.f32 %v4269, 1.442695
        %v4349 = vpow.pop %v4348
        %v4350 = vmul.f32 %v4270, 1.442695
        %v4351 = vpow.pop %v4350
        %v4352 = vmul.f32 %v4271, 1.442695
        %v4353 = vpow.pop %v4352
        %v4354 = vmul.f32 %v4272, 1.442695
        %v4355 = vpow.pop %v4354
        %v4356 = vmul.f32 %v4273, 1.442695
        %v4357 = vpow.pop %v4356
        %v4358 = vmul.f32 %v4274, 1.442695
        %v4359 = vpow.pop %v4358
        %v4360 = vmul.f32 %v4275, 1.442695
        %v4361 = vpow.pop %v4360
        %v4362 = vmul.f32 %v4276, 1.442695
        %v4363 = vpow.pop %v4362
        %v4364 = vmul.f32 %v4277, 1.442695
        %v4365 = vpow.pop %v4364
        %v4366 = vmul.f32 %v4278, 1.442695
        %v4367 = vpow.pop %v4366
        %v4368 = vmul.f32 %v4279, 1.442695
        %v4369 = vpow.pop %v4368
        %v4370 = vmul.f32 %v4280, 1.442695
        %v4371 = vpow.pop %v4370
        %v4372 = vmul.f32 %v4281, 1.442695
        %v4373 = vpow.pop %v4372
        %v4374 = vmul.f32 %v4282, 1.442695
        %v4375 = vpow.pop %v4374
        %v4376 = vmul.f32 %v4283, 1.442695
        %v4377 = vpow.pop %v4376
        %v4378 = vmul.f32 %v4284, 1.442695
        %v4379 = vpow.pop %v4378
        %v4380 = vmul.f32 %v4285, 1.442695
        %v4381 = vpow.pop %v4380
        %v4382 = vmul.f32 %v4286, 1.442695
        %v4383 = vpow.pop %v4382
        %v4384 = vmul.f32 %v4287, 1.442695
        %v4385 = vpow.pop %v4384
        %v4386 = vmul.f32 %v4288, 1.442695
        %v4387 = vpow.pop %v4386
        %v4388 = vmul.f32 %v4289, 1.442695
        %v4389 = vpow.pop %v4388
        %v4390 = vmul.f32 %v4290, 1.442695
        %v4391 = vpow.pop %v4390
        %v4392 = vmul.f32 %v4291, 1.442695
        %v4393 = vpow.pop %v4392
        %v4394 = vmul.f32 %v4292, 1.442695
        %v4395 = vpow.pop %v4394
        %v4396 = vmul.f32 %v4293, 1.442695
        %v4397 = vpow.pop %v4396
        %v4398 = vmul.f32 %v4294, 1.442695
        %v4399 = vpow.pop %v4398
        %v4400 = vmul.f32 %v4295, 1.442695
        %v4401 = vpow.pop %v4400
        %v4402 = vmul.f32 %v4296, 1.442695
        %v4403 = vpow.pop %v4402
        %v4404 = vmul.f32 %v4297, 1.442695
        %v4405 = vpow.pop %v4404
        %v4406 = vsub.f32 %v4335, 1.0
        %v4407 = vsub.f32 %v4337, 1.0
        %v4408 = vsub.f32 %v4339, 1.0
        %v4409 = vsub.f32 %v4341, 1.0
        %v4410 = vsub.f32 %v4343, 1.0
        %v4411 = vsub.f32 %v4345, 1.0
        %v4412 = vsub.f32 %v4347, 1.0
        %v4413 = vsub.f32 %v4349, 1.0
        %v4414 = vsub.f32 %v4351, 1.0
        %v4415 = vsub.f32 %v4353, 1.0
        %v4416 = vsub.f32 %v4355, 1.0
        %v4417 = vsub.f32 %v4357, 1.0
        %v4418 = vsub.f32 %v4359, 1.0
        %v4419 = vsub.f32 %v4361, 1.0
        %v4420 = vsub.f32 %v4363, 1.0
        %v4421 = vsub.f32 %v4365, 1.0
        %v4422 = vsub.f32 %v4367, 1.0
        %v4423 = vsub.f32 %v4369, 1.0
        %v4424 = vsub.f32 %v4371, 1.0
        %v4425 = vsub.f32 %v4373, 1.0
        %v4426 = vsub.f32 %v4375, 1.0
        %v4427 = vsub.f32 %v4377, 1.0
        %v4428 = vsub.f32 %v4379, 1.0
        %v4429 = vsub.f32 %v4381, 1.0
        %v4430 = vsub.f32 %v4383, 1.0
        %v4431 = vsub.f32 %v4385, 1.0
        %v4432 = vsub.f32 %v4387, 1.0
        %v4433 = vsub.f32 %v4389, 1.0
        %v4434 = vsub.f32 %v4391, 1.0
        %v4435 = vsub.f32 %v4393, 1.0
        %v4436 = vsub.f32 %v4395, 1.0
        %v4437 = vsub.f32 %v4397, 1.0
        %v4438 = vsub.f32 %v4399, 1.0
        %v4439 = vsub.f32 %v4401, 1.0
        %v4440 = vsub.f32 %v4403, 1.0
        %v4441 = vsub.f32 %v4405, 1.0
        %v4442 = vsel %vm4298, %v4262, %v4406
        %v4443 = vsel %vm4299, %v4263, %v4407
        %v4444 = vsel %vm4300, %v4264, %v4408
        %v4445 = vsel %vm4301, %v4265, %v4409
        %v4446 = vsel %vm4302, %v4266, %v4410
        %v4447 = vsel %vm4303, %v4267, %v4411
        %v4448 = vsel %vm4304, %v4268, %v4412
        %v4449 = vsel %vm4305, %v4269, %v4413
        %v4450 = vsel %vm4306, %v4270, %v4414
        %v4451 = vsel %vm4307, %v4271, %v4415
        %v4452 = vsel %vm4308, %v4272, %v4416
        %v4453 = vsel %vm4309, %v4273, %v4417
        %v4454 = vsel %vm4310, %v4274, %v4418
        %v4455 = vsel %vm4311, %v4275, %v4419
        %v4456 = vsel %vm4312, %v4276, %v4420
        %v4457 = vsel %vm4313, %v4277, %v4421
        %v4458 = vsel %vm4314, %v4278, %v4422
        %v4459 = vsel %vm4315, %v4279, %v4423
        %v4460 = vsel %vm4316, %v4280, %v4424
        %v4461 = vsel %vm4317, %v4281, %v4425
        %v4462 = vsel %vm4318, %v4282, %v4426
        %v4463 = vsel %vm4319, %v4283, %v4427
        %v4464 = vsel %vm4320, %v4284, %v4428
        %v4465 = vsel %vm4321, %v4285, %v4429
        %v4466 = vsel %vm4322, %v4286, %v4430
        %v4467 = vsel %vm4323, %v4287, %v4431
        %v4468 = vsel %vm4324, %v4288, %v4432
        %v4469 = vsel %vm4325, %v4289, %v4433
        %v4470 = vsel %vm4326, %v4290, %v4434
        %v4471 = vsel %vm4327, %v4291, %v4435
        %v4472 = vsel %vm4328, %v4292, %v4436
        %v4473 = vsel %vm4329, %v4293, %v4437
        %v4474 = vsel %vm4330, %v4294, %v4438
        %v4475 = vsel %vm4331, %v4295, %v4439
        %v4476 = vsel %vm4332, %v4296, %v4440
        %v4477 = vsel %vm4333, %v4297, %v4441
        %v4478 = vld [vmem:[#allocation7] sm:$0xff]
        %v4479 = vld [vmem:[#allocation7 + $0x8] sm:$0xff]
        %s4480 = scalar_lea.vmem [#allocation7], 16
        %v4481 = vld [vmem:[%s4480] sm:$0xff]
        %v4482 = vld [vmem:[%s4480 + $0x8] sm:$0xff]
        %v4513 = vrot.slane %v4442, 2
        %v4514 = vrot.slane %v4443, 2
        %v4515 = vrot.slane %v4444, 2
        %v4516 = vrot.slane %v4445, 2
        %v4517 = vrot.slane %v4446, 2
        %v4518 = vrot.slane %v4447, 2
        %v4519 = vrot.slane %v4448, 2
        %v4520 = vrot.slane %v4449, 2
        %v4521 = vrot.slane %v4450, 2
        %v4522 = vrot.slane %v4451, 2
        %v4523 = vrot.slane %v4452, 2
        %v4524 = vrot.slane %v4453, 2
        %v4525 = vrot.slane %v4454, 2
        %v4526 = vrot.slane %v4455, 2
        %v4527 = vrot.slane %v4456, 2
        %v4528 = vrot.slane %v4457, 2
        %v4529 = vrot.slane %v4458, 2
        %v4530 = vrot.slane %v4459, 2
        %v4531 = vrot.slane %v4460, 2
        %v4532 = vrot.slane %v4461, 2
        %v4533 = vrot.slane %v4462, 2
        %v4534 = vrot.slane %v4463, 2
        %v4535 = vrot.slane %v4464, 2
        %v4536 = vrot.slane %v4465, 2
        %v4537 = vrot.slane %v4466, 2
        %v4538 = vrot.slane %v4467, 2
        %v4539 = vrot.slane %v4468, 2
        %v4540 = vrot.slane %v4469, 2
        %v4541 = vrot.slane %v4470, 2
        %v4542 = vrot.slane %v4471, 2
        %v4543 = vsel %vm2267, %v4442, %v4513
        %vm4544 = vcmask 1043458
        %v4545 = vsel %vm4544, %v4442, %v4513
        %v4546 = vrot.slane %v4545, 2
        %v4547 = vsel %vm2267, %v4443, %v4514
        %v4548 = vsel %vm4544, %v4443, %v4514
        %v4549 = vrot.slane %v4548, 2
        %v4550 = vsel %vm2267, %v4444, %v4515
        %v4551 = vsel %vm4544, %v4444, %v4515
        %v4552 = vrot.slane %v4551, 2
        %v4553 = vsel %vm2267, %v4445, %v4516
        %v4554 = vsel %vm4544, %v4445, %v4516
        %v4555 = vrot.slane %v4554, 2
        %v4556 = vsel %vm2267, %v4446, %v4517
        %v4557 = vsel %vm4544, %v4446, %v4517
        %v4558 = vrot.slane %v4557, 2
        %v4559 = vsel %vm2267, %v4447, %v4518
        %v4560 = vsel %vm4544, %v4447, %v4518
        %v4561 = vrot.slane %v4560, 2
        %v4562 = vsel %vm2267, %v4448, %v4519
        %v4563 = vsel %vm4544, %v4448, %v4519
        %v4564 = vrot.slane %v4563, 2
        %v4565 = vsel %vm2267, %v4449, %v4520
        %v4566 = vsel %vm4544, %v4449, %v4520
        %v4567 = vrot.slane %v4566, 2
        %v4568 = vsel %vm2267, %v4450, %v4521
        %v4569 = vsel %vm4544, %v4450, %v4521
        %v4570 = vrot.slane %v4569, 2
        %v4571 = vsel %vm2267, %v4451, %v4522
        %v4572 = vsel %vm4544, %v4451, %v4522
        %v4573 = vrot.slane %v4572, 2
        %v4574 = vsel %vm2267, %v4452, %v4523
        %v4575 = vsel %vm4544, %v4452, %v4523
        %v4576 = vrot.slane %v4575, 2
        %v4577 = vsel %vm2267, %v4453, %v4524
        %v4578 = vsel %vm4544, %v4453, %v4524
        %v4579 = vrot.slane %v4578, 2
        %v4580 = vsel %vm2267, %v4454, %v4525
        %v4581 = vsel %vm4544, %v4454, %v4525
        %v4582 = vrot.slane %v4581, 2
        %v4583 = vsel %vm2267, %v4455, %v4526
        %v4584 = vsel %vm4544, %v4455, %v4526
        %v4585 = vrot.slane %v4584, 2
        %v4586 = vsel %vm2267, %v4456, %v4527
        %v4587 = vsel %vm4544, %v4456, %v4527
        %v4588 = vrot.slane %v4587, 2
        %v4589 = vsel %vm2267, %v4457, %v4528
        %v4590 = vsel %vm4544, %v4457, %v4528
        %v4591 = vrot.slane %v4590, 2
        %v4592 = vsel %vm2267, %v4458, %v4529
        %v4593 = vsel %vm4544, %v4458, %v4529
        %v4594 = vrot.slane %v4593, 2
        %v4595 = vsel %vm2267, %v4459, %v4530
        %v4596 = vsel %vm4544, %v4459, %v4530
        %v4597 = vrot.slane %v4596, 2
        %v4598 = vsel %vm2267, %v4460, %v4531
        %v4599 = vsel %vm4544, %v4460, %v4531
        %v4600 = vrot.slane %v4599, 2
        %v4601 = vsel %vm2267, %v4461, %v4532
        %v4602 = vsel %vm4544, %v4461, %v4532
        %v4603 = vrot.slane %v4602, 2
        %v4604 = vsel %vm2267, %v4462, %v4533
        %v4605 = vsel %vm4544, %v4462, %v4533
        %v4606 = vrot.slane %v4605, 2
        %v4607 = vsel %vm2267, %v4463, %v4534
        %v4608 = vsel %vm4544, %v4463, %v4534
        %v4609 = vrot.slane %v4608, 2
        %v4610 = vsel %vm2267, %v4464, %v4535
        %v4611 = vsel %vm4544, %v4464, %v4535
        %v4612 = vrot.slane %v4611, 2
        %v4613 = vsel %vm2267, %v4465, %v4536
        %v4614 = vsel %vm4544, %v4465, %v4536
        %v4615 = vrot.slane %v4614, 2
        %v4616 = vsel %vm2267, %v4466, %v4537
        %v4617 = vsel %vm4544, %v4466, %v4537
        %v4618 = vrot.slane %v4617, 2
        %v4619 = vsel %vm2267, %v4467, %v4538
        %v4620 = vsel %vm4544, %v4467, %v4538
        %v4621 = vrot.slane %v4620, 2
        %v4622 = vsel %vm2267, %v4468, %v4539
        %v4623 = vsel %vm4544, %v4468, %v4539
        %v4624 = vrot.slane %v4623, 2
        %v4625 = vsel %vm2267, %v4469, %v4540
        %v4626 = vsel %vm4544, %v4469, %v4540
        %v4627 = vrot.slane %v4626, 2
        %v4628 = vsel %vm2267, %v4470, %v4541
        %v4629 = vsel %vm4544, %v4470, %v4541
        %v4630 = vrot.slane %v4629, 2
        %v4631 = vsel %vm2267, %v4471, %v4542
        %v4632 = vsel %vm4544, %v4471, %v4542
        %v4633 = vrot.slane %v4632, 2
        %vm4634 = vcmask 1040384
        %vm4635 = vcmask 1042434
        %vm4636 = vmor %vm4634, %vm4635
        %vm4637 = vcmask 1044484
        %vm4638 = vmor %vm4636, %vm4637
        %vm4639 = vcmask 1046534
        %vm4640 = vmor %vm4638, %vm4639
        %v4641 = vrot.slane %v4543, 7
        %v4642 = vrot.slane %v4641, 2
        %v4643 = vrot.slane %v4546, 7
        %v4644 = vsel %vm4640, %v4642, %v4643
        %v4645 = vrot.slane %v4643, 2
        %v4646 = vrot.slane %v4547, 7
        %v4647 = vsel %vm4640, %v4645, %v4646
        %v4648 = vrot.slane %v4646, 2
        %v4649 = vrot.slane %v4549, 7
        %v4650 = vsel %vm4640, %v4648, %v4649
        %v4651 = vrot.slane %v4649, 2
        %v4652 = vrot.slane %v4550, 7
        %v4653 = vsel %vm4640, %v4651, %v4652
        %v4654 = vrot.slane %v4652, 2
        %v4655 = vrot.slane %v4552, 7
        %v4656 = vsel %vm4640, %v4654, %v4655
        %v4657 = vrot.slane %v4553, 7
        %v4658 = vrot.slane %v4657, 2
        %v4659 = vrot.slane %v4555, 7
        %v4660 = vsel %vm4640, %v4658, %v4659
        %v4661 = vrot.slane %v4659, 2
        %v4662 = vrot.slane %v4556, 7
        %v4663 = vsel %vm4640, %v4661, %v4662
        %v4664 = vrot.slane %v4662, 2
        %v4665 = vrot.slane %v4558, 7
        %v4666 = vsel %vm4640, %v4664, %v4665
        %v4667 = vrot.slane %v4665, 2
        %v4668 = vrot.slane %v4559, 7
        %v4669 = vsel %vm4640, %v4667, %v4668
        %v4670 = vrot.slane %v4668, 2
        %v4671 = vrot.slane %v4561, 7
        %v4672 = vsel %vm4640, %v4670, %v4671
        %v4673 = vrot.slane %v4562, 7
        %v4674 = vrot.slane %v4673, 2
        %v4675 = vrot.slane %v4564, 7
        %v4676 = vsel %vm4640, %v4674, %v4675
        %v4677 = vrot.slane %v4675, 2
        %v4678 = vrot.slane %v4565, 7
        %v4679 = vsel %vm4640, %v4677, %v4678
        %v4680 = vrot.slane %v4678, 2
        %v4681 = vrot.slane %v4567, 7
        %v4682 = vsel %vm4640, %v4680, %v4681
        %v4683 = vrot.slane %v4681, 2
        %v4684 = vrot.slane %v4568, 7
        %v4685 = vsel %vm4640, %v4683, %v4684
        %v4686 = vrot.slane %v4684, 2
        %v4687 = vrot.slane %v4570, 7
        %v4688 = vsel %vm4640, %v4686, %v4687
        %v4689 = vrot.slane %v4571, 7
        %v4690 = vrot.slane %v4689, 2
        %v4691 = vrot.slane %v4573, 7
        %v4692 = vsel %vm4640, %v4690, %v4691
        %v4693 = vrot.slane %v4691, 2
        %v4694 = vrot.slane %v4574, 7
        %v4695 = vsel %vm4640, %v4693, %v4694
        %v4696 = vrot.slane %v4694, 2
        %v4697 = vrot.slane %v4576, 7
        %v4698 = vsel %vm4640, %v4696, %v4697
        %v4699 = vrot.slane %v4697, 2
        %v4700 = vrot.slane %v4577, 7
        %v4701 = vsel %vm4640, %v4699, %v4700
        %v4702 = vrot.slane %v4700, 2
        %v4703 = vrot.slane %v4579, 7
        %v4704 = vsel %vm4640, %v4702, %v4703
        %v4705 = vrot.slane %v4580, 7
        %v4706 = vrot.slane %v4705, 2
        %v4707 = vrot.slane %v4582, 7
        %v4708 = vsel %vm4640, %v4706, %v4707
        %v4709 = vrot.slane %v4707, 2
        %v4710 = vrot.slane %v4583, 7
        %v4711 = vsel %vm4640, %v4709, %v4710
        %v4712 = vrot.slane %v4710, 2
        %v4713 = vrot.slane %v4585, 7
        %v4714 = vsel %vm4640, %v4712, %v4713
        %v4715 = vrot.slane %v4713, 2
        %v4716 = vrot.slane %v4586, 7
        %v4717 = vsel %vm4640, %v4715, %v4716
        %v4718 = vrot.slane %v4716, 2
        %v4719 = vrot.slane %v4588, 7
        %v4720 = vsel %vm4640, %v4718, %v4719
        %v4721 = vrot.slane %v4589, 7
        %v4722 = vrot.slane %v4721, 2
        %v4723 = vrot.slane %v4591, 7
        %v4724 = vsel %vm4640, %v4722, %v4723
        %v4725 = vrot.slane %v4723, 2
        %v4726 = vrot.slane %v4592, 7
        %v4727 = vsel %vm4640, %v4725, %v4726
        %v4728 = vrot.slane %v4726, 2
        %v4729 = vrot.slane %v4594, 7
        %v4730 = vsel %vm4640, %v4728, %v4729
        %v4731 = vrot.slane %v4729, 2
        %v4732 = vrot.slane %v4595, 7
        %v4733 = vsel %vm4640, %v4731, %v4732
        %v4734 = vrot.slane %v4732, 2
        %v4735 = vrot.slane %v4597, 7
        %v4736 = vsel %vm4640, %v4734, %v4735
        %v4737 = vrot.slane %v4598, 7
        %v4738 = vrot.slane %v4737, 2
        %v4739 = vrot.slane %v4600, 7
        %v4740 = vsel %vm4640, %v4738, %v4739
        %v4741 = vrot.slane %v4739, 2
        %v4742 = vrot.slane %v4601, 7
        %v4743 = vsel %vm4640, %v4741, %v4742
        %v4744 = vrot.slane %v4742, 2
        %v4745 = vrot.slane %v4603, 7
        %v4746 = vsel %vm4640, %v4744, %v4745
        %v4747 = vrot.slane %v4745, 2
        %v4748 = vrot.slane %v4604, 7
        %v4749 = vsel %vm4640, %v4747, %v4748
        %v4750 = vrot.slane %v4748, 2
        %v4751 = vrot.slane %v4606, 7
        %v4752 = vsel %vm4640, %v4750, %v4751
        %v4753 = vrot.slane %v4607, 7
        %v4754 = vrot.slane %v4753, 2
        %v4755 = vrot.slane %v4609, 7
        %v4756 = vsel %vm4640, %v4754, %v4755
        %v4757 = vrot.slane %v4755, 2
        %v4758 = vrot.slane %v4610, 7
        %v4759 = vsel %vm4640, %v4757, %v4758
        %v4760 = vrot.slane %v4758, 2
        %v4761 = vrot.slane %v4612, 7
        %v4762 = vsel %vm4640, %v4760, %v4761
        %v4763 = vrot.slane %v4761, 2
        %v4764 = vrot.slane %v4613, 7
        %v4765 = vsel %vm4640, %v4763, %v4764
        %v4766 = vrot.slane %v4764, 2
        %v4767 = vrot.slane %v4615, 7
        %v4768 = vsel %vm4640, %v4766, %v4767
        %v4769 = vrot.slane %v4616, 7
        %v4770 = vrot.slane %v4769, 2
        %v4771 = vrot.slane %v4618, 7
        %v4772 = vsel %vm4640, %v4770, %v4771
        %v4773 = vrot.slane %v4771, 2
        %v4774 = vrot.slane %v4619, 7
        %v4775 = vsel %vm4640, %v4773, %v4774
        %v4776 = vrot.slane %v4774, 2
        %v4777 = vrot.slane %v4621, 7
        %v4778 = vsel %vm4640, %v4776, %v4777
        %v4779 = vrot.slane %v4777, 2
        %v4780 = vrot.slane %v4622, 7
        %v4781 = vsel %vm4640, %v4779, %v4780
        %v4782 = vrot.slane %v4780, 2
        %v4783 = vrot.slane %v4624, 7
        %v4784 = vsel %vm4640, %v4782, %v4783
        %v4785 = vrot.slane %v4625, 7
        %v4786 = vrot.slane %v4785, 2
        %v4787 = vrot.slane %v4627, 7
        %v4788 = vsel %vm4640, %v4786, %v4787
        %v4789 = vrot.slane %v4787, 2
        %v4790 = vrot.slane %v4628, 7
        %v4791 = vsel %vm4640, %v4789, %v4790
        %v4792 = vrot.slane %v4790, 2
        %v4793 = vrot.slane %v4630, 7
        %v4794 = vsel %vm4640, %v4792, %v4793
        %v4795 = vrot.slane %v4793, 2
        %v4796 = vrot.slane %v4631, 7
        %v4797 = vsel %vm4640, %v4795, %v4796
        %v4798 = vrot.slane %v4796, 2
        %v4799 = vrot.slane %v4633, 7
        %v4800 = vsel %vm4640, %v4798, %v4799
        %4801 = vst [vmem:[#allocation1] ss:$4 sm:$0xff] %v4644
        %s4802 = scalar_lea.vmem [#allocation1], 1
        %4803 = vst [vmem:[%s4802] ss:$4 sm:$0xff] %v4647
        %s4804 = scalar_lea.vmem [#allocation1], 2
        %4805 = vst [vmem:[%s4804] ss:$4 sm:$0xff] %v4650
        %s4806 = scalar_lea.vmem [#allocation1], 3
        %4807 = vst [vmem:[%s4806] ss:$4 sm:$0xff] %v4653
        %s4808 = scalar_lea.vmem [#allocation1], 32
        %4809 = vst [vmem:[%s4808] ss:$4 sm:$0xff] %v4656
        %s4810 = scalar_lea.vmem [#allocation1], 33
        %4811 = vst [vmem:[%s4810] ss:$4 sm:$0xff] %v4660
        %s4812 = scalar_lea.vmem [#allocation1], 34
        %4813 = vst [vmem:[%s4812] ss:$4 sm:$0xff] %v4663
        %s4814 = scalar_lea.vmem [#allocation1], 35
        %4815 = vst [vmem:[%s4814] ss:$4 sm:$0xff] %v4666
        %v4816 = vld.sshfl [vmem:[#allocation1] sm:$0xff pattern:$0x73625140]
        %v4817 = vld.sshfl [vmem:[#allocation1 + $0x20] sm:$0xff pattern:$0x73625140]
        %4818 = vst [vmem:[#allocation1] ss:$4 sm:$0xff] %v4669
        %4819 = vst [vmem:[%s4802] ss:$4 sm:$0xff] %v4672
        %4820 = vst [vmem:[%s4804] ss:$4 sm:$0xff] %v4676
        %4821 = vst [vmem:[%s4806] ss:$4 sm:$0xff] %v4679
        %4822 = vst [vmem:[%s4808] ss:$4 sm:$0xff] %v4682
        %4823 = vst [vmem:[%s4810] ss:$4 sm:$0xff] %v4685
        %4824 = vst [vmem:[%s4812] ss:$4 sm:$0xff] %v4688
        %4825 = vst [vmem:[%s4814] ss:$4 sm:$0xff] %v4692
        %v4826 = vld.sshfl [vmem:[#allocation1] sm:$0xff pattern:$0x73625140]
        %v4827 = vld.sshfl [vmem:[#allocation1 + $0x20] sm:$0xff pattern:$0x73625140]
        %4828 = vst [vmem:[#allocation1] ss:$4 sm:$0xff] %v4695
        %4829 = vst [vmem:[%s4802] ss:$4 sm:$0xff] %v4698
        %4830 = vst [vmem:[%s4804] ss:$4 sm:$0xff] %v4701
        %4831 = vst [vmem:[%s4806] ss:$4 sm:$0xff] %v4704
        %4832 = vst [vmem:[%s4808] ss:$4 sm:$0xff] %v4708
        %4833 = vst [vmem:[%s4810] ss:$4 sm:$0xff] %v4711
        %4834 = vst [vmem:[%s4812] ss:$4 sm:$0xff] %v4714
        %4835 = vst [vmem:[%s4814] ss:$4 sm:$0xff] %v4717
        %v4836 = vld.sshfl [vmem:[#allocation1] sm:$0xff pattern:$0x73625140]
        %v4837 = vld.sshfl [vmem:[#allocation1 + $0x20] sm:$0xff pattern:$0x73625140]
        %4838 = vst [vmem:[#allocation1] ss:$4 sm:$0xff] %v4720
        %4839 = vst [vmem:[%s4802] ss:$4 sm:$0xff] %v4724
        %4840 = vst [vmem:[%s4804] ss:$4 sm:$0xff] %v4727
        %4841 = vst [vmem:[%s4806] ss:$4 sm:$0xff] %v4730
        %4842 = vst [vmem:[%s4808] ss:$4 sm:$0xff] %v4733
        %4843 = vst [vmem:[%s4810] ss:$4 sm:$0xff] %v4736
        %4844 = vst [vmem:[%s4812] ss:$4 sm:$0xff] %v4740
        %4845 = vst [vmem:[%s4814] ss:$4 sm:$0xff] %v4743
        %v4846 = vld.sshfl [vmem:[#allocation1] sm:$0xff pattern:$0x73625140]
        %v4847 = vld.sshfl [vmem:[#allocation1 + $0x20] sm:$0xff pattern:$0x73625140]
        %4848 = vst [vmem:[#allocation1] ss:$4 sm:$0xff] %v4746
        %4849 = vst [vmem:[%s4802] ss:$4 sm:$0xff] %v4749
        %4850 = vst [vmem:[%s4804] ss:$4 sm:$0xff] %v4752
        %4851 = vst [vmem:[%s4806] ss:$4 sm:$0xff] %v4756
        %4852 = vst [vmem:[%s4808] ss:$4 sm:$0xff] %v4759
        %4853 = vst [vmem:[%s4810] ss:$4 sm:$0xff] %v4762
        %4854 = vst [vmem:[%s4812] ss:$4 sm:$0xff] %v4765
        %4855 = vst [vmem:[%s4814] ss:$4 sm:$0xff] %v4768
        %v4856 = vld.sshfl [vmem:[#allocation1] sm:$0xff pattern:$0x73625140]
        %v4857 = vld.sshfl [vmem:[#allocation1 + $0x20] sm:$0xff pattern:$0x73625140]
        %4858 = vst [vmem:[#allocation1] ss:$4 sm:$0xff] %v4772
        %4859 = vst [vmem:[%s4802] ss:$4 sm:$0xff] %v4775
        %4860 = vst [vmem:[%s4804] ss:$4 sm:$0xff] %v4778
        %4861 = vst [vmem:[%s4806] ss:$4 sm:$0xff] %v4781
        %4862 = vst [vmem:[%s4808] ss:$4 sm:$0xff] %v4784
        %4863 = vst [vmem:[%s4810] ss:$4 sm:$0xff] %v4788
        %4864 = vst [vmem:[%s4812] ss:$4 sm:$0xff] %v4791
        %4865 = vst [vmem:[%s4814] ss:$4 sm:$0xff] %v4794
        %v4866 = vld.sshfl [vmem:[#allocation1] sm:$0xff pattern:$0x73625140]
        %v4867 = vld.sshfl [vmem:[#allocation1 + $0x20] sm:$0xff pattern:$0x73625140]
        %4868 = vst [vmem:[#allocation1] ss:$4 sm:$0xff] %v4797
        %4869 = vst [vmem:[%s4802] ss:$4 sm:$0xff] %v4800
        %v4870 = vld.sshfl [vmem:[#allocation1] sm:$0xff pattern:$0x73625140]
        %vm4871 = vcmask 130048
        %v4872 = vsel %vm4871, %v4816, 0
        %v4874 = vsel %vm4871, %v4817, 0
        %v4876 = vsel %vm4871, %v4826, 0
        %v4878 = vsel %vm4871, %v4827, 0
        %v4880 = vsel %vm4871, %v4836, 0
        %v4882 = vsel %vm4871, %v4837, 0
        %v4884 = vsel %vm4871, %v4846, 0
        %v4886 = vsel %vm4871, %v4847, 0
        %v4888 = vsel %vm4871, %v4856, 0
        %v4890 = vsel %vm4871, %v4857, 0
        %v4892 = vsel %vm4871, %v4866, 0
        %v4894 = vsel %vm4871, %v4867, 0
        %v4896 = vsel %vm4871, %v4870, 0
        %4898 = vmatpush.msra.mxu0 0.0
        %4899 = vmatpush.msra.mxu0 0.0
        %4900 = vmatpush.msra.mxu0 0.0
        %4901 = vmatpush.msra.mxu0 0.0
        %4902 = vmatpush.msra.mxu0 0.0
        %4903 = vmatpush.msra.mxu0 0.0
        %4904 = vmatpush.msra.mxu0 0.0
        %4905 = vmatpush.msra.mxu0 0.0
        %4906 = vmatpush.msra.mxu0 0.0
        %4907 = vmatpush.msra.mxu0 0.0
        %4908 = vmatpush.msra.mxu0 0.0
        %4909 = vmatpush.msra.mxu0 0.0
        %4910 = vmatpush.msra.mxu0 0.0
        %4911 = vmatpush.msra.mxu0 0.0
        %4912 = vmatpush.msra.mxu0 %v4482
        %4913 = vmatpush.msra.mxu0 %v4481
        %4914 = vmatmul.f32.gmra.mxu0 %v4872
        %v4915 = vpop.f32.mrf.mxu0
        %v4916 = vadd.f32 0.0, %v4915
        %4917 = vmatmul.f32.gmra.mxu0 %v4874
        %v4918 = vpop.f32.mrf.mxu0
        %v4919 = vadd.f32 0.0, %v4918
        %4920 = vmatmul.f32.gmra.mxu0 %v4876
        %v4921 = vpop.f32.mrf.mxu0
        %v4922 = vadd.f32 0.0, %v4921
        %4923 = vmatmul.f32.gmra.mxu0 %v4878
        %v4924 = vpop.f32.mrf.mxu0
        %v4925 = vadd.f32 0.0, %v4924
        %4926 = vmatmul.f32.gmra.mxu0 %v4880
        %v4927 = vpop.f32.mrf.mxu0
        %v4928 = vadd.f32 0.0, %v4927
        %4929 = vmatmul.f32.gmra.mxu0 %v4882
        %v4930 = vpop.f32.mrf.mxu0
        %v4931 = vadd.f32 0.0, %v4930
        %4932 = vmatmul.f32.gmra.mxu0 %v4884
        %v4933 = vpop.f32.mrf.mxu0
        %v4934 = vadd.f32 0.0, %v4933
        %4935 = vmatmul.f32.gmra.mxu0 %v4886
        %v4936 = vpop.f32.mrf.mxu0
        %v4937 = vadd.f32 0.0, %v4936
        %4938 = vmatmul.f32.gmra.mxu0 %v4888
        %v4939 = vpop.f32.mrf.mxu0
        %v4940 = vadd.f32 0.0, %v4939
        %4941 = vmatmul.f32.gmra.mxu0 %v4890
        %v4942 = vpop.f32.mrf.mxu0
        %v4943 = vadd.f32 0.0, %v4942
        %4944 = vmatmul.f32.gmra.mxu0 %v4892
        %v4945 = vpop.f32.mrf.mxu0
        %v4946 = vadd.f32 0.0, %v4945
        %4947 = vmatmul.f32.gmra.mxu0 %v4894
        %v4948 = vpop.f32.mrf.mxu0
        %v4949 = vadd.f32 0.0, %v4948
        %4950 = vmatmul.f32.gmra.mxu0 %v4896
        %v4951 = vpop.f32.mrf.mxu0
        %v4952 = vadd.f32 0.0, %v4951
        %4953 = vdwg.mxu0
        %4954 = vst [vmem:[#allocation1] ss:$4 sm:$0xff] %v4543
        %s4955 = scalar_lea.vmem [#allocation1], 1
        %4956 = vst [vmem:[%s4955] ss:$4 sm:$0xff] %v4546
        %s4957 = scalar_lea.vmem [#allocation1], 2
        %4958 = vst [vmem:[%s4957] ss:$4 sm:$0xff] %v4547
        %s4959 = scalar_lea.vmem [#allocation1], 3
        %4960 = vst [vmem:[%s4959] ss:$4 sm:$0xff] %v4549
        %s4961 = scalar_lea.vmem [#allocation1], 32
        %4962 = vst [vmem:[%s4961] ss:$4 sm:$0xff] %v4550
        %s4963 = scalar_lea.vmem [#allocation1], 33
        %4964 = vst [vmem:[%s4963] ss:$4 sm:$0xff] %v4553
        %s4965 = scalar_lea.vmem [#allocation1], 34
        %4966 = vst [vmem:[%s4965] ss:$4 sm:$0xff] %v4555
        %s4967 = scalar_lea.vmem [#allocation1], 35
        %4968 = vst [vmem:[%s4967] ss:$4 sm:$0xff] %v4556
        %v4969 = vld.sshfl [vmem:[#allocation1] sm:$0xff pattern:$0x73625140]
        %v4970 = vld.sshfl [vmem:[#allocation1 + $0x20] sm:$0xff pattern:$0x73625140]
        %4971 = vst [vmem:[#allocation1] ss:$4 sm:$0xff] %v4558
        %4972 = vst [vmem:[%s4955] ss:$4 sm:$0xff] %v4559
        %4973 = vst [vmem:[%s4957] ss:$4 sm:$0xff] %v4562
        %4974 = vst [vmem:[%s4959] ss:$4 sm:$0xff] %v4564
        %4975 = vst [vmem:[%s4961] ss:$4 sm:$0xff] %v4565
        %4976 = vst [vmem:[%s4963] ss:$4 sm:$0xff] %v4567
        %4977 = vst [vmem:[%s4965] ss:$4 sm:$0xff] %v4568
        %4978 = vst [vmem:[%s4967] ss:$4 sm:$0xff] %v4571
        %v4979 = vld.sshfl [vmem:[#allocation1] sm:$0xff pattern:$0x73625140]
        %v4980 = vld.sshfl [vmem:[#allocation1 + $0x20] sm:$0xff pattern:$0x73625140]
        %4981 = vst [vmem:[#allocation1] ss:$4 sm:$0xff] %v4573
        %4982 = vst [vmem:[%s4955] ss:$4 sm:$0xff] %v4574
        %4983 = vst [vmem:[%s4957] ss:$4 sm:$0xff] %v4576
        %4984 = vst [vmem:[%s4959] ss:$4 sm:$0xff] %v4577
        %4985 = vst [vmem:[%s4961] ss:$4 sm:$0xff] %v4580
        %4986 = vst [vmem:[%s4963] ss:$4 sm:$0xff] %v4582
        %4987 = vst [vmem:[%s4965] ss:$4 sm:$0xff] %v4583
        %4988 = vst [vmem:[%s4967] ss:$4 sm:$0xff] %v4585
        %v4989 = vld.sshfl [vmem:[#allocation1] sm:$0xff pattern:$0x73625140]
        %v4990 = vld.sshfl [vmem:[#allocation1 + $0x20] sm:$0xff pattern:$0x73625140]
        %4991 = vst [vmem:[#allocation1] ss:$4 sm:$0xff] %v4586
        %4992 = vst [vmem:[%s4955] ss:$4 sm:$0xff] %v4589
        %4993 = vst [vmem:[%s4957] ss:$4 sm:$0xff] %v4591
        %4994 = vst [vmem:[%s4959] ss:$4 sm:$0xff] %v4592
        %4995 = vst [vmem:[%s4961] ss:$4 sm:$0xff] %v4594
        %4996 = vst [vmem:[%s4963] ss:$4 sm:$0xff] %v4595
        %4997 = vst [vmem:[%s4965] ss:$4 sm:$0xff] %v4598
        %4998 = vst [vmem:[%s4967] ss:$4 sm:$0xff] %v4600
        %v4999 = vld.sshfl [vmem:[#allocation1] sm:$0xff pattern:$0x73625140]
        %v5000 = vld.sshfl [vmem:[#allocation1 + $0x20] sm:$0xff pattern:$0x73625140]
        %5001 = vst [vmem:[#allocation1] ss:$4 sm:$0xff] %v4601
        %5002 = vst [vmem:[%s4955] ss:$4 sm:$0xff] %v4603
        %5003 = vst [vmem:[%s4957] ss:$4 sm:$0xff] %v4604
        %5004 = vst [vmem:[%s4959] ss:$4 sm:$0xff] %v4607
        %5005 = vst [vmem:[%s4961] ss:$4 sm:$0xff] %v4609
        %5006 = vst [vmem:[%s4963] ss:$4 sm:$0xff] %v4610
        %5007 = vst [vmem:[%s4965] ss:$4 sm:$0xff] %v4612
        %5008 = vst [vmem:[%s4967] ss:$4 sm:$0xff] %v4613
        %v5009 = vld.sshfl [vmem:[#allocation1] sm:$0xff pattern:$0x73625140]
        %v5010 = vld.sshfl [vmem:[#allocation1 + $0x20] sm:$0xff pattern:$0x73625140]
        %5011 = vst [vmem:[#allocation1] ss:$4 sm:$0xff] %v4616
        %5012 = vst [vmem:[%s4955] ss:$4 sm:$0xff] %v4618
        %5013 = vst [vmem:[%s4957] ss:$4 sm:$0xff] %v4619
        %5014 = vst [vmem:[%s4959] ss:$4 sm:$0xff] %v4621
        %5015 = vst [vmem:[%s4961] ss:$4 sm:$0xff] %v4622
        %5016 = vst [vmem:[%s4963] ss:$4 sm:$0xff] %v4625
        %5017 = vst [vmem:[%s4965] ss:$4 sm:$0xff] %v4627
        %5018 = vst [vmem:[%s4967] ss:$4 sm:$0xff] %v4628
        %v5019 = vld.sshfl [vmem:[#allocation1] sm:$0xff pattern:$0x73625140]
        %v5020 = vld.sshfl [vmem:[#allocation1 + $0x20] sm:$0xff pattern:$0x73625140]
        %5021 = vst [vmem:[#allocation1] ss:$4 sm:$0xff] %v4630
        %5022 = vst [vmem:[%s4955] ss:$4 sm:$0xff] %v4631
        %v5023 = vld.sshfl [vmem:[#allocation1] sm:$0xff pattern:$0x73625140]
        %v5024 = vsel %vm4871, %v4969, 0
        %v5026 = vsel %vm4871, %v4970, 0
        %v5028 = vsel %vm4871, %v4979, 0
        %v5030 = vsel %vm4871, %v4980, 0
        %v5032 = vsel %vm4871, %v4989, 0
        %v5034 = vsel %vm4871, %v4990, 0
        %v5036 = vsel %vm4871, %v4999, 0
        %v5038 = vsel %vm4871, %v5000, 0
        %v5040 = vsel %vm4871, %v5009, 0
        %v5042 = vsel %vm4871, %v5010, 0
        %v5044 = vsel %vm4871, %v5019, 0
        %v5046 = vsel %vm4871, %v5020, 0
        %v5048 = vsel %vm4871, %v5023, 0
        %5050 = vmatpush.msra.mxu0 0.0
        %5051 = vmatpush.msra.mxu0 0.0
        %5052 = vmatpush.msra.mxu0 0.0
        %5053 = vmatpush.msra.mxu0 0.0
        %5054 = vmatpush.msra.mxu0 0.0
        %5055 = vmatpush.msra.mxu0 0.0
        %5056 = vmatpush.msra.mxu0 0.0
        %5057 = vmatpush.msra.mxu0 0.0
        %5058 = vmatpush.msra.mxu0 0.0
        %5059 = vmatpush.msra.mxu0 0.0
        %5060 = vmatpush.msra.mxu0 0.0
        %5061 = vmatpush.msra.mxu0 0.0
        %5062 = vmatpush.msra.mxu0 0.0
        %5063 = vmatpush.msra.mxu0 0.0
        %5064 = vmatpush.msra.mxu0 %v4479
        %5065 = vmatpush.msra.mxu0 %v4478
        %5066 = vmatmul.f32.gmra.mxu0 %v5024
        %v5067 = vpop.f32.mrf.mxu0
        %v5068 = vadd.f32 %v4916, %v5067
        %5069 = vmatmul.f32.gmra.mxu0 %v5026
        %v5070 = vpop.f32.mrf.mxu0
        %v5071 = vadd.f32 %v4919, %v5070
        %5072 = vmatmul.f32.gmra.mxu0 %v5028
        %v5073 = vpop.f32.mrf.mxu0
        %v5074 = vadd.f32 %v4922, %v5073
        %5075 = vmatmul.f32.gmra.mxu0 %v5030
        %v5076 = vpop.f32.mrf.mxu0
        %v5077 = vadd.f32 %v4925, %v5076
        %5078 = vmatmul.f32.gmra.mxu0 %v5032
        %v5079 = vpop.f32.mrf.mxu0
        %v5080 = vadd.f32 %v4928, %v5079
        %5081 = vmatmul.f32.gmra.mxu0 %v5034
        %v5082 = vpop.f32.mrf.mxu0
        %v5083 = vadd.f32 %v4931, %v5082
        %5084 = vmatmul.f32.gmra.mxu0 %v5036
        %v5085 = vpop.f32.mrf.mxu0
        %v5086 = vadd.f32 %v4934, %v5085
        %5087 = vmatmul.f32.gmra.mxu0 %v5038
        %v5088 = vpop.f32.mrf.mxu0
        %v5089 = vadd.f32 %v4937, %v5088
        %5090 = vmatmul.f32.gmra.mxu0 %v5040
        %v5091 = vpop.f32.mrf.mxu0
        %v5092 = vadd.f32 %v4940, %v5091
        %5093 = vmatmul.f32.gmra.mxu0 %v5042
        %v5094 = vpop.f32.mrf.mxu0
        %v5095 = vadd.f32 %v4943, %v5094
        %5096 = vmatmul.f32.gmra.mxu0 %v5044
        %v5097 = vpop.f32.mrf.mxu0
        %v5098 = vadd.f32 %v4946, %v5097
        %5099 = vmatmul.f32.gmra.mxu0 %v5046
        %v5100 = vpop.f32.mrf.mxu0
        %v5101 = vadd.f32 %v4949, %v5100
        %5102 = vmatmul.f32.gmra.mxu0 %v5048
        %v5103 = vpop.f32.mrf.mxu0
        %v5104 = vadd.f32 %v4952, %v5103
        %5105 = vdwg.mxu0
        %v5119 = vrot.slane %v5068, 2
        %v5120 = vrot.slane %v5068, 4
        %v5121 = vrot.slane %v5068, 6
        %v5122 = vrot.slane %v5071, 2
        %v5123 = vrot.slane %v5071, 4
        %v5124 = vrot.slane %v5071, 6
        %v5125 = vrot.slane %v5074, 2
        %v5126 = vrot.slane %v5074, 4
        %v5127 = vrot.slane %v5074, 6
        %v5128 = vrot.slane %v5077, 2
        %v5129 = vrot.slane %v5077, 4
        %v5130 = vrot.slane %v5077, 6
        %v5131 = vrot.slane %v5080, 2
        %v5132 = vrot.slane %v5080, 4
        %v5133 = vrot.slane %v5080, 6
        %v5134 = vrot.slane %v5083, 2
        %v5135 = vrot.slane %v5083, 4
        %v5136 = vrot.slane %v5083, 6
        %v5137 = vrot.slane %v5086, 2
        %v5138 = vrot.slane %v5086, 4
        %v5139 = vrot.slane %v5086, 6
        %v5140 = vrot.slane %v5089, 2
        %v5141 = vrot.slane %v5089, 4
        %v5142 = vrot.slane %v5089, 6
        %v5143 = vrot.slane %v5092, 2
        %v5144 = vrot.slane %v5092, 4
        %v5145 = vrot.slane %v5092, 6
        %v5146 = vrot.slane %v5095, 2
        %v5147 = vrot.slane %v5095, 4
        %v5148 = vrot.slane %v5095, 6
        %v5149 = vrot.slane %v5098, 2
        %v5150 = vrot.slane %v5098, 4
        %v5151 = vrot.slane %v5098, 6
        %v5152 = vrot.slane %v5101, 2
        %v5153 = vrot.slane %v5101, 4
        %v5154 = vrot.slane %v5101, 6
        %v5155 = vrot.slane %v5104, 2
        %s5193 = scalar_lea.vmem [#allocation7], 32
        %v5194 = vld [vmem:[%s5193] sm:$0xff]
        %v5195 = vld [vmem:[%s5193 + $0x8] sm:$0xff]
        %5196 = vst.sshfl [vmem:[#allocation1] sm:$0xff pattern:$0x75643120] %v4442
        %5197 = vst.sshfl [vmem:[#allocation1 + $0x10] sm:$0xff pattern:$0x75643120] %v4443
        %5198 = vst.sshfl [vmem:[#allocation1 + $0x20] sm:$0xff pattern:$0x75643120] %v4444
        %s5199 = scalar_lea.vmem [#allocation1], 1
        %v5200 = vld [vmem:[%s5199] ss:$2 sm:$0xff]
        %s5201 = scalar_lea.vmem [#allocation1], 16
        %v5202 = vld [vmem:[%s5201] ss:$2 sm:$0xff]
        %s5203 = scalar_lea.vmem [#allocation1], 17
        %v5204 = vld [vmem:[%s5203] ss:$2 sm:$0xff]
        %s5205 = scalar_lea.vmem [#allocation1], 32
        %v5206 = vld [vmem:[%s5205] ss:$2 sm:$0xff]
        %s5207 = scalar_lea.vmem [#allocation1], 33
        %v5208 = vld [vmem:[%s5207] ss:$2 sm:$0xff]
        %5209 = vst.sshfl [vmem:[#allocation1 + $0x30] sm:$0xff pattern:$0x75643120] %v4445
        %s5210 = scalar_lea.vmem [#allocation1], 49
        %v5211 = vld [vmem:[%s5210] ss:$2 sm:$0xff]
        %5212 = vst.sshfl [vmem:[#allocation1] sm:$0xff pattern:$0x75643120] %v4446
        %5213 = vst.sshfl [vmem:[#allocation1 + $0x10] sm:$0xff pattern:$0x75643120] %v4447
        %v5214 = vld [vmem:[#allocation1] ss:$2 sm:$0xff]
        %v5215 = vld [vmem:[%s5199] ss:$2 sm:$0xff]
        %v5216 = vld [vmem:[%s5201] ss:$2 sm:$0xff]
        %v5217 = vld [vmem:[%s5203] ss:$2 sm:$0xff]
        %5218 = vst.sshfl [vmem:[#allocation1 + $0x20] sm:$0xff pattern:$0x75643120] %v4448
        %5219 = vst.sshfl [vmem:[#allocation1 + $0x30] sm:$0xff pattern:$0x75643120] %v4449
        %v5220 = vld [vmem:[%s5207] ss:$2 sm:$0xff]
        %s5221 = scalar_lea.vmem [#allocation1], 48
        %v5222 = vld [vmem:[%s5221] ss:$2 sm:$0xff]
        %v5223 = vld [vmem:[%s5210] ss:$2 sm:$0xff]
        %5224 = vst.sshfl [vmem:[#allocation1] sm:$0xff pattern:$0x75643120] %v4450
        %v5225 = vld [vmem:[#allocation1] ss:$2 sm:$0xff]
        %v5226 = vld [vmem:[%s5199] ss:$2 sm:$0xff]
        %5227 = vst.sshfl [vmem:[#allocation1 + $0x10] sm:$0xff pattern:$0x75643120] %v4451
        %5228 = vst.sshfl [vmem:[#allocation1 + $0x20] sm:$0xff pattern:$0x75643120] %v4452
        %5229 = vst.sshfl [vmem:[#allocation1 + $0x30] sm:$0xff pattern:$0x75643120] %v4453
        %v5230 = vld [vmem:[%s5203] ss:$2 sm:$0xff]
        %v5231 = vld [vmem:[%s5205] ss:$2 sm:$0xff]
        %v5232 = vld [vmem:[%s5207] ss:$2 sm:$0xff]
        %v5233 = vld [vmem:[%s5221] ss:$2 sm:$0xff]
        %v5234 = vld [vmem:[%s5210] ss:$2 sm:$0xff]
        %5235 = vst.sshfl [vmem:[#allocation1] sm:$0xff pattern:$0x75643120] %v4454
        %5236 = vst.sshfl [vmem:[#allocation1 + $0x10] sm:$0xff pattern:$0x75643120] %v4455
        %5237 = vst.sshfl [vmem:[#allocation1 + $0x20] sm:$0xff pattern:$0x75643120] %v4456
        %v5238 = vld [vmem:[%s5199] ss:$2 sm:$0xff]
        %v5239 = vld [vmem:[%s5201] ss:$2 sm:$0xff]
        %v5240 = vld [vmem:[%s5203] ss:$2 sm:$0xff]
        %v5241 = vld [vmem:[%s5205] ss:$2 sm:$0xff]
        %v5242 = vld [vmem:[%s5207] ss:$2 sm:$0xff]
        %5243 = vst.sshfl [vmem:[#allocation1 + $0x30] sm:$0xff pattern:$0x75643120] %v4457
        %v5244 = vld [vmem:[%s5210] ss:$2 sm:$0xff]
        %5245 = vst.sshfl [vmem:[#allocation1] sm:$0xff pattern:$0x75643120] %v4458
        %5246 = vst.sshfl [vmem:[#allocation1 + $0x10] sm:$0xff pattern:$0x75643120] %v4459
        %v5247 = vld [vmem:[#allocation1] ss:$2 sm:$0xff]
        %v5248 = vld [vmem:[%s5199] ss:$2 sm:$0xff]
        %v5249 = vld [vmem:[%s5201] ss:$2 sm:$0xff]
        %v5250 = vld [vmem:[%s5203] ss:$2 sm:$0xff]
        %5251 = vst.sshfl [vmem:[#allocation1 + $0x20] sm:$0xff pattern:$0x75643120] %v4460
        %5252 = vst.sshfl [vmem:[#allocation1 + $0x30] sm:$0xff pattern:$0x75643120] %v4461
        %v5253 = vld [vmem:[%s5207] ss:$2 sm:$0xff]
        %v5254 = vld [vmem:[%s5221] ss:$2 sm:$0xff]
        %v5255 = vld [vmem:[%s5210] ss:$2 sm:$0xff]
        %5256 = vst.sshfl [vmem:[#allocation1] sm:$0xff pattern:$0x75643120] %v4462
        %v5257 = vld [vmem:[#allocation1] ss:$2 sm:$0xff]
        %v5258 = vld [vmem:[%s5199] ss:$2 sm:$0xff]
        %5259 = vst.sshfl [vmem:[#allocation1 + $0x10] sm:$0xff pattern:$0x75643120] %v4463
        %5260 = vst.sshfl [vmem:[#allocation1 + $0x20] sm:$0xff pattern:$0x75643120] %v4464
        %5261 = vst.sshfl [vmem:[#allocation1 + $0x30] sm:$0xff pattern:$0x75643120] %v4465
        %v5262 = vld [vmem:[%s5203] ss:$2 sm:$0xff]
        %v5263 = vld [vmem:[%s5205] ss:$2 sm:$0xff]
        %v5264 = vld [vmem:[%s5207] ss:$2 sm:$0xff]
        %v5265 = vld [vmem:[%s5221] ss:$2 sm:$0xff]
        %v5266 = vld [vmem:[%s5210] ss:$2 sm:$0xff]
        %5267 = vst.sshfl [vmem:[#allocation1] sm:$0xff pattern:$0x75643120] %v4466
        %5268 = vst.sshfl [vmem:[#allocation1 + $0x10] sm:$0xff pattern:$0x75643120] %v4467
        %5269 = vst.sshfl [vmem:[#allocation1 + $0x20] sm:$0xff pattern:$0x75643120] %v4468
        %v5270 = vld [vmem:[%s5199] ss:$2 sm:$0xff]
        %v5271 = vld [vmem:[%s5201] ss:$2 sm:$0xff]
        %v5272 = vld [vmem:[%s5203] ss:$2 sm:$0xff]
        %v5273 = vld [vmem:[%s5205] ss:$2 sm:$0xff]
        %v5274 = vld [vmem:[%s5207] ss:$2 sm:$0xff]
        %5275 = vst.sshfl [vmem:[#allocation1 + $0x30] sm:$0xff pattern:$0x75643120] %v4469
        %v5276 = vld [vmem:[%s5210] ss:$2 sm:$0xff]
        %5277 = vst.sshfl [vmem:[#allocation1] sm:$0xff pattern:$0x75643120] %v4470
        %5278 = vst.sshfl [vmem:[#allocation1 + $0x10] sm:$0xff pattern:$0x75643120] %v4471
        %v5279 = vld [vmem:[#allocation1] ss:$2 sm:$0xff]
        %v5280 = vld [vmem:[%s5199] ss:$2 sm:$0xff]
        %v5281 = vld [vmem:[%s5201] ss:$2 sm:$0xff]
        %v5282 = vld [vmem:[%s5203] ss:$2 sm:$0xff]
        %5283 = vst [vmem:[#allocation1] ss:$4 sm:$0xff] %v5200
        %s5284 = scalar_lea.vmem [#allocation1], 1
        %5285 = vst [vmem:[%s5284] ss:$4 sm:$0xff] %v5202
        %s5286 = scalar_lea.vmem [#allocation1], 2
        %5287 = vst [vmem:[%s5286] ss:$4 sm:$0xff] %v5204
        %s5288 = scalar_lea.vmem [#allocation1], 3
        %5289 = vst [vmem:[%s5288] ss:$4 sm:$0xff] %v5206
        %s5290 = scalar_lea.vmem [#allocation1], 32
        %5291 = vst [vmem:[%s5290] ss:$4 sm:$0xff] %v5208
        %s5292 = scalar_lea.vmem [#allocation1], 33
        %5293 = vst [vmem:[%s5292] ss:$4 sm:$0xff] %v5211
        %s5294 = scalar_lea.vmem [#allocation1], 34
        %5295 = vst [vmem:[%s5294] ss:$4 sm:$0xff] %v5214
        %s5296 = scalar_lea.vmem [#allocation1], 35
        %5297 = vst [vmem:[%s5296] ss:$4 sm:$0xff] %v5215
        %v5298 = vld.sshfl [vmem:[#allocation1] sm:$0xff pattern:$0x73625140]
        %v5299 = vld.sshfl [vmem:[#allocation1 + $0x20] sm:$0xff pattern:$0x73625140]
        %5300 = vst [vmem:[#allocation1] ss:$4 sm:$0xff] %v5216
        %5301 = vst [vmem:[%s5284] ss:$4 sm:$0xff] %v5217
        %5302 = vst [vmem:[%s5286] ss:$4 sm:$0xff] %v5220
        %5303 = vst [vmem:[%s5288] ss:$4 sm:$0xff] %v5222
        %5304 = vst [vmem:[%s5290] ss:$4 sm:$0xff] %v5223
        %5305 = vst [vmem:[%s5292] ss:$4 sm:$0xff] %v5225
        %5306 = vst [vmem:[%s5294] ss:$4 sm:$0xff] %v5226
        %5307 = vst [vmem:[%s5296] ss:$4 sm:$0xff] %v5230
        %v5308 = vld.sshfl [vmem:[#allocation1] sm:$0xff pattern:$0x73625140]
        %v5309 = vld.sshfl [vmem:[#allocation1 + $0x20] sm:$0xff pattern:$0x73625140]
        %5310 = vst [vmem:[#allocation1] ss:$4 sm:$0xff] %v5231
        %5311 = vst [vmem:[%s5284] ss:$4 sm:$0xff] %v5232
        %5312 = vst [vmem:[%s5286] ss:$4 sm:$0xff] %v5233
        %5313 = vst [vmem:[%s5288] ss:$4 sm:$0xff] %v5234
        %5314 = vst [vmem:[%s5290] ss:$4 sm:$0xff] %v5238
        %5315 = vst [vmem:[%s5292] ss:$4 sm:$0xff] %v5239
        %5316 = vst [vmem:[%s5294] ss:$4 sm:$0xff] %v5240
        %5317 = vst [vmem:[%s5296] ss:$4 sm:$0xff] %v5241
        %v5318 = vld.sshfl [vmem:[#allocation1] sm:$0xff pattern:$0x73625140]
        %v5319 = vld.sshfl [vmem:[#allocation1 + $0x20] sm:$0xff pattern:$0x73625140]
        %5320 = vst [vmem:[#allocation1] ss:$4 sm:$0xff] %v5242
        %5321 = vst [vmem:[%s5284] ss:$4 sm:$0xff] %v5244
        %5322 = vst [vmem:[%s5286] ss:$4 sm:$0xff] %v5247
        %5323 = vst [vmem:[%s5288] ss:$4 sm:$0xff] %v5248
        %5324 = vst [vmem:[%s5290] ss:$4 sm:$0xff] %v5249
        %5325 = vst [vmem:[%s5292] ss:$4 sm:$0xff] %v5250
        %5326 = vst [vmem:[%s5294] ss:$4 sm:$0xff] %v5253
        %5327 = vst [vmem:[%s5296] ss:$4 sm:$0xff] %v5254
        %v5328 = vld.sshfl [vmem:[#allocation1] sm:$0xff pattern:$0x73625140]
        %v5329 = vld.sshfl [vmem:[#allocation1 + $0x20] sm:$0xff pattern:$0x73625140]
        %5330 = vst [vmem:[#allocation1] ss:$4 sm:$0xff] %v5255
        %5331 = vst [vmem:[%s5284] ss:$4 sm:$0xff] %v5257
        %5332 = vst [vmem:[%s5286] ss:$4 sm:$0xff] %v5258
        %5333 = vst [vmem:[%s5288] ss:$4 sm:$0xff] %v5262
        %5334 = vst [vmem:[%s5290] ss:$4 sm:$0xff] %v5263
        %5335 = vst [vmem:[%s5292] ss:$4 sm:$0xff] %v5264
        %5336 = vst [vmem:[%s5294] ss:$4 sm:$0xff] %v5265
        %5337 = vst [vmem:[%s5296] ss:$4 sm:$0xff] %v5266
        %v5338 = vld.sshfl [vmem:[#allocation1] sm:$0xff pattern:$0x73625140]
        %v5339 = vld.sshfl [vmem:[#allocation1 + $0x20] sm:$0xff pattern:$0x73625140]
        %5340 = vst [vmem:[#allocation1] ss:$4 sm:$0xff] %v5270
        %5341 = vst [vmem:[%s5284] ss:$4 sm:$0xff] %v5271
        %5342 = vst [vmem:[%s5286] ss:$4 sm:$0xff] %v5272
        %5343 = vst [vmem:[%s5288] ss:$4 sm:$0xff] %v5273
        %5344 = vst [vmem:[%s5290] ss:$4 sm:$0xff] %v5274
        %5345 = vst [vmem:[%s5292] ss:$4 sm:$0xff] %v5276
        %5346 = vst [vmem:[%s5294] ss:$4 sm:$0xff] %v5279
        %5347 = vst [vmem:[%s5296] ss:$4 sm:$0xff] %v5280
        %v5348 = vld.sshfl [vmem:[#allocation1] sm:$0xff pattern:$0x73625140]
        %v5349 = vld.sshfl [vmem:[#allocation1 + $0x20] sm:$0xff pattern:$0x73625140]
        %5350 = vst [vmem:[#allocation1] ss:$4 sm:$0xff] %v5281
        %5351 = vst [vmem:[%s5284] ss:$4 sm:$0xff] %v5282
        %v5352 = vld.sshfl [vmem:[#allocation1] sm:$0xff pattern:$0x73625140]
        %v5353 = vsel %vm4871, %v5298, 0
        %v5355 = vsel %vm4871, %v5299, 0
        %v5357 = vsel %vm4871, %v5308, 0
        %v5359 = vsel %vm4871, %v5309, 0
        %v5361 = vsel %vm4871, %v5318, 0
        %v5363 = vsel %vm4871, %v5319, 0
        %v5365 = vsel %vm4871, %v5328, 0
        %v5367 = vsel %vm4871, %v5329, 0
        %v5369 = vsel %vm4871, %v5338, 0
        %v5371 = vsel %vm4871, %v5339, 0
        %v5373 = vsel %vm4871, %v5348, 0
        %v5375 = vsel %vm4871, %v5349, 0
        %v5377 = vsel %vm4871, %v5352, 0
        %5379 = vmatpush.msra.mxu0 0.0
        %5380 = vmatpush.msra.mxu0 0.0
        %5381 = vmatpush.msra.mxu0 0.0
        %5382 = vmatpush.msra.mxu0 0.0
        %5383 = vmatpush.msra.mxu0 0.0
        %5384 = vmatpush.msra.mxu0 0.0
        %5385 = vmatpush.msra.mxu0 0.0
        %5386 = vmatpush.msra.mxu0 0.0
        %5387 = vmatpush.msra.mxu0 0.0
        %5388 = vmatpush.msra.mxu0 0.0
        %5389 = vmatpush.msra.mxu0 0.0
        %5390 = vmatpush.msra.mxu0 0.0
        %5391 = vmatpush.msra.mxu0 0.0
        %5392 = vmatpush.msra.mxu0 0.0
        %5393 = vmatpush.msra.mxu0 %v5195
        %5394 = vmatpush.msra.mxu0 %v5194
        %5395 = vmatmul.f32.gmra.mxu0 %v5353
        %v5396 = vpop.f32.mrf.mxu0
        %v5397 = vadd.f32 0.0, %v5396
        %5398 = vmatmul.f32.gmra.mxu0 %v5355
        %v5399 = vpop.f32.mrf.mxu0
        %v5400 = vadd.f32 0.0, %v5399
        %5401 = vmatmul.f32.gmra.mxu0 %v5357
        %v5402 = vpop.f32.mrf.mxu0
        %v5403 = vadd.f32 0.0, %v5402
        %5404 = vmatmul.f32.gmra.mxu0 %v5359
        %v5405 = vpop.f32.mrf.mxu0
        %v5406 = vadd.f32 0.0, %v5405
        %5407 = vmatmul.f32.gmra.mxu0 %v5361
        %v5408 = vpop.f32.mrf.mxu0
        %v5409 = vadd.f32 0.0, %v5408
        %5410 = vmatmul.f32.gmra.mxu0 %v5363
        %v5411 = vpop.f32.mrf.mxu0
        %v5412 = vadd.f32 0.0, %v5411
        %5413 = vmatmul.f32.gmra.mxu0 %v5365
        %v5414 = vpop.f32.mrf.mxu0
        %v5415 = vadd.f32 0.0, %v5414
        %5416 = vmatmul.f32.gmra.mxu0 %v5367
        %v5417 = vpop.f32.mrf.mxu0
        %v5418 = vadd.f32 0.0, %v5417
        %5419 = vmatmul.f32.gmra.mxu0 %v5369
        %v5420 = vpop.f32.mrf.mxu0
        %v5421 = vadd.f32 0.0, %v5420
        %5422 = vmatmul.f32.gmra.mxu0 %v5371
        %v5423 = vpop.f32.mrf.mxu0
        %v5424 = vadd.f32 0.0, %v5423
        %5425 = vmatmul.f32.gmra.mxu0 %v5373
        %v5426 = vpop.f32.mrf.mxu0
        %v5427 = vadd.f32 0.0, %v5426
        %5428 = vmatmul.f32.gmra.mxu0 %v5375
        %v5429 = vpop.f32.mrf.mxu0
        %v5430 = vadd.f32 0.0, %v5429
        %5431 = vmatmul.f32.gmra.mxu0 %v5377
        %v5432 = vpop.f32.mrf.mxu0
        %v5433 = vadd.f32 0.0, %v5432
        %5434 = vdwg.mxu0
        %v5448 = vrot.slane %v5397, 2
        %v5449 = vrot.slane %v5397, 4
        %v5450 = vrot.slane %v5397, 6
        %v5451 = vrot.slane %v5400, 2
        %v5452 = vrot.slane %v5400, 4
        %v5453 = vrot.slane %v5400, 6
        %v5454 = vrot.slane %v5403, 2
        %v5455 = vrot.slane %v5403, 4
        %v5456 = vrot.slane %v5403, 6
        %v5457 = vrot.slane %v5406, 2
        %v5458 = vrot.slane %v5406, 4
        %v5459 = vrot.slane %v5406, 6
        %v5460 = vrot.slane %v5409, 2
        %v5461 = vrot.slane %v5409, 4
        %v5462 = vrot.slane %v5409, 6
        %v5463 = vrot.slane %v5412, 2
        %v5464 = vrot.slane %v5412, 4
        %v5465 = vrot.slane %v5412, 6
        %v5466 = vrot.slane %v5415, 2
        %v5467 = vrot.slane %v5415, 4
        %v5468 = vrot.slane %v5415, 6
        %v5469 = vrot.slane %v5418, 2
        %v5470 = vrot.slane %v5418, 4
        %v5471 = vrot.slane %v5418, 6
        %v5472 = vrot.slane %v5421, 2
        %v5473 = vrot.slane %v5421, 4
        %v5474 = vrot.slane %v5421, 6
        %v5475 = vrot.slane %v5424, 2
        %v5476 = vrot.slane %v5424, 4
        %v5477 = vrot.slane %v5424, 6
        %v5478 = vrot.slane %v5427, 2
        %v5479 = vrot.slane %v5427, 4
        %v5480 = vrot.slane %v5427, 6
        %v5481 = vrot.slane %v5430, 2
        %v5482 = vrot.slane %v5430, 4
        %v5483 = vrot.slane %v5430, 6
        %v5484 = vrot.slane %v5433, 2
        %v5522 = vadd.f32 %v5068, %v5397
        %v5523 = vadd.f32 %v5119, %v5448
        %v5524 = vadd.f32 %v5120, %v5449
        %v5525 = vadd.f32 %v5121, %v5450
        %v5526 = vadd.f32 %v5071, %v5400
        %v5527 = vadd.f32 %v5122, %v5451
        %v5528 = vadd.f32 %v5123, %v5452
        %v5529 = vadd.f32 %v5124, %v5453
        %v5530 = vadd.f32 %v5074, %v5403
        %v5531 = vadd.f32 %v5125, %v5454
        %v5532 = vadd.f32 %v5126, %v5455
        %v5533 = vadd.f32 %v5127, %v5456
        %v5534 = vadd.f32 %v5077, %v5406
        %v5535 = vadd.f32 %v5128, %v5457
        %v5536 = vadd.f32 %v5129, %v5458
        %v5537 = vadd.f32 %v5130, %v5459
        %v5538 = vadd.f32 %v5080, %v5409
        %v5539 = vadd.f32 %v5131, %v5460
        %v5540 = vadd.f32 %v5132, %v5461
        %v5541 = vadd.f32 %v5133, %v5462
        %v5542 = vadd.f32 %v5083, %v5412
        %v5543 = vadd.f32 %v5134, %v5463
        %v5544 = vadd.f32 %v5135, %v5464
        %v5545 = vadd.f32 %v5136, %v5465
        %v5546 = vadd.f32 %v5086, %v5415
        %v5547 = vadd.f32 %v5137, %v5466
        %v5548 = vadd.f32 %v5138, %v5467
        %v5549 = vadd.f32 %v5139, %v5468
        %v5550 = vadd.f32 %v5089, %v5418
        %v5551 = vadd.f32 %v5140, %v5469
        %v5552 = vadd.f32 %v5141, %v5470
        %v5553 = vadd.f32 %v5142, %v5471
        %v5554 = vadd.f32 %v5092, %v5421
        %v5555 = vadd.f32 %v5143, %v5472
        %v5556 = vadd.f32 %v5144, %v5473
        %v5557 = vadd.f32 %v5145, %v5474
        %v5558 = vadd.f32 %v5095, %v5424
        %v5559 = vadd.f32 %v5146, %v5475
        %v5560 = vadd.f32 %v5147, %v5476
        %v5561 = vadd.f32 %v5148, %v5477
        %v5562 = vadd.f32 %v5098, %v5427
        %v5563 = vadd.f32 %v5149, %v5478
        %v5564 = vadd.f32 %v5150, %v5479
        %v5565 = vadd.f32 %v5151, %v5480
        %v5566 = vadd.f32 %v5101, %v5430
        %v5567 = vadd.f32 %v5152, %v5481
        %v5568 = vadd.f32 %v5153, %v5482
        %v5569 = vadd.f32 %v5154, %v5483
        %v5570 = vadd.f32 %v5104, %v5433
        %v5571 = vadd.f32 %v5155, %v5484
        %s5572 = scalar_lea.vmem [#allocation7], 48
        %v5573 = vld [vmem:[%s5572] sm:$0xff]
        %v5574 = vld [vmem:[%s5572 + $0x8] sm:$0xff]
        %v5578 = vrot.slane %v4472, 2
        %v5579 = vrot.slane %v4473, 2
        %v5580 = vrot.slane %v4474, 2
        %v5581 = vsel %vm2267, %v4472, %v5578
        %v5582 = vsel %vm4544, %v4472, %v5578
        %v5583 = vrot.slane %v5582, 2
        %v5584 = vsel %vm2267, %v4473, %v5579
        %v5585 = vsel %vm4544, %v4473, %v5579
        %v5586 = vrot.slane %v5585, 2
        %v5587 = vsel %vm2267, %v4474, %v5580
        %5588 = vst [vmem:[#allocation1] ss:$4 sm:$0xff] %v4553
        %s5589 = scalar_lea.vmem [#allocation1], 1
        %5590 = vst [vmem:[%s5589] ss:$4 sm:$0xff] %v4555
        %s5591 = scalar_lea.vmem [#allocation1], 2
        %5592 = vst [vmem:[%s5591] ss:$4 sm:$0xff] %v4556
        %s5593 = scalar_lea.vmem [#allocation1], 3
        %5594 = vst [vmem:[%s5593] ss:$4 sm:$0xff] %v4558
        %s5595 = scalar_lea.vmem [#allocation1], 32
        %5596 = vst [vmem:[%s5595] ss:$4 sm:$0xff] %v4559
        %s5597 = scalar_lea.vmem [#allocation1], 33
        %5598 = vst [vmem:[%s5597] ss:$4 sm:$0xff] %v4562
        %s5599 = scalar_lea.vmem [#allocation1], 34
        %5600 = vst [vmem:[%s5599] ss:$4 sm:$0xff] %v4564
        %s5601 = scalar_lea.vmem [#allocation1], 35
        %5602 = vst [vmem:[%s5601] ss:$4 sm:$0xff] %v4565
        %v5603 = vld.sshfl [vmem:[#allocation1] sm:$0xff pattern:$0x73625140]
        %v5604 = vld.sshfl [vmem:[#allocation1 + $0x20] sm:$0xff pattern:$0x73625140]
        %5605 = vst [vmem:[#allocation1] ss:$4 sm:$0xff] %v4567
        %5606 = vst [vmem:[%s5589] ss:$4 sm:$0xff] %v4568
        %5607 = vst [vmem:[%s5591] ss:$4 sm:$0xff] %v4571
        %5608 = vst [vmem:[%s5593] ss:$4 sm:$0xff] %v4573
        %5609 = vst [vmem:[%s5595] ss:$4 sm:$0xff] %v4574
        %5610 = vst [vmem:[%s5597] ss:$4 sm:$0xff] %v4576
        %5611 = vst [vmem:[%s5599] ss:$4 sm:$0xff] %v4577
        %5612 = vst [vmem:[%s5601] ss:$4 sm:$0xff] %v4580
        %v5613 = vld.sshfl [vmem:[#allocation1] sm:$0xff pattern:$0x73625140]
        %v5614 = vld.sshfl [vmem:[#allocation1 + $0x20] sm:$0xff pattern:$0x73625140]
        %5615 = vst [vmem:[#allocation1] ss:$4 sm:$0xff] %v4582
        %5616 = vst [vmem:[%s5589] ss:$4 sm:$0xff] %v4583
        %5617 = vst [vmem:[%s5591] ss:$4 sm:$0xff] %v4585
        %5618 = vst [vmem:[%s5593] ss:$4 sm:$0xff] %v4586
        %5619 = vst [vmem:[%s5595] ss:$4 sm:$0xff] %v4589
        %5620 = vst [vmem:[%s5597] ss:$4 sm:$0xff] %v4591
        %5621 = vst [vmem:[%s5599] ss:$4 sm:$0xff] %v4592
        %5622 = vst [vmem:[%s5601] ss:$4 sm:$0xff] %v4594
        %v5623 = vld.sshfl [vmem:[#allocation1] sm:$0xff pattern:$0x73625140]
        %v5624 = vld.sshfl [vmem:[#allocation1 + $0x20] sm:$0xff pattern:$0x73625140]
        %5625 = vst [vmem:[#allocation1] ss:$4 sm:$0xff] %v4595
        %5626 = vst [vmem:[%s5589] ss:$4 sm:$0xff] %v4598
        %5627 = vst [vmem:[%s5591] ss:$4 sm:$0xff] %v4600
        %5628 = vst [vmem:[%s5593] ss:$4 sm:$0xff] %v4601
        %5629 = vst [vmem:[%s5595] ss:$4 sm:$0xff] %v4603
        %5630 = vst [vmem:[%s5597] ss:$4 sm:$0xff] %v4604
        %5631 = vst [vmem:[%s5599] ss:$4 sm:$0xff] %v4607
        %5632 = vst [vmem:[%s5601] ss:$4 sm:$0xff] %v4609
        %v5633 = vld.sshfl [vmem:[#allocation1] sm:$0xff pattern:$0x73625140]
        %v5634 = vld.sshfl [vmem:[#allocation1 + $0x20] sm:$0xff pattern:$0x73625140]
        %5635 = vst [vmem:[#allocation1] ss:$4 sm:$0xff] %v4610
        %5636 = vst [vmem:[%s5589] ss:$4 sm:$0xff] %v4612
        %5637 = vst [vmem:[%s5591] ss:$4 sm:$0xff] %v4613
        %5638 = vst [vmem:[%s5593] ss:$4 sm:$0xff] %v4616
        %5639 = vst [vmem:[%s5595] ss:$4 sm:$0xff] %v4618
        %5640 = vst [vmem:[%s5597] ss:$4 sm:$0xff] %v4619
        %5641 = vst [vmem:[%s5599] ss:$4 sm:$0xff] %v4621
        %5642 = vst [vmem:[%s5601] ss:$4 sm:$0xff] %v4622
        %v5643 = vld.sshfl [vmem:[#allocation1] sm:$0xff pattern:$0x73625140]
        %v5644 = vld.sshfl [vmem:[#allocation1 + $0x20] sm:$0xff pattern:$0x73625140]
        %5645 = vst [vmem:[#allocation1] ss:$4 sm:$0xff] %v4625
        %5646 = vst [vmem:[%s5589] ss:$4 sm:$0xff] %v4627
        %5647 = vst [vmem:[%s5591] ss:$4 sm:$0xff] %v4628
        %5648 = vst [vmem:[%s5593] ss:$4 sm:$0xff] %v4630
        %5649 = vst [vmem:[%s5595] ss:$4 sm:$0xff] %v4631
        %5650 = vst [vmem:[%s5597] ss:$4 sm:$0xff] %v5581
        %5651 = vst [vmem:[%s5599] ss:$4 sm:$0xff] %v5583
        %5652 = vst [vmem:[%s5601] ss:$4 sm:$0xff] %v5584
        %v5653 = vld.sshfl [vmem:[#allocation1] sm:$0xff pattern:$0x73625140]
        %v5654 = vld.sshfl [vmem:[#allocation1 + $0x20] sm:$0xff pattern:$0x73625140]
        %5655 = vst [vmem:[#allocation1] ss:$4 sm:$0xff] %v5586
        %5656 = vst [vmem:[%s5589] ss:$4 sm:$0xff] %v5587
        %v5657 = vld.sshfl [vmem:[#allocation1] sm:$0xff pattern:$0x73625140]
        %v5658 = vsel %vm4871, %v5603, 0
        %v5660 = vsel %vm4871, %v5604, 0
        %v5662 = vsel %vm4871, %v5613, 0
        %v5664 = vsel %vm4871, %v5614, 0
        %v5666 = vsel %vm4871, %v5623, 0
        %v5668 = vsel %vm4871, %v5624, 0
        %v5670 = vsel %vm4871, %v5633, 0
        %v5672 = vsel %vm4871, %v5634, 0
        %v5674 = vsel %vm4871, %v5643, 0
        %v5676 = vsel %vm4871, %v5644, 0
        %v5678 = vsel %vm4871, %v5653, 0
        %v5680 = vsel %vm4871, %v5654, 0
        %v5682 = vsel %vm4871, %v5657, 0
        %5684 = vmatpush.msra.mxu0 0.0
        %5685 = vmatpush.msra.mxu0 0.0
        %5686 = vmatpush.msra.mxu0 0.0
        %5687 = vmatpush.msra.mxu0 0.0
        %5688 = vmatpush.msra.mxu0 0.0
        %5689 = vmatpush.msra.mxu0 0.0
        %5690 = vmatpush.msra.mxu0 0.0
        %5691 = vmatpush.msra.mxu0 0.0
        %5692 = vmatpush.msra.mxu0 0.0
        %5693 = vmatpush.msra.mxu0 0.0
        %5694 = vmatpush.msra.mxu0 0.0
        %5695 = vmatpush.msra.mxu0 0.0
        %5696 = vmatpush.msra.mxu0 0.0
        %5697 = vmatpush.msra.mxu0 0.0
        %5698 = vmatpush.msra.mxu0 %v5574
        %5699 = vmatpush.msra.mxu0 %v5573
        %5700 = vmatmul.f32.gmra.mxu0 %v5658
        %v5701 = vpop.f32.mrf.mxu0
        %v5702 = vadd.f32 0.0, %v5701
        %5703 = vmatmul.f32.gmra.mxu0 %v5660
        %v5704 = vpop.f32.mrf.mxu0
        %v5705 = vadd.f32 0.0, %v5704
        %5706 = vmatmul.f32.gmra.mxu0 %v5662
        %v5707 = vpop.f32.mrf.mxu0
        %v5708 = vadd.f32 0.0, %v5707
        %5709 = vmatmul.f32.gmra.mxu0 %v5664
        %v5710 = vpop.f32.mrf.mxu0
        %v5711 = vadd.f32 0.0, %v5710
        %5712 = vmatmul.f32.gmra.mxu0 %v5666
        %v5713 = vpop.f32.mrf.mxu0
        %v5714 = vadd.f32 0.0, %v5713
        %5715 = vmatmul.f32.gmra.mxu0 %v5668
        %v5716 = vpop.f32.mrf.mxu0
        %v5717 = vadd.f32 0.0, %v5716
        %5718 = vmatmul.f32.gmra.mxu0 %v5670
        %v5719 = vpop.f32.mrf.mxu0
        %v5720 = vadd.f32 0.0, %v5719
        %5721 = vmatmul.f32.gmra.mxu0 %v5672
        %v5722 = vpop.f32.mrf.mxu0
        %v5723 = vadd.f32 0.0, %v5722
        %5724 = vmatmul.f32.gmra.mxu0 %v5674
        %v5725 = vpop.f32.mrf.mxu0
        %v5726 = vadd.f32 0.0, %v5725
        %5727 = vmatmul.f32.gmra.mxu0 %v5676
        %v5728 = vpop.f32.mrf.mxu0
        %v5729 = vadd.f32 0.0, %v5728
        %5730 = vmatmul.f32.gmra.mxu0 %v5678
        %v5731 = vpop.f32.mrf.mxu0
        %v5732 = vadd.f32 0.0, %v5731
        %5733 = vmatmul.f32.gmra.mxu0 %v5680
        %v5734 = vpop.f32.mrf.mxu0
        %v5735 = vadd.f32 0.0, %v5734
        %5736 = vmatmul.f32.gmra.mxu0 %v5682
        %v5737 = vpop.f32.mrf.mxu0
        %v5738 = vadd.f32 0.0, %v5737
        %5739 = vdwg.mxu0
        %v5753 = vrot.slane %v5702, 2
        %v5754 = vrot.slane %v5702, 4
        %v5755 = vrot.slane %v5702, 6
        %v5756 = vrot.slane %v5705, 2
        %v5757 = vrot.slane %v5705, 4
        %v5758 = vrot.slane %v5705, 6
        %v5759 = vrot.slane %v5708, 2
        %v5760 = vrot.slane %v5708, 4
        %v5761 = vrot.slane %v5708, 6
        %v5762 = vrot.slane %v5711, 2
        %v5763 = vrot.slane %v5711, 4
        %v5764 = vrot.slane %v5711, 6
        %v5765 = vrot.slane %v5714, 2
        %v5766 = vrot.slane %v5714, 4
        %v5767 = vrot.slane %v5714, 6
        %v5768 = vrot.slane %v5717, 2
        %v5769 = vrot.slane %v5717, 4
        %v5770 = vrot.slane %v5717, 6
        %v5771 = vrot.slane %v5720, 2
        %v5772 = vrot.slane %v5720, 4
        %v5773 = vrot.slane %v5720, 6
        %v5774 = vrot.slane %v5723, 2
        %v5775 = vrot.slane %v5723, 4
        %v5776 = vrot.slane %v5723, 6
        %v5777 = vrot.slane %v5726, 2
        %v5778 = vrot.slane %v5726, 4
        %v5779 = vrot.slane %v5726, 6
        %v5780 = vrot.slane %v5729, 2
        %v5781 = vrot.slane %v5729, 4
        %v5782 = vrot.slane %v5729, 6
        %v5783 = vrot.slane %v5732, 2
        %v5784 = vrot.slane %v5732, 4
        %v5785 = vrot.slane %v5732, 6
        %v5786 = vrot.slane %v5735, 2
        %v5787 = vrot.slane %v5735, 4
        %v5788 = vrot.slane %v5735, 6
        %v5789 = vrot.slane %v5738, 2
        %v5827 = vadd.f32 %v5522, %v5702
        %v5828 = vadd.f32 %v5523, %v5753
        %v5829 = vadd.f32 %v5524, %v5754
        %v5830 = vadd.f32 %v5525, %v5755
        %v5831 = vadd.f32 %v5526, %v5705
        %v5832 = vadd.f32 %v5527, %v5756
        %v5833 = vadd.f32 %v5528, %v5757
        %v5834 = vadd.f32 %v5529, %v5758
        %v5835 = vadd.f32 %v5530, %v5708
        %v5836 = vadd.f32 %v5531, %v5759
        %v5837 = vadd.f32 %v5532, %v5760
        %v5838 = vadd.f32 %v5533, %v5761
        %v5839 = vadd.f32 %v5534, %v5711
        %v5840 = vadd.f32 %v5535, %v5762
        %v5841 = vadd.f32 %v5536, %v5763
        %v5842 = vadd.f32 %v5537, %v5764
        %v5843 = vadd.f32 %v5538, %v5714
        %v5844 = vadd.f32 %v5539, %v5765
        %v5845 = vadd.f32 %v5540, %v5766
        %v5846 = vadd.f32 %v5541, %v5767
        %v5847 = vadd.f32 %v5542, %v5717
        %v5848 = vadd.f32 %v5543, %v5768
        %v5849 = vadd.f32 %v5544, %v5769
        %v5850 = vadd.f32 %v5545, %v5770
        %v5851 = vadd.f32 %v5546, %v5720
        %v5852 = vadd.f32 %v5547, %v5771
        %v5853 = vadd.f32 %v5548, %v5772
        %v5854 = vadd.f32 %v5549, %v5773
        %v5855 = vadd.f32 %v5550, %v5723
        %v5856 = vadd.f32 %v5551, %v5774
        %v5857 = vadd.f32 %v5552, %v5775
        %v5858 = vadd.f32 %v5553, %v5776
        %v5859 = vadd.f32 %v5554, %v5726
        %v5860 = vadd.f32 %v5555, %v5777
        %v5861 = vadd.f32 %v5556, %v5778
        %v5862 = vadd.f32 %v5557, %v5779
        %v5863 = vadd.f32 %v5558, %v5729
        %v5864 = vadd.f32 %v5559, %v5780
        %v5865 = vadd.f32 %v5560, %v5781
        %v5866 = vadd.f32 %v5561, %v5782
        %v5867 = vadd.f32 %v5562, %v5732
        %v5868 = vadd.f32 %v5563, %v5783
        %v5869 = vadd.f32 %v5564, %v5784
        %v5870 = vadd.f32 %v5565, %v5785
        %v5871 = vadd.f32 %v5566, %v5735
        %v5872 = vadd.f32 %v5567, %v5786
        %v5873 = vadd.f32 %v5568, %v5787
        %v5874 = vadd.f32 %v5569, %v5788
        %v5875 = vadd.f32 %v5570, %v5738
        %v5876 = vadd.f32 %v5571, %v5789
        %s5877 = scalar_lea.vmem [#allocation7], 64
        %v5878 = vld [vmem:[%s5877] sm:$0xff]
        %v5879 = vld [vmem:[%s5877 + $0x8] sm:$0xff]
        %v5880 = vsel %vm4544, %v4474, %v5580
        %v5881 = vrot.slane %v5880, 2
        %v5882 = vrot.slane %v5581, 7
        %v5883 = vrot.slane %v5882, 2
        %v5884 = vrot.slane %v5583, 7
        %v5885 = vsel %vm4640, %v5883, %v5884
        %v5886 = vrot.slane %v5884, 2
        %v5887 = vrot.slane %v5584, 7
        %v5888 = vsel %vm4640, %v5886, %v5887
        %v5889 = vrot.slane %v5887, 2
        %v5890 = vrot.slane %v5586, 7
        %v5891 = vsel %vm4640, %v5889, %v5890
        %v5892 = vrot.slane %v5890, 2
        %v5893 = vrot.slane %v5587, 7
        %v5894 = vsel %vm4640, %v5892, %v5893
        %v5895 = vrot.slane %v5893, 2
        %v5896 = vrot.slane %v5881, 7
        %v5897 = vsel %vm4640, %v5895, %v5896
        %5898 = vst [vmem:[#allocation1] ss:$4 sm:$0xff] %v4660
        %s5899 = scalar_lea.vmem [#allocation1], 1
        %5900 = vst [vmem:[%s5899] ss:$4 sm:$0xff] %v4663
        %s5901 = scalar_lea.vmem [#allocation1], 2
        %5902 = vst [vmem:[%s5901] ss:$4 sm:$0xff] %v4666
        %s5903 = scalar_lea.vmem [#allocation1], 3
        %5904 = vst [vmem:[%s5903] ss:$4 sm:$0xff] %v4669
        %s5905 = scalar_lea.vmem [#allocation1], 32
        %5906 = vst [vmem:[%s5905] ss:$4 sm:$0xff] %v4672
        %s5907 = scalar_lea.vmem [#allocation1], 33
        %5908 = vst [vmem:[%s5907] ss:$4 sm:$0xff] %v4676
        %s5909 = scalar_lea.vmem [#allocation1], 34
        %5910 = vst [vmem:[%s5909] ss:$4 sm:$0xff] %v4679
        %s5911 = scalar_lea.vmem [#allocation1], 35
        %5912 = vst [vmem:[%s5911] ss:$4 sm:$0xff] %v4682
        %v5913 = vld.sshfl [vmem:[#allocation1] sm:$0xff pattern:$0x73625140]
        %v5914 = vld.sshfl [vmem:[#allocation1 + $0x20] sm:$0xff pattern:$0x73625140]
        %5915 = vst [vmem:[#allocation1] ss:$4 sm:$0xff] %v4685
        %5916 = vst [vmem:[%s5899] ss:$4 sm:$0xff] %v4688
        %5917 = vst [vmem:[%s5901] ss:$4 sm:$0xff] %v4692
        %5918 = vst [vmem:[%s5903] ss:$4 sm:$0xff] %v4695
        %5919 = vst [vmem:[%s5905] ss:$4 sm:$0xff] %v4698
        %5920 = vst [vmem:[%s5907] ss:$4 sm:$0xff] %v4701
        %5921 = vst [vmem:[%s5909] ss:$4 sm:$0xff] %v4704
        %5922 = vst [vmem:[%s5911] ss:$4 sm:$0xff] %v4708
        %v5923 = vld.sshfl [vmem:[#allocation1] sm:$0xff pattern:$0x73625140]
        %v5924 = vld.sshfl [vmem:[#allocation1 + $0x20] sm:$0xff pattern:$0x73625140]
        %5925 = vst [vmem:[#allocation1] ss:$4 sm:$0xff] %v4711
        %5926 = vst [vmem:[%s5899] ss:$4 sm:$0xff] %v4714
        %5927 = vst [vmem:[%s5901] ss:$4 sm:$0xff] %v4717
        %5928 = vst [vmem:[%s5903] ss:$4 sm:$0xff] %v4720
        %5929 = vst [vmem:[%s5905] ss:$4 sm:$0xff] %v4724
        %5930 = vst [vmem:[%s5907] ss:$4 sm:$0xff] %v4727
        %5931 = vst [vmem:[%s5909] ss:$4 sm:$0xff] %v4730
        %5932 = vst [vmem:[%s5911] ss:$4 sm:$0xff] %v4733
        %v5933 = vld.sshfl [vmem:[#allocation1] sm:$0xff pattern:$0x73625140]
        %v5934 = vld.sshfl [vmem:[#allocation1 + $0x20] sm:$0xff pattern:$0x73625140]
        %5935 = vst [vmem:[#allocation1] ss:$4 sm:$0xff] %v4736
        %5936 = vst [vmem:[%s5899] ss:$4 sm:$0xff] %v4740
        %5937 = vst [vmem:[%s5901] ss:$4 sm:$0xff] %v4743
        %5938 = vst [vmem:[%s5903] ss:$4 sm:$0xff] %v4746
        %5939 = vst [vmem:[%s5905] ss:$4 sm:$0xff] %v4749
        %5940 = vst [vmem:[%s5907] ss:$4 sm:$0xff] %v4752
        %5941 = vst [vmem:[%s5909] ss:$4 sm:$0xff] %v4756
        %5942 = vst [vmem:[%s5911] ss:$4 sm:$0xff] %v4759
        %v5943 = vld.sshfl [vmem:[#allocation1] sm:$0xff pattern:$0x73625140]
        %v5944 = vld.sshfl [vmem:[#allocation1 + $0x20] sm:$0xff pattern:$0x73625140]
        %5945 = vst [vmem:[#allocation1] ss:$4 sm:$0xff] %v4762
        %5946 = vst [vmem:[%s5899] ss:$4 sm:$0xff] %v4765
        %5947 = vst [vmem:[%s5901] ss:$4 sm:$0xff] %v4768
        %5948 = vst [vmem:[%s5903] ss:$4 sm:$0xff] %v4772
        %5949 = vst [vmem:[%s5905] ss:$4 sm:$0xff] %v4775
        %5950 = vst [vmem:[%s5907] ss:$4 sm:$0xff] %v4778
        %5951 = vst [vmem:[%s5909] ss:$4 sm:$0xff] %v4781
        %5952 = vst [vmem:[%s5911] ss:$4 sm:$0xff] %v4784
        %v5953 = vld.sshfl [vmem:[#allocation1] sm:$0xff pattern:$0x73625140]
        %v5954 = vld.sshfl [vmem:[#allocation1 + $0x20] sm:$0xff pattern:$0x73625140]
        %5955 = vst [vmem:[#allocation1] ss:$4 sm:$0xff] %v4788
        %5956 = vst [vmem:[%s5899] ss:$4 sm:$0xff] %v4791
        %5957 = vst [vmem:[%s5901] ss:$4 sm:$0xff] %v4794
        %5958 = vst [vmem:[%s5903] ss:$4 sm:$0xff] %v4797
        %5959 = vst [vmem:[%s5905] ss:$4 sm:$0xff] %v4800
        %5960 = vst [vmem:[%s5907] ss:$4 sm:$0xff] %v5885
        %5961 = vst [vmem:[%s5909] ss:$4 sm:$0xff] %v5888
        %5962 = vst [vmem:[%s5911] ss:$4 sm:$0xff] %v5891
        %v5963 = vld.sshfl [vmem:[#allocation1] sm:$0xff pattern:$0x73625140]
        %v5964 = vld.sshfl [vmem:[#allocation1 + $0x20] sm:$0xff pattern:$0x73625140]
        %5965 = vst [vmem:[#allocation1] ss:$4 sm:$0xff] %v5894
        %5966 = vst [vmem:[%s5899] ss:$4 sm:$0xff] %v5897
        %v5967 = vld.sshfl [vmem:[#allocation1] sm:$0xff pattern:$0x73625140]
        %v5968 = vsel %vm4871, %v5913, 0
        %v5970 = vsel %vm4871, %v5914, 0
        %v5972 = vsel %vm4871, %v5923, 0
        %v5974 = vsel %vm4871, %v5924, 0
        %v5976 = vsel %vm4871, %v5933, 0
        %v5978 = vsel %vm4871, %v5934, 0
        %v5980 = vsel %vm4871, %v5943, 0
        %v5982 = vsel %vm4871, %v5944, 0
        %v5984 = vsel %vm4871, %v5953, 0
        %v5986 = vsel %vm4871, %v5954, 0
        %v5988 = vsel %vm4871, %v5963, 0
        %v5990 = vsel %vm4871, %v5964, 0
        %v5992 = vsel %vm4871, %v5967, 0
        %5994 = vmatpush.msra.mxu0 0.0
        %5995 = vmatpush.msra.mxu0 0.0
        %5996 = vmatpush.msra.mxu0 0.0
        %5997 = vmatpush.msra.mxu0 0.0
        %5998 = vmatpush.msra.mxu0 0.0
        %5999 = vmatpush.msra.mxu0 0.0
        %6000 = vmatpush.msra.mxu0 0.0
        %6001 = vmatpush.msra.mxu0 0.0
        %6002 = vmatpush.msra.mxu0 0.0
        %6003 = vmatpush.msra.mxu0 0.0
        %6004 = vmatpush.msra.mxu0 0.0
        %6005 = vmatpush.msra.mxu0 0.0
        %6006 = vmatpush.msra.mxu0 0.0
        %6007 = vmatpush.msra.mxu0 0.0
        %6008 = vmatpush.msra.mxu0 %v5879
        %6009 = vmatpush.msra.mxu0 %v5878
        %6010 = vmatmul.f32.gmra.mxu0 %v5968
        %v6011 = vpop.f32.mrf.mxu0
        %v6012 = vadd.f32 0.0, %v6011
        %6013 = vmatmul.f32.gmra.mxu0 %v5970
        %v6014 = vpop.f32.mrf.mxu0
        %v6015 = vadd.f32 0.0, %v6014
        %6016 = vmatmul.f32.gmra.mxu0 %v5972
        %v6017 = vpop.f32.mrf.mxu0
        %v6018 = vadd.f32 0.0, %v6017
        %6019 = vmatmul.f32.gmra.mxu0 %v5974
        %v6020 = vpop.f32.mrf.mxu0
        %v6021 = vadd.f32 0.0, %v6020
        %6022 = vmatmul.f32.gmra.mxu0 %v5976
        %v6023 = vpop.f32.mrf.mxu0
        %v6024 = vadd.f32 0.0, %v6023
        %6025 = vmatmul.f32.gmra.mxu0 %v5978
        %v6026 = vpop.f32.mrf.mxu0
        %v6027 = vadd.f32 0.0, %v6026
        %6028 = vmatmul.f32.gmra.mxu0 %v5980
        %v6029 = vpop.f32.mrf.mxu0
        %v6030 = vadd.f32 0.0, %v6029
        %6031 = vmatmul.f32.gmra.mxu0 %v5982
        %v6032 = vpop.f32.mrf.mxu0
        %v6033 = vadd.f32 0.0, %v6032
        %6034 = vmatmul.f32.gmra.mxu0 %v5984
        %v6035 = vpop.f32.mrf.mxu0
        %v6036 = vadd.f32 0.0, %v6035
        %6037 = vmatmul.f32.gmra.mxu0 %v5986
        %v6038 = vpop.f32.mrf.mxu0
        %v6039 = vadd.f32 0.0, %v6038
        %6040 = vmatmul.f32.gmra.mxu0 %v5988
        %v6041 = vpop.f32.mrf.mxu0
        %v6042 = vadd.f32 0.0, %v6041
        %6043 = vmatmul.f32.gmra.mxu0 %v5990
        %v6044 = vpop.f32.mrf.mxu0
        %v6045 = vadd.f32 0.0, %v6044
        %6046 = vmatmul.f32.gmra.mxu0 %v5992
        %v6047 = vpop.f32.mrf.mxu0
        %v6048 = vadd.f32 0.0, %v6047
        %6049 = vdwg.mxu0
        %v6063 = vrot.slane %v6012, 2
        %v6064 = vrot.slane %v6012, 4
        %v6065 = vrot.slane %v6012, 6
        %v6066 = vrot.slane %v6015, 2
        %v6067 = vrot.slane %v6015, 4
        %v6068 = vrot.slane %v6015, 6
        %v6069 = vrot.slane %v6018, 2
        %v6070 = vrot.slane %v6018, 4
        %v6071 = vrot.slane %v6018, 6
        %v6072 = vrot.slane %v6021, 2
        %v6073 = vrot.slane %v6021, 4
        %v6074 = vrot.slane %v6021, 6
        %v6075 = vrot.slane %v6024, 2
        %v6076 = vrot.slane %v6024, 4
        %v6077 = vrot.slane %v6024, 6
        %v6078 = vrot.slane %v6027, 2
        %v6079 = vrot.slane %v6027, 4
        %v6080 = vrot.slane %v6027, 6
        %v6081 = vrot.slane %v6030, 2
        %v6082 = vrot.slane %v6030, 4
        %v6083 = vrot.slane %v6030, 6
        %v6084 = vrot.slane %v6033, 2
        %v6085 = vrot.slane %v6033, 4
        %v6086 = vrot.slane %v6033, 6
        %v6087 = vrot.slane %v6036, 2
        %v6088 = vrot.slane %v6036, 4
        %v6089 = vrot.slane %v6036, 6
        %v6090 = vrot.slane %v6039, 2
        %v6091 = vrot.slane %v6039, 4
        %v6092 = vrot.slane %v6039, 6
        %v6093 = vrot.slane %v6042, 2
        %v6094 = vrot.slane %v6042, 4
        %v6095 = vrot.slane %v6042, 6
        %v6096 = vrot.slane %v6045, 2
        %v6097 = vrot.slane %v6045, 4
        %v6098 = vrot.slane %v6045, 6
        %v6099 = vrot.slane %v6048, 2
        %v6137 = vadd.f32 %v5827, %v6012
        %v6138 = vadd.f32 %v5828, %v6063
        %v6139 = vadd.f32 %v5829, %v6064
        %v6140 = vadd.f32 %v5830, %v6065
        %v6141 = vadd.f32 %v5831, %v6015
        %v6142 = vadd.f32 %v5832, %v6066
        %v6143 = vadd.f32 %v5833, %v6067
        %v6144 = vadd.f32 %v5834, %v6068
        %v6145 = vadd.f32 %v5835, %v6018
        %v6146 = vadd.f32 %v5836, %v6069
        %v6147 = vadd.f32 %v5837, %v6070
        %v6148 = vadd.f32 %v5838, %v6071
        %v6149 = vadd.f32 %v5839, %v6021
        %v6150 = vadd.f32 %v5840, %v6072
        %v6151 = vadd.f32 %v5841, %v6073
        %v6152 = vadd.f32 %v5842, %v6074
        %v6153 = vadd.f32 %v5843, %v6024
        %v6154 = vadd.f32 %v5844, %v6075
        %v6155 = vadd.f32 %v5845, %v6076
        %v6156 = vadd.f32 %v5846, %v6077
        %v6157 = vadd.f32 %v5847, %v6027
        %v6158 = vadd.f32 %v5848, %v6078
        %v6159 = vadd.f32 %v5849, %v6079
        %v6160 = vadd.f32 %v5850, %v6080
        %v6161 = vadd.f32 %v5851, %v6030
        %v6162 = vadd.f32 %v5852, %v6081
        %v6163 = vadd.f32 %v5853, %v6082
        %v6164 = vadd.f32 %v5854, %v6083
        %v6165 = vadd.f32 %v5855, %v6033
        %v6166 = vadd.f32 %v5856, %v6084
        %v6167 = vadd.f32 %v5857, %v6085
        %v6168 = vadd.f32 %v5858, %v6086
        %v6169 = vadd.f32 %v5859, %v6036
        %v6170 = vadd.f32 %v5860, %v6087
        %v6171 = vadd.f32 %v5861, %v6088
        %v6172 = vadd.f32 %v5862, %v6089
        %v6173 = vadd.f32 %v5863, %v6039
        %v6174 = vadd.f32 %v5864, %v6090
        %v6175 = vadd.f32 %v5865, %v6091
        %v6176 = vadd.f32 %v5866, %v6092
        %v6177 = vadd.f32 %v5867, %v6042
        %v6178 = vadd.f32 %v5868, %v6093
        %v6179 = vadd.f32 %v5869, %v6094
        %v6180 = vadd.f32 %v5870, %v6095
        %v6181 = vadd.f32 %v5871, %v6045
        %v6182 = vadd.f32 %v5872, %v6096
        %v6183 = vadd.f32 %v5873, %v6097
        %v6184 = vadd.f32 %v5874, %v6098
        %v6185 = vadd.f32 %v5875, %v6048
        %v6186 = vadd.f32 %v5876, %v6099
        %s6187 = scalar_lea.vmem [#allocation7], 80
        %v6188 = vld [vmem:[%s6187] sm:$0xff]
        %v6189 = vld [vmem:[%s6187 + $0x8] sm:$0xff]
        %6190 = vst.sshfl [vmem:[#allocation1] sm:$0xff pattern:$0x75643120] %v4445
        %6191 = vst.sshfl [vmem:[#allocation1 + $0x10] sm:$0xff pattern:$0x75643120] %v4446
        %6192 = vst.sshfl [vmem:[#allocation1 + $0x20] sm:$0xff pattern:$0x75643120] %v4447
        %s6193 = scalar_lea.vmem [#allocation1], 1
        %v6194 = vld [vmem:[%s6193] ss:$2 sm:$0xff]
        %s6195 = scalar_lea.vmem [#allocation1], 16
        %v6196 = vld [vmem:[%s6195] ss:$2 sm:$0xff]
        %s6197 = scalar_lea.vmem [#allocation1], 17
        %v6198 = vld [vmem:[%s6197] ss:$2 sm:$0xff]
        %s6199 = scalar_lea.vmem [#allocation1], 32
        %v6200 = vld [vmem:[%s6199] ss:$2 sm:$0xff]
        %s6201 = scalar_lea.vmem [#allocation1], 33
        %v6202 = vld [vmem:[%s6201] ss:$2 sm:$0xff]
        %6203 = vst.sshfl [vmem:[#allocation1 + $0x30] sm:$0xff pattern:$0x75643120] %v4448
        %s6204 = scalar_lea.vmem [#allocation1], 49
        %v6205 = vld [vmem:[%s6204] ss:$2 sm:$0xff]
        %6206 = vst.sshfl [vmem:[#allocation1] sm:$0xff pattern:$0x75643120] %v4449
        %6207 = vst.sshfl [vmem:[#allocation1 + $0x10] sm:$0xff pattern:$0x75643120] %v4450
        %v6208 = vld [vmem:[#allocation1] ss:$2 sm:$0xff]
        %v6209 = vld [vmem:[%s6193] ss:$2 sm:$0xff]
        %v6210 = vld [vmem:[%s6195] ss:$2 sm:$0xff]
        %v6211 = vld [vmem:[%s6197] ss:$2 sm:$0xff]
        %6212 = vst.sshfl [vmem:[#allocation1 + $0x20] sm:$0xff pattern:$0x75643120] %v4451
        %6213 = vst.sshfl [vmem:[#allocation1 + $0x30] sm:$0xff pattern:$0x75643120] %v4452
        %v6214 = vld [vmem:[%s6201] ss:$2 sm:$0xff]
        %s6215 = scalar_lea.vmem [#allocation1], 48
        %v6216 = vld [vmem:[%s6215] ss:$2 sm:$0xff]
        %v6217 = vld [vmem:[%s6204] ss:$2 sm:$0xff]
        %6218 = vst.sshfl [vmem:[#allocation1] sm:$0xff pattern:$0x75643120] %v4453
        %v6219 = vld [vmem:[#allocation1] ss:$2 sm:$0xff]
        %v6220 = vld [vmem:[%s6193] ss:$2 sm:$0xff]
        %6221 = vst.sshfl [vmem:[#allocation1 + $0x10] sm:$0xff pattern:$0x75643120] %v4454
        %6222 = vst.sshfl [vmem:[#allocation1 + $0x20] sm:$0xff pattern:$0x75643120] %v4455
        %6223 = vst.sshfl [vmem:[#allocation1 + $0x30] sm:$0xff pattern:$0x75643120] %v4456
        %v6224 = vld [vmem:[%s6197] ss:$2 sm:$0xff]
        %v6225 = vld [vmem:[%s6199] ss:$2 sm:$0xff]
        %v6226 = vld [vmem:[%s6201] ss:$2 sm:$0xff]
        %v6227 = vld [vmem:[%s6215] ss:$2 sm:$0xff]
        %v6228 = vld [vmem:[%s6204] ss:$2 sm:$0xff]
        %6229 = vst.sshfl [vmem:[#allocation1] sm:$0xff pattern:$0x75643120] %v4457
        %6230 = vst.sshfl [vmem:[#allocation1 + $0x10] sm:$0xff pattern:$0x75643120] %v4458
        %6231 = vst.sshfl [vmem:[#allocation1 + $0x20] sm:$0xff pattern:$0x75643120] %v4459
        %v6232 = vld [vmem:[%s6193] ss:$2 sm:$0xff]
        %v6233 = vld [vmem:[%s6195] ss:$2 sm:$0xff]
        %v6234 = vld [vmem:[%s6197] ss:$2 sm:$0xff]
        %v6235 = vld [vmem:[%s6199] ss:$2 sm:$0xff]
        %v6236 = vld [vmem:[%s6201] ss:$2 sm:$0xff]
        %6237 = vst.sshfl [vmem:[#allocation1 + $0x30] sm:$0xff pattern:$0x75643120] %v4460
        %v6238 = vld [vmem:[%s6204] ss:$2 sm:$0xff]
        %6239 = vst.sshfl [vmem:[#allocation1] sm:$0xff pattern:$0x75643120] %v4461
        %6240 = vst.sshfl [vmem:[#allocation1 + $0x10] sm:$0xff pattern:$0x75643120] %v4462
        %v6241 = vld [vmem:[#allocation1] ss:$2 sm:$0xff]
        %v6242 = vld [vmem:[%s6193] ss:$2 sm:$0xff]
        %v6243 = vld [vmem:[%s6195] ss:$2 sm:$0xff]
        %v6244 = vld [vmem:[%s6197] ss:$2 sm:$0xff]
        %6245 = vst.sshfl [vmem:[#allocation1 + $0x20] sm:$0xff pattern:$0x75643120] %v4463
        %6246 = vst.sshfl [vmem:[#allocation1 + $0x30] sm:$0xff pattern:$0x75643120] %v4464
        %v6247 = vld [vmem:[%s6201] ss:$2 sm:$0xff]
        %v6248 = vld [vmem:[%s6215] ss:$2 sm:$0xff]
        %v6249 = vld [vmem:[%s6204] ss:$2 sm:$0xff]
        %6250 = vst.sshfl [vmem:[#allocation1] sm:$0xff pattern:$0x75643120] %v4465
        %v6251 = vld [vmem:[#allocation1] ss:$2 sm:$0xff]
        %v6252 = vld [vmem:[%s6193] ss:$2 sm:$0xff]
        %6253 = vst.sshfl [vmem:[#allocation1 + $0x10] sm:$0xff pattern:$0x75643120] %v4466
        %6254 = vst.sshfl [vmem:[#allocation1 + $0x20] sm:$0xff pattern:$0x75643120] %v4467
        %6255 = vst.sshfl [vmem:[#allocation1 + $0x30] sm:$0xff pattern:$0x75643120] %v4468
        %v6256 = vld [vmem:[%s6197] ss:$2 sm:$0xff]
        %v6257 = vld [vmem:[%s6199] ss:$2 sm:$0xff]
        %v6258 = vld [vmem:[%s6201] ss:$2 sm:$0xff]
        %v6259 = vld [vmem:[%s6215] ss:$2 sm:$0xff]
        %v6260 = vld [vmem:[%s6204] ss:$2 sm:$0xff]
        %6261 = vst.sshfl [vmem:[#allocation1] sm:$0xff pattern:$0x75643120] %v4469
        %6262 = vst.sshfl [vmem:[#allocation1 + $0x10] sm:$0xff pattern:$0x75643120] %v4470
        %6263 = vst.sshfl [vmem:[#allocation1 + $0x20] sm:$0xff pattern:$0x75643120] %v4471
        %v6264 = vld [vmem:[%s6193] ss:$2 sm:$0xff]
        %v6265 = vld [vmem:[%s6195] ss:$2 sm:$0xff]
        %v6266 = vld [vmem:[%s6197] ss:$2 sm:$0xff]
        %v6267 = vld [vmem:[%s6199] ss:$2 sm:$0xff]
        %v6268 = vld [vmem:[%s6201] ss:$2 sm:$0xff]
        %6269 = vst.sshfl [vmem:[#allocation1 + $0x30] sm:$0xff pattern:$0x75643120] %v4472
        %v6270 = vld [vmem:[%s6204] ss:$2 sm:$0xff]
        %6271 = vst.sshfl [vmem:[#allocation1] sm:$0xff pattern:$0x75643120] %v4473
        %6272 = vst.sshfl [vmem:[#allocation1 + $0x10] sm:$0xff pattern:$0x75643120] %v4474
        %v6273 = vld [vmem:[#allocation1] ss:$2 sm:$0xff]
        %v6274 = vld [vmem:[%s6193] ss:$2 sm:$0xff]
        %v6275 = vld [vmem:[%s6195] ss:$2 sm:$0xff]
        %v6276 = vld [vmem:[%s6197] ss:$2 sm:$0xff]
        %6277 = vst [vmem:[#allocation1] ss:$4 sm:$0xff] %v6194
        %s6278 = scalar_lea.vmem [#allocation1], 1
        %6279 = vst [vmem:[%s6278] ss:$4 sm:$0xff] %v6196
        %s6280 = scalar_lea.vmem [#allocation1], 2
        %6281 = vst [vmem:[%s6280] ss:$4 sm:$0xff] %v6198
        %s6282 = scalar_lea.vmem [#allocation1], 3
        %6283 = vst [vmem:[%s6282] ss:$4 sm:$0xff] %v6200
        %s6284 = scalar_lea.vmem [#allocation1], 32
        %6285 = vst [vmem:[%s6284] ss:$4 sm:$0xff] %v6202
        %s6286 = scalar_lea.vmem [#allocation1], 33
        %6287 = vst [vmem:[%s6286] ss:$4 sm:$0xff] %v6205
        %s6288 = scalar_lea.vmem [#allocation1], 34
        %6289 = vst [vmem:[%s6288] ss:$4 sm:$0xff] %v6208
        %s6290 = scalar_lea.vmem [#allocation1], 35
        %6291 = vst [vmem:[%s6290] ss:$4 sm:$0xff] %v6209
        %v6292 = vld.sshfl [vmem:[#allocation1] sm:$0xff pattern:$0x73625140]
        %v6293 = vld.sshfl [vmem:[#allocation1 + $0x20] sm:$0xff pattern:$0x73625140]
        %6294 = vst [vmem:[#allocation1] ss:$4 sm:$0xff] %v6210
        %6295 = vst [vmem:[%s6278] ss:$4 sm:$0xff] %v6211
        %6296 = vst [vmem:[%s6280] ss:$4 sm:$0xff] %v6214
        %6297 = vst [vmem:[%s6282] ss:$4 sm:$0xff] %v6216
        %6298 = vst [vmem:[%s6284] ss:$4 sm:$0xff] %v6217
        %6299 = vst [vmem:[%s6286] ss:$4 sm:$0xff] %v6219
        %6300 = vst [vmem:[%s6288] ss:$4 sm:$0xff] %v6220
        %6301 = vst [vmem:[%s6290] ss:$4 sm:$0xff] %v6224
        %v6302 = vld.sshfl [vmem:[#allocation1] sm:$0xff pattern:$0x73625140]
        %v6303 = vld.sshfl [vmem:[#allocation1 + $0x20] sm:$0xff pattern:$0x73625140]
        %6304 = vst [vmem:[#allocation1] ss:$4 sm:$0xff] %v6225
        %6305 = vst [vmem:[%s6278] ss:$4 sm:$0xff] %v6226
        %6306 = vst [vmem:[%s6280] ss:$4 sm:$0xff] %v6227
        %6307 = vst [vmem:[%s6282] ss:$4 sm:$0xff] %v6228
        %6308 = vst [vmem:[%s6284] ss:$4 sm:$0xff] %v6232
        %6309 = vst [vmem:[%s6286] ss:$4 sm:$0xff] %v6233
        %6310 = vst [vmem:[%s6288] ss:$4 sm:$0xff] %v6234
        %6311 = vst [vmem:[%s6290] ss:$4 sm:$0xff] %v6235
        %v6312 = vld.sshfl [vmem:[#allocation1] sm:$0xff pattern:$0x73625140]
        %v6313 = vld.sshfl [vmem:[#allocation1 + $0x20] sm:$0xff pattern:$0x73625140]
        %6314 = vst [vmem:[#allocation1] ss:$4 sm:$0xff] %v6236
        %6315 = vst [vmem:[%s6278] ss:$4 sm:$0xff] %v6238
        %6316 = vst [vmem:[%s6280] ss:$4 sm:$0xff] %v6241
        %6317 = vst [vmem:[%s6282] ss:$4 sm:$0xff] %v6242
        %6318 = vst [vmem:[%s6284] ss:$4 sm:$0xff] %v6243
        %6319 = vst [vmem:[%s6286] ss:$4 sm:$0xff] %v6244
        %6320 = vst [vmem:[%s6288] ss:$4 sm:$0xff] %v6247
        %6321 = vst [vmem:[%s6290] ss:$4 sm:$0xff] %v6248
        %v6322 = vld.sshfl [vmem:[#allocation1] sm:$0xff pattern:$0x73625140]
        %v6323 = vld.sshfl [vmem:[#allocation1 + $0x20] sm:$0xff pattern:$0x73625140]
        %6324 = vst [vmem:[#allocation1] ss:$4 sm:$0xff] %v6249
        %6325 = vst [vmem:[%s6278] ss:$4 sm:$0xff] %v6251
        %6326 = vst [vmem:[%s6280] ss:$4 sm:$0xff] %v6252
        %6327 = vst [vmem:[%s6282] ss:$4 sm:$0xff] %v6256
        %6328 = vst [vmem:[%s6284] ss:$4 sm:$0xff] %v6257
        %6329 = vst [vmem:[%s6286] ss:$4 sm:$0xff] %v6258
        %6330 = vst [vmem:[%s6288] ss:$4 sm:$0xff] %v6259
        %6331 = vst [vmem:[%s6290] ss:$4 sm:$0xff] %v6260
        %v6332 = vld.sshfl [vmem:[#allocation1] sm:$0xff pattern:$0x73625140]
        %v6333 = vld.sshfl [vmem:[#allocation1 + $0x20] sm:$0xff pattern:$0x73625140]
        %6334 = vst [vmem:[#allocation1] ss:$4 sm:$0xff] %v6264
        %6335 = vst [vmem:[%s6278] ss:$4 sm:$0xff] %v6265
        %6336 = vst [vmem:[%s6280] ss:$4 sm:$0xff] %v6266
        %6337 = vst [vmem:[%s6282] ss:$4 sm:$0xff] %v6267
        %6338 = vst [vmem:[%s6284] ss:$4 sm:$0xff] %v6268
        %6339 = vst [vmem:[%s6286] ss:$4 sm:$0xff] %v6270
        %6340 = vst [vmem:[%s6288] ss:$4 sm:$0xff] %v6273
        %6341 = vst [vmem:[%s6290] ss:$4 sm:$0xff] %v6274
        %v6342 = vld.sshfl [vmem:[#allocation1] sm:$0xff pattern:$0x73625140]
        %v6343 = vld.sshfl [vmem:[#allocation1 + $0x20] sm:$0xff pattern:$0x73625140]
        %6344 = vst [vmem:[#allocation1] ss:$4 sm:$0xff] %v6275
        %6345 = vst [vmem:[%s6278] ss:$4 sm:$0xff] %v6276
        %v6346 = vld.sshfl [vmem:[#allocation1] sm:$0xff pattern:$0x73625140]
        %v6347 = vsel %vm4871, %v6292, 0
        %v6349 = vsel %vm4871, %v6293, 0
        %v6351 = vsel %vm4871, %v6302, 0
        %v6353 = vsel %vm4871, %v6303, 0
        %v6355 = vsel %vm4871, %v6312, 0
        %v6357 = vsel %vm4871, %v6313, 0
        %v6359 = vsel %vm4871, %v6322, 0
        %v6361 = vsel %vm4871, %v6323, 0
        %v6363 = vsel %vm4871, %v6332, 0
        %v6365 = vsel %vm4871, %v6333, 0
        %v6367 = vsel %vm4871, %v6342, 0
        %v6369 = vsel %vm4871, %v6343, 0
        %v6371 = vsel %vm4871, %v6346, 0
        %6373 = vmatpush.msra.mxu0 0.0
        %6374 = vmatpush.msra.mxu0 0.0
        %6375 = vmatpush.msra.mxu0 0.0
        %6376 = vmatpush.msra.mxu0 0.0
        %6377 = vmatpush.msra.mxu0 0.0
        %6378 = vmatpush.msra.mxu0 0.0
        %6379 = vmatpush.msra.mxu0 0.0
        %6380 = vmatpush.msra.mxu0 0.0
        %6381 = vmatpush.msra.mxu0 0.0
        %6382 = vmatpush.msra.mxu0 0.0
        %6383 = vmatpush.msra.mxu0 0.0
        %6384 = vmatpush.msra.mxu0 0.0
        %6385 = vmatpush.msra.mxu0 0.0
        %6386 = vmatpush.msra.mxu0 0.0
        %6387 = vmatpush.msra.mxu0 %v6189
        %6388 = vmatpush.msra.mxu0 %v6188
        %6389 = vmatmul.f32.gmra.mxu0 %v6347
        %v6390 = vpop.f32.mrf.mxu0
        %v6391 = vadd.f32 0.0, %v6390
        %6392 = vmatmul.f32.gmra.mxu0 %v6349
        %v6393 = vpop.f32.mrf.mxu0
        %v6394 = vadd.f32 0.0, %v6393
        %6395 = vmatmul.f32.gmra.mxu0 %v6351
        %v6396 = vpop.f32.mrf.mxu0
        %v6397 = vadd.f32 0.0, %v6396
        %6398 = vmatmul.f32.gmra.mxu0 %v6353
        %v6399 = vpop.f32.mrf.mxu0
        %v6400 = vadd.f32 0.0, %v6399
        %6401 = vmatmul.f32.gmra.mxu0 %v6355
        %v6402 = vpop.f32.mrf.mxu0
        %v6403 = vadd.f32 0.0, %v6402
        %6404 = vmatmul.f32.gmra.mxu0 %v6357
        %v6405 = vpop.f32.mrf.mxu0
        %v6406 = vadd.f32 0.0, %v6405
        %6407 = vmatmul.f32.gmra.mxu0 %v6359
        %v6408 = vpop.f32.mrf.mxu0
        %v6409 = vadd.f32 0.0, %v6408
        %6410 = vmatmul.f32.gmra.mxu0 %v6361
        %v6411 = vpop.f32.mrf.mxu0
        %v6412 = vadd.f32 0.0, %v6411
        %6413 = vmatmul.f32.gmra.mxu0 %v6363
        %v6414 = vpop.f32.mrf.mxu0
        %v6415 = vadd.f32 0.0, %v6414
        %6416 = vmatmul.f32.gmra.mxu0 %v6365
        %v6417 = vpop.f32.mrf.mxu0
        %v6418 = vadd.f32 0.0, %v6417
        %6419 = vmatmul.f32.gmra.mxu0 %v6367
        %v6420 = vpop.f32.mrf.mxu0
        %v6421 = vadd.f32 0.0, %v6420
        %6422 = vmatmul.f32.gmra.mxu0 %v6369
        %v6423 = vpop.f32.mrf.mxu0
        %v6424 = vadd.f32 0.0, %v6423
        %6425 = vmatmul.f32.gmra.mxu0 %v6371
        %v6426 = vpop.f32.mrf.mxu0
        %v6427 = vadd.f32 0.0, %v6426
        %6428 = vdwg.mxu0
        %v6442 = vrot.slane %v6391, 2
        %v6443 = vrot.slane %v6391, 4
        %v6444 = vrot.slane %v6391, 6
        %v6445 = vrot.slane %v6394, 2
        %v6446 = vrot.slane %v6394, 4
        %v6447 = vrot.slane %v6394, 6
        %v6448 = vrot.slane %v6397, 2
        %v6449 = vrot.slane %v6397, 4
        %v6450 = vrot.slane %v6397, 6
        %v6451 = vrot.slane %v6400, 2
        %v6452 = vrot.slane %v6400, 4
        %v6453 = vrot.slane %v6400, 6
        %v6454 = vrot.slane %v6403, 2
        %v6455 = vrot.slane %v6403, 4
        %v6456 = vrot.slane %v6403, 6
        %v6457 = vrot.slane %v6406, 2
        %v6458 = vrot.slane %v6406, 4
        %v6459 = vrot.slane %v6406, 6
        %v6460 = vrot.slane %v6409, 2
        %v6461 = vrot.slane %v6409, 4
        %v6462 = vrot.slane %v6409, 6
        %v6463 = vrot.slane %v6412, 2
        %v6464 = vrot.slane %v6412, 4
        %v6465 = vrot.slane %v6412, 6
        %v6466 = vrot.slane %v6415, 2
        %v6467 = vrot.slane %v6415, 4
        %v6468 = vrot.slane %v6415, 6
        %v6469 = vrot.slane %v6418, 2
        %v6470 = vrot.slane %v6418, 4
        %v6471 = vrot.slane %v6418, 6
        %v6472 = vrot.slane %v6421, 2
        %v6473 = vrot.slane %v6421, 4
        %v6474 = vrot.slane %v6421, 6
        %v6475 = vrot.slane %v6424, 2
        %v6476 = vrot.slane %v6424, 4
        %v6477 = vrot.slane %v6424, 6
        %v6478 = vrot.slane %v6427, 2
        %v6516 = vadd.f32 %v6137, %v6391
        %v6517 = vadd.f32 %v6138, %v6442
        %v6518 = vadd.f32 %v6139, %v6443
        %v6519 = vadd.f32 %v6140, %v6444
        %v6520 = vadd.f32 %v6141, %v6394
        %v6521 = vadd.f32 %v6142, %v6445
        %v6522 = vadd.f32 %v6143, %v6446
        %v6523 = vadd.f32 %v6144, %v6447
        %v6524 = vadd.f32 %v6145, %v6397
        %v6525 = vadd.f32 %v6146, %v6448
        %v6526 = vadd.f32 %v6147, %v6449
        %v6527 = vadd.f32 %v6148, %v6450
        %v6528 = vadd.f32 %v6149, %v6400
        %v6529 = vadd.f32 %v6150, %v6451
        %v6530 = vadd.f32 %v6151, %v6452
        %v6531 = vadd.f32 %v6152, %v6453
        %v6532 = vadd.f32 %v6153, %v6403
        %v6533 = vadd.f32 %v6154, %v6454
        %v6534 = vadd.f32 %v6155, %v6455
        %v6535 = vadd.f32 %v6156, %v6456
        %v6536 = vadd.f32 %v6157, %v6406
        %v6537 = vadd.f32 %v6158, %v6457
        %v6538 = vadd.f32 %v6159, %v6458
        %v6539 = vadd.f32 %v6160, %v6459
        %v6540 = vadd.f32 %v6161, %v6409
        %v6541 = vadd.f32 %v6162, %v6460
        %v6542 = vadd.f32 %v6163, %v6461
        %v6543 = vadd.f32 %v6164, %v6462
        %v6544 = vadd.f32 %v6165, %v6412
        %v6545 = vadd.f32 %v6166, %v6463
        %v6546 = vadd.f32 %v6167, %v6464
        %v6547 = vadd.f32 %v6168, %v6465
        %v6548 = vadd.f32 %v6169, %v6415
        %v6549 = vadd.f32 %v6170, %v6466
        %v6550 = vadd.f32 %v6171, %v6467
        %v6551 = vadd.f32 %v6172, %v6468
        %v6552 = vadd.f32 %v6173, %v6418
        %v6553 = vadd.f32 %v6174, %v6469
        %v6554 = vadd.f32 %v6175, %v6470
        %v6555 = vadd.f32 %v6176, %v6471
        %v6556 = vadd.f32 %v6177, %v6421
        %v6557 = vadd.f32 %v6178, %v6472
        %v6558 = vadd.f32 %v6179, %v6473
        %v6559 = vadd.f32 %v6180, %v6474
        %v6560 = vadd.f32 %v6181, %v6424
        %v6561 = vadd.f32 %v6182, %v6475
        %v6562 = vadd.f32 %v6183, %v6476
        %v6563 = vadd.f32 %v6184, %v6477
        %v6564 = vadd.f32 %v6185, %v6427
        %v6565 = vadd.f32 %v6186, %v6478
        %s6566 = scalar_lea.vmem [#allocation7], 96
        %v6567 = vld [vmem:[%s6566] sm:$0xff]
        %v6568 = vld [vmem:[%s6566 + $0x8] sm:$0xff]
        %v6572 = vrot.slane %v4475, 2
        %v6573 = vrot.slane %v4476, 2
        %v6574 = vrot.slane %v4477, 2
        %v6575 = vsel %vm2267, %v4475, %v6572
        %v6576 = vsel %vm4544, %v4475, %v6572
        %v6577 = vrot.slane %v6576, 2
        %v6578 = vsel %vm2267, %v4476, %v6573
        %v6579 = vsel %vm4544, %v4476, %v6573
        %v6580 = vrot.slane %v6579, 2
        %v6581 = vsel %vm2267, %v4477, %v6574
        %6582 = vst [vmem:[#allocation1] ss:$4 sm:$0xff] %v4562
        %s6583 = scalar_lea.vmem [#allocation1], 1
        %6584 = vst [vmem:[%s6583] ss:$4 sm:$0xff] %v4564
        %s6585 = scalar_lea.vmem [#allocation1], 2
        %6586 = vst [vmem:[%s6585] ss:$4 sm:$0xff] %v4565
        %s6587 = scalar_lea.vmem [#allocation1], 3
        %6588 = vst [vmem:[%s6587] ss:$4 sm:$0xff] %v4567
        %s6589 = scalar_lea.vmem [#allocation1], 32
        %6590 = vst [vmem:[%s6589] ss:$4 sm:$0xff] %v4568
        %s6591 = scalar_lea.vmem [#allocation1], 33
        %6592 = vst [vmem:[%s6591] ss:$4 sm:$0xff] %v4571
        %s6593 = scalar_lea.vmem [#allocation1], 34
        %6594 = vst [vmem:[%s6593] ss:$4 sm:$0xff] %v4573
        %s6595 = scalar_lea.vmem [#allocation1], 35
        %6596 = vst [vmem:[%s6595] ss:$4 sm:$0xff] %v4574
        %v6597 = vld.sshfl [vmem:[#allocation1] sm:$0xff pattern:$0x73625140]
        %v6598 = vld.sshfl [vmem:[#allocation1 + $0x20] sm:$0xff pattern:$0x73625140]
        %6599 = vst [vmem:[#allocation1] ss:$4 sm:$0xff] %v4576
        %6600 = vst [vmem:[%s6583] ss:$4 sm:$0xff] %v4577
        %6601 = vst [vmem:[%s6585] ss:$4 sm:$0xff] %v4580
        %6602 = vst [vmem:[%s6587] ss:$4 sm:$0xff] %v4582
        %6603 = vst [vmem:[%s6589] ss:$4 sm:$0xff] %v4583
        %6604 = vst [vmem:[%s6591] ss:$4 sm:$0xff] %v4585
        %6605 = vst [vmem:[%s6593] ss:$4 sm:$0xff] %v4586
        %6606 = vst [vmem:[%s6595] ss:$4 sm:$0xff] %v4589
        %v6607 = vld.sshfl [vmem:[#allocation1] sm:$0xff pattern:$0x73625140]
        %v6608 = vld.sshfl [vmem:[#allocation1 + $0x20] sm:$0xff pattern:$0x73625140]
        %6609 = vst [vmem:[#allocation1] ss:$4 sm:$0xff] %v4591
        %6610 = vst [vmem:[%s6583] ss:$4 sm:$0xff] %v4592
        %6611 = vst [vmem:[%s6585] ss:$4 sm:$0xff] %v4594
        %6612 = vst [vmem:[%s6587] ss:$4 sm:$0xff] %v4595
        %6613 = vst [vmem:[%s6589] ss:$4 sm:$0xff] %v4598
        %6614 = vst [vmem:[%s6591] ss:$4 sm:$0xff] %v4600
        %6615 = vst [vmem:[%s6593] ss:$4 sm:$0xff] %v4601
        %6616 = vst [vmem:[%s6595] ss:$4 sm:$0xff] %v4603
        %v6617 = vld.sshfl [vmem:[#allocation1] sm:$0xff pattern:$0x73625140]
        %v6618 = vld.sshfl [vmem:[#allocation1 + $0x20] sm:$0xff pattern:$0x73625140]
        %6619 = vst [vmem:[#allocation1] ss:$4 sm:$0xff] %v4604
        %6620 = vst [vmem:[%s6583] ss:$4 sm:$0xff] %v4607
        %6621 = vst [vmem:[%s6585] ss:$4 sm:$0xff] %v4609
        %6622 = vst [vmem:[%s6587] ss:$4 sm:$0xff] %v4610
        %6623 = vst [vmem:[%s6589] ss:$4 sm:$0xff] %v4612
        %6624 = vst [vmem:[%s6591] ss:$4 sm:$0xff] %v4613
        %6625 = vst [vmem:[%s6593] ss:$4 sm:$0xff] %v4616
        %6626 = vst [vmem:[%s6595] ss:$4 sm:$0xff] %v4618
        %v6627 = vld.sshfl [vmem:[#allocation1] sm:$0xff pattern:$0x73625140]
        %v6628 = vld.sshfl [vmem:[#allocation1 + $0x20] sm:$0xff pattern:$0x73625140]
        %6629 = vst [vmem:[#allocation1] ss:$4 sm:$0xff] %v4619
        %6630 = vst [vmem:[%s6583] ss:$4 sm:$0xff] %v4621
        %6631 = vst [vmem:[%s6585] ss:$4 sm:$0xff] %v4622
        %6632 = vst [vmem:[%s6587] ss:$4 sm:$0xff] %v4625
        %6633 = vst [vmem:[%s6589] ss:$4 sm:$0xff] %v4627
        %6634 = vst [vmem:[%s6591] ss:$4 sm:$0xff] %v4628
        %6635 = vst [vmem:[%s6593] ss:$4 sm:$0xff] %v4630
        %6636 = vst [vmem:[%s6595] ss:$4 sm:$0xff] %v4631
        %v6637 = vld.sshfl [vmem:[#allocation1] sm:$0xff pattern:$0x73625140]
        %v6638 = vld.sshfl [vmem:[#allocation1 + $0x20] sm:$0xff pattern:$0x73625140]
        %6639 = vst [vmem:[#allocation1] ss:$4 sm:$0xff] %v5581
        %6640 = vst [vmem:[%s6583] ss:$4 sm:$0xff] %v5583
        %6641 = vst [vmem:[%s6585] ss:$4 sm:$0xff] %v5584
        %6642 = vst [vmem:[%s6587] ss:$4 sm:$0xff] %v5586
        %6643 = vst [vmem:[%s6589] ss:$4 sm:$0xff] %v5587
        %6644 = vst [vmem:[%s6591] ss:$4 sm:$0xff] %v6575
        %6645 = vst [vmem:[%s6593] ss:$4 sm:$0xff] %v6577
        %6646 = vst [vmem:[%s6595] ss:$4 sm:$0xff] %v6578
        %v6647 = vld.sshfl [vmem:[#allocation1] sm:$0xff pattern:$0x73625140]
        %v6648 = vld.sshfl [vmem:[#allocation1 + $0x20] sm:$0xff pattern:$0x73625140]
        %6649 = vst [vmem:[#allocation1] ss:$4 sm:$0xff] %v6580
        %6650 = vst [vmem:[%s6583] ss:$4 sm:$0xff] %v6581
        %v6651 = vld.sshfl [vmem:[#allocation1] sm:$0xff pattern:$0x73625140]
        %v6652 = vsel %vm4871, %v6597, 0
        %v6654 = vsel %vm4871, %v6598, 0
        %v6656 = vsel %vm4871, %v6607, 0
        %v6658 = vsel %vm4871, %v6608, 0
        %v6660 = vsel %vm4871, %v6617, 0
        %v6662 = vsel %vm4871, %v6618, 0
        %v6664 = vsel %vm4871, %v6627, 0
        %v6666 = vsel %vm4871, %v6628, 0
        %v6668 = vsel %vm4871, %v6637, 0
        %v6670 = vsel %vm4871, %v6638, 0
        %v6672 = vsel %vm4871, %v6647, 0
        %v6674 = vsel %vm4871, %v6648, 0
        %v6676 = vsel %vm4871, %v6651, 0
        %6678 = vmatpush.msra.mxu0 0.0
        %6679 = vmatpush.msra.mxu0 0.0
        %6680 = vmatpush.msra.mxu0 0.0
        %6681 = vmatpush.msra.mxu0 0.0
        %6682 = vmatpush.msra.mxu0 0.0
        %6683 = vmatpush.msra.mxu0 0.0
        %6684 = vmatpush.msra.mxu0 0.0
        %6685 = vmatpush.msra.mxu0 0.0
        %6686 = vmatpush.msra.mxu0 0.0
        %6687 = vmatpush.msra.mxu0 0.0
        %6688 = vmatpush.msra.mxu0 0.0
        %6689 = vmatpush.msra.mxu0 0.0
        %6690 = vmatpush.msra.mxu0 0.0
        %6691 = vmatpush.msra.mxu0 0.0
        %6692 = vmatpush.msra.mxu0 %v6568
        %6693 = vmatpush.msra.mxu0 %v6567
        %6694 = vmatmul.f32.gmra.mxu0 %v6652
        %v6695 = vpop.f32.mrf.mxu0
        %v6696 = vadd.f32 0.0, %v6695
        %6697 = vmatmul.f32.gmra.mxu0 %v6654
        %v6698 = vpop.f32.mrf.mxu0
        %v6699 = vadd.f32 0.0, %v6698
        %6700 = vmatmul.f32.gmra.mxu0 %v6656
        %v6701 = vpop.f32.mrf.mxu0
        %v6702 = vadd.f32 0.0, %v6701
        %6703 = vmatmul.f32.gmra.mxu0 %v6658
        %v6704 = vpop.f32.mrf.mxu0
        %v6705 = vadd.f32 0.0, %v6704
        %6706 = vmatmul.f32.gmra.mxu0 %v6660
        %v6707 = vpop.f32.mrf.mxu0
        %v6708 = vadd.f32 0.0, %v6707
        %6709 = vmatmul.f32.gmra.mxu0 %v6662
        %v6710 = vpop.f32.mrf.mxu0
        %v6711 = vadd.f32 0.0, %v6710
        %6712 = vmatmul.f32.gmra.mxu0 %v6664
        %v6713 = vpop.f32.mrf.mxu0
        %v6714 = vadd.f32 0.0, %v6713
        %6715 = vmatmul.f32.gmra.mxu0 %v6666
        %v6716 = vpop.f32.mrf.mxu0
        %v6717 = vadd.f32 0.0, %v6716
        %6718 = vmatmul.f32.gmra.mxu0 %v6668
        %v6719 = vpop.f32.mrf.mxu0
        %v6720 = vadd.f32 0.0, %v6719
        %6721 = vmatmul.f32.gmra.mxu0 %v6670
        %v6722 = vpop.f32.mrf.mxu0
        %v6723 = vadd.f32 0.0, %v6722
        %6724 = vmatmul.f32.gmra.mxu0 %v6672
        %v6725 = vpop.f32.mrf.mxu0
        %v6726 = vadd.f32 0.0, %v6725
        %6727 = vmatmul.f32.gmra.mxu0 %v6674
        %v6728 = vpop.f32.mrf.mxu0
        %v6729 = vadd.f32 0.0, %v6728
        %6730 = vmatmul.f32.gmra.mxu0 %v6676
        %v6731 = vpop.f32.mrf.mxu0
        %v6732 = vadd.f32 0.0, %v6731
        %6733 = vdwg.mxu0
        %v6747 = vrot.slane %v6696, 2
        %v6748 = vrot.slane %v6696, 4
        %v6749 = vrot.slane %v6696, 6
        %v6750 = vrot.slane %v6699, 2
        %v6751 = vrot.slane %v6699, 4
        %v6752 = vrot.slane %v6699, 6
        %v6753 = vrot.slane %v6702, 2
        %v6754 = vrot.slane %v6702, 4
        %v6755 = vrot.slane %v6702, 6
        %v6756 = vrot.slane %v6705, 2
        %v6757 = vrot.slane %v6705, 4
        %v6758 = vrot.slane %v6705, 6
        %v6759 = vrot.slane %v6708, 2
        %v6760 = vrot.slane %v6708, 4
        %v6761 = vrot.slane %v6708, 6
        %v6762 = vrot.slane %v6711, 2
        %v6763 = vrot.slane %v6711, 4
        %v6764 = vrot.slane %v6711, 6
        %v6765 = vrot.slane %v6714, 2
        %v6766 = vrot.slane %v6714, 4
        %v6767 = vrot.slane %v6714, 6
        %v6768 = vrot.slane %v6717, 2
        %v6769 = vrot.slane %v6717, 4
        %v6770 = vrot.slane %v6717, 6
        %v6771 = vrot.slane %v6720, 2
        %v6772 = vrot.slane %v6720, 4
        %v6773 = vrot.slane %v6720, 6
        %v6774 = vrot.slane %v6723, 2
        %v6775 = vrot.slane %v6723, 4
        %v6776 = vrot.slane %v6723, 6
        %v6777 = vrot.slane %v6726, 2
        %v6778 = vrot.slane %v6726, 4
        %v6779 = vrot.slane %v6726, 6
        %v6780 = vrot.slane %v6729, 2
        %v6781 = vrot.slane %v6729, 4
        %v6782 = vrot.slane %v6729, 6
        %v6783 = vrot.slane %v6732, 2
        %v6821 = vadd.f32 %v6516, %v6696
        %v6822 = vadd.f32 %v6517, %v6747
        %v6823 = vadd.f32 %v6518, %v6748
        %v6824 = vadd.f32 %v6519, %v6749
        %v6825 = vadd.f32 %v6520, %v6699
        %v6826 = vadd.f32 %v6521, %v6750
        %v6827 = vadd.f32 %v6522, %v6751
        %v6828 = vadd.f32 %v6523, %v6752
        %v6829 = vadd.f32 %v6524, %v6702
        %v6830 = vadd.f32 %v6525, %v6753
        %v6831 = vadd.f32 %v6526, %v6754
        %v6832 = vadd.f32 %v6527, %v6755
        %v6833 = vadd.f32 %v6528, %v6705
        %v6834 = vadd.f32 %v6529, %v6756
        %v6835 = vadd.f32 %v6530, %v6757
        %v6836 = vadd.f32 %v6531, %v6758
        %v6837 = vadd.f32 %v6532, %v6708
        %v6838 = vadd.f32 %v6533, %v6759
        %v6839 = vadd.f32 %v6534, %v6760
        %v6840 = vadd.f32 %v6535, %v6761
        %v6841 = vadd.f32 %v6536, %v6711
        %v6842 = vadd.f32 %v6537, %v6762
        %v6843 = vadd.f32 %v6538, %v6763
        %v6844 = vadd.f32 %v6539, %v6764
        %v6845 = vadd.f32 %v6540, %v6714
        %v6846 = vadd.f32 %v6541, %v6765
        %v6847 = vadd.f32 %v6542, %v6766
        %v6848 = vadd.f32 %v6543, %v6767
        %v6849 = vadd.f32 %v6544, %v6717
        %v6850 = vadd.f32 %v6545, %v6768
        %v6851 = vadd.f32 %v6546, %v6769
        %v6852 = vadd.f32 %v6547, %v6770
        %v6853 = vadd.f32 %v6548, %v6720
        %v6854 = vadd.f32 %v6549, %v6771
        %v6855 = vadd.f32 %v6550, %v6772
        %v6856 = vadd.f32 %v6551, %v6773
        %v6857 = vadd.f32 %v6552, %v6723
        %v6858 = vadd.f32 %v6553, %v6774
        %v6859 = vadd.f32 %v6554, %v6775
        %v6860 = vadd.f32 %v6555, %v6776
        %v6861 = vadd.f32 %v6556, %v6726
        %v6862 = vadd.f32 %v6557, %v6777
        %v6863 = vadd.f32 %v6558, %v6778
        %v6864 = vadd.f32 %v6559, %v6779
        %v6865 = vadd.f32 %v6560, %v6729
        %v6866 = vadd.f32 %v6561, %v6780
        %v6867 = vadd.f32 %v6562, %v6781
        %v6868 = vadd.f32 %v6563, %v6782
        %v6869 = vadd.f32 %v6564, %v6732
        %v6870 = vadd.f32 %v6565, %v6783
        %s6871 = scalar_lea.vmem [#allocation7], 112
        %v6872 = vld [vmem:[%s6871] sm:$0xff]
        %v6873 = vld [vmem:[%s6871 + $0x8] sm:$0xff]
        %v6874 = vsel %vm4544, %v4477, %v6574
        %v6875 = vrot.slane %v6874, 2
        %v6876 = vrot.slane %v6575, 7
        %v6877 = vrot.slane %v6876, 2
        %v6878 = vrot.slane %v6577, 7
        %v6879 = vsel %vm4640, %v6877, %v6878
        %v6880 = vrot.slane %v6878, 2
        %v6881 = vrot.slane %v6578, 7
        %v6882 = vsel %vm4640, %v6880, %v6881
        %v6883 = vrot.slane %v6881, 2
        %v6884 = vrot.slane %v6580, 7
        %v6885 = vsel %vm4640, %v6883, %v6884
        %v6886 = vrot.slane %v6884, 2
        %v6887 = vrot.slane %v6581, 7
        %v6888 = vsel %vm4640, %v6886, %v6887
        %v6889 = vrot.slane %v6887, 2
        %v6890 = vrot.slane %v6875, 7
        %v6891 = vsel %vm4640, %v6889, %v6890
        %6892 = vst [vmem:[#allocation1] ss:$4 sm:$0xff] %v4676
        %s6893 = scalar_lea.vmem [#allocation1], 1
        %6894 = vst [vmem:[%s6893] ss:$4 sm:$0xff] %v4679
        %s6895 = scalar_lea.vmem [#allocation1], 2
        %6896 = vst [vmem:[%s6895] ss:$4 sm:$0xff] %v4682
        %s6897 = scalar_lea.vmem [#allocation1], 3
        %6898 = vst [vmem:[%s6897] ss:$4 sm:$0xff] %v4685
        %s6899 = scalar_lea.vmem [#allocation1], 32
        %6900 = vst [vmem:[%s6899] ss:$4 sm:$0xff] %v4688
        %s6901 = scalar_lea.vmem [#allocation1], 33
        %6902 = vst [vmem:[%s6901] ss:$4 sm:$0xff] %v4692
        %s6903 = scalar_lea.vmem [#allocation1], 34
        %6904 = vst [vmem:[%s6903] ss:$4 sm:$0xff] %v4695
        %s6905 = scalar_lea.vmem [#allocation1], 35
        %6906 = vst [vmem:[%s6905] ss:$4 sm:$0xff] %v4698
        %v6907 = vld.sshfl [vmem:[#allocation1] sm:$0xff pattern:$0x73625140]
        %v6908 = vld.sshfl [vmem:[#allocation1 + $0x20] sm:$0xff pattern:$0x73625140]
        %6909 = vst [vmem:[#allocation1] ss:$4 sm:$0xff] %v4701
        %6910 = vst [vmem:[%s6893] ss:$4 sm:$0xff] %v4704
        %6911 = vst [vmem:[%s6895] ss:$4 sm:$0xff] %v4708
        %6912 = vst [vmem:[%s6897] ss:$4 sm:$0xff] %v4711
        %6913 = vst [vmem:[%s6899] ss:$4 sm:$0xff] %v4714
        %6914 = vst [vmem:[%s6901] ss:$4 sm:$0xff] %v4717
        %6915 = vst [vmem:[%s6903] ss:$4 sm:$0xff] %v4720
        %6916 = vst [vmem:[%s6905] ss:$4 sm:$0xff] %v4724
        %v6917 = vld.sshfl [vmem:[#allocation1] sm:$0xff pattern:$0x73625140]
        %v6918 = vld.sshfl [vmem:[#allocation1 + $0x20] sm:$0xff pattern:$0x73625140]
        %6919 = vst [vmem:[#allocation1] ss:$4 sm:$0xff] %v4727
        %6920 = vst [vmem:[%s6893] ss:$4 sm:$0xff] %v4730
        %6921 = vst [vmem:[%s6895] ss:$4 sm:$0xff] %v4733
        %6922 = vst [vmem:[%s6897] ss:$4 sm:$0xff] %v4736
        %6923 = vst [vmem:[%s6899] ss:$4 sm:$0xff] %v4740
        %6924 = vst [vmem:[%s6901] ss:$4 sm:$0xff] %v4743
        %6925 = vst [vmem:[%s6903] ss:$4 sm:$0xff] %v4746
        %6926 = vst [vmem:[%s6905] ss:$4 sm:$0xff] %v4749
        %v6927 = vld.sshfl [vmem:[#allocation1] sm:$0xff pattern:$0x73625140]
        %v6928 = vld.sshfl [vmem:[#allocation1 + $0x20] sm:$0xff pattern:$0x73625140]
        %6929 = vst [vmem:[#allocation1] ss:$4 sm:$0xff] %v4752
        %6930 = vst [vmem:[%s6893] ss:$4 sm:$0xff] %v4756
        %6931 = vst [vmem:[%s6895] ss:$4 sm:$0xff] %v4759
        %6932 = vst [vmem:[%s6897] ss:$4 sm:$0xff] %v4762
        %6933 = vst [vmem:[%s6899] ss:$4 sm:$0xff] %v4765
        %6934 = vst [vmem:[%s6901] ss:$4 sm:$0xff] %v4768
        %6935 = vst [vmem:[%s6903] ss:$4 sm:$0xff] %v4772
        %6936 = vst [vmem:[%s6905] ss:$4 sm:$0xff] %v4775
        %v6937 = vld.sshfl [vmem:[#allocation1] sm:$0xff pattern:$0x73625140]
        %v6938 = vld.sshfl [vmem:[#allocation1 + $0x20] sm:$0xff pattern:$0x73625140]
        %6939 = vst [vmem:[#allocation1] ss:$4 sm:$0xff] %v4778
        %6940 = vst [vmem:[%s6893] ss:$4 sm:$0xff] %v4781
        %6941 = vst [vmem:[%s6895] ss:$4 sm:$0xff] %v4784
        %6942 = vst [vmem:[%s6897] ss:$4 sm:$0xff] %v4788
        %6943 = vst [vmem:[%s6899] ss:$4 sm:$0xff] %v4791
        %6944 = vst [vmem:[%s6901] ss:$4 sm:$0xff] %v4794
        %6945 = vst [vmem:[%s6903] ss:$4 sm:$0xff] %v4797
        %6946 = vst [vmem:[%s6905] ss:$4 sm:$0xff] %v4800
        %v6947 = vld.sshfl [vmem:[#allocation1] sm:$0xff pattern:$0x73625140]
        %v6948 = vld.sshfl [vmem:[#allocation1 + $0x20] sm:$0xff pattern:$0x73625140]
        %6949 = vst [vmem:[#allocation1] ss:$4 sm:$0xff] %v5885
        %6950 = vst [vmem:[%s6893] ss:$4 sm:$0xff] %v5888
        %6951 = vst [vmem:[%s6895] ss:$4 sm:$0xff] %v5891
        %6952 = vst [vmem:[%s6897] ss:$4 sm:$0xff] %v5894
        %6953 = vst [vmem:[%s6899] ss:$4 sm:$0xff] %v5897
        %6954 = vst [vmem:[%s6901] ss:$4 sm:$0xff] %v6879
        %6955 = vst [vmem:[%s6903] ss:$4 sm:$0xff] %v6882
        %6956 = vst [vmem:[%s6905] ss:$4 sm:$0xff] %v6885
        %v6957 = vld.sshfl [vmem:[#allocation1] sm:$0xff pattern:$0x73625140]
        %v6958 = vld.sshfl [vmem:[#allocation1 + $0x20] sm:$0xff pattern:$0x73625140]
        %6959 = vst [vmem:[#allocation1] ss:$4 sm:$0xff] %v6888
        %6960 = vst [vmem:[%s6893] ss:$4 sm:$0xff] %v6891
        %v6961 = vld.sshfl [vmem:[#allocation1] sm:$0xff pattern:$0x73625140]
        %v6962 = vsel %vm4871, %v6907, 0
        %v6964 = vsel %vm4871, %v6908, 0
        %v6966 = vsel %vm4871, %v6917, 0
        %v6968 = vsel %vm4871, %v6918, 0
        %v6970 = vsel %vm4871, %v6927, 0
        %v6972 = vsel %vm4871, %v6928, 0
        %v6974 = vsel %vm4871, %v6937, 0
        %v6976 = vsel %vm4871, %v6938, 0
        %v6978 = vsel %vm4871, %v6947, 0
        %v6980 = vsel %vm4871, %v6948, 0
        %v6982 = vsel %vm4871, %v6957, 0
        %v6984 = vsel %vm4871, %v6958, 0
        %v6986 = vsel %vm4871, %v6961, 0
        %6988 = vmatpush.msra.mxu0 0.0
        %6989 = vmatpush.msra.mxu0 0.0
        %6990 = vmatpush.msra.mxu0 0.0
        %6991 = vmatpush.msra.mxu0 0.0
        %6992 = vmatpush.msra.mxu0 0.0
        %6993 = vmatpush.msra.mxu0 0.0
        %6994 = vmatpush.msra.mxu0 0.0
        %6995 = vmatpush.msra.mxu0 0.0
        %6996 = vmatpush.msra.mxu0 0.0
        %6997 = vmatpush.msra.mxu0 0.0
        %6998 = vmatpush.msra.mxu0 0.0
        %6999 = vmatpush.msra.mxu0 0.0
        %7000 = vmatpush.msra.mxu0 0.0
        %7001 = vmatpush.msra.mxu0 0.0
        %7002 = vmatpush.msra.mxu0 %v6873
        %7003 = vmatpush.msra.mxu0 %v6872
        %7004 = vmatmul.f32.gmra.mxu0 %v6962
        %v7005 = vpop.f32.mrf.mxu0
        %v7006 = vadd.f32 0.0, %v7005
        %7007 = vmatmul.f32.gmra.mxu0 %v6964
        %v7008 = vpop.f32.mrf.mxu0
        %v7009 = vadd.f32 0.0, %v7008
        %7010 = vmatmul.f32.gmra.mxu0 %v6966
        %v7011 = vpop.f32.mrf.mxu0
        %v7012 = vadd.f32 0.0, %v7011
        %7013 = vmatmul.f32.gmra.mxu0 %v6968
        %v7014 = vpop.f32.mrf.mxu0
        %v7015 = vadd.f32 0.0, %v7014
        %7016 = vmatmul.f32.gmra.mxu0 %v6970
        %v7017 = vpop.f32.mrf.mxu0
        %v7018 = vadd.f32 0.0, %v7017
        %7019 = vmatmul.f32.gmra.mxu0 %v6972
        %v7020 = vpop.f32.mrf.mxu0
        %v7021 = vadd.f32 0.0, %v7020
        %7022 = vmatmul.f32.gmra.mxu0 %v6974
        %v7023 = vpop.f32.mrf.mxu0
        %v7024 = vadd.f32 0.0, %v7023
        %7025 = vmatmul.f32.gmra.mxu0 %v6976
        %v7026 = vpop.f32.mrf.mxu0
        %v7027 = vadd.f32 0.0, %v7026
        %7028 = vmatmul.f32.gmra.mxu0 %v6978
        %v7029 = vpop.f32.mrf.mxu0
        %v7030 = vadd.f32 0.0, %v7029
        %7031 = vmatmul.f32.gmra.mxu0 %v6980
        %v7032 = vpop.f32.mrf.mxu0
        %v7033 = vadd.f32 0.0, %v7032
        %7034 = vmatmul.f32.gmra.mxu0 %v6982
        %v7035 = vpop.f32.mrf.mxu0
        %v7036 = vadd.f32 0.0, %v7035
        %7037 = vmatmul.f32.gmra.mxu0 %v6984
        %v7038 = vpop.f32.mrf.mxu0
        %v7039 = vadd.f32 0.0, %v7038
        %7040 = vmatmul.f32.gmra.mxu0 %v6986
        %v7041 = vpop.f32.mrf.mxu0
        %v7042 = vadd.f32 0.0, %v7041
        %7043 = vdwg.mxu0
        %v7057 = vrot.slane %v7006, 2
        %v7058 = vrot.slane %v7006, 4
        %v7059 = vrot.slane %v7006, 6
        %v7060 = vrot.slane %v7009, 2
        %v7061 = vrot.slane %v7009, 4
        %v7062 = vrot.slane %v7009, 6
        %v7063 = vrot.slane %v7012, 2
        %v7064 = vrot.slane %v7012, 4
        %v7065 = vrot.slane %v7012, 6
        %v7066 = vrot.slane %v7015, 2
        %v7067 = vrot.slane %v7015, 4
        %v7068 = vrot.slane %v7015, 6
        %v7069 = vrot.slane %v7018, 2
        %v7070 = vrot.slane %v7018, 4
        %v7071 = vrot.slane %v7018, 6
        %v7072 = vrot.slane %v7021, 2
        %v7073 = vrot.slane %v7021, 4
        %v7074 = vrot.slane %v7021, 6
        %v7075 = vrot.slane %v7024, 2
        %v7076 = vrot.slane %v7024, 4
        %v7077 = vrot.slane %v7024, 6
        %v7078 = vrot.slane %v7027, 2
        %v7079 = vrot.slane %v7027, 4
        %v7080 = vrot.slane %v7027, 6
        %v7081 = vrot.slane %v7030, 2
        %v7082 = vrot.slane %v7030, 4
        %v7083 = vrot.slane %v7030, 6
        %v7084 = vrot.slane %v7033, 2
        %v7085 = vrot.slane %v7033, 4
        %v7086 = vrot.slane %v7033, 6
        %v7087 = vrot.slane %v7036, 2
        %v7088 = vrot.slane %v7036, 4
        %v7089 = vrot.slane %v7036, 6
        %v7090 = vrot.slane %v7039, 2
        %v7091 = vrot.slane %v7039, 4
        %v7092 = vrot.slane %v7039, 6
        %v7093 = vrot.slane %v7042, 2
        %v7131 = vadd.f32 %v6821, %v7006
        %v7132 = vadd.f32 %v6822, %v7057
        %v7133 = vadd.f32 %v6823, %v7058
        %v7134 = vadd.f32 %v6824, %v7059
        %v7135 = vadd.f32 %v6825, %v7009
        %v7136 = vadd.f32 %v6826, %v7060
        %v7137 = vadd.f32 %v6827, %v7061
        %v7138 = vadd.f32 %v6828, %v7062
        %v7139 = vadd.f32 %v6829, %v7012
        %v7140 = vadd.f32 %v6830, %v7063
        %v7141 = vadd.f32 %v6831, %v7064
        %v7142 = vadd.f32 %v6832, %v7065
        %v7143 = vadd.f32 %v6833, %v7015
        %v7144 = vadd.f32 %v6834, %v7066
        %v7145 = vadd.f32 %v6835, %v7067
        %v7146 = vadd.f32 %v6836, %v7068
        %v7147 = vadd.f32 %v6837, %v7018
        %v7148 = vadd.f32 %v6838, %v7069
        %v7149 = vadd.f32 %v6839, %v7070
        %v7150 = vadd.f32 %v6840, %v7071
        %v7151 = vadd.f32 %v6841, %v7021
        %v7152 = vadd.f32 %v6842, %v7072
        %v7153 = vadd.f32 %v6843, %v7073
        %v7154 = vadd.f32 %v6844, %v7074
        %v7155 = vadd.f32 %v6845, %v7024
        %v7156 = vadd.f32 %v6846, %v7075
        %v7157 = vadd.f32 %v6847, %v7076
        %v7158 = vadd.f32 %v6848, %v7077
        %v7159 = vadd.f32 %v6849, %v7027
        %v7160 = vadd.f32 %v6850, %v7078
        %v7161 = vadd.f32 %v6851, %v7079
        %v7162 = vadd.f32 %v6852, %v7080
        %v7163 = vadd.f32 %v6853, %v7030
        %v7164 = vadd.f32 %v6854, %v7081
        %v7165 = vadd.f32 %v6855, %v7082
        %v7166 = vadd.f32 %v6856, %v7083
        %v7167 = vadd.f32 %v6857, %v7033
        %v7168 = vadd.f32 %v6858, %v7084
        %v7169 = vadd.f32 %v6859, %v7085
        %v7170 = vadd.f32 %v6860, %v7086
        %v7171 = vadd.f32 %v6861, %v7036
        %v7172 = vadd.f32 %v6862, %v7087
        %v7173 = vadd.f32 %v6863, %v7088
        %v7174 = vadd.f32 %v6864, %v7089
        %v7175 = vadd.f32 %v6865, %v7039
        %v7176 = vadd.f32 %v6866, %v7090
        %v7177 = vadd.f32 %v6867, %v7091
        %v7178 = vadd.f32 %v6868, %v7092
        %v7179 = vadd.f32 %v6869, %v7042
        %v7180 = vadd.f32 %v6870, %v7093
        %s7181 = scalar_lea.vmem [#allocation7], 128
        %v7182 = vld [vmem:[%s7181] sm:$0xff]
        %v7183 = vld [vmem:[%s7181 + $0x8] sm:$0xff]
        %7184 = vst.sshfl [vmem:[#allocation1] sm:$0xff pattern:$0x75643120] %v4448
        %7185 = vst.sshfl [vmem:[#allocation1 + $0x10] sm:$0xff pattern:$0x75643120] %v4449
        %7186 = vst.sshfl [vmem:[#allocation1 + $0x20] sm:$0xff pattern:$0x75643120] %v4450
        %s7187 = scalar_lea.vmem [#allocation1], 1
        %v7188 = vld [vmem:[%s7187] ss:$2 sm:$0xff]
        %s7189 = scalar_lea.vmem [#allocation1], 16
        %v7190 = vld [vmem:[%s7189] ss:$2 sm:$0xff]
        %s7191 = scalar_lea.vmem [#allocation1], 17
        %v7192 = vld [vmem:[%s7191] ss:$2 sm:$0xff]
        %s7193 = scalar_lea.vmem [#allocation1], 32
        %v7194 = vld [vmem:[%s7193] ss:$2 sm:$0xff]
        %s7195 = scalar_lea.vmem [#allocation1], 33
        %v7196 = vld [vmem:[%s7195] ss:$2 sm:$0xff]
        %7197 = vst.sshfl [vmem:[#allocation1 + $0x30] sm:$0xff pattern:$0x75643120] %v4451
        %s7198 = scalar_lea.vmem [#allocation1], 49
        %v7199 = vld [vmem:[%s7198] ss:$2 sm:$0xff]
        %7200 = vst.sshfl [vmem:[#allocation1] sm:$0xff pattern:$0x75643120] %v4452
        %7201 = vst.sshfl [vmem:[#allocation1 + $0x10] sm:$0xff pattern:$0x75643120] %v4453
        %v7202 = vld [vmem:[#allocation1] ss:$2 sm:$0xff]
        %v7203 = vld [vmem:[%s7187] ss:$2 sm:$0xff]
        %v7204 = vld [vmem:[%s7189] ss:$2 sm:$0xff]
        %v7205 = vld [vmem:[%s7191] ss:$2 sm:$0xff]
        %7206 = vst.sshfl [vmem:[#allocation1 + $0x20] sm:$0xff pattern:$0x75643120] %v4454
        %7207 = vst.sshfl [vmem:[#allocation1 + $0x30] sm:$0xff pattern:$0x75643120] %v4455
        %v7208 = vld [vmem:[%s7195] ss:$2 sm:$0xff]
        %s7209 = scalar_lea.vmem [#allocation1], 48
        %v7210 = vld [vmem:[%s7209] ss:$2 sm:$0xff]
        %v7211 = vld [vmem:[%s7198] ss:$2 sm:$0xff]
        %7212 = vst.sshfl [vmem:[#allocation1] sm:$0xff pattern:$0x75643120] %v4456
        %v7213 = vld [vmem:[#allocation1] ss:$2 sm:$0xff]
        %v7214 = vld [vmem:[%s7187] ss:$2 sm:$0xff]
        %7215 = vst.sshfl [vmem:[#allocation1 + $0x10] sm:$0xff pattern:$0x75643120] %v4457
        %7216 = vst.sshfl [vmem:[#allocation1 + $0x20] sm:$0xff pattern:$0x75643120] %v4458
        %7217 = vst.sshfl [vmem:[#allocation1 + $0x30] sm:$0xff pattern:$0x75643120] %v4459
        %v7218 = vld [vmem:[%s7191] ss:$2 sm:$0xff]
        %v7219 = vld [vmem:[%s7193] ss:$2 sm:$0xff]
        %v7220 = vld [vmem:[%s7195] ss:$2 sm:$0xff]
        %v7221 = vld [vmem:[%s7209] ss:$2 sm:$0xff]
        %v7222 = vld [vmem:[%s7198] ss:$2 sm:$0xff]
        %7223 = vst.sshfl [vmem:[#allocation1] sm:$0xff pattern:$0x75643120] %v4460
        %7224 = vst.sshfl [vmem:[#allocation1 + $0x10] sm:$0xff pattern:$0x75643120] %v4461
        %7225 = vst.sshfl [vmem:[#allocation1 + $0x20] sm:$0xff pattern:$0x75643120] %v4462
        %v7226 = vld [vmem:[%s7187] ss:$2 sm:$0xff]
        %v7227 = vld [vmem:[%s7189] ss:$2 sm:$0xff]
        %v7228 = vld [vmem:[%s7191] ss:$2 sm:$0xff]
        %v7229 = vld [vmem:[%s7193] ss:$2 sm:$0xff]
        %v7230 = vld [vmem:[%s7195] ss:$2 sm:$0xff]
        %7231 = vst.sshfl [vmem:[#allocation1 + $0x30] sm:$0xff pattern:$0x75643120] %v4463
        %v7232 = vld [vmem:[%s7198] ss:$2 sm:$0xff]
        %7233 = vst.sshfl [vmem:[#allocation1] sm:$0xff pattern:$0x75643120] %v4464
        %7234 = vst.sshfl [vmem:[#allocation1 + $0x10] sm:$0xff pattern:$0x75643120] %v4465
        %v7235 = vld [vmem:[#allocation1] ss:$2 sm:$0xff]
        %v7236 = vld [vmem:[%s7187] ss:$2 sm:$0xff]
        %v7237 = vld [vmem:[%s7189] ss:$2 sm:$0xff]
        %v7238 = vld [vmem:[%s7191] ss:$2 sm:$0xff]
        %7239 = vst.sshfl [vmem:[#allocation1 + $0x20] sm:$0xff pattern:$0x75643120] %v4466
        %7240 = vst.sshfl [vmem:[#allocation1 + $0x30] sm:$0xff pattern:$0x75643120] %v4467
        %v7241 = vld [vmem:[%s7195] ss:$2 sm:$0xff]
        %v7242 = vld [vmem:[%s7209] ss:$2 sm:$0xff]
        %v7243 = vld [vmem:[%s7198] ss:$2 sm:$0xff]
        %7244 = vst.sshfl [vmem:[#allocation1] sm:$0xff pattern:$0x75643120] %v4468
        %v7245 = vld [vmem:[#allocation1] ss:$2 sm:$0xff]
        %v7246 = vld [vmem:[%s7187] ss:$2 sm:$0xff]
        %7247 = vst.sshfl [vmem:[#allocation1 + $0x10] sm:$0xff pattern:$0x75643120] %v4469
        %7248 = vst.sshfl [vmem:[#allocation1 + $0x20] sm:$0xff pattern:$0x75643120] %v4470
        %7249 = vst.sshfl [vmem:[#allocation1 + $0x30] sm:$0xff pattern:$0x75643120] %v4471
        %v7250 = vld [vmem:[%s7191] ss:$2 sm:$0xff]
        %v7251 = vld [vmem:[%s7193] ss:$2 sm:$0xff]
        %v7252 = vld [vmem:[%s7195] ss:$2 sm:$0xff]
        %v7253 = vld [vmem:[%s7209] ss:$2 sm:$0xff]
        %v7254 = vld [vmem:[%s7198] ss:$2 sm:$0xff]
        %7255 = vst.sshfl [vmem:[#allocation1] sm:$0xff pattern:$0x75643120] %v4472
        %7256 = vst.sshfl [vmem:[#allocation1 + $0x10] sm:$0xff pattern:$0x75643120] %v4473
        %7257 = vst.sshfl [vmem:[#allocation1 + $0x20] sm:$0xff pattern:$0x75643120] %v4474
        %v7258 = vld [vmem:[%s7187] ss:$2 sm:$0xff]
        %v7259 = vld [vmem:[%s7189] ss:$2 sm:$0xff]
        %v7260 = vld [vmem:[%s7191] ss:$2 sm:$0xff]
        %v7261 = vld [vmem:[%s7193] ss:$2 sm:$0xff]
        %v7262 = vld [vmem:[%s7195] ss:$2 sm:$0xff]
        %7263 = vst.sshfl [vmem:[#allocation1 + $0x30] sm:$0xff pattern:$0x75643120] %v4475
        %v7264 = vld [vmem:[%s7198] ss:$2 sm:$0xff]
        %7265 = vst.sshfl [vmem:[#allocation1] sm:$0xff pattern:$0x75643120] %v4476
        %7266 = vst.sshfl [vmem:[#allocation1 + $0x10] sm:$0xff pattern:$0x75643120] %v4477
        %v7267 = vld [vmem:[#allocation1] ss:$2 sm:$0xff]
        %v7268 = vld [vmem:[%s7187] ss:$2 sm:$0xff]
        %v7269 = vld [vmem:[%s7189] ss:$2 sm:$0xff]
        %v7270 = vld [vmem:[%s7191] ss:$2 sm:$0xff]
        %7271 = vst [vmem:[#allocation1] ss:$4 sm:$0xff] %v7188
        %s7272 = scalar_lea.vmem [#allocation1], 1
        %7273 = vst [vmem:[%s7272] ss:$4 sm:$0xff] %v7190
        %s7274 = scalar_lea.vmem [#allocation1], 2
        %7275 = vst [vmem:[%s7274] ss:$4 sm:$0xff] %v7192
        %s7276 = scalar_lea.vmem [#allocation1], 3
        %7277 = vst [vmem:[%s7276] ss:$4 sm:$0xff] %v7194
        %s7278 = scalar_lea.vmem [#allocation1], 32
        %7279 = vst [vmem:[%s7278] ss:$4 sm:$0xff] %v7196
        %s7280 = scalar_lea.vmem [#allocation1], 33
        %7281 = vst [vmem:[%s7280] ss:$4 sm:$0xff] %v7199
        %s7282 = scalar_lea.vmem [#allocation1], 34
        %7283 = vst [vmem:[%s7282] ss:$4 sm:$0xff] %v7202
        %s7284 = scalar_lea.vmem [#allocation1], 35
        %7285 = vst [vmem:[%s7284] ss:$4 sm:$0xff] %v7203
        %v7286 = vld.sshfl [vmem:[#allocation1] sm:$0xff pattern:$0x73625140]
        %v7287 = vld.sshfl [vmem:[#allocation1 + $0x20] sm:$0xff pattern:$0x73625140]
        %7288 = vst [vmem:[#allocation1] ss:$4 sm:$0xff] %v7204
        %7289 = vst [vmem:[%s7272] ss:$4 sm:$0xff] %v7205
        %7290 = vst [vmem:[%s7274] ss:$4 sm:$0xff] %v7208
        %7291 = vst [vmem:[%s7276] ss:$4 sm:$0xff] %v7210
        %7292 = vst [vmem:[%s7278] ss:$4 sm:$0xff] %v7211
        %7293 = vst [vmem:[%s7280] ss:$4 sm:$0xff] %v7213
        %7294 = vst [vmem:[%s7282] ss:$4 sm:$0xff] %v7214
        %7295 = vst [vmem:[%s7284] ss:$4 sm:$0xff] %v7218
        %v7296 = vld.sshfl [vmem:[#allocation1] sm:$0xff pattern:$0x73625140]
        %v7297 = vld.sshfl [vmem:[#allocation1 + $0x20] sm:$0xff pattern:$0x73625140]
        %7298 = vst [vmem:[#allocation1] ss:$4 sm:$0xff] %v7219
        %7299 = vst [vmem:[%s7272] ss:$4 sm:$0xff] %v7220
        %7300 = vst [vmem:[%s7274] ss:$4 sm:$0xff] %v7221
        %7301 = vst [vmem:[%s7276] ss:$4 sm:$0xff] %v7222
        %7302 = vst [vmem:[%s7278] ss:$4 sm:$0xff] %v7226
        %7303 = vst [vmem:[%s7280] ss:$4 sm:$0xff] %v7227
        %7304 = vst [vmem:[%s7282] ss:$4 sm:$0xff] %v7228
        %7305 = vst [vmem:[%s7284] ss:$4 sm:$0xff] %v7229
        %v7306 = vld.sshfl [vmem:[#allocation1] sm:$0xff pattern:$0x73625140]
        %v7307 = vld.sshfl [vmem:[#allocation1 + $0x20] sm:$0xff pattern:$0x73625140]
        %7308 = vst [vmem:[#allocation1] ss:$4 sm:$0xff] %v7230
        %7309 = vst [vmem:[%s7272] ss:$4 sm:$0xff] %v7232
        %7310 = vst [vmem:[%s7274] ss:$4 sm:$0xff] %v7235
        %7311 = vst [vmem:[%s7276] ss:$4 sm:$0xff] %v7236
        %7312 = vst [vmem:[%s7278] ss:$4 sm:$0xff] %v7237
        %7313 = vst [vmem:[%s7280] ss:$4 sm:$0xff] %v7238
        %7314 = vst [vmem:[%s7282] ss:$4 sm:$0xff] %v7241
        %7315 = vst [vmem:[%s7284] ss:$4 sm:$0xff] %v7242
        %v7316 = vld.sshfl [vmem:[#allocation1] sm:$0xff pattern:$0x73625140]
        %v7317 = vld.sshfl [vmem:[#allocation1 + $0x20] sm:$0xff pattern:$0x73625140]
        %7318 = vst [vmem:[#allocation1] ss:$4 sm:$0xff] %v7243
        %7319 = vst [vmem:[%s7272] ss:$4 sm:$0xff] %v7245
        %7320 = vst [vmem:[%s7274] ss:$4 sm:$0xff] %v7246
        %7321 = vst [vmem:[%s7276] ss:$4 sm:$0xff] %v7250
        %7322 = vst [vmem:[%s7278] ss:$4 sm:$0xff] %v7251
        %7323 = vst [vmem:[%s7280] ss:$4 sm:$0xff] %v7252
        %7324 = vst [vmem:[%s7282] ss:$4 sm:$0xff] %v7253
        %7325 = vst [vmem:[%s7284] ss:$4 sm:$0xff] %v7254
        %v7326 = vld.sshfl [vmem:[#allocation1] sm:$0xff pattern:$0x73625140]
        %v7327 = vld.sshfl [vmem:[#allocation1 + $0x20] sm:$0xff pattern:$0x73625140]
        %7328 = vst [vmem:[#allocation1] ss:$4 sm:$0xff] %v7258
        %7329 = vst [vmem:[%s7272] ss:$4 sm:$0xff] %v7259
        %7330 = vst [vmem:[%s7274] ss:$4 sm:$0xff] %v7260
        %7331 = vst [vmem:[%s7276] ss:$4 sm:$0xff] %v7261
        %7332 = vst [vmem:[%s7278] ss:$4 sm:$0xff] %v7262
        %7333 = vst [vmem:[%s7280] ss:$4 sm:$0xff] %v7264
        %7334 = vst [vmem:[%s7282] ss:$4 sm:$0xff] %v7267
        %7335 = vst [vmem:[%s7284] ss:$4 sm:$0xff] %v7268
        %v7336 = vld.sshfl [vmem:[#allocation1] sm:$0xff pattern:$0x73625140]
        %v7337 = vld.sshfl [vmem:[#allocation1 + $0x20] sm:$0xff pattern:$0x73625140]
        %7338 = vst [vmem:[#allocation1] ss:$4 sm:$0xff] %v7269
        %7339 = vst [vmem:[%s7272] ss:$4 sm:$0xff] %v7270
        %v7340 = vld.sshfl [vmem:[#allocation1] sm:$0xff pattern:$0x73625140]
        %v7341 = vsel %vm4871, %v7286, 0
        %v7343 = vsel %vm4871, %v7287, 0
        %v7345 = vsel %vm4871, %v7296, 0
        %v7347 = vsel %vm4871, %v7297, 0
        %v7349 = vsel %vm4871, %v7306, 0
        %v7351 = vsel %vm4871, %v7307, 0
        %v7353 = vsel %vm4871, %v7316, 0
        %v7355 = vsel %vm4871, %v7317, 0
        %v7357 = vsel %vm4871, %v7326, 0
        %v7359 = vsel %vm4871, %v7327, 0
        %v7361 = vsel %vm4871, %v7336, 0
        %v7363 = vsel %vm4871, %v7337, 0
        %v7365 = vsel %vm4871, %v7340, 0
        %7367 = vmatpush.msra.mxu0 0.0
        %7368 = vmatpush.msra.mxu0 0.0
        %7369 = vmatpush.msra.mxu0 0.0
        %7370 = vmatpush.msra.mxu0 0.0
        %7371 = vmatpush.msra.mxu0 0.0
        %7372 = vmatpush.msra.mxu0 0.0
        %7373 = vmatpush.msra.mxu0 0.0
        %7374 = vmatpush.msra.mxu0 0.0
        %7375 = vmatpush.msra.mxu0 0.0
        %7376 = vmatpush.msra.mxu0 0.0
        %7377 = vmatpush.msra.mxu0 0.0
        %7378 = vmatpush.msra.mxu0 0.0
        %7379 = vmatpush.msra.mxu0 0.0
        %7380 = vmatpush.msra.mxu0 0.0
        %7381 = vmatpush.msra.mxu0 %v7183
        %7382 = vmatpush.msra.mxu0 %v7182
        %7383 = vmatmul.f32.gmra.mxu0 %v7341
        %v7384 = vpop.f32.mrf.mxu0
        %v7385 = vadd.f32 0.0, %v7384
        %7386 = vmatmul.f32.gmra.mxu0 %v7343
        %v7387 = vpop.f32.mrf.mxu0
        %v7388 = vadd.f32 0.0, %v7387
        %7389 = vmatmul.f32.gmra.mxu0 %v7345
        %v7390 = vpop.f32.mrf.mxu0
        %v7391 = vadd.f32 0.0, %v7390
        %7392 = vmatmul.f32.gmra.mxu0 %v7347
        %v7393 = vpop.f32.mrf.mxu0
        %v7394 = vadd.f32 0.0, %v7393
        %7395 = vmatmul.f32.gmra.mxu0 %v7349
        %v7396 = vpop.f32.mrf.mxu0
        %v7397 = vadd.f32 0.0, %v7396
        %7398 = vmatmul.f32.gmra.mxu0 %v7351
        %v7399 = vpop.f32.mrf.mxu0
        %v7400 = vadd.f32 0.0, %v7399
        %7401 = vmatmul.f32.gmra.mxu0 %v7353
        %v7402 = vpop.f32.mrf.mxu0
        %v7403 = vadd.f32 0.0, %v7402
        %7404 = vmatmul.f32.gmra.mxu0 %v7355
        %v7405 = vpop.f32.mrf.mxu0
        %v7406 = vadd.f32 0.0, %v7405
        %7407 = vmatmul.f32.gmra.mxu0 %v7357
        %v7408 = vpop.f32.mrf.mxu0
        %v7409 = vadd.f32 0.0, %v7408
        %7410 = vmatmul.f32.gmra.mxu0 %v7359
        %v7411 = vpop.f32.mrf.mxu0
        %v7412 = vadd.f32 0.0, %v7411
        %7413 = vmatmul.f32.gmra.mxu0 %v7361
        %v7414 = vpop.f32.mrf.mxu0
        %v7415 = vadd.f32 0.0, %v7414
        %7416 = vmatmul.f32.gmra.mxu0 %v7363
        %v7417 = vpop.f32.mrf.mxu0
        %v7418 = vadd.f32 0.0, %v7417
        %7419 = vmatmul.f32.gmra.mxu0 %v7365
        %v7420 = vpop.f32.mrf.mxu0
        %v7421 = vadd.f32 0.0, %v7420
        %7422 = vdwg.mxu0
        %v7436 = vrot.slane %v7385, 2
        %v7437 = vrot.slane %v7385, 4
        %v7438 = vrot.slane %v7385, 6
        %v7439 = vrot.slane %v7388, 2
        %v7440 = vrot.slane %v7388, 4
        %v7441 = vrot.slane %v7388, 6
        %v7442 = vrot.slane %v7391, 2
        %v7443 = vrot.slane %v7391, 4
        %v7444 = vrot.slane %v7391, 6
        %v7445 = vrot.slane %v7394, 2
        %v7446 = vrot.slane %v7394, 4
        %v7447 = vrot.slane %v7394, 6
        %v7448 = vrot.slane %v7397, 2
        %v7449 = vrot.slane %v7397, 4
        %v7450 = vrot.slane %v7397, 6
        %v7451 = vrot.slane %v7400, 2
        %v7452 = vrot.slane %v7400, 4
        %v7453 = vrot.slane %v7400, 6
        %v7454 = vrot.slane %v7403, 2
        %v7455 = vrot.slane %v7403, 4
        %v7456 = vrot.slane %v7403, 6
        %v7457 = vrot.slane %v7406, 2
        %v7458 = vrot.slane %v7406, 4
        %v7459 = vrot.slane %v7406, 6
        %v7460 = vrot.slane %v7409, 2
        %v7461 = vrot.slane %v7409, 4
        %v7462 = vrot.slane %v7409, 6
        %v7463 = vrot.slane %v7412, 2
        %v7464 = vrot.slane %v7412, 4
        %v7465 = vrot.slane %v7412, 6
        %v7466 = vrot.slane %v7415, 2
        %v7467 = vrot.slane %v7415, 4
        %v7468 = vrot.slane %v7415, 6
        %v7469 = vrot.slane %v7418, 2
        %v7470 = vrot.slane %v7418, 4
        %v7471 = vrot.slane %v7418, 6
        %v7472 = vrot.slane %v7421, 2
        %v7510 = vadd.f32 %v7131, %v7385
        %v7511 = vadd.f32 %v7132, %v7436
        %v7512 = vadd.f32 %v7133, %v7437
        %v7513 = vadd.f32 %v7134, %v7438
        %v7514 = vadd.f32 %v7135, %v7388
        %v7515 = vadd.f32 %v7136, %v7439
        %v7516 = vadd.f32 %v7137, %v7440
        %v7517 = vadd.f32 %v7138, %v7441
        %v7518 = vadd.f32 %v7139, %v7391
        %v7519 = vadd.f32 %v7140, %v7442
        %v7520 = vadd.f32 %v7141, %v7443
        %v7521 = vadd.f32 %v7142, %v7444
        %v7522 = vadd.f32 %v7143, %v7394
        %v7523 = vadd.f32 %v7144, %v7445
        %v7524 = vadd.f32 %v7145, %v7446
        %v7525 = vadd.f32 %v7146, %v7447
        %v7526 = vadd.f32 %v7147, %v7397
        %v7527 = vadd.f32 %v7148, %v7448
        %v7528 = vadd.f32 %v7149, %v7449
        %v7529 = vadd.f32 %v7150, %v7450
        %v7530 = vadd.f32 %v7151, %v7400
        %v7531 = vadd.f32 %v7152, %v7451
        %v7532 = vadd.f32 %v7153, %v7452
        %v7533 = vadd.f32 %v7154, %v7453
        %v7534 = vadd.f32 %v7155, %v7403
        %v7535 = vadd.f32 %v7156, %v7454
        %v7536 = vadd.f32 %v7157, %v7455
        %v7537 = vadd.f32 %v7158, %v7456
        %v7538 = vadd.f32 %v7159, %v7406
        %v7539 = vadd.f32 %v7160, %v7457
        %v7540 = vadd.f32 %v7161, %v7458
        %v7541 = vadd.f32 %v7162, %v7459
        %v7542 = vadd.f32 %v7163, %v7409
        %v7543 = vadd.f32 %v7164, %v7460
        %v7544 = vadd.f32 %v7165, %v7461
        %v7545 = vadd.f32 %v7166, %v7462
        %v7546 = vadd.f32 %v7167, %v7412
        %v7547 = vadd.f32 %v7168, %v7463
        %v7548 = vadd.f32 %v7169, %v7464
        %v7549 = vadd.f32 %v7170, %v7465
        %v7550 = vadd.f32 %v7171, %v7415
        %v7551 = vadd.f32 %v7172, %v7466
        %v7552 = vadd.f32 %v7173, %v7467
        %v7553 = vadd.f32 %v7174, %v7468
        %v7554 = vadd.f32 %v7175, %v7418
        %v7555 = vadd.f32 %v7176, %v7469
        %v7556 = vadd.f32 %v7177, %v7470
        %v7557 = vadd.f32 %v7178, %v7471
        %v7558 = vadd.f32 %v7179, %v7421
        %v7559 = vadd.f32 %v7180, %v7472
        %v7560 = vld [vmem:[%s6] sm:$0x1]
        %v7562 = vperm.slane %v7560, 0
        %v7564 = vrot.slane %v7562, 2
        %v7565 = vrot.slane %v7562, 4
        %v7566 = vrot.slane %v7562, 6
        %v7570 = vadd.f32 %v7510, %v7562
        %v7571 = vadd.f32 %v7511, %v7564
        %v7572 = vadd.f32 %v7512, %v7565
        %v7573 = vadd.f32 %v7513, %v7566
        %v7574 = vadd.f32 %v7514, %v7562
        %v7575 = vadd.f32 %v7515, %v7562
        %v7576 = vadd.f32 %v7516, %v7564
        %v7577 = vadd.f32 %v7517, %v7565
        %v7578 = vadd.f32 %v7518, %v7566
        %v7579 = vadd.f32 %v7519, %v7562
        %v7580 = vadd.f32 %v7520, %v7562
        %v7581 = vadd.f32 %v7521, %v7564
        %v7582 = vadd.f32 %v7522, %v7565
        %v7583 = vadd.f32 %v7523, %v7566
        %v7584 = vadd.f32 %v7524, %v7562
        %v7585 = vadd.f32 %v7525, %v7562
        %v7586 = vadd.f32 %v7526, %v7564
        %v7587 = vadd.f32 %v7527, %v7565
        %v7588 = vadd.f32 %v7528, %v7566
        %v7589 = vadd.f32 %v7529, %v7562
        %v7590 = vadd.f32 %v7530, %v7562
        %v7591 = vadd.f32 %v7531, %v7564
        %v7592 = vadd.f32 %v7532, %v7565
        %v7593 = vadd.f32 %v7533, %v7566
        %v7594 = vadd.f32 %v7534, %v7562
        %v7595 = vadd.f32 %v7535, %v7562
        %v7596 = vadd.f32 %v7536, %v7564
        %v7597 = vadd.f32 %v7537, %v7565
        %v7598 = vadd.f32 %v7538, %v7566
        %v7599 = vadd.f32 %v7539, %v7562
        %v7600 = vadd.f32 %v7540, %v7562
        %v7601 = vadd.f32 %v7541, %v7564
        %v7602 = vadd.f32 %v7542, %v7565
        %v7603 = vadd.f32 %v7543, %v7566
        %v7604 = vadd.f32 %v7544, %v7562
        %v7605 = vadd.f32 %v7545, %v7562
        %v7606 = vadd.f32 %v7546, %v7564
        %v7607 = vadd.f32 %v7547, %v7565
        %v7608 = vadd.f32 %v7548, %v7566
        %v7609 = vadd.f32 %v7549, %v7562
        %v7610 = vadd.f32 %v7550, %v7562
        %v7611 = vadd.f32 %v7551, %v7564
        %v7612 = vadd.f32 %v7552, %v7565
        %v7613 = vadd.f32 %v7553, %v7566
        %v7614 = vadd.f32 %v7554, %v7562
        %v7615 = vadd.f32 %v7555, %v7562
        %v7616 = vadd.f32 %v7556, %v7564
        %v7617 = vadd.f32 %v7557, %v7565
        %v7618 = vadd.f32 %v7558, %v7566
        %v7619 = vadd.f32 %v7559, %v7562
        %vm7620 = vcmp.gt.f32.partialorder %v7570, 0.0
        %vm7621 = vcmp.gt.f32.partialorder %v7571, 0.0
        %vm7622 = vcmp.gt.f32.partialorder %v7572, 0.0
        %vm7623 = vcmp.gt.f32.partialorder %v7573, 0.0
        %vm7624 = vcmp.gt.f32.partialorder %v7574, 0.0
        %vm7625 = vcmp.gt.f32.partialorder %v7575, 0.0
        %vm7626 = vcmp.gt.f32.partialorder %v7576, 0.0
        %vm7627 = vcmp.gt.f32.partialorder %v7577, 0.0
        %vm7628 = vcmp.gt.f32.partialorder %v7578, 0.0
        %vm7629 = vcmp.gt.f32.partialorder %v7579, 0.0
        %vm7630 = vcmp.gt.f32.partialorder %v7580, 0.0
        %vm7631 = vcmp.gt.f32.partialorder %v7581, 0.0
        %vm7632 = vcmp.gt.f32.partialorder %v7582, 0.0
        %vm7633 = vcmp.gt.f32.partialorder %v7583, 0.0
        %vm7634 = vcmp.gt.f32.partialorder %v7584, 0.0
        %vm7635 = vcmp.gt.f32.partialorder %v7585, 0.0
        %vm7636 = vcmp.gt.f32.partialorder %v7586, 0.0
        %vm7637 = vcmp.gt.f32.partialorder %v7587, 0.0
        %vm7638 = vcmp.gt.f32.partialorder %v7588, 0.0
        %vm7639 = vcmp.gt.f32.partialorder %v7589, 0.0
        %vm7640 = vcmp.gt.f32.partialorder %v7590, 0.0
        %vm7641 = vcmp.gt.f32.partialorder %v7591, 0.0
        %vm7642 = vcmp.gt.f32.partialorder %v7592, 0.0
        %vm7643 = vcmp.gt.f32.partialorder %v7593, 0.0
        %vm7644 = vcmp.gt.f32.partialorder %v7594, 0.0
        %vm7645 = vcmp.gt.f32.partialorder %v7595, 0.0
        %vm7646 = vcmp.gt.f32.partialorder %v7596, 0.0
        %vm7647 = vcmp.gt.f32.partialorder %v7597, 0.0
        %vm7648 = vcmp.gt.f32.partialorder %v7598, 0.0
        %vm7649 = vcmp.gt.f32.partialorder %v7599, 0.0
        %vm7650 = vcmp.gt.f32.partialorder %v7600, 0.0
        %vm7651 = vcmp.gt.f32.partialorder %v7601, 0.0
        %vm7652 = vcmp.gt.f32.partialorder %v7602, 0.0
        %vm7653 = vcmp.gt.f32.partialorder %v7603, 0.0
        %vm7654 = vcmp.gt.f32.partialorder %v7604, 0.0
        %vm7655 = vcmp.gt.f32.partialorder %v7605, 0.0
        %vm7656 = vcmp.gt.f32.partialorder %v7606, 0.0
        %vm7657 = vcmp.gt.f32.partialorder %v7607, 0.0
        %vm7658 = vcmp.gt.f32.partialorder %v7608, 0.0
        %vm7659 = vcmp.gt.f32.partialorder %v7609, 0.0
        %vm7660 = vcmp.gt.f32.partialorder %v7610, 0.0
        %vm7661 = vcmp.gt.f32.partialorder %v7611, 0.0
        %vm7662 = vcmp.gt.f32.partialorder %v7612, 0.0
        %vm7663 = vcmp.gt.f32.partialorder %v7613, 0.0
        %vm7664 = vcmp.gt.f32.partialorder %v7614, 0.0
        %vm7665 = vcmp.gt.f32.partialorder %v7615, 0.0
        %vm7666 = vcmp.gt.f32.partialorder %v7616, 0.0
        %vm7667 = vcmp.gt.f32.partialorder %v7617, 0.0
        %vm7668 = vcmp.gt.f32.partialorder %v7618, 0.0
        %vm7669 = vcmp.gt.f32.partialorder %v7619, 0.0
        %v7670 = vmul.f32 %v7570, 1.442695
        %v7671 = vpow.pop %v7670
        %v7672 = vmul.f32 %v7571, 1.442695
        %v7673 = vpow.pop %v7672
        %v7674 = vmul.f32 %v7572, 1.442695
        %v7675 = vpow.pop %v7674
        %v7676 = vmul.f32 %v7573, 1.442695
        %v7677 = vpow.pop %v7676
        %v7678 = vmul.f32 %v7574, 1.442695
        %v7679 = vpow.pop %v7678
        %v7680 = vmul.f32 %v7575, 1.442695
        %v7681 = vpow.pop %v7680
        %v7682 = vmul.f32 %v7576, 1.442695
        %v7683 = vpow.pop %v7682
        %v7684 = vmul.f32 %v7577, 1.442695
        %v7685 = vpow.pop %v7684
        %v7686 = vmul.f32 %v7578, 1.442695
        %v7687 = vpow.pop %v7686
        %v7688 = vmul.f32 %v7579, 1.442695
        %v7689 = vpow.pop %v7688
        %v7690 = vmul.f32 %v7580, 1.442695
        %v7691 = vpow.pop %v7690
        %v7692 = vmul.f32 %v7581, 1.442695
        %v7693 = vpow.pop %v7692
        %v7694 = vmul.f32 %v7582, 1.442695
        %v7695 = vpow.pop %v7694
        %v7696 = vmul.f32 %v7583, 1.442695
        %v7697 = vpow.pop %v7696
        %v7698 = vmul.f32 %v7584, 1.442695
        %v7699 = vpow.pop %v7698
        %v7700 = vmul.f32 %v7585, 1.442695
        %v7701 = vpow.pop %v7700
        %v7702 = vmul.f32 %v7586, 1.442695
        %v7703 = vpow.pop %v7702
        %v7704 = vmul.f32 %v7587, 1.442695
        %v7705 = vpow.pop %v7704
        %v7706 = vmul.f32 %v7588, 1.442695
        %v7707 = vpow.pop %v7706
        %v7708 = vmul.f32 %v7589, 1.442695
        %v7709 = vpow.pop %v7708
        %v7710 = vmul.f32 %v7590, 1.442695
        %v7711 = vpow.pop %v7710
        %v7712 = vmul.f32 %v7591, 1.442695
        %v7713 = vpow.pop %v7712
        %v7714 = vmul.f32 %v7592, 1.442695
        %v7715 = vpow.pop %v7714
        %v7716 = vmul.f32 %v7593, 1.442695
        %v7717 = vpow.pop %v7716
        %v7718 = vmul.f32 %v7594, 1.442695
        %v7719 = vpow.pop %v7718
        %v7720 = vmul.f32 %v7595, 1.442695
        %v7721 = vpow.pop %v7720
        %v7722 = vmul.f32 %v7596, 1.442695
        %v7723 = vpow.pop %v7722
        %v7724 = vmul.f32 %v7597, 1.442695
        %v7725 = vpow.pop %v7724
        %v7726 = vmul.f32 %v7598, 1.442695
        %v7727 = vpow.pop %v7726
        %v7728 = vmul.f32 %v7599, 1.442695
        %v7729 = vpow.pop %v7728
        %v7730 = vmul.f32 %v7600, 1.442695
        %v7731 = vpow.pop %v7730
        %v7732 = vmul.f32 %v7601, 1.442695
        %v7733 = vpow.pop %v7732
        %v7734 = vmul.f32 %v7602, 1.442695
        %v7735 = vpow.pop %v7734
        %v7736 = vmul.f32 %v7603, 1.442695
        %v7737 = vpow.pop %v7736
        %v7738 = vmul.f32 %v7604, 1.442695
        %v7739 = vpow.pop %v7738
        %v7740 = vmul.f32 %v7605, 1.442695
        %v7741 = vpow.pop %v7740
        %v7742 = vmul.f32 %v7606, 1.442695
        %v7743 = vpow.pop %v7742
        %v7744 = vmul.f32 %v7607, 1.442695
        %v7745 = vpow.pop %v7744
        %v7746 = vmul.f32 %v7608, 1.442695
        %v7747 = vpow.pop %v7746
        %v7748 = vmul.f32 %v7609, 1.442695
        %v7749 = vpow.pop %v7748
        %v7750 = vmul.f32 %v7610, 1.442695
        %v7751 = vpow.pop %v7750
        %v7752 = vmul.f32 %v7611, 1.442695
        %v7753 = vpow.pop %v7752
        %v7754 = vmul.f32 %v7612, 1.442695
        %v7755 = vpow.pop %v7754
        %v7756 = vmul.f32 %v7613, 1.442695
        %v7757 = vpow.pop %v7756
        %v7758 = vmul.f32 %v7614, 1.442695
        %v7759 = vpow.pop %v7758
        %v7760 = vmul.f32 %v7615, 1.442695
        %v7761 = vpow.pop %v7760
        %v7762 = vmul.f32 %v7616, 1.442695
        %v7763 = vpow.pop %v7762
        %v7764 = vmul.f32 %v7617, 1.442695
        %v7765 = vpow.pop %v7764
        %v7766 = vmul.f32 %v7618, 1.442695
        %v7767 = vpow.pop %v7766
        %v7768 = vmul.f32 %v7619, 1.442695
        %v7769 = vpow.pop %v7768
        %v7770 = vsub.f32 %v7671, 1.0
        %v7771 = vsub.f32 %v7673, 1.0
        %v7772 = vsub.f32 %v7675, 1.0
        %v7773 = vsub.f32 %v7677, 1.0
        %v7774 = vsub.f32 %v7679, 1.0
        %v7775 = vsub.f32 %v7681, 1.0
        %v7776 = vsub.f32 %v7683, 1.0
        %v7777 = vsub.f32 %v7685, 1.0
        %v7778 = vsub.f32 %v7687, 1.0
        %v7779 = vsub.f32 %v7689, 1.0
        %v7780 = vsub.f32 %v7691, 1.0
        %v7781 = vsub.f32 %v7693, 1.0
        %v7782 = vsub.f32 %v7695, 1.0
        %v7783 = vsub.f32 %v7697, 1.0
        %v7784 = vsub.f32 %v7699, 1.0
        %v7785 = vsub.f32 %v7701, 1.0
        %v7786 = vsub.f32 %v7703, 1.0
        %v7787 = vsub.f32 %v7705, 1.0
        %v7788 = vsub.f32 %v7707, 1.0
        %v7789 = vsub.f32 %v7709, 1.0
        %v7790 = vsub.f32 %v7711, 1.0
        %v7791 = vsub.f32 %v7713, 1.0
        %v7792 = vsub.f32 %v7715, 1.0
        %v7793 = vsub.f32 %v7717, 1.0
        %v7794 = vsub.f32 %v7719, 1.0
        %v7795 = vsub.f32 %v7721, 1.0
        %v7796 = vsub.f32 %v7723, 1.0
        %v7797 = vsub.f32 %v7725, 1.0
        %v7798 = vsub.f32 %v7727, 1.0
        %v7799 = vsub.f32 %v7729, 1.0
        %v7800 = vsub.f32 %v7731, 1.0
        %v7801 = vsub.f32 %v7733, 1.0
        %v7802 = vsub.f32 %v7735, 1.0
        %v7803 = vsub.f32 %v7737, 1.0
        %v7804 = vsub.f32 %v7739, 1.0
        %v7805 = vsub.f32 %v7741, 1.0
        %v7806 = vsub.f32 %v7743, 1.0
        %v7807 = vsub.f32 %v7745, 1.0
        %v7808 = vsub.f32 %v7747, 1.0
        %v7809 = vsub.f32 %v7749, 1.0
        %v7810 = vsub.f32 %v7751, 1.0
        %v7811 = vsub.f32 %v7753, 1.0
        %v7812 = vsub.f32 %v7755, 1.0
        %v7813 = vsub.f32 %v7757, 1.0
        %v7814 = vsub.f32 %v7759, 1.0
        %v7815 = vsub.f32 %v7761, 1.0
        %v7816 = vsub.f32 %v7763, 1.0
        %v7817 = vsub.f32 %v7765, 1.0
        %v7818 = vsub.f32 %v7767, 1.0
        %v7819 = vsub.f32 %v7769, 1.0
        %v7820 = vsel %vm7620, %v7570, %v7770
        %v7821 = vsel %vm7621, %v7571, %v7771
        %v7822 = vsel %vm7622, %v7572, %v7772
        %v7823 = vsel %vm7623, %v7573, %v7773
        %v7824 = vsel %vm7624, %v7574, %v7774
        %v7825 = vsel %vm7625, %v7575, %v7775
        %v7826 = vsel %vm7626, %v7576, %v7776
        %v7827 = vsel %vm7627, %v7577, %v7777
        %v7828 = vsel %vm7628, %v7578, %v7778
        %v7829 = vsel %vm7629, %v7579, %v7779
        %v7830 = vsel %vm7630, %v7580, %v7780
        %v7831 = vsel %vm7631, %v7581, %v7781
        %v7832 = vsel %vm7632, %v7582, %v7782
        %v7833 = vsel %vm7633, %v7583, %v7783
        %v7834 = vsel %vm7634, %v7584, %v7784
        %v7835 = vsel %vm7635, %v7585, %v7785
        %v7836 = vsel %vm7636, %v7586, %v7786
        %v7837 = vsel %vm7637, %v7587, %v7787
        %v7838 = vsel %vm7638, %v7588, %v7788
        %v7839 = vsel %vm7639, %v7589, %v7789
        %v7840 = vsel %vm7640, %v7590, %v7790
        %v7841 = vsel %vm7641, %v7591, %v7791
        %v7842 = vsel %vm7642, %v7592, %v7792
        %v7843 = vsel %vm7643, %v7593, %v7793
        %v7844 = vsel %vm7644, %v7594, %v7794
        %v7845 = vsel %vm7645, %v7595, %v7795
        %v7846 = vsel %vm7646, %v7596, %v7796
        %v7847 = vsel %vm7647, %v7597, %v7797
        %v7848 = vsel %vm7648, %v7598, %v7798
        %v7849 = vsel %vm7649, %v7599, %v7799
        %v7850 = vsel %vm7650, %v7600, %v7800
        %v7851 = vsel %vm7651, %v7601, %v7801
        %v7852 = vsel %vm7652, %v7602, %v7802
        %v7853 = vsel %vm7653, %v7603, %v7803
        %v7854 = vsel %vm7654, %v7604, %v7804
        %v7855 = vsel %vm7655, %v7605, %v7805
        %v7856 = vsel %vm7656, %v7606, %v7806
        %v7857 = vsel %vm7657, %v7607, %v7807
        %v7858 = vsel %vm7658, %v7608, %v7808
        %v7859 = vsel %vm7659, %v7609, %v7809
        %v7860 = vsel %vm7660, %v7610, %v7810
        %v7861 = vsel %vm7661, %v7611, %v7811
        %v7862 = vsel %vm7662, %v7612, %v7812
        %v7863 = vsel %vm7663, %v7613, %v7813
        %v7864 = vsel %vm7664, %v7614, %v7814
        %v7865 = vsel %vm7665, %v7615, %v7815
        %v7866 = vsel %vm7666, %v7616, %v7816
        %v7867 = vsel %vm7667, %v7617, %v7817
        %v7868 = vsel %vm7668, %v7618, %v7818
        %v7869 = vsel %vm7669, %v7619, %v7819
        %7920 = vst [vmem:[#allocation1] ss:$4 sm:$0xff] %v7820
        %s7921 = scalar_lea.vmem [#allocation1], 1
        %7922 = vst [vmem:[%s7921] ss:$4 sm:$0xff] %v7821
        %s7923 = scalar_lea.vmem [#allocation1], 2
        %7924 = vst [vmem:[%s7923] ss:$4 sm:$0xff] %v7822
        %s7925 = scalar_lea.vmem [#allocation1], 3
        %7926 = vst [vmem:[%s7925] ss:$4 sm:$0xff] %v7823
        %s7927 = scalar_lea.vmem [#allocation1], 32
        %7928 = vst [vmem:[%s7927] ss:$4 sm:$0xff] %v7824
        %v7929 = vld.sshfl [vmem:[#allocation1] sm:$0xff pattern:$0x73625140]
        %v7930 = vld.sshfl [vmem:[#allocation1 + $0x20] sm:$0xff pattern:$0x73625140]
        %7931 = vst [vmem:[#allocation1] ss:$4 sm:$0xff] %v7825
        %7932 = vst [vmem:[%s7921] ss:$4 sm:$0xff] %v7826
        %7933 = vst [vmem:[%s7923] ss:$4 sm:$0xff] %v7827
        %7934 = vst [vmem:[%s7925] ss:$4 sm:$0xff] %v7828
        %7935 = vst [vmem:[%s7927] ss:$4 sm:$0xff] %v7829
        %v7936 = vld.sshfl [vmem:[#allocation1] sm:$0xff pattern:$0x73625140]
        %v7937 = vld.sshfl [vmem:[#allocation1 + $0x20] sm:$0xff pattern:$0x73625140]
        %7938 = vst [vmem:[#allocation1] ss:$4 sm:$0xff] %v7830
        %7939 = vst [vmem:[%s7921] ss:$4 sm:$0xff] %v7831
        %7940 = vst [vmem:[%s7923] ss:$4 sm:$0xff] %v7832
        %7941 = vst [vmem:[%s7925] ss:$4 sm:$0xff] %v7833
        %7942 = vst [vmem:[%s7927] ss:$4 sm:$0xff] %v7834
        %v7943 = vld.sshfl [vmem:[#allocation1] sm:$0xff pattern:$0x73625140]
        %v7944 = vld.sshfl [vmem:[#allocation1 + $0x20] sm:$0xff pattern:$0x73625140]
        %7945 = vst [vmem:[#allocation1] ss:$4 sm:$0xff] %v7835
        %7946 = vst [vmem:[%s7921] ss:$4 sm:$0xff] %v7836
        %7947 = vst [vmem:[%s7923] ss:$4 sm:$0xff] %v7837
        %7948 = vst [vmem:[%s7925] ss:$4 sm:$0xff] %v7838
        %7949 = vst [vmem:[%s7927] ss:$4 sm:$0xff] %v7839
        %v7950 = vld.sshfl [vmem:[#allocation1] sm:$0xff pattern:$0x73625140]
        %v7951 = vld.sshfl [vmem:[#allocation1 + $0x20] sm:$0xff pattern:$0x73625140]
        %7952 = vst [vmem:[#allocation1] ss:$4 sm:$0xff] %v7840
        %7953 = vst [vmem:[%s7921] ss:$4 sm:$0xff] %v7841
        %7954 = vst [vmem:[%s7923] ss:$4 sm:$0xff] %v7842
        %7955 = vst [vmem:[%s7925] ss:$4 sm:$0xff] %v7843
        %7956 = vst [vmem:[%s7927] ss:$4 sm:$0xff] %v7844
        %v7957 = vld.sshfl [vmem:[#allocation1] sm:$0xff pattern:$0x73625140]
        %v7958 = vld.sshfl [vmem:[#allocation1 + $0x20] sm:$0xff pattern:$0x73625140]
        %7959 = vst [vmem:[#allocation1] ss:$4 sm:$0xff] %v7845
        %7960 = vst [vmem:[%s7921] ss:$4 sm:$0xff] %v7846
        %7961 = vst [vmem:[%s7923] ss:$4 sm:$0xff] %v7847
        %7962 = vst [vmem:[%s7925] ss:$4 sm:$0xff] %v7848
        %7963 = vst [vmem:[%s7927] ss:$4 sm:$0xff] %v7849
        %v7964 = vld.sshfl [vmem:[#allocation1] sm:$0xff pattern:$0x73625140]
        %v7965 = vld.sshfl [vmem:[#allocation1 + $0x20] sm:$0xff pattern:$0x73625140]
        %7966 = vst [vmem:[#allocation1] ss:$4 sm:$0xff] %v7850
        %7967 = vst [vmem:[%s7921] ss:$4 sm:$0xff] %v7851
        %7968 = vst [vmem:[%s7923] ss:$4 sm:$0xff] %v7852
        %7969 = vst [vmem:[%s7925] ss:$4 sm:$0xff] %v7853
        %7970 = vst [vmem:[%s7927] ss:$4 sm:$0xff] %v7854
        %v7971 = vld.sshfl [vmem:[#allocation1] sm:$0xff pattern:$0x73625140]
        %v7972 = vld.sshfl [vmem:[#allocation1 + $0x20] sm:$0xff pattern:$0x73625140]
        %7973 = vst [vmem:[#allocation1] ss:$4 sm:$0xff] %v7855
        %7974 = vst [vmem:[%s7921] ss:$4 sm:$0xff] %v7856
        %7975 = vst [vmem:[%s7923] ss:$4 sm:$0xff] %v7857
        %7976 = vst [vmem:[%s7925] ss:$4 sm:$0xff] %v7858
        %7977 = vst [vmem:[%s7927] ss:$4 sm:$0xff] %v7859
        %v7978 = vld.sshfl [vmem:[#allocation1] sm:$0xff pattern:$0x73625140]
        %v7979 = vld.sshfl [vmem:[#allocation1 + $0x20] sm:$0xff pattern:$0x73625140]
        %7980 = vst [vmem:[#allocation1] ss:$4 sm:$0xff] %v7860
        %7981 = vst [vmem:[%s7921] ss:$4 sm:$0xff] %v7861
        %7982 = vst [vmem:[%s7923] ss:$4 sm:$0xff] %v7862
        %7983 = vst [vmem:[%s7925] ss:$4 sm:$0xff] %v7863
        %7984 = vst [vmem:[%s7927] ss:$4 sm:$0xff] %v7864
        %v7985 = vld.sshfl [vmem:[#allocation1] sm:$0xff pattern:$0x73625140]
        %v7986 = vld.sshfl [vmem:[#allocation1 + $0x20] sm:$0xff pattern:$0x73625140]
        %7987 = vst [vmem:[#allocation1] ss:$4 sm:$0xff] %v7865
        %7988 = vst [vmem:[%s7921] ss:$4 sm:$0xff] %v7866
        %7989 = vst [vmem:[%s7923] ss:$4 sm:$0xff] %v7867
        %7990 = vst [vmem:[%s7925] ss:$4 sm:$0xff] %v7868
        %7991 = vst [vmem:[%s7927] ss:$4 sm:$0xff] %v7869
        %v7992 = vld.sshfl [vmem:[#allocation1] sm:$0xff pattern:$0x73625140]
        %v7993 = vld.sshfl [vmem:[#allocation1 + $0x20] sm:$0xff pattern:$0x73625140]
        %v8014 = vsel %vm4871, %v7929, 0.0
        %v8015 = vsel %vm4871, %v7936, 0.0
        %v8016 = vadd.f32 %v8014, %v8015
        %v8017 = vsel %vm4871, %v7943, 0.0
        %v8018 = vadd.f32 %v8016, %v8017
        %v8019 = vsel %vm4871, %v7950, 0.0
        %v8020 = vadd.f32 %v8018, %v8019
        %v8021 = vsel %vm4871, %v7957, 0.0
        %v8022 = vadd.f32 %v8020, %v8021
        %v8023 = vsel %vm4871, %v7964, 0.0
        %v8024 = vadd.f32 %v8022, %v8023
        %v8025 = vsel %vm4871, %v7971, 0.0
        %v8026 = vadd.f32 %v8024, %v8025
        %v8027 = vsel %vm4871, %v7978, 0.0
        %v8028 = vadd.f32 %v8026, %v8027
        %v8029 = vsel %vm4871, %v7985, 0.0
        %v8030 = vadd.f32 %v8028, %v8029
        %v8031 = vsel %vm4871, %v7992, 0.0
        %v8032 = vadd.f32 %v8030, %v8031
        %vm8033 = vcmask 123904
        %v8034 = vsel %vm8033, %v7930, 0.0
        %v8035 = vsel %vm8033, %v7937, 0.0
        %v8036 = vadd.f32 %v8034, %v8035
        %v8037 = vsel %vm8033, %v7944, 0.0
        %v8038 = vadd.f32 %v8036, %v8037
        %v8039 = vsel %vm8033, %v7951, 0.0
        %v8040 = vadd.f32 %v8038, %v8039
        %v8041 = vsel %vm8033, %v7958, 0.0
        %v8042 = vadd.f32 %v8040, %v8041
        %v8043 = vsel %vm8033, %v7965, 0.0
        %v8044 = vadd.f32 %v8042, %v8043
        %v8045 = vsel %vm8033, %v7972, 0.0
        %v8046 = vadd.f32 %v8044, %v8045
        %v8047 = vsel %vm8033, %v7979, 0.0
        %v8048 = vadd.f32 %v8046, %v8047
        %v8049 = vsel %vm8033, %v7986, 0.0
        %v8050 = vadd.f32 %v8048, %v8049
        %v8051 = vsel %vm8033, %v7993, 0.0
        %v8052 = vadd.f32 %v8050, %v8051
        %v8053 = vsel %vm4871, %v8032, 0.0
        %v8054 = vsel %vm8033, %v8052, 0.0
        %v8055 = vadd.f32 %v8053, %v8054
        %v8056 = vrot.slane %v8055, 4
        %v8057 = vadd.f32 %v8055, %v8056
        %v8058 = vrot.slane %v8057, 2
        %v8059 = vadd.f32 %v8057, %v8058
        %v8060 = vrot.slane %v8059, 1
        %v8061 = vadd.f32 %v8059, %v8060
        %v8062 = vmul.f32 %v8061, 0.01
        %v8063 = vld [vmem:[%s7] sm:$0xff]
        %v8064 = vld [vmem:[%s7 + $0x8] sm:$0xff]
        %v8065 = vld [vmem:[#allocation2] sm:$0x1]
        %v8067 = vsel %vm4871, %v8062, 0
        %8069 = vmatpush.msra.mxu0 0.0
        %8070 = vmatpush.msra.mxu0 0.0
        %8071 = vmatpush.msra.mxu0 0.0
        %8072 = vmatpush.msra.mxu0 0.0
        %8073 = vmatpush.msra.mxu0 0.0
        %8074 = vmatpush.msra.mxu0 0.0
        %8075 = vmatpush.msra.mxu0 0.0
        %8076 = vmatpush.msra.mxu0 0.0
        %8077 = vmatpush.msra.mxu0 0.0
        %8078 = vmatpush.msra.mxu0 0.0
        %8079 = vmatpush.msra.mxu0 0.0
        %8080 = vmatpush.msra.mxu0 0.0
        %8081 = vmatpush.msra.mxu0 0.0
        %8082 = vmatpush.msra.mxu0 0.0
        %8083 = vmatpush.msra.mxu0 %v8064
        %8084 = vmatpush.msra.mxu0 %v8063
        %8085 = vmatmul.f32.gmra.mxu0 %v8067
        %v8086 = vpop.f32.mrf.mxu0
        %v8087 = vadd.f32 %v8065, %v8086
        %8088 = vdwg.mxu0
        %vm8089 = vcmask 0
        %8090 = vst.msk [vmem:[%s385] sm:$0x1] %vm8089, %v8087
        %p8091 = scmp.lt.s32.totalorder %s26, 1
        %s8092 = scalar_select %p8091, %s26, 1
        %s8093 = scalar_lea.vmem %s9, %s8092
        // Predicated region
        $region69: #{tpu_custom_call.1} parent=55 // pred_check
          %p8094 = pneg %p238
        $region70: #{tpu_custom_call.1} parent=55 // pred_check_branch
          %8096 = sbr.rel (%p8094) target = $region72
        $region71: #{tpu_custom_call.1} parent=55 // pred_region
          _
        $region72: #{tpu_custom_call.1} parent=55 // pred_fallthru
          _
      $region56: #{tpu_custom_call.1} parent=5 // pred_fallthru
        _
      %p8097 = scmp.le.s32.totalorder 2, %s21
      // Predicated region
      $region73: #{tpu_custom_call.1} parent=5 // pred_check
        %p8098 = pneg %p8097
      $region74: #{tpu_custom_call.1} parent=5 // pred_check_branch
        %8100 = sbr.rel (%p8098) target = $region76
      $region75: #{tpu_custom_call.1} parent=5 // pred_region
        %s8101 = ssub.s32 %s21, 2
        // Predicated region
        $region77: #{tpu_custom_call.1} parent=75 // pred_check
          %p8102 = pneg %p244
        $region78: #{tpu_custom_call.1} parent=75 // pred_check_branch
          %8104 = sbr.rel (%p8102) target = $region80
        $region79: #{tpu_custom_call.1} parent=75 // pred_region
          %p8105 = scmp.lt.s32.totalorder %s27, 1
          %s8106 = scalar_select %p8105, %s27, 1
          %s8107 = scalar_lea.vmem %s9, %s8106
        $region80: #{tpu_custom_call.1} parent=75 // pred_fallthru
          _
      $region76: #{tpu_custom_call.1} parent=5 // pred_fallthru
        _
    $region6: #{tpu_custom_call.1} parent=1 // loop_footer
      %s25 = sadd.s32 1, %s21
    $region7: #{tpu_custom_call.1} parent=1 // loop_footer_branch
      %20 = sbr.rel target = $region3
    $region8: #{tpu_custom_call.1} parent=1 // loop_exit
      _
    %8108 = vsyncpa [#allocation4], 1
    %s8109 = scalar_lea.sflag [#allocation4], 1
    %8110 = vsyncpa %s8109, 1
    %8111 = vsyncpa [#allocation6], 1

</llo_original>
